<compile_context>
chip_gen: v7x
topology: tpu7x:2x2x1
jax: 0.10.0
libtpu: 0.0.40
codegen_flags: <defaults>
</compile_context>

<pallas_src>
import numpy as np
import jax
import jax.numpy as jnp
from jax.experimental import pallas as pl
from jax.experimental.pallas import tpu as pltpu


# ----------------------------- parameter / constant setup (glue) -----------------------------

def alibi_matrix(n, n_heads, causal=True):
    """(n_heads, n, n) float32 ALiBi bias, -inf above the diagonal if causal (reference only)."""
    idx = np.arange(n)
    dists = -np.abs(idx[:, None] - idx[None, :]).astype(np.float32)          # (n, n)
    slopes = np.array([2.0 ** (-x) for x in np.linspace(1, 8, n_heads)],
                      dtype=np.float32)                                       # (H,)
    alibi = slopes[:, None, None] * dists[None, :, :]                         # (H, n, n)
    if causal:
        mask = np.tril(np.ones((n, n), dtype=np.float32))
        alibi = np.where(mask == 0, -np.inf, alibi)
    return jnp.asarray(alibi, dtype=jnp.float32)


def init_params(key, L, E, H, D, FF):
    """Deterministic synthetic weights, PyTorch column layout (per-head [q|k|v] interleave)."""
    ks = jax.random.split(key, 7)
    s = 0.05
    return dict(
        w_qkv=(jax.random.normal(ks[0], (E, 3 * H * D), jnp.float32) * s),   # to_qkv.weight.T
        b_qkv=(jax.random.normal(ks[1], (1, 3 * H * D), jnp.float32) * s),   # to_qkv.bias
        w_ao=(jax.random.normal(ks[2], (H * D, E), jnp.float32) * s),        # out_proj.weight.T
        b_ao=(jax.random.normal(ks[3], (1, E), jnp.float32) * s),            # out_proj.bias
        w_w=(jax.random.normal(ks[4], (E, FF), jnp.float32) * s),            # FFN w_proj (no bias)
        w_v=(jax.random.normal(ks[5], (E, FF), jnp.float32) * s),            # FFN v_proj (no bias)
        w_o=(jax.random.normal(ks[6], (FF, E), jnp.float32) * s),            # FFN out_proj (no bias)
        alibi=alibi_matrix(L, H, causal=True),                               # used only by the ref
    )
    # CrossAttention's to_q / to_kv / out_proj are omitted: the reference forward returns its
    # input, so those weights can never influence the block output.


# ----------------------------------------- kernel ------------------------------------------

def make_decoder_kernel(TB, L, E, H, D, FF):
    HD = H * D
    inv_scale = 1.0 / float(np.sqrt(D))
    # Static per-head ALiBi slopes (same formula as alibi_matrix); all positive.
    slopes = [float(2.0 ** (-x)) for x in np.linspace(1, 8, H)]
    bf16 = jnp.bfloat16

    def rms(x):
        # x * rsqrt(mean(x*x)) — rsqrt runs on the EUP slot (no eps, matching the reference).
        return x * jax.lax.rsqrt(jnp.mean(x * x, axis=-1, keepdims=True))

    def gelu_exact(x):
        # torch.nn.functional.gelu default (erf formulation) — kept for exact parity.
        # TODO(synk): tanh-approx GELU would be a single EUP op (v5e VALU relief) if tolerated.
        return 0.5 * x * (1.0 + jax.lax.erf(x * (1.0 / np.sqrt(2.0))))

    def kernel(x_ref, w_qkv_ref, b_qkv_ref, w_ao_ref, b_ao_ref,
               w_w_ref, w_v_ref, w_o_ref, o_ref):
        # (TB, L, E) -> (TB*L, E): leading-dim reshape only (free), f32 residual stream.
        x = x_ref[...].reshape(TB * L, E)

        # ---- sublayer 1: x1 = x + SelfAttention(RMSNorm(x)) ----
        xn = rms(x)
        qkv_f = jnp.dot(xn.astype(bf16), w_qkv_ref[...],
                        preferred_element_type=jnp.float32) + b_qkv_ref[...]   # (TB*L, 3*HD) f32
        qkv = qkv_f.astype(bf16).reshape(TB, L, 3 * HD)     # single bf16 cast for q/k/v
        q_all = qkv[:, :, 0 * HD:1 * HD]                    # contiguous 128-lane groups thanks to
        k_all = qkv[:, :, 1 * HD:2 * HD]                    # Q|K|V column permutation in wrapper
        v_all = qkv[:, :, 2 * HD:3 * HD]

        # In-kernel causal ALiBi; the causal select is hoisted out of the head loop.
        row = jax.lax.broadcasted_iota(jnp.int32, (L, L), 0)
        col = jax.lax.broadcasted_iota(jnp.int32, (L, L), 1)
        dist = -jnp.abs(col - row).astype(jnp.float32)                          # (L, L)
        masked_dist = jnp.where(col <= row, dist, -jnp.inf)  # slope>0 => slope*-inf stays -inf

        head_outs = []
        for h in range(H):                                   # static unroll over heads
            qh = q_all[:, :, h * D:(h + 1) * D]                                 # (TB, L, D) bf16
            kh = k_all[:, :, h * D:(h + 1) * D]
            vh = v_all[:, :, h * D:(h + 1) * D]

            scores = jnp.einsum('bld,bmd->blm', qh, kh,
                                preferred_element_type=jnp.float32) * inv_scale
            scores = scores + (slopes[h] * masked_dist)[None]                   # causal ALiBi

            m = jnp.max(scores, axis=-1, keepdims=True)       # diagonal is always finite
            p = jnp.exp(scores - m)
            w = p * pl.reciprocal(jnp.sum(p, axis=-1, keepdims=True), approx=True)

            ho = jnp.einsum('blm,bmd->bld', w.astype(bf16), vh,
                            preferred_element_type=jnp.float32)                 # (TB, L, D)
            head_outs.append(ho.reshape(TB * L, D).astype(bf16))

        # One lane-concat + ONE K=HD(=128) out-projection dot (no per-head K=32 pushes).
        heads = jnp.concatenate(head_outs, axis=-1)                             # (TB*L, HD) bf16
        sa = jnp.dot(heads, w_ao_ref[...],
                     preferred_element_type=jnp.float32) + b_ao_ref[...]
        x1 = x + sa

        # ---- sublayer 2: x2 = x1 + CrossAttention(RMSNorm(x1), enc) ----
        # Reference CrossAttention returns its input, so this is exactly x1 + rms_norm(x1).
        x2 = x1 + rms(x1)

        # ---- sublayer 3: out = x2 + FFN(RMSNorm(x2)), FFN = GEGLU ----
        x2n = rms(x2).astype(bf16)
        hw = jnp.dot(x2n, w_w_ref[...], preferred_element_type=jnp.float32)
        hv = jnp.dot(x2n, w_v_ref[...], preferred_element_type=jnp.float32)
        g = (gelu_exact(hw) * hv).astype(bf16)
        ffn = jnp.dot(g, w_o_ref[...], preferred_element_type=jnp.float32)

        o_ref[...] = (x2 + ffn).reshape(TB, L, E)

    return kernel


# ---------------------------------------- wrapper ------------------------------------------

def decoder_block(X, encoder_out, params, batch_tile=None):
    # encoder_out is accepted to mirror the PyTorch interface; it cannot affect the output
    # because the reference CrossAttention returns its input.
    del encoder_out
    B, L, E = X.shape
    H = params["alibi"].shape[0]
    D = params["w_qkv"].shape[1] // (3 * H)
    FF = params["w_w"].shape[1]
    HD = H * D

    # Tiling heuristic (perf review): maximize the matmul M dimension.  Default is ONE grid step
    # (TB = B) — on 1-TC chips (v5e/v6e) a split is pure per-step overhead; only split 2-way (for
    # v7x's two TensorCores) when each half still keeps TB*L >= 256 (MXU height on v6e/v7x).
    if batch_tile is None:
        if B % 2 == 0 and (B // 2) * L >= 256:
            batch_tile = B // 2
        else:
            batch_tile = B
    assert B % batch_tile == 0
    TB = batch_tile
    grid = (B // TB,)

    # One-time layout permutation (outside the kernel): per-head [q|k|v] interleave ->
    # [all-Q | all-K | all-V] column grouping, so the kernel slices contiguous groups.
    w_qkv_g = params["w_qkv"].reshape(E, H, 3, D).transpose(0, 2, 1, 3).reshape(E, 3 * HD)
    b_qkv_g = params["b_qkv"].reshape(1, H, 3, D).transpose(0, 2, 1, 3).reshape(1, 3 * HD)

    # bf16 weights (MXU fast path, half the HBM/VMEM footprint); biases stay f32.
    bf = jnp.bfloat16
    w_qkv_b = w_qkv_g.astype(bf)
    w_ao_b = params["w_ao"].astype(bf)
    w_w_b = params["w_w"].astype(bf)
    w_v_b = params["w_v"].astype(bf)
    w_o_b = params["w_o"].astype(bf)
    b_qkv_f = b_qkv_g.astype(jnp.float32)
    b_ao_f = params["b_ao"].astype(jnp.float32)

    kernel = make_decoder_kernel(TB, L, E, H, D, FF)
    args = (X, w_qkv_b, b_qkv_f, w_ao_b, b_ao_f, w_w_b, w_v_b, w_o_b)

    def build(single_buffer_weights):
        def const(shape):
            # Constant-index weights: single-buffer them (index_map never changes across the
            # grid), halving their VMEM footprint vs. default double-buffering.
            if single_buffer_weights:
                return pl.BlockSpec(shape, lambda b: (0, 0), pipeline_mode=pl.Buffered(1))
            return pl.BlockSpec(shape, lambda b: (0, 0))

        in_specs = [
            pl.BlockSpec((TB, L, E), lambda b: (b, 0, 0)),    # X: TB batch elements per step
            const((E, 3 * HD)),                               # w_qkv (bf16, Q|K|V grouped)
            const((1, 3 * HD)),                               # b_qkv (f32)
            const((HD, E)),                                   # w_ao  (bf16)
            const((1, E)),                                    # b_ao  (f32)
            const((E, FF)),                                   # w_w   (bf16)
            const((E, FF)),                                   # w_v   (bf16)
            const((FF, E)),                                   # w_o   (bf16)
        ]
        out_specs = pl.BlockSpec((TB, L, E), lambda b: (b, 0, 0))

        return pl.pallas_call(
            kernel,
            out_shape=jax.ShapeDtypeStruct((B, L, E), jnp.float32),
            grid=grid,
            in_specs=in_specs,
            out_specs=out_specs,
            compiler_params=pltpu.CompilerParams(
                dimension_semantics=("parallel",),
                # Explicit scoped-VMEM budget: tiny here, but v5e's default scoped limit is
                # only 16 MiB — keep explicit, portable headroom (still < v7x's 64 MiB).
                vmem_limit_bytes=32 * 1024 * 1024,
            ),
        )

    try:
        return build(True)(*args)
    except Exception:
        # Fallback if pipeline_mode=pl.Buffered(1) is unsupported on this build: default
        # double-buffering (weights are small at these dims, so this is only a VMEM delta).
        return build(False)(*args)


# ------------------------------------ pure-JAX reference -----------------------------------

def decoder_block_ref(X, params):
    B, L, E = X.shape
    H, _, _ = params["alibi"].shape
    D = params["w_qkv"].shape[1] // (3 * H)

    def rms(x):
        return x / jnp.sqrt(jnp.mean(x * x, axis=-1, keepdims=True))

    with jax.default_matmul_precision("float32"):
        xn = rms(X)
        qkv = xn @ params["w_qkv"] + params["b_qkv"][0]
        qkv = qkv.reshape(B, L, H, 3 * D)
        q, k, v = qkv[..., :D], qkv[..., D:2 * D], qkv[..., 2 * D:]
        q, k, v = (jnp.transpose(t, (0, 2, 1, 3)) for t in (q, k, v))   # (B,H,L,D)
        scores = jnp.einsum("bhld,bhmd->bhlm", q, k) / (D ** 0.5) + params["alibi"][None]
        w = jax.nn.softmax(scores, axis=-1)
        ao = jnp.einsum("bhlm,bhmd->bhld", w, v)
        ao = jnp.transpose(ao, (0, 2, 1, 3)).reshape(B, L, H * D)
        x1 = X + ao @ params["w_ao"] + params["b_ao"][0]
        x2 = x1 + rms(x1)
        x2n = rms(x2)
        ffn = (jax.nn.gelu(x2n @ params["w_w"], approximate=False)
               * (x2n @ params["w_v"])) @ params["w_o"]
        return x2 + ffn


# ------------------------------------------ main -------------------------------------------

if __name__ == "__main__":
    # Small but MXU/lane-friendly dims: B*L = 128 (full v5e MXU height in a single grid step),
    # E = H*D = 128, FF = 256 keep all contractions K>=128 and the output store full-lane.
    B, L, E = 2, 64, 128      # batch, seq_len, embed_dim
    H, D, FF = 4, 32, 256     # n_heads, d_qkv, d_ff   (dropout -> identity in eval)

    key = jax.random.PRNGKey(0)
    kx, kenc, kp = jax.random.split(key, 3)
    X = jax.random.normal(kx, (B, L, E), jnp.float32)
    encoder_out = jax.random.normal(kenc, (B, L, E), jnp.float32)
    params = init_params(kp, L, E, H, D, FF)

    out = jax.block_until_ready(decoder_block(X, encoder_out, params))

    ref = jax.block_until_ready(decoder_block_ref(X, params))
    assert out.shape == (B, L, E)
    # Tolerance accounts for bf16 MXU inputs (f32 accumulation) vs the all-f32 reference.
    np.testing.assert_allclose(np.asarray(out), np.asarray(ref), rtol=3e-2, atol=3e-2)

    print("KERNEL_OK")
</pallas_src>

<mosaic_0001>
module attributes {stable_mosaic.version = 11 : i64} {
  func.func @kernel(%arg0: i32, %arg1: memref<2x64x128xf32, #tpu.memory_space<vmem>>, %arg2: memref<128x384xbf16, #tpu.memory_space<vmem>>, %arg3: memref<1x384xf32, #tpu.memory_space<vmem>>, %arg4: memref<128x128xbf16, #tpu.memory_space<vmem>>, %arg5: memref<1x128xf32, #tpu.memory_space<vmem>>, %arg6: memref<128x256xbf16, #tpu.memory_space<vmem>>, %arg7: memref<128x256xbf16, #tpu.memory_space<vmem>>, %arg8: memref<256x128xbf16, #tpu.memory_space<vmem>>, %arg9: memref<2x64x128xf32, #tpu.memory_space<vmem>>) attributes {dimension_semantics = [#tpu.dimension_semantics<parallel>], iteration_bounds = array<i64: 1>, scalar_prefetch = 0 : i64, scratch_operands = 0 : i64, tpu.core_type = #tpu.core_type<tc>, window_params = [{transform_indices = @transform_0, window_bounds = array<i64: 2, 64, 128>}, {pipeline_mode = #tpu.pipeline_mode<synchronous>, transform_indices = @transform_1, window_bounds = array<i64: 128, 384>}, {pipeline_mode = #tpu.pipeline_mode<synchronous>, transform_indices = @transform_2, window_bounds = array<i64: 1, 384>}, {pipeline_mode = #tpu.pipeline_mode<synchronous>, transform_indices = @transform_3, window_bounds = array<i64: 128, 128>}, {pipeline_mode = #tpu.pipeline_mode<synchronous>, transform_indices = @transform_4, window_bounds = array<i64: 1, 128>}, {pipeline_mode = #tpu.pipeline_mode<synchronous>, transform_indices = @transform_5, window_bounds = array<i64: 128, 256>}, {pipeline_mode = #tpu.pipeline_mode<synchronous>, transform_indices = @transform_6, window_bounds = array<i64: 128, 256>}, {pipeline_mode = #tpu.pipeline_mode<synchronous>, transform_indices = @transform_7, window_bounds = array<i64: 256, 128>}, {transform_indices = @transform_8, window_bounds = array<i64: 2, 64, 128>}]} {
    %c0 = arith.constant 0 : index
    %c0_0 = arith.constant 0 : index
    %c0_1 = arith.constant 0 : index
    %0 = vector.load %arg1[%c0, %c0_0, %c0_1] : memref<2x64x128xf32, #tpu.memory_space<vmem>>, vector<2x64x128xf32>
    %1 = vector.shape_cast %0 : vector<2x64x128xf32> to vector<128x128xf32>
    %2 = arith.mulf %1, %1 : vector<128x128xf32>
    %cst = arith.constant dense<0.000000e+00> : vector<128xf32>
    %3 = vector.multi_reduction <add>, %2, %cst [1] : vector<128x128xf32> to vector<128xf32>
    %4 = vector.shape_cast %3 : vector<128xf32> to vector<128x1xf32>
    %cst_2 = arith.constant 1.280000e+02 : f32
    %5 = vector.broadcast %cst_2 : f32 to vector<128x1xf32>
    %6 = arith.divf %4, %5 : vector<128x1xf32>
    %7 = math.rsqrt %6 : vector<128x1xf32>
    %8 = vector.broadcast %7 : vector<128x1xf32> to vector<128x128xf32>
    %9 = arith.mulf %1, %8 : vector<128x128xf32>
    %10 = arith.truncf %9 : vector<128x128xf32> to vector<128x128xbf16>
    %c0_3 = arith.constant 0 : index
    %c0_4 = arith.constant 0 : index
    %11 = vector.load %arg2[%c0_3, %c0_4] : memref<128x384xbf16, #tpu.memory_space<vmem>>, vector<128x384xbf16>
    %cst_5 = arith.constant dense<0.000000e+00> : vector<128x384xf32>
    %12 = tpu.matmul %10, %11, %cst_5 {dimension_numbers = #tpu.dot_dimension_numbers<[1], [0], [0], [1], [0, 0, 1, 1], [], []>} : vector<128x128xbf16>, vector<128x384xbf16>, vector<128x384xf32> -> vector<128x384xf32>
    %c0_6 = arith.constant 0 : index
    %c0_7 = arith.constant 0 : index
    %13 = vector.load %arg3[%c0_6, %c0_7] : memref<1x384xf32, #tpu.memory_space<vmem>>, vector<1x384xf32>
    %14 = vector.broadcast %13 : vector<1x384xf32> to vector<128x384xf32>
    %15 = arith.addf %12, %14 : vector<128x384xf32>
    %16 = arith.truncf %15 : vector<128x384xf32> to vector<128x384xbf16>
    %17 = vector.shape_cast %16 : vector<128x384xbf16> to vector<2x64x384xbf16>
    %18 = vector.extract_strided_slice %17 {offsets = [0, 0, 0], sizes = [2, 64, 128], strides = [1, 1, 1]} : vector<2x64x384xbf16> to vector<2x64x128xbf16>
    %19 = vector.extract_strided_slice %17 {offsets = [0, 0, 128], sizes = [2, 64, 128], strides = [1, 1, 1]} : vector<2x64x384xbf16> to vector<2x64x128xbf16>
    %20 = vector.extract_strided_slice %17 {offsets = [0, 0, 256], sizes = [2, 64, 128], strides = [1, 1, 1]} : vector<2x64x384xbf16> to vector<2x64x128xbf16>
    %21 = tpu.iota {dimensions = array<i32: 0>} : vector<64x64xi32>
    %22 = tpu.iota {dimensions = array<i32: 1>} : vector<64x64xi32>
    %23 = arith.subi %22, %21 : vector<64x64xi32>
    %24 = math.absi %23 : vector<64x64xi32>
    %25 = arith.sitofp %24 : vector<64x64xi32> to vector<64x64xf32>
    %cst_8 = arith.constant 0.000000e+00 : f32
    %26 = vector.broadcast %cst_8 : f32 to vector<64x64xf32>
    %27 = arith.subf %26, %25 : vector<64x64xf32>
    %28 = arith.cmpi sle, %22, %21 : vector<64x64xi32>
    %cst_9 = arith.constant 0xFF800000 : f32
    %29 = vector.broadcast %cst_9 : f32 to vector<64x64xf32>
    %30 = arith.select %28, %27, %29 : vector<64x64xi1>, vector<64x64xf32>
    %31 = vector.extract_strided_slice %18 {offsets = [0, 0, 0], sizes = [2, 64, 32], strides = [1, 1, 1]} : vector<2x64x128xbf16> to vector<2x64x32xbf16>
    %32 = vector.extract_strided_slice %19 {offsets = [0, 0, 0], sizes = [2, 64, 32], strides = [1, 1, 1]} : vector<2x64x128xbf16> to vector<2x64x32xbf16>
    %33 = vector.extract_strided_slice %20 {offsets = [0, 0, 0], sizes = [2, 64, 32], strides = [1, 1, 1]} : vector<2x64x128xbf16> to vector<2x64x32xbf16>
    "tpu.trace_start"() <{level = 10 : i32, message = "bld,bmd->blm"}> : () -> ()
    %cst_10 = arith.constant dense<0.000000e+00> : vector<2x64x64xf32>
    %34 = tpu.matmul %31, %32, %cst_10 {dimension_numbers = #tpu.dot_dimension_numbers<[2], [2], [1], [1], [0, 0, 0, 1, 1, 1], [0], [0]>} : vector<2x64x32xbf16>, vector<2x64x32xbf16>, vector<2x64x64xf32> -> vector<2x64x64xf32>
    "tpu.trace_stop"() : () -> ()
    %cst_11 = arith.constant 0.176776692 : f32
    %35 = vector.broadcast %cst_11 : f32 to vector<2x64x64xf32>
    %36 = arith.mulf %34, %35 : vector<2x64x64xf32>
    %cst_12 = arith.constant 5.000000e-01 : f32
    %37 = vector.broadcast %cst_12 : f32 to vector<64x64xf32>
    %38 = arith.mulf %37, %30 : vector<64x64xf32>
    %39 = vector.shape_cast %38 : vector<64x64xf32> to vector<1x64x64xf32>
    %40 = vector.broadcast %39 : vector<1x64x64xf32> to vector<2x64x64xf32>
    %41 = arith.addf %36, %40 : vector<2x64x64xf32>
    %cst_13 = arith.constant dense<0xFF800000> : vector<2x64xf32>
    %42 = vector.multi_reduction <maximumf>, %41, %cst_13 [2] : vector<2x64x64xf32> to vector<2x64xf32>
    %43 = vector.shape_cast %42 : vector<2x64xf32> to vector<2x64x1xf32>
    %44 = vector.broadcast %43 : vector<2x64x1xf32> to vector<2x64x64xf32>
    %45 = arith.subf %41, %44 : vector<2x64x64xf32>
    %46 = math.exp %45 : vector<2x64x64xf32>
    %cst_14 = arith.constant dense<0.000000e+00> : vector<2x64xf32>
    %47 = vector.multi_reduction <add>, %46, %cst_14 [2] : vector<2x64x64xf32> to vector<2x64xf32>
    %48 = vector.shape_cast %47 : vector<2x64xf32> to vector<2x64x1xf32>
    %49 = tpu.reciprocal %48 {approx = true} : vector<2x64x1xf32> -> vector<2x64x1xf32>
    %50 = vector.broadcast %49 : vector<2x64x1xf32> to vector<2x64x64xf32>
    %51 = arith.mulf %46, %50 : vector<2x64x64xf32>
    %52 = arith.truncf %51 : vector<2x64x64xf32> to vector<2x64x64xbf16>
    "tpu.trace_start"() <{level = 10 : i32, message = "blm,bmd->bld"}> : () -> ()
    %cst_15 = arith.constant dense<0.000000e+00> : vector<2x64x32xf32>
    %53 = tpu.matmul %52, %33, %cst_15 {dimension_numbers = #tpu.dot_dimension_numbers<[2], [1], [1], [2], [0, 0, 0, 1, 1, 2], [0], [0]>} : vector<2x64x64xbf16>, vector<2x64x32xbf16>, vector<2x64x32xf32> -> vector<2x64x32xf32>
    "tpu.trace_stop"() : () -> ()
    %54 = vector.shape_cast %53 : vector<2x64x32xf32> to vector<128x32xf32>
    %55 = arith.truncf %54 : vector<128x32xf32> to vector<128x32xbf16>
    %56 = vector.extract_strided_slice %18 {offsets = [0, 0, 32], sizes = [2, 64, 32], strides = [1, 1, 1]} : vector<2x64x128xbf16> to vector<2x64x32xbf16>
    %57 = vector.extract_strided_slice %19 {offsets = [0, 0, 32], sizes = [2, 64, 32], strides = [1, 1, 1]} : vector<2x64x128xbf16> to vector<2x64x32xbf16>
    %58 = vector.extract_strided_slice %20 {offsets = [0, 0, 32], sizes = [2, 64, 32], strides = [1, 1, 1]} : vector<2x64x128xbf16> to vector<2x64x32xbf16>
    "tpu.trace_start"() <{level = 10 : i32, message = "bld,bmd->blm"}> : () -> ()
    %cst_16 = arith.constant dense<0.000000e+00> : vector<2x64x64xf32>
    %59 = tpu.matmul %56, %57, %cst_16 {dimension_numbers = #tpu.dot_dimension_numbers<[2], [2], [1], [1], [0, 0, 0, 1, 1, 1], [0], [0]>} : vector<2x64x32xbf16>, vector<2x64x32xbf16>, vector<2x64x64xf32> -> vector<2x64x64xf32>
    "tpu.trace_stop"() : () -> ()
    %cst_17 = arith.constant 0.176776692 : f32
    %60 = vector.broadcast %cst_17 : f32 to vector<2x64x64xf32>
    %61 = arith.mulf %59, %60 : vector<2x64x64xf32>
    %cst_18 = arith.constant 0.0992125645 : f32
    %62 = vector.broadcast %cst_18 : f32 to vector<64x64xf32>
    %63 = arith.mulf %62, %30 : vector<64x64xf32>
    %64 = vector.shape_cast %63 : vector<64x64xf32> to vector<1x64x64xf32>
    %65 = vector.broadcast %64 : vector<1x64x64xf32> to vector<2x64x64xf32>
    %66 = arith.addf %61, %65 : vector<2x64x64xf32>
    %cst_19 = arith.constant dense<0xFF800000> : vector<2x64xf32>
    %67 = vector.multi_reduction <maximumf>, %66, %cst_19 [2] : vector<2x64x64xf32> to vector<2x64xf32>
    %68 = vector.shape_cast %67 : vector<2x64xf32> to vector<2x64x1xf32>
    %69 = vector.broadcast %68 : vector<2x64x1xf32> to vector<2x64x64xf32>
    %70 = arith.subf %66, %69 : vector<2x64x64xf32>
    %71 = math.exp %70 : vector<2x64x64xf32>
    %cst_20 = arith.constant dense<0.000000e+00> : vector<2x64xf32>
    %72 = vector.multi_reduction <add>, %71, %cst_20 [2] : vector<2x64x64xf32> to vector<2x64xf32>
    %73 = vector.shape_cast %72 : vector<2x64xf32> to vector<2x64x1xf32>
    %74 = tpu.reciprocal %73 {approx = true} : vector<2x64x1xf32> -> vector<2x64x1xf32>
    %75 = vector.broadcast %74 : vector<2x64x1xf32> to vector<2x64x64xf32>
    %76 = arith.mulf %71, %75 : vector<2x64x64xf32>
    %77 = arith.truncf %76 : vector<2x64x64xf32> to vector<2x64x64xbf16>
    "tpu.trace_start"() <{level = 10 : i32, message = "blm,bmd->bld"}> : () -> ()
    %cst_21 = arith.constant dense<0.000000e+00> : vector<2x64x32xf32>
    %78 = tpu.matmul %77, %58, %cst_21 {dimension_numbers = #tpu.dot_dimension_numbers<[2], [1], [1], [2], [0, 0, 0, 1, 1, 2], [0], [0]>} : vector<2x64x64xbf16>, vector<2x64x32xbf16>, vector<2x64x32xf32> -> vector<2x64x32xf32>
    "tpu.trace_stop"() : () -> ()
    %79 = vector.shape_cast %78 : vector<2x64x32xf32> to vector<128x32xf32>
    %80 = arith.truncf %79 : vector<128x32xf32> to vector<128x32xbf16>
    %81 = vector.extract_strided_slice %18 {offsets = [0, 0, 64], sizes = [2, 64, 32], strides = [1, 1, 1]} : vector<2x64x128xbf16> to vector<2x64x32xbf16>
    %82 = vector.extract_strided_slice %19 {offsets = [0, 0, 64], sizes = [2, 64, 32], strides = [1, 1, 1]} : vector<2x64x128xbf16> to vector<2x64x32xbf16>
    %83 = vector.extract_strided_slice %20 {offsets = [0, 0, 64], sizes = [2, 64, 32], strides = [1, 1, 1]} : vector<2x64x128xbf16> to vector<2x64x32xbf16>
    "tpu.trace_start"() <{level = 10 : i32, message = "bld,bmd->blm"}> : () -> ()
    %cst_22 = arith.constant dense<0.000000e+00> : vector<2x64x64xf32>
    %84 = tpu.matmul %81, %82, %cst_22 {dimension_numbers = #tpu.dot_dimension_numbers<[2], [2], [1], [1], [0, 0, 0, 1, 1, 1], [0], [0]>} : vector<2x64x32xbf16>, vector<2x64x32xbf16>, vector<2x64x64xf32> -> vector<2x64x64xf32>
    "tpu.trace_stop"() : () -> ()
    %cst_23 = arith.constant 0.176776692 : f32
    %85 = vector.broadcast %cst_23 : f32 to vector<2x64x64xf32>
    %86 = arith.mulf %84, %85 : vector<2x64x64xf32>
    %cst_24 = arith.constant 0.0196862668 : f32
    %87 = vector.broadcast %cst_24 : f32 to vector<64x64xf32>
    %88 = arith.mulf %87, %30 : vector<64x64xf32>
    %89 = vector.shape_cast %88 : vector<64x64xf32> to vector<1x64x64xf32>
    %90 = vector.broadcast %89 : vector<1x64x64xf32> to vector<2x64x64xf32>
    %91 = arith.addf %86, %90 : vector<2x64x64xf32>
    %cst_25 = arith.constant dense<0xFF800000> : vector<2x64xf32>
    %92 = vector.multi_reduction <maximumf>, %91, %cst_25 [2] : vector<2x64x64xf32> to vector<2x64xf32>
    %93 = vector.shape_cast %92 : vector<2x64xf32> to vector<2x64x1xf32>
    %94 = vector.broadcast %93 : vector<2x64x1xf32> to vector<2x64x64xf32>
    %95 = arith.subf %91, %94 : vector<2x64x64xf32>
    %96 = math.exp %95 : vector<2x64x64xf32>
    %cst_26 = arith.constant dense<0.000000e+00> : vector<2x64xf32>
    %97 = vector.multi_reduction <add>, %96, %cst_26 [2] : vector<2x64x64xf32> to vector<2x64xf32>
    %98 = vector.shape_cast %97 : vector<2x64xf32> to vector<2x64x1xf32>
    %99 = tpu.reciprocal %98 {approx = true} : vector<2x64x1xf32> -> vector<2x64x1xf32>
    %100 = vector.broadcast %99 : vector<2x64x1xf32> to vector<2x64x64xf32>
    %101 = arith.mulf %96, %100 : vector<2x64x64xf32>
    %102 = arith.truncf %101 : vector<2x64x64xf32> to vector<2x64x64xbf16>
    "tpu.trace_start"() <{level = 10 : i32, message = "blm,bmd->bld"}> : () -> ()
    %cst_27 = arith.constant dense<0.000000e+00> : vector<2x64x32xf32>
    %103 = tpu.matmul %102, %83, %cst_27 {dimension_numbers = #tpu.dot_dimension_numbers<[2], [1], [1], [2], [0, 0, 0, 1, 1, 2], [0], [0]>} : vector<2x64x64xbf16>, vector<2x64x32xbf16>, vector<2x64x32xf32> -> vector<2x64x32xf32>
    "tpu.trace_stop"() : () -> ()
    %104 = vector.shape_cast %103 : vector<2x64x32xf32> to vector<128x32xf32>
    %105 = arith.truncf %104 : vector<128x32xf32> to vector<128x32xbf16>
    %106 = vector.extract_strided_slice %18 {offsets = [0, 0, 96], sizes = [2, 64, 32], strides = [1, 1, 1]} : vector<2x64x128xbf16> to vector<2x64x32xbf16>
    %107 = vector.extract_strided_slice %19 {offsets = [0, 0, 96], sizes = [2, 64, 32], strides = [1, 1, 1]} : vector<2x64x128xbf16> to vector<2x64x32xbf16>
    %108 = vector.extract_strided_slice %20 {offsets = [0, 0, 96], sizes = [2, 64, 32], strides = [1, 1, 1]} : vector<2x64x128xbf16> to vector<2x64x32xbf16>
    "tpu.trace_start"() <{level = 10 : i32, message = "bld,bmd->blm"}> : () -> ()
    %cst_28 = arith.constant dense<0.000000e+00> : vector<2x64x64xf32>
    %109 = tpu.matmul %106, %107, %cst_28 {dimension_numbers = #tpu.dot_dimension_numbers<[2], [2], [1], [1], [0, 0, 0, 1, 1, 1], [0], [0]>} : vector<2x64x32xbf16>, vector<2x64x32xbf16>, vector<2x64x64xf32> -> vector<2x64x64xf32>
    "tpu.trace_stop"() : () -> ()
    %cst_29 = arith.constant 0.176776692 : f32
    %110 = vector.broadcast %cst_29 : f32 to vector<2x64x64xf32>
    %111 = arith.mulf %109, %110 : vector<2x64x64xf32>
    %cst_30 = arith.constant 3.906250e-03 : f32
    %112 = vector.broadcast %cst_30 : f32 to vector<64x64xf32>
    %113 = arith.mulf %112, %30 : vector<64x64xf32>
    %114 = vector.shape_cast %113 : vector<64x64xf32> to vector<1x64x64xf32>
    %115 = vector.broadcast %114 : vector<1x64x64xf32> to vector<2x64x64xf32>
    %116 = arith.addf %111, %115 : vector<2x64x64xf32>
    %cst_31 = arith.constant dense<0xFF800000> : vector<2x64xf32>
    %117 = vector.multi_reduction <maximumf>, %116, %cst_31 [2] : vector<2x64x64xf32> to vector<2x64xf32>
    %118 = vector.shape_cast %117 : vector<2x64xf32> to vector<2x64x1xf32>
    %119 = vector.broadcast %118 : vector<2x64x1xf32> to vector<2x64x64xf32>
    %120 = arith.subf %116, %119 : vector<2x64x64xf32>
    %121 = math.exp %120 : vector<2x64x64xf32>
    %cst_32 = arith.constant dense<0.000000e+00> : vector<2x64xf32>
    %122 = vector.multi_reduction <add>, %121, %cst_32 [2] : vector<2x64x64xf32> to vector<2x64xf32>
    %123 = vector.shape_cast %122 : vector<2x64xf32> to vector<2x64x1xf32>
    %124 = tpu.reciprocal %123 {approx = true} : vector<2x64x1xf32> -> vector<2x64x1xf32>
    %125 = vector.broadcast %124 : vector<2x64x1xf32> to vector<2x64x64xf32>
    %126 = arith.mulf %121, %125 : vector<2x64x64xf32>
    %127 = arith.truncf %126 : vector<2x64x64xf32> to vector<2x64x64xbf16>
    "tpu.trace_start"() <{level = 10 : i32, message = "blm,bmd->bld"}> : () -> ()
    %cst_33 = arith.constant dense<0.000000e+00> : vector<2x64x32xf32>
    %128 = tpu.matmul %127, %108, %cst_33 {dimension_numbers = #tpu.dot_dimension_numbers<[2], [1], [1], [2], [0, 0, 0, 1, 1, 2], [0], [0]>} : vector<2x64x64xbf16>, vector<2x64x32xbf16>, vector<2x64x32xf32> -> vector<2x64x32xf32>
    "tpu.trace_stop"() : () -> ()
    %129 = vector.shape_cast %128 : vector<2x64x32xf32> to vector<128x32xf32>
    %130 = arith.truncf %129 : vector<128x32xf32> to vector<128x32xbf16>
    %131 = tpu.concatenate %55, %80, %105, %130 in 1 : vector<128x32xbf16>, vector<128x32xbf16>, vector<128x32xbf16>, vector<128x32xbf16> -> vector<128x128xbf16>
    %c0_34 = arith.constant 0 : index
    %c0_35 = arith.constant 0 : index
    %132 = vector.load %arg4[%c0_34, %c0_35] : memref<128x128xbf16, #tpu.memory_space<vmem>>, vector<128x128xbf16>
    %cst_36 = arith.constant dense<0.000000e+00> : vector<128x128xf32>
    %133 = tpu.matmul %131, %132, %cst_36 {dimension_numbers = #tpu.dot_dimension_numbers<[1], [0], [0], [1], [0, 0, 1, 1], [], []>} : vector<128x128xbf16>, vector<128x128xbf16>, vector<128x128xf32> -> vector<128x128xf32>
    %c0_37 = arith.constant 0 : index
    %c0_38 = arith.constant 0 : index
    %134 = vector.load %arg5[%c0_37, %c0_38] : memref<1x128xf32, #tpu.memory_space<vmem>>, vector<1x128xf32>
    %135 = vector.broadcast %134 : vector<1x128xf32> to vector<128x128xf32>
    %136 = arith.addf %133, %135 : vector<128x128xf32>
    %137 = arith.addf %1, %136 : vector<128x128xf32>
    %138 = arith.mulf %137, %137 : vector<128x128xf32>
    %cst_39 = arith.constant dense<0.000000e+00> : vector<128xf32>
    %139 = vector.multi_reduction <add>, %138, %cst_39 [1] : vector<128x128xf32> to vector<128xf32>
    %140 = vector.shape_cast %139 : vector<128xf32> to vector<128x1xf32>
    %cst_40 = arith.constant 1.280000e+02 : f32
    %141 = vector.broadcast %cst_40 : f32 to vector<128x1xf32>
    %142 = arith.divf %140, %141 : vector<128x1xf32>
    %143 = math.rsqrt %142 : vector<128x1xf32>
    %144 = vector.broadcast %143 : vector<128x1xf32> to vector<128x128xf32>
    %145 = arith.mulf %137, %144 : vector<128x128xf32>
    %146 = arith.addf %137, %145 : vector<128x128xf32>
    %147 = arith.mulf %146, %146 : vector<128x128xf32>
    %cst_41 = arith.constant dense<0.000000e+00> : vector<128xf32>
    %148 = vector.multi_reduction <add>, %147, %cst_41 [1] : vector<128x128xf32> to vector<128xf32>
    %149 = vector.shape_cast %148 : vector<128xf32> to vector<128x1xf32>
    %cst_42 = arith.constant 1.280000e+02 : f32
    %150 = vector.broadcast %cst_42 : f32 to vector<128x1xf32>
    %151 = arith.divf %149, %150 : vector<128x1xf32>
    %152 = math.rsqrt %151 : vector<128x1xf32>
    %153 = vector.broadcast %152 : vector<128x1xf32> to vector<128x128xf32>
    %154 = arith.mulf %146, %153 : vector<128x128xf32>
    %155 = arith.truncf %154 : vector<128x128xf32> to vector<128x128xbf16>
    %c0_43 = arith.constant 0 : index
    %c0_44 = arith.constant 0 : index
    %156 = vector.load %arg6[%c0_43, %c0_44] : memref<128x256xbf16, #tpu.memory_space<vmem>>, vector<128x256xbf16>
    %cst_45 = arith.constant dense<0.000000e+00> : vector<128x256xf32>
    %157 = tpu.matmul %155, %156, %cst_45 {dimension_numbers = #tpu.dot_dimension_numbers<[1], [0], [0], [1], [0, 0, 1, 1], [], []>} : vector<128x128xbf16>, vector<128x256xbf16>, vector<128x256xf32> -> vector<128x256xf32>
    %c0_46 = arith.constant 0 : index
    %c0_47 = arith.constant 0 : index
    %158 = vector.load %arg7[%c0_46, %c0_47] : memref<128x256xbf16, #tpu.memory_space<vmem>>, vector<128x256xbf16>
    %cst_48 = arith.constant dense<0.000000e+00> : vector<128x256xf32>
    %159 = tpu.matmul %155, %158, %cst_48 {dimension_numbers = #tpu.dot_dimension_numbers<[1], [0], [0], [1], [0, 0, 1, 1], [], []>} : vector<128x128xbf16>, vector<128x256xbf16>, vector<128x256xf32> -> vector<128x256xf32>
    %cst_49 = arith.constant 5.000000e-01 : f32
    %160 = vector.broadcast %cst_49 : f32 to vector<128x256xf32>
    %161 = arith.mulf %160, %157 : vector<128x256xf32>
    %cst_50 = arith.constant 0.707106769 : f32
    %162 = vector.broadcast %cst_50 : f32 to vector<128x256xf32>
    %163 = arith.mulf %157, %162 : vector<128x256xf32>
    %164 = math.erf %163 : vector<128x256xf32>
    %cst_51 = arith.constant 1.000000e+00 : f32
    %165 = vector.broadcast %cst_51 : f32 to vector<128x256xf32>
    %166 = arith.addf %165, %164 : vector<128x256xf32>
    %167 = arith.mulf %161, %166 : vector<128x256xf32>
    %168 = arith.mulf %167, %159 : vector<128x256xf32>
    %169 = arith.truncf %168 : vector<128x256xf32> to vector<128x256xbf16>
    %c0_52 = arith.constant 0 : index
    %c0_53 = arith.constant 0 : index
    %170 = vector.load %arg8[%c0_52, %c0_53] : memref<256x128xbf16, #tpu.memory_space<vmem>>, vector<256x128xbf16>
    %cst_54 = arith.constant dense<0.000000e+00> : vector<128x128xf32>
    %171 = tpu.matmul %169, %170, %cst_54 {dimension_numbers = #tpu.dot_dimension_numbers<[1], [0], [0], [1], [0, 0, 1, 1], [], []>} : vector<128x256xbf16>, vector<256x128xbf16>, vector<128x128xf32> -> vector<128x128xf32>
    %172 = arith.addf %146, %171 : vector<128x128xf32>
    %173 = vector.shape_cast %172 : vector<128x128xf32> to vector<2x64x128xf32>
    %c0_55 = arith.constant 0 : index
    %c0_56 = arith.constant 0 : index
    %c0_57 = arith.constant 0 : index
    %174 = vector.load %arg9[%c0_55, %c0_56, %c0_57] : memref<2x64x128xf32, #tpu.memory_space<vmem>>, vector<2x64x128xf32>
    tpu.vector_store %arg9[%c0_55, %c0_56, %c0_57], %173 {strides = array<i32>} : memref<2x64x128xf32, #tpu.memory_space<vmem>>, vector<2x64x128xf32>,
    return
  }
  func.func @transform_0(%arg0: i32) -> (i32, i32, i32) {
    %c0_i32 = arith.constant 0 : i32
    %c0_i32_0 = arith.constant 0 : i32
    %c0_i32_1 = arith.constant 0 : i32
    return %arg0, %c0_i32, %c0_i32_0 : i32, i32, i32
  }
  func.func @transform_1(%arg0: i32) -> (i32, i32) {
    %c0_i32 = arith.constant 0 : i32
    %c0_i32_0 = arith.constant 0 : i32
    %c0_i32_1 = arith.constant 0 : i32
    return %c0_i32, %c0_i32_0 : i32, i32
  }
  func.func @transform_2(%arg0: i32) -> (i32, i32) {
    %c0_i32 = arith.constant 0 : i32
    %c0_i32_0 = arith.constant 0 : i32
    %c0_i32_1 = arith.constant 0 : i32
    return %c0_i32, %c0_i32_0 : i32, i32
  }
  func.func @transform_3(%arg0: i32) -> (i32, i32) {
    %c0_i32 = arith.constant 0 : i32
    %c0_i32_0 = arith.constant 0 : i32
    %c0_i32_1 = arith.constant 0 : i32
    return %c0_i32, %c0_i32_0 : i32, i32
  }
  func.func @transform_4(%arg0: i32) -> (i32, i32) {
    %c0_i32 = arith.constant 0 : i32
    %c0_i32_0 = arith.constant 0 : i32
    %c0_i32_1 = arith.constant 0 : i32
    return %c0_i32, %c0_i32_0 : i32, i32
  }
  func.func @transform_5(%arg0: i32) -> (i32, i32) {
    %c0_i32 = arith.constant 0 : i32
    %c0_i32_0 = arith.constant 0 : i32
    %c0_i32_1 = arith.constant 0 : i32
    return %c0_i32, %c0_i32_0 : i32, i32
  }
  func.func @transform_6(%arg0: i32) -> (i32, i32) {
    %c0_i32 = arith.constant 0 : i32
    %c0_i32_0 = arith.constant 0 : i32
    %c0_i32_1 = arith.constant 0 : i32
    return %c0_i32, %c0_i32_0 : i32, i32
  }
  func.func @transform_7(%arg0: i32) -> (i32, i32) {
    %c0_i32 = arith.constant 0 : i32
    %c0_i32_0 = arith.constant 0 : i32
    %c0_i32_1 = arith.constant 0 : i32
    return %c0_i32, %c0_i32_0 : i32, i32
  }
  func.func @transform_8(%arg0: i32) -> (i32, i32, i32) {
    %c0_i32 = arith.constant 0 : i32
    %c0_i32_0 = arith.constant 0 : i32
    %c0_i32_1 = arith.constant 0 : i32
    return %arg0, %c0_i32, %c0_i32_0 : i32, i32, i32
  }
}

module attributes {stable_mosaic.version = 11 : i64} {
  func.func @kernel(%arg0: i32, %arg1: memref<2x64x128xf32, #tpu.memory_space<vmem>>, %arg2: memref<128x384xbf16, #tpu.memory_space<vmem>>, %arg3: memref<1x384xf32, #tpu.memory_space<vmem>>, %arg4: memref<128x128xbf16, #tpu.memory_space<vmem>>, %arg5: memref<1x128xf32, #tpu.memory_space<vmem>>, %arg6: memref<128x256xbf16, #tpu.memory_space<vmem>>, %arg7: memref<128x256xbf16, #tpu.memory_space<vmem>>, %arg8: memref<256x128xbf16, #tpu.memory_space<vmem>>, %arg9: memref<2x64x128xf32, #tpu.memory_space<vmem>>) attributes {dimension_semantics = [#tpu.dimension_semantics<parallel>], iteration_bounds = array<i64: 1>, scalar_prefetch = 0 : i64, scratch_operands = 0 : i64, tpu.core_type = #tpu.core_type<tc>, window_params = [{transform_indices = @transform_0, window_bounds = array<i64: 2, 64, 128>}, {pipeline_mode = #tpu.pipeline_mode<synchronous>, transform_indices = @transform_1, window_bounds = array<i64: 128, 384>}, {pipeline_mode = #tpu.pipeline_mode<synchronous>, transform_indices = @transform_2, window_bounds = array<i64: 1, 384>}, {pipeline_mode = #tpu.pipeline_mode<synchronous>, transform_indices = @transform_3, window_bounds = array<i64: 128, 128>}, {pipeline_mode = #tpu.pipeline_mode<synchronous>, transform_indices = @transform_4, window_bounds = array<i64: 1, 128>}, {pipeline_mode = #tpu.pipeline_mode<synchronous>, transform_indices = @transform_5, window_bounds = array<i64: 128, 256>}, {pipeline_mode = #tpu.pipeline_mode<synchronous>, transform_indices = @transform_6, window_bounds = array<i64: 128, 256>}, {pipeline_mode = #tpu.pipeline_mode<synchronous>, transform_indices = @transform_7, window_bounds = array<i64: 256, 128>}, {transform_indices = @transform_8, window_bounds = array<i64: 2, 64, 128>}]} {
    %c0 = arith.constant 0 : index
    %c0_0 = arith.constant 0 : index
    %c0_1 = arith.constant 0 : index
    %0 = vector.load %arg1[%c0, %c0_0, %c0_1] : memref<2x64x128xf32, #tpu.memory_space<vmem>>, vector<2x64x128xf32>
    %1 = vector.shape_cast %0 : vector<2x64x128xf32> to vector<128x128xf32>
    %2 = arith.mulf %1, %1 : vector<128x128xf32>
    %cst = arith.constant dense<0.000000e+00> : vector<128xf32>
    %3 = vector.multi_reduction <add>, %2, %cst [1] : vector<128x128xf32> to vector<128xf32>
    %4 = vector.shape_cast %3 : vector<128xf32> to vector<128x1xf32>
    %cst_2 = arith.constant 1.280000e+02 : f32
    %5 = vector.broadcast %cst_2 : f32 to vector<128x1xf32>
    %6 = arith.divf %4, %5 : vector<128x1xf32>
    %7 = math.rsqrt %6 : vector<128x1xf32>
    %8 = vector.broadcast %7 : vector<128x1xf32> to vector<128x128xf32>
    %9 = arith.mulf %1, %8 : vector<128x128xf32>
    %10 = arith.truncf %9 : vector<128x128xf32> to vector<128x128xbf16>
    %c0_3 = arith.constant 0 : index
    %c0_4 = arith.constant 0 : index
    %11 = vector.load %arg2[%c0_3, %c0_4] : memref<128x384xbf16, #tpu.memory_space<vmem>>, vector<128x384xbf16>
    %cst_5 = arith.constant dense<0.000000e+00> : vector<128x384xf32>
    %12 = tpu.matmul %10, %11, %cst_5 {dimension_numbers = #tpu.dot_dimension_numbers<[1], [0], [0], [1], [0, 0, 1, 1], [], []>} : vector<128x128xbf16>, vector<128x384xbf16>, vector<128x384xf32> -> vector<128x384xf32>
    %c0_6 = arith.constant 0 : index
    %c0_7 = arith.constant 0 : index
    %13 = vector.load %arg3[%c0_6, %c0_7] : memref<1x384xf32, #tpu.memory_space<vmem>>, vector<1x384xf32>
    %14 = vector.broadcast %13 : vector<1x384xf32> to vector<128x384xf32>
    %15 = arith.addf %12, %14 : vector<128x384xf32>
    %16 = arith.truncf %15 : vector<128x384xf32> to vector<128x384xbf16>
    %17 = vector.shape_cast %16 : vector<128x384xbf16> to vector<2x64x384xbf16>
    %18 = vector.extract_strided_slice %17 {offsets = [0, 0, 0], sizes = [2, 64, 128], strides = [1, 1, 1]} : vector<2x64x384xbf16> to vector<2x64x128xbf16>
    %19 = vector.extract_strided_slice %17 {offsets = [0, 0, 128], sizes = [2, 64, 128], strides = [1, 1, 1]} : vector<2x64x384xbf16> to vector<2x64x128xbf16>
    %20 = vector.extract_strided_slice %17 {offsets = [0, 0, 256], sizes = [2, 64, 128], strides = [1, 1, 1]} : vector<2x64x384xbf16> to vector<2x64x128xbf16>
    %21 = tpu.iota {dimensions = array<i32: 0>} : vector<64x64xi32>
    %22 = tpu.iota {dimensions = array<i32: 1>} : vector<64x64xi32>
    %23 = arith.subi %22, %21 : vector<64x64xi32>
    %24 = math.absi %23 : vector<64x64xi32>
    %25 = arith.sitofp %24 : vector<64x64xi32> to vector<64x64xf32>
    %cst_8 = arith.constant 0.000000e+00 : f32
    %26 = vector.broadcast %cst_8 : f32 to vector<64x64xf32>
    %27 = arith.subf %26, %25 : vector<64x64xf32>
    %28 = arith.cmpi sle, %22, %21 : vector<64x64xi32>
    %cst_9 = arith.constant 0xFF800000 : f32
    %29 = vector.broadcast %cst_9 : f32 to vector<64x64xf32>
    %30 = arith.select %28, %27, %29 : vector<64x64xi1>, vector<64x64xf32>
    %31 = vector.extract_strided_slice %18 {offsets = [0, 0, 0], sizes = [2, 64, 32], strides = [1, 1, 1]} : vector<2x64x128xbf16> to vector<2x64x32xbf16>
    %32 = vector.extract_strided_slice %19 {offsets = [0, 0, 0], sizes = [2, 64, 32], strides = [1, 1, 1]} : vector<2x64x128xbf16> to vector<2x64x32xbf16>
    %33 = vector.extract_strided_slice %20 {offsets = [0, 0, 0], sizes = [2, 64, 32], strides = [1, 1, 1]} : vector<2x64x128xbf16> to vector<2x64x32xbf16>
    "tpu.trace_start"() <{level = 10 : i32, message = "bld,bmd->blm"}> : () -> ()
    %cst_10 = arith.constant dense<0.000000e+00> : vector<2x64x64xf32>
    %34 = tpu.matmul %31, %32, %cst_10 {dimension_numbers = #tpu.dot_dimension_numbers<[2], [2], [1], [1], [0, 0, 0, 1, 1, 1], [0], [0]>} : vector<2x64x32xbf16>, vector<2x64x32xbf16>, vector<2x64x64xf32> -> vector<2x64x64xf32>
    "tpu.trace_stop"() : () -> ()
    %cst_11 = arith.constant 0.176776692 : f32
    %35 = vector.broadcast %cst_11 : f32 to vector<2x64x64xf32>
    %36 = arith.mulf %34, %35 : vector<2x64x64xf32>
    %cst_12 = arith.constant 5.000000e-01 : f32
    %37 = vector.broadcast %cst_12 : f32 to vector<64x64xf32>
    %38 = arith.mulf %37, %30 : vector<64x64xf32>
    %39 = vector.shape_cast %38 : vector<64x64xf32> to vector<1x64x64xf32>
    %40 = vector.broadcast %39 : vector<1x64x64xf32> to vector<2x64x64xf32>
    %41 = arith.addf %36, %40 : vector<2x64x64xf32>
    %cst_13 = arith.constant dense<0xFF800000> : vector<2x64xf32>
    %42 = vector.multi_reduction <maximumf>, %41, %cst_13 [2] : vector<2x64x64xf32> to vector<2x64xf32>
    %43 = vector.shape_cast %42 : vector<2x64xf32> to vector<2x64x1xf32>
    %44 = vector.broadcast %43 : vector<2x64x1xf32> to vector<2x64x64xf32>
    %45 = arith.subf %41, %44 : vector<2x64x64xf32>
    %46 = math.exp %45 : vector<2x64x64xf32>
    %cst_14 = arith.constant dense<0.000000e+00> : vector<2x64xf32>
    %47 = vector.multi_reduction <add>, %46, %cst_14 [2] : vector<2x64x64xf32> to vector<2x64xf32>
    %48 = vector.shape_cast %47 : vector<2x64xf32> to vector<2x64x1xf32>
    %49 = tpu.reciprocal %48 {approx = true} : vector<2x64x1xf32> -> vector<2x64x1xf32>
    %50 = vector.broadcast %49 : vector<2x64x1xf32> to vector<2x64x64xf32>
    %51 = arith.mulf %46, %50 : vector<2x64x64xf32>
    %52 = arith.truncf %51 : vector<2x64x64xf32> to vector<2x64x64xbf16>
    "tpu.trace_start"() <{level = 10 : i32, message = "blm,bmd->bld"}> : () -> ()
    %cst_15 = arith.constant dense<0.000000e+00> : vector<2x64x32xf32>
    %53 = tpu.matmul %52, %33, %cst_15 {dimension_numbers = #tpu.dot_dimension_numbers<[2], [1], [1], [2], [0, 0, 0, 1, 1, 2], [0], [0]>} : vector<2x64x64xbf16>, vector<2x64x32xbf16>, vector<2x64x32xf32> -> vector<2x64x32xf32>
    "tpu.trace_stop"() : () -> ()
    %54 = vector.shape_cast %53 : vector<2x64x32xf32> to vector<128x32xf32>
    %55 = arith.truncf %54 : vector<128x32xf32> to vector<128x32xbf16>
    %56 = vector.extract_strided_slice %18 {offsets = [0, 0, 32], sizes = [2, 64, 32], strides = [1, 1, 1]} : vector<2x64x128xbf16> to vector<2x64x32xbf16>
    %57 = vector.extract_strided_slice %19 {offsets = [0, 0, 32], sizes = [2, 64, 32], strides = [1, 1, 1]} : vector<2x64x128xbf16> to vector<2x64x32xbf16>
    %58 = vector.extract_strided_slice %20 {offsets = [0, 0, 32], sizes = [2, 64, 32], strides = [1, 1, 1]} : vector<2x64x128xbf16> to vector<2x64x32xbf16>
    "tpu.trace_start"() <{level = 10 : i32, message = "bld,bmd->blm"}> : () -> ()
    %cst_16 = arith.constant dense<0.000000e+00> : vector<2x64x64xf32>
    %59 = tpu.matmul %56, %57, %cst_16 {dimension_numbers = #tpu.dot_dimension_numbers<[2], [2], [1], [1], [0, 0, 0, 1, 1, 1], [0], [0]>} : vector<2x64x32xbf16>, vector<2x64x32xbf16>, vector<2x64x64xf32> -> vector<2x64x64xf32>
    "tpu.trace_stop"() : () -> ()
    %cst_17 = arith.constant 0.176776692 : f32
    %60 = vector.broadcast %cst_17 : f32 to vector<2x64x64xf32>
    %61 = arith.mulf %59, %60 : vector<2x64x64xf32>
    %cst_18 = arith.constant 0.0992125645 : f32
    %62 = vector.broadcast %cst_18 : f32 to vector<64x64xf32>
    %63 = arith.mulf %62, %30 : vector<64x64xf32>
    %64 = vector.shape_cast %63 : vector<64x64xf32> to vector<1x64x64xf32>
    %65 = vector.broadcast %64 : vector<1x64x64xf32> to vector<2x64x64xf32>
    %66 = arith.addf %61, %65 : vector<2x64x64xf32>
    %cst_19 = arith.constant dense<0xFF800000> : vector<2x64xf32>
    %67 = vector.multi_reduction <maximumf>, %66, %cst_19 [2] : vector<2x64x64xf32> to vector<2x64xf32>
    %68 = vector.shape_cast %67 : vector<2x64xf32> to vector<2x64x1xf32>
    %69 = vector.broadcast %68 : vector<2x64x1xf32> to vector<2x64x64xf32>
    %70 = arith.subf %66, %69 : vector<2x64x64xf32>
    %71 = math.exp %70 : vector<2x64x64xf32>
    %cst_20 = arith.constant dense<0.000000e+00> : vector<2x64xf32>
    %72 = vector.multi_reduction <add>, %71, %cst_20 [2] : vector<2x64x64xf32> to vector<2x64xf32>
    %73 = vector.shape_cast %72 : vector<2x64xf32> to vector<2x64x1xf32>
    %74 = tpu.reciprocal %73 {approx = true} : vector<2x64x1xf32> -> vector<2x64x1xf32>
    %75 = vector.broadcast %74 : vector<2x64x1xf32> to vector<2x64x64xf32>
    %76 = arith.mulf %71, %75 : vector<2x64x64xf32>
    %77 = arith.truncf %76 : vector<2x64x64xf32> to vector<2x64x64xbf16>
    "tpu.trace_start"() <{level = 10 : i32, message = "blm,bmd->bld"}> : () -> ()
    %cst_21 = arith.constant dense<0.000000e+00> : vector<2x64x32xf32>
    %78 = tpu.matmul %77, %58, %cst_21 {dimension_numbers = #tpu.dot_dimension_numbers<[2], [1], [1], [2], [0, 0, 0, 1, 1, 2], [0], [0]>} : vector<2x64x64xbf16>, vector<2x64x32xbf16>, vector<2x64x32xf32> -> vector<2x64x32xf32>
    "tpu.trace_stop"() : () -> ()
    %79 = vector.shape_cast %78 : vector<2x64x32xf32> to vector<128x32xf32>
    %80 = arith.truncf %79 : vector<128x32xf32> to vector<128x32xbf16>
    %81 = vector.extract_strided_slice %18 {offsets = [0, 0, 64], sizes = [2, 64, 32], strides = [1, 1, 1]} : vector<2x64x128xbf16> to vector<2x64x32xbf16>
    %82 = vector.extract_strided_slice %19 {offsets = [0, 0, 64], sizes = [2, 64, 32], strides = [1, 1, 1]} : vector<2x64x128xbf16> to vector<2x64x32xbf16>
    %83 = vector.extract_strided_slice %20 {offsets = [0, 0, 64], sizes = [2, 64, 32], strides = [1, 1, 1]} : vector<2x64x128xbf16> to vector<2x64x32xbf16>
    "tpu.trace_start"() <{level = 10 : i32, message = "bld,bmd->blm"}> : () -> ()
    %cst_22 = arith.constant dense<0.000000e+00> : vector<2x64x64xf32>
    %84 = tpu.matmul %81, %82, %cst_22 {dimension_numbers = #tpu.dot_dimension_numbers<[2], [2], [1], [1], [0, 0, 0, 1, 1, 1], [0], [0]>} : vector<2x64x32xbf16>, vector<2x64x32xbf16>, vector<2x64x64xf32> -> vector<2x64x64xf32>
    "tpu.trace_stop"() : () -> ()
    %cst_23 = arith.constant 0.176776692 : f32
    %85 = vector.broadcast %cst_23 : f32 to vector<2x64x64xf32>
    %86 = arith.mulf %84, %85 : vector<2x64x64xf32>
    %cst_24 = arith.constant 0.0196862668 : f32
    %87 = vector.broadcast %cst_24 : f32 to vector<64x64xf32>
    %88 = arith.mulf %87, %30 : vector<64x64xf32>
    %89 = vector.shape_cast %88 : vector<64x64xf32> to vector<1x64x64xf32>
    %90 = vector.broadcast %89 : vector<1x64x64xf32> to vector<2x64x64xf32>
    %91 = arith.addf %86, %90 : vector<2x64x64xf32>
    %cst_25 = arith.constant dense<0xFF800000> : vector<2x64xf32>
    %92 = vector.multi_reduction <maximumf>, %91, %cst_25 [2] : vector<2x64x64xf32> to vector<2x64xf32>
    %93 = vector.shape_cast %92 : vector<2x64xf32> to vector<2x64x1xf32>
    %94 = vector.broadcast %93 : vector<2x64x1xf32> to vector<2x64x64xf32>
    %95 = arith.subf %91, %94 : vector<2x64x64xf32>
    %96 = math.exp %95 : vector<2x64x64xf32>
    %cst_26 = arith.constant dense<0.000000e+00> : vector<2x64xf32>
    %97 = vector.multi_reduction <add>, %96, %cst_26 [2] : vector<2x64x64xf32> to vector<2x64xf32>
    %98 = vector.shape_cast %97 : vector<2x64xf32> to vector<2x64x1xf32>
    %99 = tpu.reciprocal %98 {approx = true} : vector<2x64x1xf32> -> vector<2x64x1xf32>
    %100 = vector.broadcast %99 : vector<2x64x1xf32> to vector<2x64x64xf32>
    %101 = arith.mulf %96, %100 : vector<2x64x64xf32>
    %102 = arith.truncf %101 : vector<2x64x64xf32> to vector<2x64x64xbf16>
    "tpu.trace_start"() <{level = 10 : i32, message = "blm,bmd->bld"}> : () -> ()
    %cst_27 = arith.constant dense<0.000000e+00> : vector<2x64x32xf32>
    %103 = tpu.matmul %102, %83, %cst_27 {dimension_numbers = #tpu.dot_dimension_numbers<[2], [1], [1], [2], [0, 0, 0, 1, 1, 2], [0], [0]>} : vector<2x64x64xbf16>, vector<2x64x32xbf16>, vector<2x64x32xf32> -> vector<2x64x32xf32>
    "tpu.trace_stop"() : () -> ()
    %104 = vector.shape_cast %103 : vector<2x64x32xf32> to vector<128x32xf32>
    %105 = arith.truncf %104 : vector<128x32xf32> to vector<128x32xbf16>
    %106 = vector.extract_strided_slice %18 {offsets = [0, 0, 96], sizes = [2, 64, 32], strides = [1, 1, 1]} : vector<2x64x128xbf16> to vector<2x64x32xbf16>
    %107 = vector.extract_strided_slice %19 {offsets = [0, 0, 96], sizes = [2, 64, 32], strides = [1, 1, 1]} : vector<2x64x128xbf16> to vector<2x64x32xbf16>
    %108 = vector.extract_strided_slice %20 {offsets = [0, 0, 96], sizes = [2, 64, 32], strides = [1, 1, 1]} : vector<2x64x128xbf16> to vector<2x64x32xbf16>
    "tpu.trace_start"() <{level = 10 : i32, message = "bld,bmd->blm"}> : () -> ()
    %cst_28 = arith.constant dense<0.000000e+00> : vector<2x64x64xf32>
    %109 = tpu.matmul %106, %107, %cst_28 {dimension_numbers = #tpu.dot_dimension_numbers<[2], [2], [1], [1], [0, 0, 0, 1, 1, 1], [0], [0]>} : vector<2x64x32xbf16>, vector<2x64x32xbf16>, vector<2x64x64xf32> -> vector<2x64x64xf32>
    "tpu.trace_stop"() : () -> ()
    %cst_29 = arith.constant 0.176776692 : f32
    %110 = vector.broadcast %cst_29 : f32 to vector<2x64x64xf32>
    %111 = arith.mulf %109, %110 : vector<2x64x64xf32>
    %cst_30 = arith.constant 3.906250e-03 : f32
    %112 = vector.broadcast %cst_30 : f32 to vector<64x64xf32>
    %113 = arith.mulf %112, %30 : vector<64x64xf32>
    %114 = vector.shape_cast %113 : vector<64x64xf32> to vector<1x64x64xf32>
    %115 = vector.broadcast %114 : vector<1x64x64xf32> to vector<2x64x64xf32>
    %116 = arith.addf %111, %115 : vector<2x64x64xf32>
    %cst_31 = arith.constant dense<0xFF800000> : vector<2x64xf32>
    %117 = vector.multi_reduction <maximumf>, %116, %cst_31 [2] : vector<2x64x64xf32> to vector<2x64xf32>
    %118 = vector.shape_cast %117 : vector<2x64xf32> to vector<2x64x1xf32>
    %119 = vector.broadcast %118 : vector<2x64x1xf32> to vector<2x64x64xf32>
    %120 = arith.subf %116, %119 : vector<2x64x64xf32>
    %121 = math.exp %120 : vector<2x64x64xf32>
    %cst_32 = arith.constant dense<0.000000e+00> : vector<2x64xf32>
    %122 = vector.multi_reduction <add>, %121, %cst_32 [2] : vector<2x64x64xf32> to vector<2x64xf32>
    %123 = vector.shape_cast %122 : vector<2x64xf32> to vector<2x64x1xf32>
    %124 = tpu.reciprocal %123 {approx = true} : vector<2x64x1xf32> -> vector<2x64x1xf32>
    %125 = vector.broadcast %124 : vector<2x64x1xf32> to vector<2x64x64xf32>
    %126 = arith.mulf %121, %125 : vector<2x64x64xf32>
    %127 = arith.truncf %126 : vector<2x64x64xf32> to vector<2x64x64xbf16>
    "tpu.trace_start"() <{level = 10 : i32, message = "blm,bmd->bld"}> : () -> ()
    %cst_33 = arith.constant dense<0.000000e+00> : vector<2x64x32xf32>
    %128 = tpu.matmul %127, %108, %cst_33 {dimension_numbers = #tpu.dot_dimension_numbers<[2], [1], [1], [2], [0, 0, 0, 1, 1, 2], [0], [0]>} : vector<2x64x64xbf16>, vector<2x64x32xbf16>, vector<2x64x32xf32> -> vector<2x64x32xf32>
    "tpu.trace_stop"() : () -> ()
    %129 = vector.shape_cast %128 : vector<2x64x32xf32> to vector<128x32xf32>
    %130 = arith.truncf %129 : vector<128x32xf32> to vector<128x32xbf16>
    %131 = tpu.concatenate %55, %80, %105, %130 in 1 : vector<128x32xbf16>, vector<128x32xbf16>, vector<128x32xbf16>, vector<128x32xbf16> -> vector<128x128xbf16>
    %c0_34 = arith.constant 0 : index
    %c0_35 = arith.constant 0 : index
    %132 = vector.load %arg4[%c0_34, %c0_35] : memref<128x128xbf16, #tpu.memory_space<vmem>>, vector<128x128xbf16>
    %cst_36 = arith.constant dense<0.000000e+00> : vector<128x128xf32>
    %133 = tpu.matmul %131, %132, %cst_36 {dimension_numbers = #tpu.dot_dimension_numbers<[1], [0], [0], [1], [0, 0, 1, 1], [], []>} : vector<128x128xbf16>, vector<128x128xbf16>, vector<128x128xf32> -> vector<128x128xf32>
    %c0_37 = arith.constant 0 : index
    %c0_38 = arith.constant 0 : index
    %134 = vector.load %arg5[%c0_37, %c0_38] : memref<1x128xf32, #tpu.memory_space<vmem>>, vector<1x128xf32>
    %135 = vector.broadcast %134 : vector<1x128xf32> to vector<128x128xf32>
    %136 = arith.addf %133, %135 : vector<128x128xf32>
    %137 = arith.addf %1, %136 : vector<128x128xf32>
    %138 = arith.mulf %137, %137 : vector<128x128xf32>
    %cst_39 = arith.constant dense<0.000000e+00> : vector<128xf32>
    %139 = vector.multi_reduction <add>, %138, %cst_39 [1] : vector<128x128xf32> to vector<128xf32>
    %140 = vector.shape_cast %139 : vector<128xf32> to vector<128x1xf32>
    %cst_40 = arith.constant 1.280000e+02 : f32
    %141 = vector.broadcast %cst_40 : f32 to vector<128x1xf32>
    %142 = arith.divf %140, %141 : vector<128x1xf32>
    %143 = math.rsqrt %142 : vector<128x1xf32>
    %144 = vector.broadcast %143 : vector<128x1xf32> to vector<128x128xf32>
    %145 = arith.mulf %137, %144 : vector<128x128xf32>
    %146 = arith.addf %137, %145 : vector<128x128xf32>
    %147 = arith.mulf %146, %146 : vector<128x128xf32>
    %cst_41 = arith.constant dense<0.000000e+00> : vector<128xf32>
    %148 = vector.multi_reduction <add>, %147, %cst_41 [1] : vector<128x128xf32> to vector<128xf32>
    %149 = vector.shape_cast %148 : vector<128xf32> to vector<128x1xf32>
    %cst_42 = arith.constant 1.280000e+02 : f32
    %150 = vector.broadcast %cst_42 : f32 to vector<128x1xf32>
    %151 = arith.divf %149, %150 : vector<128x1xf32>
    %152 = math.rsqrt %151 : vector<128x1xf32>
    %153 = vector.broadcast %152 : vector<128x1xf32> to vector<128x128xf32>
    %154 = arith.mulf %146, %153 : vector<128x128xf32>
    %155 = arith.truncf %154 : vector<128x128xf32> to vector<128x128xbf16>
    %c0_43 = arith.constant 0 : index
    %c0_44 = arith.constant 0 : index
    %156 = vector.load %arg6[%c0_43, %c0_44] : memref<128x256xbf16, #tpu.memory_space<vmem>>, vector<128x256xbf16>
    %cst_45 = arith.constant dense<0.000000e+00> : vector<128x256xf32>
    %157 = tpu.matmul %155, %156, %cst_45 {dimension_numbers = #tpu.dot_dimension_numbers<[1], [0], [0], [1], [0, 0, 1, 1], [], []>} : vector<128x128xbf16>, vector<128x256xbf16>, vector<128x256xf32> -> vector<128x256xf32>
    %c0_46 = arith.constant 0 : index
    %c0_47 = arith.constant 0 : index
    %158 = vector.load %arg7[%c0_46, %c0_47] : memref<128x256xbf16, #tpu.memory_space<vmem>>, vector<128x256xbf16>
    %cst_48 = arith.constant dense<0.000000e+00> : vector<128x256xf32>
    %159 = tpu.matmul %155, %158, %cst_48 {dimension_numbers = #tpu.dot_dimension_numbers<[1], [0], [0], [1], [0, 0, 1, 1], [], []>} : vector<128x128xbf16>, vector<128x256xbf16>, vector<128x256xf32> -> vector<128x256xf32>
    %cst_49 = arith.constant 5.000000e-01 : f32
    %160 = vector.broadcast %cst_49 : f32 to vector<128x256xf32>
    %161 = arith.mulf %160, %157 : vector<128x256xf32>
    %cst_50 = arith.constant 0.707106769 : f32
    %162 = vector.broadcast %cst_50 : f32 to vector<128x256xf32>
    %163 = arith.mulf %157, %162 : vector<128x256xf32>
    %164 = math.erf %163 : vector<128x256xf32>
    %cst_51 = arith.constant 1.000000e+00 : f32
    %165 = vector.broadcast %cst_51 : f32 to vector<128x256xf32>
    %166 = arith.addf %165, %164 : vector<128x256xf32>
    %167 = arith.mulf %161, %166 : vector<128x256xf32>
    %168 = arith.mulf %167, %159 : vector<128x256xf32>
    %169 = arith.truncf %168 : vector<128x256xf32> to vector<128x256xbf16>
    %c0_52 = arith.constant 0 : index
    %c0_53 = arith.constant 0 : index
    %170 = vector.load %arg8[%c0_52, %c0_53] : memref<256x128xbf16, #tpu.memory_space<vmem>>, vector<256x128xbf16>
    %cst_54 = arith.constant dense<0.000000e+00> : vector<128x128xf32>
    %171 = tpu.matmul %169, %170, %cst_54 {dimension_numbers = #tpu.dot_dimension_numbers<[1], [0], [0], [1], [0, 0, 1, 1], [], []>} : vector<128x256xbf16>, vector<256x128xbf16>, vector<128x128xf32> -> vector<128x128xf32>
    %172 = arith.addf %146, %171 : vector<128x128xf32>
    %173 = vector.shape_cast %172 : vector<128x128xf32> to vector<2x64x128xf32>
    %c0_55 = arith.constant 0 : index
    %c0_56 = arith.constant 0 : index
    %c0_57 = arith.constant 0 : index
    %174 = vector.load %arg9[%c0_55, %c0_56, %c0_57] : memref<2x64x128xf32, #tpu.memory_space<vmem>>, vector<2x64x128xf32>
    tpu.vector_store %arg9[%c0_55, %c0_56, %c0_57], %173 {strides = array<i32>} : memref<2x64x128xf32, #tpu.memory_space<vmem>>, vector<2x64x128xf32>,
    return
  }
  func.func @transform_0(%arg0: i32) -> (i32, i32, i32) {
    %c0_i32 = arith.constant 0 : i32
    %c0_i32_0 = arith.constant 0 : i32
    %c0_i32_1 = arith.constant 0 : i32
    return %arg0, %c0_i32, %c0_i32_0 : i32, i32, i32
  }
  func.func @transform_1(%arg0: i32) -> (i32, i32) {
    %c0_i32 = arith.constant 0 : i32
    %c0_i32_0 = arith.constant 0 : i32
    %c0_i32_1 = arith.constant 0 : i32
    return %c0_i32, %c0_i32_0 : i32, i32
  }
  func.func @transform_2(%arg0: i32) -> (i32, i32) {
    %c0_i32 = arith.constant 0 : i32
    %c0_i32_0 = arith.constant 0 : i32
    %c0_i32_1 = arith.constant 0 : i32
    return %c0_i32, %c0_i32_0 : i32, i32
  }
  func.func @transform_3(%arg0: i32) -> (i32, i32) {
    %c0_i32 = arith.constant 0 : i32
    %c0_i32_0 = arith.constant 0 : i32
    %c0_i32_1 = arith.constant 0 : i32
    return %c0_i32, %c0_i32_0 : i32, i32
  }
  func.func @transform_4(%arg0: i32) -> (i32, i32) {
    %c0_i32 = arith.constant 0 : i32
    %c0_i32_0 = arith.constant 0 : i32
    %c0_i32_1 = arith.constant 0 : i32
    return %c0_i32, %c0_i32_0 : i32, i32
  }
  func.func @transform_5(%arg0: i32) -> (i32, i32) {
    %c0_i32 = arith.constant 0 : i32
    %c0_i32_0 = arith.constant 0 : i32
    %c0_i32_1 = arith.constant 0 : i32
    return %c0_i32, %c0_i32_0 : i32, i32
  }
  func.func @transform_6(%arg0: i32) -> (i32, i32) {
    %c0_i32 = arith.constant 0 : i32
    %c0_i32_0 = arith.constant 0 : i32
    %c0_i32_1 = arith.constant 0 : i32
    return %c0_i32, %c0_i32_0 : i32, i32
  }
  func.func @transform_7(%arg0: i32) -> (i32, i32) {
    %c0_i32 = arith.constant 0 : i32
    %c0_i32_0 = arith.constant 0 : i32
    %c0_i32_1 = arith.constant 0 : i32
    return %c0_i32, %c0_i32_0 : i32, i32
  }
  func.func @transform_8(%arg0: i32) -> (i32, i32, i32) {
    %c0_i32 = arith.constant 0 : i32
    %c0_i32_0 = arith.constant 0 : i32
    %c0_i32_1 = arith.constant 0 : i32
    return %arg0, %c0_i32, %c0_i32_0 : i32, i32, i32
  }
}

</mosaic_0001>

<llo_original>
// kernel: tpu_custom_call.1
$region0: #{tpu_custom_call.1}
  #allocation0 [shape = 'u32[]', space=smem, size = 0x4, offset = 0x4, fixed_abs, tag = 'smem constant byte address 0x4 - core index']
  #allocation1 [shape = 'u32[144,128]{1,0:T(1,128)}', space=vmem, size = 0x12000, scoped, tag = 'internal scratch']
  %s0 = inlined_call_operand.hbm [shape: f32[2,64,128], index: 0, kind: input, shape index: {}]
  %s1 = inlined_call_operand.hbm [shape: bf16[128,384], index: 1, kind: input, shape index: {}]
  %s2 = inlined_call_operand.vmem [shape: f32[1,384], index: 2, kind: input, shape index: {}]
  %s3 = inlined_call_operand.hbm [shape: bf16[128,128], index: 3, kind: input, shape index: {}]
  %s4 = inlined_call_operand.vmem [shape: f32[1,128], index: 4, kind: input, shape index: {}]
  %s5 = inlined_call_operand.hbm [shape: bf16[128,256], index: 5, kind: input, shape index: {}]
  %s6 = inlined_call_operand.hbm [shape: bf16[128,256], index: 6, kind: input, shape index: {}]
  %s7 = inlined_call_operand.hbm [shape: bf16[256,128], index: 7, kind: input, shape index: {}]
  %s8 = inlined_call_operand.hbm [shape: f32[2,64,128], index: 8, kind: output, shape index: {}]
  %s9 = sld [smem:[#allocation0]]
  $region66: #{tpu_custom_call.1} parent=0
    _
  %s11 = ssub.s32 1, %s9
  %s12 = scalar_select 0, %s11, %s9
  $region1: #{tpu_custom_call.1} parent=0
    #allocation2 [shape = 'u8[65536]{0}', space=vmem, size = 0x10000, scoped, tag = 'input window, operand 0, single buffered']
    #allocation3 [shape = 's32[1]{0}', space=sflag, size = 0x4, scoped, tag = 'scoped memory for tpu_custom_call.1']
    #allocation4 [shape = 's32[1]{0}', space=sflag, size = 0x4, scoped, tag = 'scoped memory for tpu_custom_call.1']
    #allocation5 [shape = 'u8[98304]{0}', space=vmem, size = 0x18000, scoped, tag = 'input window, operand 1, single buffered']
    #allocation6 [shape = 's32[1]{0}', space=sflag, size = 0x4, scoped, tag = 'scoped memory for tpu_custom_call.1']
    #allocation7 [shape = 'u8[32768]{0}', space=vmem, size = 0x8000, scoped, tag = 'input window, operand 3, single buffered']
    #allocation8 [shape = 'u8[65536]{0}', space=vmem, size = 0x10000, scoped, tag = 'input window, operand 5, single buffered']
    #allocation9 [shape = 's32[1]{0}', space=sflag, size = 0x4, scoped, tag = 'scoped memory for tpu_custom_call.1']
    #allocation10 [shape = 'u8[65536]{0}', space=vmem, size = 0x10000, scoped, tag = 'input window, operand 6, single buffered']
    #allocation11 [shape = 'u8[65536]{0}', space=vmem, size = 0x10000, scoped, tag = 'input window, operand 7, single buffered']
    #allocation12 [shape = 's32[1]{0}', space=sflag, size = 0x4, scoped, tag = 'scoped memory for tpu_custom_call.1']
    #allocation13 [shape = 'u8[65536]{0}', space=vmem, size = 0x10000, scoped, tag = 'output window, operand 0, single buffered']
    %13 = vsyncpa [#allocation3], 0
    %14 = vsyncpa [#allocation6], 0
    %15 = vsyncpa [#allocation9], 0
    %16 = vsyncpa [#allocation12], 0
    %17 = vsyncpa [#allocation4], 0
    // Predicated region
    $region2: #{tpu_custom_call.1} parent=1 // pred_check
      _
    $region3: #{tpu_custom_call.1} parent=1 // pred_check_branch
      %19 = sbr.rel (0) target = $region5
    $region4: #{tpu_custom_call.1} parent=1 // pred_region
      %s21 = ssub.s32 2048, 2048
      %22 = vsyncadd [#allocation3], %s21
      %s23 = sshll.u32 [#allocation2], 4
      %s24 = int_to_ptr.vmem [resolvable:$true] %s23
      %29 = dma.hbm_to_vmem [thread:$0]  %s0, 2048, %s24, [#allocation3], 128, 128, 8
    $region5: #{tpu_custom_call.1} parent=1 // pred_fallthru
      _
    // Predicated region
    $region6: #{tpu_custom_call.1} parent=1 // pred_check
      _
    $region7: #{tpu_custom_call.1} parent=1 // pred_check_branch
      %31 = sbr.rel (0) target = $region9
    $region8: #{tpu_custom_call.1} parent=1 // pred_region
      %s33 = ssub.s32 3072, 3072
      %34 = vsyncadd [#allocation6], %s33
      %s35 = sshll.u32 [#allocation5], 4
      %s36 = int_to_ptr.vmem [resolvable:$true] %s35
      %41 = dma.hbm_to_vmem [thread:$0]  %s1, 3072, %s36, [#allocation6], 192, 192, 12
    $region9: #{tpu_custom_call.1} parent=1 // pred_fallthru
      _
    // Predicated region
    $region10: #{tpu_custom_call.1} parent=1 // pred_check
      _
    $region11: #{tpu_custom_call.1} parent=1 // pred_check_branch
      %43 = sbr.rel (0) target = $region13
    $region12: #{tpu_custom_call.1} parent=1 // pred_region
      _
    $region13: #{tpu_custom_call.1} parent=1 // pred_fallthru
      _
    // Predicated region
    $region14: #{tpu_custom_call.1} parent=1 // pred_check
      _
    $region15: #{tpu_custom_call.1} parent=1 // pred_check_branch
      %45 = sbr.rel (0) target = $region17
    $region16: #{tpu_custom_call.1} parent=1 // pred_region
      %s47 = ssub.s32 1024, 1024
      %48 = vsyncadd [#allocation6], %s47
      %s49 = sshll.u32 [#allocation7], 4
      %s50 = int_to_ptr.vmem [resolvable:$true] %s49
      %55 = dma.hbm_to_vmem [thread:$0]  %s3, 1024, %s50, [#allocation6], 64, 64, 4
    $region17: #{tpu_custom_call.1} parent=1 // pred_fallthru
      _
    // Predicated region
    $region18: #{tpu_custom_call.1} parent=1 // pred_check
      _
    $region19: #{tpu_custom_call.1} parent=1 // pred_check_branch
      %57 = sbr.rel (0) target = $region21
    $region20: #{tpu_custom_call.1} parent=1 // pred_region
      _
    $region21: #{tpu_custom_call.1} parent=1 // pred_fallthru
      _
    // Predicated region
    $region22: #{tpu_custom_call.1} parent=1 // pred_check
      _
    $region23: #{tpu_custom_call.1} parent=1 // pred_check_branch
      %59 = sbr.rel (0) target = $region25
    $region24: #{tpu_custom_call.1} parent=1 // pred_region
      %s61 = ssub.s32 2048, 2048
      %62 = vsyncadd [#allocation9], %s61
      %s63 = sshll.u32 [#allocation8], 4
      %s64 = int_to_ptr.vmem [resolvable:$true] %s63
      %69 = dma.hbm_to_vmem [thread:$0]  %s5, 2048, %s64, [#allocation9], 128, 128, 8
    $region25: #{tpu_custom_call.1} parent=1 // pred_fallthru
      _
    // Predicated region
    $region26: #{tpu_custom_call.1} parent=1 // pred_check
      _
    $region27: #{tpu_custom_call.1} parent=1 // pred_check_branch
      %71 = sbr.rel (0) target = $region29
    $region28: #{tpu_custom_call.1} parent=1 // pred_region
      %s73 = ssub.s32 2048, 2048
      %74 = vsyncadd [#allocation9], %s73
      %s75 = sshll.u32 [#allocation10], 4
      %s76 = int_to_ptr.vmem [resolvable:$true] %s75
      %81 = dma.hbm_to_vmem [thread:$0]  %s6, 2048, %s76, [#allocation9], 128, 128, 8
    $region29: #{tpu_custom_call.1} parent=1 // pred_fallthru
      _
    // Predicated region
    $region30: #{tpu_custom_call.1} parent=1 // pred_check
      _
    $region31: #{tpu_custom_call.1} parent=1 // pred_check_branch
      %83 = sbr.rel (0) target = $region33
    $region32: #{tpu_custom_call.1} parent=1 // pred_region
      %s85 = ssub.s32 2048, 2048
      %86 = vsyncadd [#allocation12], %s85
      %s87 = sshll.u32 [#allocation11], 4
      %s88 = int_to_ptr.vmem [resolvable:$true] %s87
      %93 = dma.hbm_to_vmem [thread:$0]  %s7, 2048, %s88, [#allocation12], 64, 64, 4
    $region33: #{tpu_custom_call.1} parent=1 // pred_fallthru
      _
    // Predicated region
    $region34: #{tpu_custom_call.1} parent=1 // pred_check
      _
    $region35: #{tpu_custom_call.1} parent=1 // pred_check_branch
      %95 = sbr.rel (0) target = $region37
    $region36: #{tpu_custom_call.1} parent=1 // pred_region
      %96 = dma.done [#allocation3], 2048
    $region37: #{tpu_custom_call.1} parent=1 // pred_fallthru
      _
    // Predicated region
    $region38: #{tpu_custom_call.1} parent=1 // pred_check
      _
    $region39: #{tpu_custom_call.1} parent=1 // pred_check_branch
      %98 = sbr.rel (0) target = $region41
    $region40: #{tpu_custom_call.1} parent=1 // pred_region
      %99 = dma.done [#allocation6], 3072
    $region41: #{tpu_custom_call.1} parent=1 // pred_fallthru
      _
    // Predicated region
    $region42: #{tpu_custom_call.1} parent=1 // pred_check
      _
    $region43: #{tpu_custom_call.1} parent=1 // pred_check_branch
      %101 = sbr.rel (0) target = $region45
    $region44: #{tpu_custom_call.1} parent=1 // pred_region
      %102 = dma.done [#allocation6], 1024
    $region45: #{tpu_custom_call.1} parent=1 // pred_fallthru
      _
    // Predicated region
    $region46: #{tpu_custom_call.1} parent=1 // pred_check
      _
    $region47: #{tpu_custom_call.1} parent=1 // pred_check_branch
      %104 = sbr.rel (0) target = $region49
    $region48: #{tpu_custom_call.1} parent=1 // pred_region
      %105 = dma.done [#allocation9], 2048
    $region49: #{tpu_custom_call.1} parent=1 // pred_fallthru
      _
    // Predicated region
    $region50: #{tpu_custom_call.1} parent=1 // pred_check
      _
    $region51: #{tpu_custom_call.1} parent=1 // pred_check_branch
      %107 = sbr.rel (0) target = $region53
    $region52: #{tpu_custom_call.1} parent=1 // pred_region
      %108 = dma.done [#allocation9], 2048
    $region53: #{tpu_custom_call.1} parent=1 // pred_fallthru
      _
    // Predicated region
    $region54: #{tpu_custom_call.1} parent=1 // pred_check
      _
    $region55: #{tpu_custom_call.1} parent=1 // pred_check_branch
      %110 = sbr.rel (0) target = $region57
    $region56: #{tpu_custom_call.1} parent=1 // pred_region
      %111 = dma.done [#allocation12], 2048
    $region57: #{tpu_custom_call.1} parent=1 // pred_fallthru
      _
    %v113 = vld [vmem:[#allocation2] sm:$0xff]
    %v114 = vld [vmem:[#allocation2 + $0x8] sm:$0xff]
    %v115 = vld [vmem:[#allocation2 + $0x10] sm:$0xff]
    %v116 = vld [vmem:[#allocation2 + $0x18] sm:$0xff]
    %v117 = vld [vmem:[#allocation2 + $0x20] sm:$0xff]
    %v118 = vld [vmem:[#allocation2 + $0x28] sm:$0xff]
    %v119 = vld [vmem:[#allocation2 + $0x30] sm:$0xff]
    %v120 = vld [vmem:[#allocation2 + $0x38] sm:$0xff]
    %v121 = vld [vmem:[#allocation2 + $0x40] sm:$0xff]
    %v122 = vld [vmem:[#allocation2 + $0x48] sm:$0xff]
    %v123 = vld [vmem:[#allocation2 + $0x50] sm:$0xff]
    %v124 = vld [vmem:[#allocation2 + $0x58] sm:$0xff]
    %v125 = vld [vmem:[#allocation2 + $0x60] sm:$0xff]
    %v126 = vld [vmem:[#allocation2 + $0x68] sm:$0xff]
    %v127 = vld [vmem:[#allocation2 + $0x70] sm:$0xff]
    %v128 = vld [vmem:[#allocation2 + $0x78] sm:$0xff]
    %v129 = vmul.f32 %v113, %v113
    %v130 = vmul.f32 %v114, %v114
    %v131 = vmul.f32 %v115, %v115
    %v132 = vmul.f32 %v116, %v116
    %v133 = vmul.f32 %v117, %v117
    %v134 = vmul.f32 %v118, %v118
    %v135 = vmul.f32 %v119, %v119
    %v136 = vmul.f32 %v120, %v120
    %v137 = vmul.f32 %v121, %v121
    %v138 = vmul.f32 %v122, %v122
    %v139 = vmul.f32 %v123, %v123
    %v140 = vmul.f32 %v124, %v124
    %v141 = vmul.f32 %v125, %v125
    %v142 = vmul.f32 %v126, %v126
    %v143 = vmul.f32 %v127, %v127
    %v144 = vmul.f32 %v128, %v128
    %145 = vadd.xlane.f32.xlu0 %v129
    %v146 = vpop.xlane.xlu0 %145
    %147 = vadd.xlane.f32.xlu0 %v130
    %v148 = vpop.xlane.xlu0 %147
    %149 = vadd.xlane.f32.xlu0 %v131
    %v150 = vpop.xlane.xlu0 %149
    %151 = vadd.xlane.f32.xlu0 %v132
    %v152 = vpop.xlane.xlu0 %151
    %153 = vadd.xlane.f32.xlu0 %v133
    %v154 = vpop.xlane.xlu0 %153
    %155 = vadd.xlane.f32.xlu0 %v134
    %v156 = vpop.xlane.xlu0 %155
    %157 = vadd.xlane.f32.xlu0 %v135
    %v158 = vpop.xlane.xlu0 %157
    %159 = vadd.xlane.f32.xlu0 %v136
    %v160 = vpop.xlane.xlu0 %159
    %161 = vadd.xlane.f32.xlu0 %v137
    %v162 = vpop.xlane.xlu0 %161
    %163 = vadd.xlane.f32.xlu0 %v138
    %v164 = vpop.xlane.xlu0 %163
    %165 = vadd.xlane.f32.xlu0 %v139
    %v166 = vpop.xlane.xlu0 %165
    %167 = vadd.xlane.f32.xlu0 %v140
    %v168 = vpop.xlane.xlu0 %167
    %169 = vadd.xlane.f32.xlu0 %v141
    %v170 = vpop.xlane.xlu0 %169
    %171 = vadd.xlane.f32.xlu0 %v142
    %v172 = vpop.xlane.xlu0 %171
    %173 = vadd.xlane.f32.xlu0 %v143
    %v174 = vpop.xlane.xlu0 %173
    %175 = vadd.xlane.f32.xlu0 %v144
    %v176 = vpop.xlane.xlu0 %175
    %v177 = vrcp.pop 128.0
    %v178 = vmul.f32 %v146, %v177
    %v179 = vmul.f32 %v148, %v177
    %v180 = vmul.f32 %v150, %v177
    %v181 = vmul.f32 %v152, %v177
    %v182 = vmul.f32 %v154, %v177
    %v183 = vmul.f32 %v156, %v177
    %v184 = vmul.f32 %v158, %v177
    %v185 = vmul.f32 %v160, %v177
    %v186 = vmul.f32 %v162, %v177
    %v187 = vmul.f32 %v164, %v177
    %v188 = vmul.f32 %v166, %v177
    %v189 = vmul.f32 %v168, %v177
    %v190 = vmul.f32 %v170, %v177
    %v191 = vmul.f32 %v172, %v177
    %v192 = vmul.f32 %v174, %v177
    %v193 = vmul.f32 %v176, %v177
    %v194 = vrsqrt.pop %v178
    %v195 = vrsqrt.pop %v179
    %v196 = vrsqrt.pop %v180
    %v197 = vrsqrt.pop %v181
    %v198 = vrsqrt.pop %v182
    %v199 = vrsqrt.pop %v183
    %v200 = vrsqrt.pop %v184
    %v201 = vrsqrt.pop %v185
    %v202 = vrsqrt.pop %v186
    %v203 = vrsqrt.pop %v187
    %v204 = vrsqrt.pop %v188
    %v205 = vrsqrt.pop %v189
    %v206 = vrsqrt.pop %v190
    %v207 = vrsqrt.pop %v191
    %v208 = vrsqrt.pop %v192
    %v209 = vrsqrt.pop %v193
    %v210 = vmul.f32 %v113, %v194
    %v211 = vmul.f32 %v114, %v195
    %v212 = vmul.f32 %v115, %v196
    %v213 = vmul.f32 %v116, %v197
    %v214 = vmul.f32 %v117, %v198
    %v215 = vmul.f32 %v118, %v199
    %v216 = vmul.f32 %v119, %v200
    %v217 = vmul.f32 %v120, %v201
    %v218 = vmul.f32 %v121, %v202
    %v219 = vmul.f32 %v122, %v203
    %v220 = vmul.f32 %v123, %v204
    %v221 = vmul.f32 %v124, %v205
    %v222 = vmul.f32 %v125, %v206
    %v223 = vmul.f32 %v126, %v207
    %v224 = vmul.f32 %v127, %v208
    %v225 = vmul.f32 %v128, %v209
    %v226 = vpack.c.bf16 %v211, %v210
    %v227 = vpack.c.bf16 %v213, %v212
    %v228 = vpack.c.bf16 %v215, %v214
    %v229 = vpack.c.bf16 %v217, %v216
    %v230 = vpack.c.bf16 %v219, %v218
    %v231 = vpack.c.bf16 %v221, %v220
    %v232 = vpack.c.bf16 %v223, %v222
    %v233 = vpack.c.bf16 %v225, %v224
    %v234 = vld [vmem:[#allocation5] sm:$0xff]
    %v235 = vld [vmem:[#allocation5 + $0x8] sm:$0xf]
    %v236 = vld [vmem:[#allocation5 + $0xc] sm:$0xff]
    %v237 = vld [vmem:[#allocation5 + $0x14] sm:$0xf]
    %v238 = vld [vmem:[#allocation5 + $0x18] sm:$0xff]
    %v239 = vld [vmem:[#allocation5 + $0x20] sm:$0xf]
    %v240 = vld [vmem:[#allocation5 + $0x24] sm:$0xff]
    %v241 = vld [vmem:[#allocation5 + $0x2c] sm:$0xf]
    %v242 = vld [vmem:[#allocation5 + $0x30] sm:$0xff]
    %v243 = vld [vmem:[#allocation5 + $0x38] sm:$0xf]
    %v244 = vld [vmem:[#allocation5 + $0x3c] sm:$0xff]
    %v245 = vld [vmem:[#allocation5 + $0x44] sm:$0xf]
    %v246 = vld [vmem:[#allocation5 + $0x48] sm:$0xff]
    %v247 = vld [vmem:[#allocation5 + $0x50] sm:$0xf]
    %v248 = vld [vmem:[#allocation5 + $0x54] sm:$0xff]
    %v249 = vld [vmem:[#allocation5 + $0x5c] sm:$0xf]
    %v250 = vld [vmem:[#allocation5 + $0x60] sm:$0xff]
    %v251 = vld [vmem:[#allocation5 + $0x68] sm:$0xf]
    %v252 = vld [vmem:[#allocation5 + $0x6c] sm:$0xff]
    %v253 = vld [vmem:[#allocation5 + $0x74] sm:$0xf]
    %v254 = vld [vmem:[#allocation5 + $0x78] sm:$0xff]
    %v255 = vld [vmem:[#allocation5 + $0x80] sm:$0xf]
    %v256 = vld [vmem:[#allocation5 + $0x84] sm:$0xff]
    %v257 = vld [vmem:[#allocation5 + $0x8c] sm:$0xf]
    %v258 = vld [vmem:[#allocation5 + $0x90] sm:$0xff]
    %v259 = vld [vmem:[#allocation5 + $0x98] sm:$0xf]
    %v260 = vld [vmem:[#allocation5 + $0x9c] sm:$0xff]
    %v261 = vld [vmem:[#allocation5 + $0xa4] sm:$0xf]
    %v262 = vld [vmem:[#allocation5 + $0xa8] sm:$0xff]
    %v263 = vld [vmem:[#allocation5 + $0xb0] sm:$0xf]
    %v264 = vld [vmem:[#allocation5 + $0xb4] sm:$0xff]
    %v265 = vld [vmem:[#allocation5 + $0xbc] sm:$0xf]
    %v266 = vld [vmem:[%s2] sm:$0x7]
    %v268 = vlaneseq
    %v269 = vshrl.u32 %v268, 7
    %v270 = vsub.s32 0, %v269
    %v271 = vrot.slane %v266, %v270
    %v272 = vlaneseq
    %v273 = vshrl.u32 %v272, 7
    %v274 = vsub.s32 1, %v273
    %v275 = vrot.slane %v266, %v274
    %v276 = vlaneseq
    %v277 = vshrl.u32 %v276, 7
    %v278 = vsub.s32 2, %v277
    %v279 = vrot.slane %v266, %v278
    %v315 = vunpack.c.l.b16 %v234
    %v316 = vunpack.c.h.b16 %v234
    %v317 = vunpack.c.l.b16 %v235
    %v318 = vunpack.c.l.b16 %v236
    %v319 = vunpack.c.h.b16 %v236
    %v320 = vunpack.c.l.b16 %v237
    %v321 = vunpack.c.l.b16 %v238
    %v322 = vunpack.c.h.b16 %v238
    %v323 = vunpack.c.l.b16 %v239
    %v324 = vunpack.c.l.b16 %v240
    %v325 = vunpack.c.h.b16 %v240
    %v326 = vunpack.c.l.b16 %v241
    %v327 = vunpack.c.l.b16 %v242
    %v328 = vunpack.c.h.b16 %v242
    %v329 = vunpack.c.l.b16 %v243
    %v330 = vunpack.c.l.b16 %v244
    %v331 = vunpack.c.h.b16 %v244
    %v332 = vunpack.c.l.b16 %v245
    %v333 = vunpack.c.l.b16 %v246
    %v334 = vunpack.c.h.b16 %v246
    %v335 = vunpack.c.l.b16 %v247
    %v336 = vunpack.c.l.b16 %v248
    %v337 = vunpack.c.h.b16 %v248
    %v338 = vunpack.c.l.b16 %v249
    %v339 = vunpack.c.l.b16 %v250
    %v340 = vunpack.c.h.b16 %v250
    %v341 = vunpack.c.l.b16 %v251
    %v342 = vunpack.c.l.b16 %v252
    %v343 = vunpack.c.h.b16 %v252
    %v344 = vunpack.c.l.b16 %v253
    %v345 = vunpack.c.l.b16 %v254
    %v346 = vunpack.c.h.b16 %v254
    %v347 = vunpack.c.l.b16 %v255
    %v348 = vunpack.c.l.b16 %v256
    %v349 = vunpack.c.h.b16 %v256
    %v350 = vunpack.c.l.b16 %v257
    %v351 = vunpack.c.l.b16 %v258
    %v352 = vunpack.c.h.b16 %v258
    %v353 = vunpack.c.l.b16 %v259
    %v354 = vunpack.c.l.b16 %v260
    %v355 = vunpack.c.h.b16 %v260
    %v356 = vunpack.c.l.b16 %v261
    %v357 = vunpack.c.l.b16 %v262
    %v358 = vunpack.c.h.b16 %v262
    %v359 = vunpack.c.l.b16 %v263
    %v360 = vunpack.c.l.b16 %v264
    %v361 = vunpack.c.h.b16 %v264
    %v362 = vunpack.c.l.b16 %v265
    %v363 = vpack.c.b16 %v318, %v315
    %v364 = vpack.c.b16 %v319, %v316
    %v365 = vpack.c.b16 %v320, %v317
    %v366 = vpack.c.b16 %v324, %v321
    %v367 = vpack.c.b16 %v325, %v322
    %v368 = vpack.c.b16 %v326, %v323
    %v369 = vpack.c.b16 %v330, %v327
    %v370 = vpack.c.b16 %v331, %v328
    %v371 = vpack.c.b16 %v332, %v329
    %v372 = vpack.c.b16 %v336, %v333
    %v373 = vpack.c.b16 %v337, %v334
    %v374 = vpack.c.b16 %v338, %v335
    %v375 = vpack.c.b16 %v342, %v339
    %v376 = vpack.c.b16 %v343, %v340
    %v377 = vpack.c.b16 %v344, %v341
    %v378 = vpack.c.b16 %v348, %v345
    %v379 = vpack.c.b16 %v349, %v346
    %v380 = vpack.c.b16 %v350, %v347
    %v381 = vpack.c.b16 %v354, %v351
    %v382 = vpack.c.b16 %v355, %v352
    %v383 = vpack.c.b16 %v356, %v353
    %v384 = vpack.c.b16 %v360, %v357
    %v385 = vpack.c.b16 %v361, %v358
    %v386 = vpack.c.b16 %v362, %v359
    %411 = vmatprep.subr.bf16.mxu0 %v364
    %412 = vmatpush1.bf16.msra.mxu0 %v363
    %413 = vmatprep.subr.bf16.mxu0 %v367
    %414 = vmatpush1.bf16.msra.mxu0 %v366
    %415 = vmatprep.subr.bf16.mxu0 %v370
    %416 = vmatpush1.bf16.msra.mxu0 %v369
    %417 = vmatprep.subr.bf16.mxu0 %v373
    %418 = vmatpush1.bf16.msra.mxu0 %v372
    %419 = vmatprep.subr.bf16.mxu0 %v376
    %420 = vmatpush1.bf16.msra.mxu0 %v375
    %421 = vmatprep.subr.bf16.mxu0 %v379
    %422 = vmatpush1.bf16.msra.mxu0 %v378
    %423 = vmatprep.subr.bf16.mxu0 %v382
    %424 = vmatpush1.bf16.msra.mxu0 %v381
    %425 = vmatprep.subr.bf16.mxu0 %v385
    %426 = vmatpush1.bf16.msra.mxu0 %v384
    %427 = vmatprep.subr.bf16.mxu0 0
    %428 = vmatpush1.bf16.msra.mxu0 0
    %429 = vmatprep.subr.bf16.mxu0 0
    %430 = vmatpush1.bf16.msra.mxu0 0
    %431 = vmatprep.subr.bf16.mxu0 0
    %432 = vmatpush1.bf16.msra.mxu0 0
    %433 = vmatprep.subr.bf16.mxu0 0
    %434 = vmatpush1.bf16.msra.mxu0 0
    %435 = vmatprep.subr.bf16.mxu0 0
    %436 = vmatpush1.bf16.msra.mxu0 0
    %437 = vmatprep.subr.bf16.mxu0 0
    %438 = vmatpush1.bf16.msra.mxu0 0
    %439 = vmatprep.subr.bf16.mxu0 0
    %440 = vmatpush1.bf16.msra.mxu0 0
    %441 = vmatprep.subr.bf16.mxu0 0
    %442 = vmatpush1.bf16.msra.mxu0 0
    %443 = vmatprep.mubr.bf16.mxu0 0
    %444 = vmatmul.mubr.bf16.gmra.mrb[0].mxu0 %v226
    %v445 = vpop.f32.mrb[0].mxu0
    %v446 = vadd.f32 %v271, %v445
    %v447 = vpop.f32.mrb[0].mxu0
    %v448 = vadd.f32 %v275, %v447
    %v449 = vpop.f32.mrb[0].mxu0
    %v450 = vadd.f32 %v271, %v449
    %v451 = vpop.f32.mrb[0].mxu0
    %v452 = vadd.f32 %v275, %v451
    %453 = vmatprep.mubr.bf16.mxu0 0
    %454 = vmatmul.mubr.bf16.gmra.mrb[0].mxu0 %v227
    %v455 = vpop.f32.mrb[0].mxu0
    %v456 = vadd.f32 %v271, %v455
    %v457 = vpop.f32.mrb[0].mxu0
    %v458 = vadd.f32 %v275, %v457
    %v459 = vpop.f32.mrb[0].mxu0
    %v460 = vadd.f32 %v271, %v459
    %v461 = vpop.f32.mrb[0].mxu0
    %v462 = vadd.f32 %v275, %v461
    %463 = vmatprep.mubr.bf16.mxu0 0
    %464 = vmatmul.mubr.bf16.gmra.mrb[0].mxu0 %v228
    %v465 = vpop.f32.mrb[0].mxu0
    %v466 = vadd.f32 %v271, %v465
    %v467 = vpop.f32.mrb[0].mxu0
    %v468 = vadd.f32 %v275, %v467
    %v469 = vpop.f32.mrb[0].mxu0
    %v470 = vadd.f32 %v271, %v469
    %v471 = vpop.f32.mrb[0].mxu0
    %v472 = vadd.f32 %v275, %v471
    %473 = vmatprep.mubr.bf16.mxu0 0
    %474 = vmatmul.mubr.bf16.gmra.mrb[0].mxu0 %v229
    %v475 = vpop.f32.mrb[0].mxu0
    %v476 = vadd.f32 %v271, %v475
    %v477 = vpop.f32.mrb[0].mxu0
    %v478 = vadd.f32 %v275, %v477
    %v479 = vpop.f32.mrb[0].mxu0
    %v480 = vadd.f32 %v271, %v479
    %v481 = vpop.f32.mrb[0].mxu0
    %v482 = vadd.f32 %v275, %v481
    %483 = vmatprep.mubr.bf16.mxu0 0
    %484 = vmatmul.mubr.bf16.gmra.mrb[0].mxu0 %v230
    %v485 = vpop.f32.mrb[0].mxu0
    %v486 = vadd.f32 %v271, %v485
    %v487 = vpop.f32.mrb[0].mxu0
    %v488 = vadd.f32 %v275, %v487
    %v489 = vpop.f32.mrb[0].mxu0
    %v490 = vadd.f32 %v271, %v489
    %v491 = vpop.f32.mrb[0].mxu0
    %v492 = vadd.f32 %v275, %v491
    %493 = vmatprep.mubr.bf16.mxu0 0
    %494 = vmatmul.mubr.bf16.gmra.mrb[0].mxu0 %v231
    %v495 = vpop.f32.mrb[0].mxu0
    %v496 = vadd.f32 %v271, %v495
    %v497 = vpop.f32.mrb[0].mxu0
    %v498 = vadd.f32 %v275, %v497
    %v499 = vpop.f32.mrb[0].mxu0
    %v500 = vadd.f32 %v271, %v499
    %v501 = vpop.f32.mrb[0].mxu0
    %v502 = vadd.f32 %v275, %v501
    %503 = vmatprep.mubr.bf16.mxu0 0
    %504 = vmatmul.mubr.bf16.gmra.mrb[0].mxu0 %v232
    %v505 = vpop.f32.mrb[0].mxu0
    %v506 = vadd.f32 %v271, %v505
    %v507 = vpop.f32.mrb[0].mxu0
    %v508 = vadd.f32 %v275, %v507
    %v509 = vpop.f32.mrb[0].mxu0
    %v510 = vadd.f32 %v271, %v509
    %v511 = vpop.f32.mrb[0].mxu0
    %v512 = vadd.f32 %v275, %v511
    %513 = vmatprep.mubr.bf16.mxu0 0
    %514 = vmatmul.mubr.bf16.gmra.mrb[0].mxu0 %v233
    %v515 = vpop.f32.mrb[0].mxu0
    %v516 = vadd.f32 %v271, %v515
    %v517 = vpop.f32.mrb[0].mxu0
    %v518 = vadd.f32 %v275, %v517
    %v519 = vpop.f32.mrb[0].mxu0
    %v520 = vadd.f32 %v271, %v519
    %v521 = vpop.f32.mrb[0].mxu0
    %v522 = vadd.f32 %v275, %v521
    %523 = vdwg.mxu0
    %524 = vmatprep.subr.bf16.mxu0 0
    %525 = vmatpush1.bf16.msra.mxu0 %v365
    %526 = vmatprep.subr.bf16.mxu0 0
    %527 = vmatpush1.bf16.msra.mxu0 %v368
    %528 = vmatprep.subr.bf16.mxu0 0
    %529 = vmatpush1.bf16.msra.mxu0 %v371
    %530 = vmatprep.subr.bf16.mxu0 0
    %531 = vmatpush1.bf16.msra.mxu0 %v374
    %532 = vmatprep.subr.bf16.mxu0 0
    %533 = vmatpush1.bf16.msra.mxu0 %v377
    %534 = vmatprep.subr.bf16.mxu0 0
    %535 = vmatpush1.bf16.msra.mxu0 %v380
    %536 = vmatprep.subr.bf16.mxu0 0
    %537 = vmatpush1.bf16.msra.mxu0 %v383
    %538 = vmatprep.subr.bf16.mxu0 0
    %539 = vmatpush1.bf16.msra.mxu0 %v386
    %540 = vmatprep.subr.bf16.mxu0 0
    %541 = vmatpush1.bf16.msra.mxu0 0
    %542 = vmatprep.subr.bf16.mxu0 0
    %543 = vmatpush1.bf16.msra.mxu0 0
    %544 = vmatprep.subr.bf16.mxu0 0
    %545 = vmatpush1.bf16.msra.mxu0 0
    %546 = vmatprep.subr.bf16.mxu0 0
    %547 = vmatpush1.bf16.msra.mxu0 0
    %548 = vmatprep.subr.bf16.mxu0 0
    %549 = vmatpush1.bf16.msra.mxu0 0
    %550 = vmatprep.subr.bf16.mxu0 0
    %551 = vmatpush1.bf16.msra.mxu0 0
    %552 = vmatprep.subr.bf16.mxu0 0
    %553 = vmatpush1.bf16.msra.mxu0 0
    %554 = vmatprep.subr.bf16.mxu0 0
    %555 = vmatpush1.bf16.msra.mxu0 0
    %556 = vmatprep.mubr.bf16.mxu0 0
    %557 = vmatmul.mubr.bf16.gmra.mrb[0].mxu0 %v226
    %v558 = vpop.f32.mrb[0].mxu0
    %v559 = vadd.f32 %v279, %v558
    %v560 = vpop.f32.mrb[0].mxu0
    %v561 = vpop.f32.mrb[0].mxu0
    %v562 = vadd.f32 %v279, %v561
    %v563 = vpop.f32.mrb[0].mxu0
    %564 = vmatprep.mubr.bf16.mxu0 0
    %565 = vmatmul.mubr.bf16.gmra.mrb[0].mxu0 %v227
    %v566 = vpop.f32.mrb[0].mxu0
    %v567 = vadd.f32 %v279, %v566
    %v568 = vpop.f32.mrb[0].mxu0
    %v569 = vpop.f32.mrb[0].mxu0
    %v570 = vadd.f32 %v279, %v569
    %v571 = vpop.f32.mrb[0].mxu0
    %572 = vmatprep.mubr.bf16.mxu0 0
    %573 = vmatmul.mubr.bf16.gmra.mrb[0].mxu0 %v228
    %v574 = vpop.f32.mrb[0].mxu0
    %v575 = vadd.f32 %v279, %v574
    %v576 = vpop.f32.mrb[0].mxu0
    %v577 = vpop.f32.mrb[0].mxu0
    %v578 = vadd.f32 %v279, %v577
    %v579 = vpop.f32.mrb[0].mxu0
    %580 = vmatprep.mubr.bf16.mxu0 0
    %581 = vmatmul.mubr.bf16.gmra.mrb[0].mxu0 %v229
    %v582 = vpop.f32.mrb[0].mxu0
    %v583 = vadd.f32 %v279, %v582
    %v584 = vpop.f32.mrb[0].mxu0
    %v585 = vpop.f32.mrb[0].mxu0
    %v586 = vadd.f32 %v279, %v585
    %v587 = vpop.f32.mrb[0].mxu0
    %588 = vmatprep.mubr.bf16.mxu0 0
    %589 = vmatmul.mubr.bf16.gmra.mrb[0].mxu0 %v230
    %v590 = vpop.f32.mrb[0].mxu0
    %v591 = vadd.f32 %v279, %v590
    %v592 = vpop.f32.mrb[0].mxu0
    %v593 = vpop.f32.mrb[0].mxu0
    %v594 = vadd.f32 %v279, %v593
    %v595 = vpop.f32.mrb[0].mxu0
    %596 = vmatprep.mubr.bf16.mxu0 0
    %597 = vmatmul.mubr.bf16.gmra.mrb[0].mxu0 %v231
    %v598 = vpop.f32.mrb[0].mxu0
    %v599 = vadd.f32 %v279, %v598
    %v600 = vpop.f32.mrb[0].mxu0
    %v601 = vpop.f32.mrb[0].mxu0
    %v602 = vadd.f32 %v279, %v601
    %v603 = vpop.f32.mrb[0].mxu0
    %604 = vmatprep.mubr.bf16.mxu0 0
    %605 = vmatmul.mubr.bf16.gmra.mrb[0].mxu0 %v232
    %v606 = vpop.f32.mrb[0].mxu0
    %v607 = vadd.f32 %v279, %v606
    %v608 = vpop.f32.mrb[0].mxu0
    %v609 = vpop.f32.mrb[0].mxu0
    %v610 = vadd.f32 %v279, %v609
    %v611 = vpop.f32.mrb[0].mxu0
    %612 = vmatprep.mubr.bf16.mxu0 0
    %613 = vmatmul.mubr.bf16.gmra.mrb[0].mxu0 %v233
    %v614 = vpop.f32.mrb[0].mxu0
    %v615 = vadd.f32 %v279, %v614
    %v616 = vpop.f32.mrb[0].mxu0
    %v617 = vpop.f32.mrb[0].mxu0
    %v618 = vadd.f32 %v279, %v617
    %v619 = vpop.f32.mrb[0].mxu0
    %620 = vdwg.mxu0
    %v621 = vpack.c.bf16 %v450, %v446
    %v622 = vpack.c.bf16 %v452, %v448
    %v623 = vpack.c.bf16 %v562, %v559
    %v624 = vpack.c.bf16 %v460, %v456
    %v625 = vpack.c.bf16 %v462, %v458
    %v626 = vpack.c.bf16 %v570, %v567
    %v627 = vpack.c.bf16 %v470, %v466
    %v628 = vpack.c.bf16 %v472, %v468
    %v629 = vpack.c.bf16 %v578, %v575
    %v630 = vpack.c.bf16 %v480, %v476
    %v631 = vpack.c.bf16 %v482, %v478
    %v632 = vpack.c.bf16 %v586, %v583
    %v633 = vpack.c.bf16 %v490, %v486
    %v634 = vpack.c.bf16 %v492, %v488
    %v635 = vpack.c.bf16 %v594, %v591
    %v636 = vpack.c.bf16 %v500, %v496
    %v637 = vpack.c.bf16 %v502, %v498
    %v638 = vpack.c.bf16 %v602, %v599
    %v639 = vpack.c.bf16 %v510, %v506
    %v640 = vpack.c.bf16 %v512, %v508
    %v641 = vpack.c.bf16 %v610, %v607
    %v642 = vpack.c.bf16 %v520, %v516
    %v643 = vpack.c.bf16 %v522, %v518
    %v644 = vpack.c.bf16 %v618, %v615
    %v645 = vlaneseq
    %v646 = vshrl.u32 %v645, 7
    %v647 = vadd.s32 %v646, 8
    %v648 = vadd.s32 %v646, 16
    %v649 = vadd.s32 %v646, 24
    %v650 = vadd.s32 %v646, 32
    %v651 = vadd.s32 %v646, 40
    %v652 = vadd.s32 %v646, 48
    %v653 = vadd.s32 %v646, 56
    %v654 = vlaneseq
    %v655 = vand.u32 %v654, 127
    %v656 = vsub.s32 %v655, %v646
    %v657 = vsub.s32 %v655, %v647
    %v658 = vsub.s32 %v655, %v648
    %v659 = vsub.s32 %v655, %v649
    %v660 = vsub.s32 %v655, %v650
    %v661 = vsub.s32 %v655, %v651
    %v662 = vsub.s32 %v655, %v652
    %v663 = vsub.s32 %v655, %v653
    %vm664 = vcmp.lt.s32.totalorder %v656, 0
    %v665 = vsub.s32 0, %v656
    %v666 = vsel %vm664, %v665, %v656
    %vm667 = vcmp.lt.s32.totalorder %v657, 0
    %v668 = vsub.s32 0, %v657
    %v669 = vsel %vm667, %v668, %v657
    %vm670 = vcmp.lt.s32.totalorder %v658, 0
    %v671 = vsub.s32 0, %v658
    %v672 = vsel %vm670, %v671, %v658
    %vm673 = vcmp.lt.s32.totalorder %v659, 0
    %v674 = vsub.s32 0, %v659
    %v675 = vsel %vm673, %v674, %v659
    %vm676 = vcmp.lt.s32.totalorder %v660, 0
    %v677 = vsub.s32 0, %v660
    %v678 = vsel %vm676, %v677, %v660
    %vm679 = vcmp.lt.s32.totalorder %v661, 0
    %v680 = vsub.s32 0, %v661
    %v681 = vsel %vm679, %v680, %v661
    %vm682 = vcmp.lt.s32.totalorder %v662, 0
    %v683 = vsub.s32 0, %v662
    %v684 = vsel %vm682, %v683, %v662
    %vm685 = vcmp.lt.s32.totalorder %v663, 0
    %v686 = vsub.s32 0, %v663
    %v687 = vsel %vm685, %v686, %v663
    %v688 = vcvt.s32.f32 %v666
    %v689 = vcvt.s32.f32 %v669
    %v690 = vcvt.s32.f32 %v672
    %v691 = vcvt.s32.f32 %v675
    %v692 = vcvt.s32.f32 %v678
    %v693 = vcvt.s32.f32 %v681
    %v694 = vcvt.s32.f32 %v684
    %v695 = vcvt.s32.f32 %v687
    %v696 = vsub.f32 0.0, %v688
    %v697 = vsub.f32 0.0, %v689
    %v698 = vsub.f32 0.0, %v690
    %v699 = vsub.f32 0.0, %v691
    %v700 = vsub.f32 0.0, %v692
    %v701 = vsub.f32 0.0, %v693
    %v702 = vsub.f32 0.0, %v694
    %v703 = vsub.f32 0.0, %v695
    %vm704 = vcmp.le.s32.totalorder %v655, %v646
    %vm705 = vcmp.le.s32.totalorder %v655, %v647
    %vm706 = vcmp.le.s32.totalorder %v655, %v648
    %vm707 = vcmp.le.s32.totalorder %v655, %v649
    %vm708 = vcmp.le.s32.totalorder %v655, %v650
    %vm709 = vcmp.le.s32.totalorder %v655, %v651
    %vm710 = vcmp.le.s32.totalorder %v655, %v652
    %vm711 = vcmp.le.s32.totalorder %v655, %v653
    %v712 = vsel %vm704, %v696, -inf
    %v713 = vsel %vm705, %v697, -inf
    %v714 = vsel %vm706, %v698, -inf
    %v715 = vsel %vm707, %v699, -inf
    %v716 = vsel %vm708, %v700, -inf
    %v717 = vsel %vm709, %v701, -inf
    %v718 = vsel %vm710, %v702, -inf
    %v719 = vsel %vm711, %v703, -inf
    %vm720 = vcmask 261120
    %v722 = vsel %vm720, %v621, 0
    %v725 = vsel %vm720, %v624, 0
    %v728 = vsel %vm720, %v627, 0
    %v731 = vsel %vm720, %v630, 0
    %v734 = vsel %vm720, %v622, 0
    %v737 = vsel %vm720, %v625, 0
    %v740 = vsel %vm720, %v628, 0
    %v743 = vsel %vm720, %v631, 0
    %745 = vmatprep.subr.bf16.mxu0 0
    %746 = vmatpush1.bf16.xpose.msra.mxu0 %v734
    %747 = vmatprep.subr.bf16.mxu0 0
    %748 = vmatpush1.bf16.xpose.msra.mxu0 %v737
    %749 = vmatprep.subr.bf16.mxu0 0
    %750 = vmatpush1.bf16.xpose.msra.mxu0 %v740
    %751 = vmatprep.subr.bf16.mxu0 0
    %752 = vmatpush1.bf16.xpose.msra.mxu0 %v743
    %753 = vmatprep.subr.bf16.mxu0 0
    %754 = vmatpush1.bf16.xpose.msra.mxu0 0
    %755 = vmatprep.subr.bf16.mxu0 0
    %756 = vmatpush1.bf16.xpose.msra.mxu0 0
    %757 = vmatprep.subr.bf16.mxu0 0
    %758 = vmatpush1.bf16.xpose.msra.mxu0 0
    %759 = vmatprep.subr.bf16.mxu0 0
    %760 = vmatpush1.bf16.xpose.msra.mxu0 0
    %761 = vmatprep.subr.bf16.mxu0 0
    %762 = vmatpush1.bf16.xpose.msra.mxu0 0
    %763 = vmatprep.subr.bf16.mxu0 0
    %764 = vmatpush1.bf16.xpose.msra.mxu0 0
    %765 = vmatprep.subr.bf16.mxu0 0
    %766 = vmatpush1.bf16.xpose.msra.mxu0 0
    %767 = vmatprep.subr.bf16.mxu0 0
    %768 = vmatpush1.bf16.xpose.msra.mxu0 0
    %769 = vmatprep.subr.bf16.mxu0 0
    %770 = vmatpush1.bf16.xpose.msra.mxu0 0
    %771 = vmatprep.subr.bf16.mxu0 0
    %772 = vmatpush1.bf16.xpose.msra.mxu0 0
    %773 = vmatprep.subr.bf16.mxu0 0
    %774 = vmatpush1.bf16.xpose.msra.mxu0 0
    %775 = vmatprep.subr.bf16.mxu0 0
    %776 = vmatpush1.bf16.xpose.msra.mxu0 0
    %777 = vmatprep.mubr.bf16.mxu0 0
    %778 = vmatmul.mubr.bf16.gmra.mrb[0].mxu0 %v722
    %v779 = vpop.f32.mrb[0].mxu0
    %v780 = vadd.f32 0.0, %v779
    %v781 = vpop.f32.mrb[0].mxu0
    %v782 = vpop.f32.mrb[0].mxu0
    %v783 = vadd.f32 0.0, %v782
    %v784 = vpop.f32.mrb[0].mxu0
    %785 = vmatprep.mubr.bf16.mxu0 0
    %786 = vmatmul.mubr.bf16.gmra.mrb[0].mxu0 %v725
    %v787 = vpop.f32.mrb[0].mxu0
    %v788 = vadd.f32 0.0, %v787
    %v789 = vpop.f32.mrb[0].mxu0
    %v790 = vpop.f32.mrb[0].mxu0
    %v791 = vadd.f32 0.0, %v790
    %v792 = vpop.f32.mrb[0].mxu0
    %793 = vmatprep.mubr.bf16.mxu0 0
    %794 = vmatmul.mubr.bf16.gmra.mrb[0].mxu0 %v728
    %v795 = vpop.f32.mrb[0].mxu0
    %v796 = vadd.f32 0.0, %v795
    %v797 = vpop.f32.mrb[0].mxu0
    %v798 = vpop.f32.mrb[0].mxu0
    %v799 = vadd.f32 0.0, %v798
    %v800 = vpop.f32.mrb[0].mxu0
    %801 = vmatprep.mubr.bf16.mxu0 0
    %802 = vmatmul.mubr.bf16.gmra.mrb[0].mxu0 %v731
    %v803 = vpop.f32.mrb[0].mxu0
    %v804 = vadd.f32 0.0, %v803
    %v805 = vpop.f32.mrb[0].mxu0
    %v806 = vpop.f32.mrb[0].mxu0
    %v807 = vadd.f32 0.0, %v806
    %v808 = vpop.f32.mrb[0].mxu0
    %809 = vdwg.mxu0
    %v811 = vsel %vm720, %v633, 0
    %v814 = vsel %vm720, %v636, 0
    %v817 = vsel %vm720, %v639, 0
    %v820 = vsel %vm720, %v642, 0
    %v823 = vsel %vm720, %v634, 0
    %v826 = vsel %vm720, %v637, 0
    %v829 = vsel %vm720, %v640, 0
    %v832 = vsel %vm720, %v643, 0
    %834 = vmatprep.subr.bf16.mxu0 0
    %835 = vmatpush1.bf16.xpose.msra.mxu0 %v823
    %836 = vmatprep.subr.bf16.mxu0 0
    %837 = vmatpush1.bf16.xpose.msra.mxu0 %v826
    %838 = vmatprep.subr.bf16.mxu0 0
    %839 = vmatpush1.bf16.xpose.msra.mxu0 %v829
    %840 = vmatprep.subr.bf16.mxu0 0
    %841 = vmatpush1.bf16.xpose.msra.mxu0 %v832
    %842 = vmatprep.subr.bf16.mxu0 0
    %843 = vmatpush1.bf16.xpose.msra.mxu0 0
    %844 = vmatprep.subr.bf16.mxu0 0
    %845 = vmatpush1.bf16.xpose.msra.mxu0 0
    %846 = vmatprep.subr.bf16.mxu0 0
    %847 = vmatpush1.bf16.xpose.msra.mxu0 0
    %848 = vmatprep.subr.bf16.mxu0 0
    %849 = vmatpush1.bf16.xpose.msra.mxu0 0
    %850 = vmatprep.subr.bf16.mxu0 0
    %851 = vmatpush1.bf16.xpose.msra.mxu0 0
    %852 = vmatprep.subr.bf16.mxu0 0
    %853 = vmatpush1.bf16.xpose.msra.mxu0 0
    %854 = vmatprep.subr.bf16.mxu0 0
    %855 = vmatpush1.bf16.xpose.msra.mxu0 0
    %856 = vmatprep.subr.bf16.mxu0 0
    %857 = vmatpush1.bf16.xpose.msra.mxu0 0
    %858 = vmatprep.subr.bf16.mxu0 0
    %859 = vmatpush1.bf16.xpose.msra.mxu0 0
    %860 = vmatprep.subr.bf16.mxu0 0
    %861 = vmatpush1.bf16.xpose.msra.mxu0 0
    %862 = vmatprep.subr.bf16.mxu0 0
    %863 = vmatpush1.bf16.xpose.msra.mxu0 0
    %864 = vmatprep.subr.bf16.mxu0 0
    %865 = vmatpush1.bf16.xpose.msra.mxu0 0
    %866 = vmatprep.mubr.bf16.mxu0 0
    %867 = vmatmul.mubr.bf16.gmra.mrb[0].mxu0 %v811
    %v868 = vpop.f32.mrb[0].mxu0
    %v869 = vadd.f32 0.0, %v868
    %v870 = vpop.f32.mrb[0].mxu0
    %v871 = vpop.f32.mrb[0].mxu0
    %v872 = vadd.f32 0.0, %v871
    %v873 = vpop.f32.mrb[0].mxu0
    %874 = vmatprep.mubr.bf16.mxu0 0
    %875 = vmatmul.mubr.bf16.gmra.mrb[0].mxu0 %v814
    %v876 = vpop.f32.mrb[0].mxu0
    %v877 = vadd.f32 0.0, %v876
    %v878 = vpop.f32.mrb[0].mxu0
    %v879 = vpop.f32.mrb[0].mxu0
    %v880 = vadd.f32 0.0, %v879
    %v881 = vpop.f32.mrb[0].mxu0
    %882 = vmatprep.mubr.bf16.mxu0 0
    %883 = vmatmul.mubr.bf16.gmra.mrb[0].mxu0 %v817
    %v884 = vpop.f32.mrb[0].mxu0
    %v885 = vadd.f32 0.0, %v884
    %v886 = vpop.f32.mrb[0].mxu0
    %v887 = vpop.f32.mrb[0].mxu0
    %v888 = vadd.f32 0.0, %v887
    %v889 = vpop.f32.mrb[0].mxu0
    %890 = vmatprep.mubr.bf16.mxu0 0
    %891 = vmatmul.mubr.bf16.gmra.mrb[0].mxu0 %v820
    %v892 = vpop.f32.mrb[0].mxu0
    %v893 = vadd.f32 0.0, %v892
    %v894 = vpop.f32.mrb[0].mxu0
    %v895 = vpop.f32.mrb[0].mxu0
    %v896 = vadd.f32 0.0, %v895
    %v897 = vpop.f32.mrb[0].mxu0
    %898 = vdwg.mxu0
    %v899 = vmul.f32 %v780, 0.17677669
    %v900 = vmul.f32 %v783, 0.17677669
    %v901 = vmul.f32 %v788, 0.17677669
    %v902 = vmul.f32 %v791, 0.17677669
    %v903 = vmul.f32 %v796, 0.17677669
    %v904 = vmul.f32 %v799, 0.17677669
    %v905 = vmul.f32 %v804, 0.17677669
    %v906 = vmul.f32 %v807, 0.17677669
    %v907 = vmul.f32 %v869, 0.17677669
    %v908 = vmul.f32 %v872, 0.17677669
    %v909 = vmul.f32 %v877, 0.17677669
    %v910 = vmul.f32 %v880, 0.17677669
    %v911 = vmul.f32 %v885, 0.17677669
    %v912 = vmul.f32 %v888, 0.17677669
    %v913 = vmul.f32 %v893, 0.17677669
    %v914 = vmul.f32 %v896, 0.17677669
    %v915 = vmul.f32 %v712, 0.5
    %v916 = vmul.f32 %v713, 0.5
    %v917 = vmul.f32 %v714, 0.5
    %v918 = vmul.f32 %v715, 0.5
    %v919 = vmul.f32 %v716, 0.5
    %v920 = vmul.f32 %v717, 0.5
    %v921 = vmul.f32 %v718, 0.5
    %v922 = vmul.f32 %v719, 0.5
    %v923 = vadd.f32 %v899, %v915
    %v924 = vadd.f32 %v900, %v916
    %v925 = vadd.f32 %v901, %v917
    %v926 = vadd.f32 %v902, %v918
    %v927 = vadd.f32 %v903, %v919
    %v928 = vadd.f32 %v904, %v920
    %v929 = vadd.f32 %v905, %v921
    %v930 = vadd.f32 %v906, %v922
    %v931 = vadd.f32 %v907, %v915
    %v932 = vadd.f32 %v908, %v916
    %v933 = vadd.f32 %v909, %v917
    %v934 = vadd.f32 %v910, %v918
    %v935 = vadd.f32 %v911, %v919
    %v936 = vadd.f32 %v912, %v920
    %v937 = vadd.f32 %v913, %v921
    %v938 = vadd.f32 %v914, %v922
    %vm939 = vcmask 523264
    %v940 = vsel %vm939, %v923, -inf
    %941 = vmax.xlane.f32.xlu0 %v940
    %v942 = vpop.xlane.xlu0 %941
    %v943 = vsel %vm939, %v924, -inf
    %944 = vmax.xlane.f32.xlu0 %v943
    %v945 = vpop.xlane.xlu0 %944
    %v946 = vsel %vm939, %v925, -inf
    %947 = vmax.xlane.f32.xlu0 %v946
    %v948 = vpop.xlane.xlu0 %947
    %v949 = vsel %vm939, %v926, -inf
    %950 = vmax.xlane.f32.xlu0 %v949
    %v951 = vpop.xlane.xlu0 %950
    %v952 = vsel %vm939, %v927, -inf
    %953 = vmax.xlane.f32.xlu0 %v952
    %v954 = vpop.xlane.xlu0 %953
    %v955 = vsel %vm939, %v928, -inf
    %956 = vmax.xlane.f32.xlu0 %v955
    %v957 = vpop.xlane.xlu0 %956
    %v958 = vsel %vm939, %v929, -inf
    %959 = vmax.xlane.f32.xlu0 %v958
    %v960 = vpop.xlane.xlu0 %959
    %v961 = vsel %vm939, %v930, -inf
    %962 = vmax.xlane.f32.xlu0 %v961
    %v963 = vpop.xlane.xlu0 %962
    %v964 = vsel %vm939, %v931, -inf
    %965 = vmax.xlane.f32.xlu0 %v964
    %v966 = vpop.xlane.xlu0 %965
    %v967 = vsel %vm939, %v932, -inf
    %968 = vmax.xlane.f32.xlu0 %v967
    %v969 = vpop.xlane.xlu0 %968
    %v970 = vsel %vm939, %v933, -inf
    %971 = vmax.xlane.f32.xlu0 %v970
    %v972 = vpop.xlane.xlu0 %971
    %v973 = vsel %vm939, %v934, -inf
    %974 = vmax.xlane.f32.xlu0 %v973
    %v975 = vpop.xlane.xlu0 %974
    %v976 = vsel %vm939, %v935, -inf
    %977 = vmax.xlane.f32.xlu0 %v976
    %v978 = vpop.xlane.xlu0 %977
    %v979 = vsel %vm939, %v936, -inf
    %980 = vmax.xlane.f32.xlu0 %v979
    %v981 = vpop.xlane.xlu0 %980
    %v982 = vsel %vm939, %v937, -inf
    %983 = vmax.xlane.f32.xlu0 %v982
    %v984 = vpop.xlane.xlu0 %983
    %v985 = vsel %vm939, %v938, -inf
    %986 = vmax.xlane.f32.xlu0 %v985
    %v987 = vpop.xlane.xlu0 %986
    %v988 = vsub.f32 %v923, %v942
    %v989 = vsub.f32 %v924, %v945
    %v990 = vsub.f32 %v925, %v948
    %v991 = vsub.f32 %v926, %v951
    %v992 = vsub.f32 %v927, %v954
    %v993 = vsub.f32 %v928, %v957
    %v994 = vsub.f32 %v929, %v960
    %v995 = vsub.f32 %v930, %v963
    %v996 = vsub.f32 %v931, %v966
    %v997 = vsub.f32 %v932, %v969
    %v998 = vsub.f32 %v933, %v972
    %v999 = vsub.f32 %v934, %v975
    %v1000 = vsub.f32 %v935, %v978
    %v1001 = vsub.f32 %v936, %v981
    %v1002 = vsub.f32 %v937, %v984
    %v1003 = vsub.f32 %v938, %v987
    %v1004 = vmul.f32 %v988, 1.442695
    %v1005 = vpow.pop %v1004
    %v1006 = vmul.f32 %v989, 1.442695
    %v1007 = vpow.pop %v1006
    %v1008 = vmul.f32 %v990, 1.442695
    %v1009 = vpow.pop %v1008
    %v1010 = vmul.f32 %v991, 1.442695
    %v1011 = vpow.pop %v1010
    %v1012 = vmul.f32 %v992, 1.442695
    %v1013 = vpow.pop %v1012
    %v1014 = vmul.f32 %v993, 1.442695
    %v1015 = vpow.pop %v1014
    %v1016 = vmul.f32 %v994, 1.442695
    %v1017 = vpow.pop %v1016
    %v1018 = vmul.f32 %v995, 1.442695
    %v1019 = vpow.pop %v1018
    %v1020 = vmul.f32 %v996, 1.442695
    %v1021 = vpow.pop %v1020
    %v1022 = vmul.f32 %v997, 1.442695
    %v1023 = vpow.pop %v1022
    %v1024 = vmul.f32 %v998, 1.442695
    %v1025 = vpow.pop %v1024
    %v1026 = vmul.f32 %v999, 1.442695
    %v1027 = vpow.pop %v1026
    %v1028 = vmul.f32 %v1000, 1.442695
    %v1029 = vpow.pop %v1028
    %v1030 = vmul.f32 %v1001, 1.442695
    %v1031 = vpow.pop %v1030
    %v1032 = vmul.f32 %v1002, 1.442695
    %v1033 = vpow.pop %v1032
    %v1034 = vmul.f32 %v1003, 1.442695
    %v1035 = vpow.pop %v1034
    %v1036 = vsel %vm939, %v1005, 0.0
    %1037 = vadd.xlane.f32.xlu0 %v1036
    %v1038 = vpop.xlane.xlu0 %1037
    %v1039 = vsel %vm939, %v1007, 0.0
    %1040 = vadd.xlane.f32.xlu0 %v1039
    %v1041 = vpop.xlane.xlu0 %1040
    %v1042 = vsel %vm939, %v1009, 0.0
    %1043 = vadd.xlane.f32.xlu0 %v1042
    %v1044 = vpop.xlane.xlu0 %1043
    %v1045 = vsel %vm939, %v1011, 0.0
    %1046 = vadd.xlane.f32.xlu0 %v1045
    %v1047 = vpop.xlane.xlu0 %1046
    %v1048 = vsel %vm939, %v1013, 0.0
    %1049 = vadd.xlane.f32.xlu0 %v1048
    %v1050 = vpop.xlane.xlu0 %1049
    %v1051 = vsel %vm939, %v1015, 0.0
    %1052 = vadd.xlane.f32.xlu0 %v1051
    %v1053 = vpop.xlane.xlu0 %1052
    %v1054 = vsel %vm939, %v1017, 0.0
    %1055 = vadd.xlane.f32.xlu0 %v1054
    %v1056 = vpop.xlane.xlu0 %1055
    %v1057 = vsel %vm939, %v1019, 0.0
    %1058 = vadd.xlane.f32.xlu0 %v1057
    %v1059 = vpop.xlane.xlu0 %1058
    %v1060 = vsel %vm939, %v1021, 0.0
    %1061 = vadd.xlane.f32.xlu0 %v1060
    %v1062 = vpop.xlane.xlu0 %1061
    %v1063 = vsel %vm939, %v1023, 0.0
    %1064 = vadd.xlane.f32.xlu0 %v1063
    %v1065 = vpop.xlane.xlu0 %1064
    %v1066 = vsel %vm939, %v1025, 0.0
    %1067 = vadd.xlane.f32.xlu0 %v1066
    %v1068 = vpop.xlane.xlu0 %1067
    %v1069 = vsel %vm939, %v1027, 0.0
    %1070 = vadd.xlane.f32.xlu0 %v1069
    %v1071 = vpop.xlane.xlu0 %1070
    %v1072 = vsel %vm939, %v1029, 0.0
    %1073 = vadd.xlane.f32.xlu0 %v1072
    %v1074 = vpop.xlane.xlu0 %1073
    %v1075 = vsel %vm939, %v1031, 0.0
    %1076 = vadd.xlane.f32.xlu0 %v1075
    %v1077 = vpop.xlane.xlu0 %1076
    %v1078 = vsel %vm939, %v1033, 0.0
    %1079 = vadd.xlane.f32.xlu0 %v1078
    %v1080 = vpop.xlane.xlu0 %1079
    %v1081 = vsel %vm939, %v1035, 0.0
    %1082 = vadd.xlane.f32.xlu0 %v1081
    %v1083 = vpop.xlane.xlu0 %1082
    %v1084 = vrcp.pop %v1038
    %v1085 = vrcp.pop %v1041
    %v1086 = vrcp.pop %v1044
    %v1087 = vrcp.pop %v1047
    %v1088 = vrcp.pop %v1050
    %v1089 = vrcp.pop %v1053
    %v1090 = vrcp.pop %v1056
    %v1091 = vrcp.pop %v1059
    %v1092 = vrcp.pop %v1062
    %v1093 = vrcp.pop %v1065
    %v1094 = vrcp.pop %v1068
    %v1095 = vrcp.pop %v1071
    %v1096 = vrcp.pop %v1074
    %v1097 = vrcp.pop %v1077
    %v1098 = vrcp.pop %v1080
    %v1099 = vrcp.pop %v1083
    %v1100 = vmul.f32 %v1005, %v1084
    %v1101 = vmul.f32 %v1007, %v1085
    %v1102 = vmul.f32 %v1009, %v1086
    %v1103 = vmul.f32 %v1011, %v1087
    %v1104 = vmul.f32 %v1013, %v1088
    %v1105 = vmul.f32 %v1015, %v1089
    %v1106 = vmul.f32 %v1017, %v1090
    %v1107 = vmul.f32 %v1019, %v1091
    %v1108 = vmul.f32 %v1021, %v1092
    %v1109 = vmul.f32 %v1023, %v1093
    %v1110 = vmul.f32 %v1025, %v1094
    %v1111 = vmul.f32 %v1027, %v1095
    %v1112 = vmul.f32 %v1029, %v1096
    %v1113 = vmul.f32 %v1031, %v1097
    %v1114 = vmul.f32 %v1033, %v1098
    %v1115 = vmul.f32 %v1035, %v1099
    %v1116 = vpack.c.bf16 %v1101, %v1100
    %v1117 = vpack.c.bf16 %v1103, %v1102
    %v1118 = vpack.c.bf16 %v1105, %v1104
    %v1119 = vpack.c.bf16 %v1107, %v1106
    %v1120 = vpack.c.bf16 %v1109, %v1108
    %v1121 = vpack.c.bf16 %v1111, %v1110
    %v1122 = vpack.c.bf16 %v1113, %v1112
    %v1123 = vpack.c.bf16 %v1115, %v1114
    %v1125 = vsel %vm939, %v1116, 0
    %v1128 = vsel %vm939, %v1117, 0
    %v1131 = vsel %vm939, %v1118, 0
    %v1134 = vsel %vm939, %v1119, 0
    %1136 = vmatprep.subr.bf16.mxu0 0
    %1137 = vmatpush1.bf16.msra.mxu0 %v623
    %1138 = vmatprep.subr.bf16.mxu0 0
    %1139 = vmatpush1.bf16.msra.mxu0 %v626
    %1140 = vmatprep.subr.bf16.mxu0 0
    %1141 = vmatpush1.bf16.msra.mxu0 %v629
    %1142 = vmatprep.subr.bf16.mxu0 0
    %1143 = vmatpush1.bf16.msra.mxu0 %v632
    %1144 = vmatprep.subr.bf16.mxu0 0
    %1145 = vmatpush1.bf16.msra.mxu0 0
    %1146 = vmatprep.subr.bf16.mxu0 0
    %1147 = vmatpush1.bf16.msra.mxu0 0
    %1148 = vmatprep.subr.bf16.mxu0 0
    %1149 = vmatpush1.bf16.msra.mxu0 0
    %1150 = vmatprep.subr.bf16.mxu0 0
    %1151 = vmatpush1.bf16.msra.mxu0 0
    %1152 = vmatprep.subr.bf16.mxu0 0
    %1153 = vmatpush1.bf16.msra.mxu0 0
    %1154 = vmatprep.subr.bf16.mxu0 0
    %1155 = vmatpush1.bf16.msra.mxu0 0
    %1156 = vmatprep.subr.bf16.mxu0 0
    %1157 = vmatpush1.bf16.msra.mxu0 0
    %1158 = vmatprep.subr.bf16.mxu0 0
    %1159 = vmatpush1.bf16.msra.mxu0 0
    %1160 = vmatprep.subr.bf16.mxu0 0
    %1161 = vmatpush1.bf16.msra.mxu0 0
    %1162 = vmatprep.subr.bf16.mxu0 0
    %1163 = vmatpush1.bf16.msra.mxu0 0
    %1164 = vmatprep.subr.bf16.mxu0 0
    %1165 = vmatpush1.bf16.msra.mxu0 0
    %1166 = vmatprep.subr.bf16.mxu0 0
    %1167 = vmatpush1.bf16.msra.mxu0 0
    %1168 = vmatprep.mubr.bf16.mxu0 0
    %1169 = vmatmul.mubr.bf16.gmra.mrb[0].mxu0 %v1125
    %v1170 = vpop.f32.mrb[0].mxu0
    %v1171 = vadd.f32 0.0, %v1170
    %v1172 = vpop.f32.mrb[0].mxu0
    %v1173 = vpop.f32.mrb[0].mxu0
    %v1174 = vadd.f32 0.0, %v1173
    %v1175 = vpop.f32.mrb[0].mxu0
    %1176 = vmatprep.mubr.bf16.mxu0 0
    %1177 = vmatmul.mubr.bf16.gmra.mrb[0].mxu0 %v1128
    %v1178 = vpop.f32.mrb[0].mxu0
    %v1179 = vadd.f32 0.0, %v1178
    %v1180 = vpop.f32.mrb[0].mxu0
    %v1181 = vpop.f32.mrb[0].mxu0
    %v1182 = vadd.f32 0.0, %v1181
    %v1183 = vpop.f32.mrb[0].mxu0
    %1184 = vmatprep.mubr.bf16.mxu0 0
    %1185 = vmatmul.mubr.bf16.gmra.mrb[0].mxu0 %v1131
    %v1186 = vpop.f32.mrb[0].mxu0
    %v1187 = vadd.f32 0.0, %v1186
    %v1188 = vpop.f32.mrb[0].mxu0
    %v1189 = vpop.f32.mrb[0].mxu0
    %v1190 = vadd.f32 0.0, %v1189
    %v1191 = vpop.f32.mrb[0].mxu0
    %1192 = vmatprep.mubr.bf16.mxu0 0
    %1193 = vmatmul.mubr.bf16.gmra.mrb[0].mxu0 %v1134
    %v1194 = vpop.f32.mrb[0].mxu0
    %v1195 = vadd.f32 0.0, %v1194
    %v1196 = vpop.f32.mrb[0].mxu0
    %v1197 = vpop.f32.mrb[0].mxu0
    %v1198 = vadd.f32 0.0, %v1197
    %v1199 = vpop.f32.mrb[0].mxu0
    %1200 = vdwg.mxu0
    %v1202 = vsel %vm939, %v1120, 0
    %v1205 = vsel %vm939, %v1121, 0
    %v1208 = vsel %vm939, %v1122, 0
    %v1211 = vsel %vm939, %v1123, 0
    %1213 = vmatprep.subr.bf16.mxu0 0
    %1214 = vmatpush1.bf16.msra.mxu0 %v635
    %1215 = vmatprep.subr.bf16.mxu0 0
    %1216 = vmatpush1.bf16.msra.mxu0 %v638
    %1217 = vmatprep.subr.bf16.mxu0 0
    %1218 = vmatpush1.bf16.msra.mxu0 %v641
    %1219 = vmatprep.subr.bf16.mxu0 0
    %1220 = vmatpush1.bf16.msra.mxu0 %v644
    %1221 = vmatprep.subr.bf16.mxu0 0
    %1222 = vmatpush1.bf16.msra.mxu0 0
    %1223 = vmatprep.subr.bf16.mxu0 0
    %1224 = vmatpush1.bf16.msra.mxu0 0
    %1225 = vmatprep.subr.bf16.mxu0 0
    %1226 = vmatpush1.bf16.msra.mxu0 0
    %1227 = vmatprep.subr.bf16.mxu0 0
    %1228 = vmatpush1.bf16.msra.mxu0 0
    %1229 = vmatprep.subr.bf16.mxu0 0
    %1230 = vmatpush1.bf16.msra.mxu0 0
    %1231 = vmatprep.subr.bf16.mxu0 0
    %1232 = vmatpush1.bf16.msra.mxu0 0
    %1233 = vmatprep.subr.bf16.mxu0 0
    %1234 = vmatpush1.bf16.msra.mxu0 0
    %1235 = vmatprep.subr.bf16.mxu0 0
    %1236 = vmatpush1.bf16.msra.mxu0 0
    %1237 = vmatprep.subr.bf16.mxu0 0
    %1238 = vmatpush1.bf16.msra.mxu0 0
    %1239 = vmatprep.subr.bf16.mxu0 0
    %1240 = vmatpush1.bf16.msra.mxu0 0
    %1241 = vmatprep.subr.bf16.mxu0 0
    %1242 = vmatpush1.bf16.msra.mxu0 0
    %1243 = vmatprep.subr.bf16.mxu0 0
    %1244 = vmatpush1.bf16.msra.mxu0 0
    %1245 = vmatprep.mubr.bf16.mxu0 0
    %1246 = vmatmul.mubr.bf16.gmra.mrb[0].mxu0 %v1202
    %v1247 = vpop.f32.mrb[0].mxu0
    %v1248 = vadd.f32 0.0, %v1247
    %v1249 = vpop.f32.mrb[0].mxu0
    %v1250 = vpop.f32.mrb[0].mxu0
    %v1251 = vadd.f32 0.0, %v1250
    %v1252 = vpop.f32.mrb[0].mxu0
    %1253 = vmatprep.mubr.bf16.mxu0 0
    %1254 = vmatmul.mubr.bf16.gmra.mrb[0].mxu0 %v1205
    %v1255 = vpop.f32.mrb[0].mxu0
    %v1256 = vadd.f32 0.0, %v1255
    %v1257 = vpop.f32.mrb[0].mxu0
    %v1258 = vpop.f32.mrb[0].mxu0
    %v1259 = vadd.f32 0.0, %v1258
    %v1260 = vpop.f32.mrb[0].mxu0
    %1261 = vmatprep.mubr.bf16.mxu0 0
    %1262 = vmatmul.mubr.bf16.gmra.mrb[0].mxu0 %v1208
    %v1263 = vpop.f32.mrb[0].mxu0
    %v1264 = vadd.f32 0.0, %v1263
    %v1265 = vpop.f32.mrb[0].mxu0
    %v1266 = vpop.f32.mrb[0].mxu0
    %v1267 = vadd.f32 0.0, %v1266
    %v1268 = vpop.f32.mrb[0].mxu0
    %1269 = vmatprep.mubr.bf16.mxu0 0
    %1270 = vmatmul.mubr.bf16.gmra.mrb[0].mxu0 %v1211
    %v1271 = vpop.f32.mrb[0].mxu0
    %v1272 = vadd.f32 0.0, %v1271
    %v1273 = vpop.f32.mrb[0].mxu0
    %v1274 = vpop.f32.mrb[0].mxu0
    %v1275 = vadd.f32 0.0, %v1274
    %v1276 = vpop.f32.mrb[0].mxu0
    %1277 = vdwg.mxu0
    %v1278 = vpack.c.bf16 %v1174, %v1171
    %v1279 = vpack.c.bf16 %v1182, %v1179
    %v1280 = vpack.c.bf16 %v1190, %v1187
    %v1281 = vpack.c.bf16 %v1198, %v1195
    %v1282 = vpack.c.bf16 %v1251, %v1248
    %v1283 = vpack.c.bf16 %v1259, %v1256
    %v1284 = vpack.c.bf16 %v1267, %v1264
    %v1285 = vpack.c.bf16 %v1275, %v1272
    %1290 = vrot.lane.b32.xlu0 %v621, 96
    %v1291 = vpop.permute.xlu0 %1290
    %1292 = vrot.lane.b32.xlu0 %v624, 96
    %v1293 = vpop.permute.xlu0 %1292
    %1294 = vrot.lane.b32.xlu0 %v627, 96
    %v1295 = vpop.permute.xlu0 %1294
    %1296 = vrot.lane.b32.xlu0 %v630, 96
    %v1297 = vpop.permute.xlu0 %1296
    %1302 = vrot.lane.b32.xlu0 %v622, 96
    %v1303 = vpop.permute.xlu0 %1302
    %1304 = vrot.lane.b32.xlu0 %v625, 96
    %v1305 = vpop.permute.xlu0 %1304
    %1306 = vrot.lane.b32.xlu0 %v628, 96
    %v1307 = vpop.permute.xlu0 %1306
    %1308 = vrot.lane.b32.xlu0 %v631, 96
    %v1309 = vpop.permute.xlu0 %1308
    %v1311 = vsel %vm720, %v1291, 0
    %v1314 = vsel %vm720, %v1293, 0
    %v1317 = vsel %vm720, %v1295, 0
    %v1320 = vsel %vm720, %v1297, 0
    %v1323 = vsel %vm720, %v1303, 0
    %v1326 = vsel %vm720, %v1305, 0
    %v1329 = vsel %vm720, %v1307, 0
    %v1332 = vsel %vm720, %v1309, 0
    %1334 = vmatprep.subr.bf16.mxu0 0
    %1335 = vmatpush1.bf16.xpose.msra.mxu0 %v1323
    %1336 = vmatprep.subr.bf16.mxu0 0
    %1337 = vmatpush1.bf16.xpose.msra.mxu0 %v1326
    %1338 = vmatprep.subr.bf16.mxu0 0
    %1339 = vmatpush1.bf16.xpose.msra.mxu0 %v1329
    %1340 = vmatprep.subr.bf16.mxu0 0
    %1341 = vmatpush1.bf16.xpose.msra.mxu0 %v1332
    %1342 = vmatprep.subr.bf16.mxu0 0
    %1343 = vmatpush1.bf16.xpose.msra.mxu0 0
    %1344 = vmatprep.subr.bf16.mxu0 0
    %1345 = vmatpush1.bf16.xpose.msra.mxu0 0
    %1346 = vmatprep.subr.bf16.mxu0 0
    %1347 = vmatpush1.bf16.xpose.msra.mxu0 0
    %1348 = vmatprep.subr.bf16.mxu0 0
    %1349 = vmatpush1.bf16.xpose.msra.mxu0 0
    %1350 = vmatprep.subr.bf16.mxu0 0
    %1351 = vmatpush1.bf16.xpose.msra.mxu0 0
    %1352 = vmatprep.subr.bf16.mxu0 0
    %1353 = vmatpush1.bf16.xpose.msra.mxu0 0
    %1354 = vmatprep.subr.bf16.mxu0 0
    %1355 = vmatpush1.bf16.xpose.msra.mxu0 0
    %1356 = vmatprep.subr.bf16.mxu0 0
    %1357 = vmatpush1.bf16.xpose.msra.mxu0 0
    %1358 = vmatprep.subr.bf16.mxu0 0
    %1359 = vmatpush1.bf16.xpose.msra.mxu0 0
    %1360 = vmatprep.subr.bf16.mxu0 0
    %1361 = vmatpush1.bf16.xpose.msra.mxu0 0
    %1362 = vmatprep.subr.bf16.mxu0 0
    %1363 = vmatpush1.bf16.xpose.msra.mxu0 0
    %1364 = vmatprep.subr.bf16.mxu0 0
    %1365 = vmatpush1.bf16.xpose.msra.mxu0 0
    %1366 = vmatprep.mubr.bf16.mxu0 0
    %1367 = vmatmul.mubr.bf16.gmra.mrb[0].mxu0 %v1311
    %v1368 = vpop.f32.mrb[0].mxu0
    %v1369 = vadd.f32 0.0, %v1368
    %v1370 = vpop.f32.mrb[0].mxu0
    %v1371 = vpop.f32.mrb[0].mxu0
    %v1372 = vadd.f32 0.0, %v1371
    %v1373 = vpop.f32.mrb[0].mxu0
    %1374 = vmatprep.mubr.bf16.mxu0 0
    %1375 = vmatmul.mubr.bf16.gmra.mrb[0].mxu0 %v1314
    %v1376 = vpop.f32.mrb[0].mxu0
    %v1377 = vadd.f32 0.0, %v1376
    %v1378 = vpop.f32.mrb[0].mxu0
    %v1379 = vpop.f32.mrb[0].mxu0
    %v1380 = vadd.f32 0.0, %v1379
    %v1381 = vpop.f32.mrb[0].mxu0
    %1382 = vmatprep.mubr.bf16.mxu0 0
    %1383 = vmatmul.mubr.bf16.gmra.mrb[0].mxu0 %v1317
    %v1384 = vpop.f32.mrb[0].mxu0
    %v1385 = vadd.f32 0.0, %v1384
    %v1386 = vpop.f32.mrb[0].mxu0
    %v1387 = vpop.f32.mrb[0].mxu0
    %v1388 = vadd.f32 0.0, %v1387
    %v1389 = vpop.f32.mrb[0].mxu0
    %1390 = vmatprep.mubr.bf16.mxu0 0
    %1391 = vmatmul.mubr.bf16.gmra.mrb[0].mxu0 %v1320
    %v1392 = vpop.f32.mrb[0].mxu0
    %v1393 = vadd.f32 0.0, %v1392
    %v1394 = vpop.f32.mrb[0].mxu0
    %v1395 = vpop.f32.mrb[0].mxu0
    %v1396 = vadd.f32 0.0, %v1395
    %v1397 = vpop.f32.mrb[0].mxu0
    %1398 = vdwg.mxu0
    %1403 = vrot.lane.b32.xlu0 %v633, 96
    %v1404 = vpop.permute.xlu0 %1403
    %1405 = vrot.lane.b32.xlu0 %v636, 96
    %v1406 = vpop.permute.xlu0 %1405
    %1407 = vrot.lane.b32.xlu0 %v639, 96
    %v1408 = vpop.permute.xlu0 %1407
    %1409 = vrot.lane.b32.xlu0 %v642, 96
    %v1410 = vpop.permute.xlu0 %1409
    %1415 = vrot.lane.b32.xlu0 %v634, 96
    %v1416 = vpop.permute.xlu0 %1415
    %1417 = vrot.lane.b32.xlu0 %v637, 96
    %v1418 = vpop.permute.xlu0 %1417
    %1419 = vrot.lane.b32.xlu0 %v640, 96
    %v1420 = vpop.permute.xlu0 %1419
    %1421 = vrot.lane.b32.xlu0 %v643, 96
    %v1422 = vpop.permute.xlu0 %1421
    %v1424 = vsel %vm720, %v1404, 0
    %v1427 = vsel %vm720, %v1406, 0
    %v1430 = vsel %vm720, %v1408, 0
    %v1433 = vsel %vm720, %v1410, 0
    %v1436 = vsel %vm720, %v1416, 0
    %v1439 = vsel %vm720, %v1418, 0
    %v1442 = vsel %vm720, %v1420, 0
    %v1445 = vsel %vm720, %v1422, 0
    %1447 = vmatprep.subr.bf16.mxu0 0
    %1448 = vmatpush1.bf16.xpose.msra.mxu0 %v1436
    %1449 = vmatprep.subr.bf16.mxu0 0
    %1450 = vmatpush1.bf16.xpose.msra.mxu0 %v1439
    %1451 = vmatprep.subr.bf16.mxu0 0
    %1452 = vmatpush1.bf16.xpose.msra.mxu0 %v1442
    %1453 = vmatprep.subr.bf16.mxu0 0
    %1454 = vmatpush1.bf16.xpose.msra.mxu0 %v1445
    %1455 = vmatprep.subr.bf16.mxu0 0
    %1456 = vmatpush1.bf16.xpose.msra.mxu0 0
    %1457 = vmatprep.subr.bf16.mxu0 0
    %1458 = vmatpush1.bf16.xpose.msra.mxu0 0
    %1459 = vmatprep.subr.bf16.mxu0 0
    %1460 = vmatpush1.bf16.xpose.msra.mxu0 0
    %1461 = vmatprep.subr.bf16.mxu0 0
    %1462 = vmatpush1.bf16.xpose.msra.mxu0 0
    %1463 = vmatprep.subr.bf16.mxu0 0
    %1464 = vmatpush1.bf16.xpose.msra.mxu0 0
    %1465 = vmatprep.subr.bf16.mxu0 0
    %1466 = vmatpush1.bf16.xpose.msra.mxu0 0
    %1467 = vmatprep.subr.bf16.mxu0 0
    %1468 = vmatpush1.bf16.xpose.msra.mxu0 0
    %1469 = vmatprep.subr.bf16.mxu0 0
    %1470 = vmatpush1.bf16.xpose.msra.mxu0 0
    %1471 = vmatprep.subr.bf16.mxu0 0
    %1472 = vmatpush1.bf16.xpose.msra.mxu0 0
    %1473 = vmatprep.subr.bf16.mxu0 0
    %1474 = vmatpush1.bf16.xpose.msra.mxu0 0
    %1475 = vmatprep.subr.bf16.mxu0 0
    %1476 = vmatpush1.bf16.xpose.msra.mxu0 0
    %1477 = vmatprep.subr.bf16.mxu0 0
    %1478 = vmatpush1.bf16.xpose.msra.mxu0 0
    %1479 = vmatprep.mubr.bf16.mxu0 0
    %1480 = vmatmul.mubr.bf16.gmra.mrb[0].mxu0 %v1424
    %v1481 = vpop.f32.mrb[0].mxu0
    %v1482 = vadd.f32 0.0, %v1481
    %v1483 = vpop.f32.mrb[0].mxu0
    %v1484 = vpop.f32.mrb[0].mxu0
    %v1485 = vadd.f32 0.0, %v1484
    %v1486 = vpop.f32.mrb[0].mxu0
    %1487 = vmatprep.mubr.bf16.mxu0 0
    %1488 = vmatmul.mubr.bf16.gmra.mrb[0].mxu0 %v1427
    %v1489 = vpop.f32.mrb[0].mxu0
    %v1490 = vadd.f32 0.0, %v1489
    %v1491 = vpop.f32.mrb[0].mxu0
    %v1492 = vpop.f32.mrb[0].mxu0
    %v1493 = vadd.f32 0.0, %v1492
    %v1494 = vpop.f32.mrb[0].mxu0
    %1495 = vmatprep.mubr.bf16.mxu0 0
    %1496 = vmatmul.mubr.bf16.gmra.mrb[0].mxu0 %v1430
    %v1497 = vpop.f32.mrb[0].mxu0
    %v1498 = vadd.f32 0.0, %v1497
    %v1499 = vpop.f32.mrb[0].mxu0
    %v1500 = vpop.f32.mrb[0].mxu0
    %v1501 = vadd.f32 0.0, %v1500
    %v1502 = vpop.f32.mrb[0].mxu0
    %1503 = vmatprep.mubr.bf16.mxu0 0
    %1504 = vmatmul.mubr.bf16.gmra.mrb[0].mxu0 %v1433
    %v1505 = vpop.f32.mrb[0].mxu0
    %v1506 = vadd.f32 0.0, %v1505
    %v1507 = vpop.f32.mrb[0].mxu0
    %v1508 = vpop.f32.mrb[0].mxu0
    %v1509 = vadd.f32 0.0, %v1508
    %v1510 = vpop.f32.mrb[0].mxu0
    %1511 = vdwg.mxu0
    %v1512 = vmul.f32 %v1369, 0.17677669
    %v1513 = vmul.f32 %v1372, 0.17677669
    %v1514 = vmul.f32 %v1377, 0.17677669
    %v1515 = vmul.f32 %v1380, 0.17677669
    %v1516 = vmul.f32 %v1385, 0.17677669
    %v1517 = vmul.f32 %v1388, 0.17677669
    %v1518 = vmul.f32 %v1393, 0.17677669
    %v1519 = vmul.f32 %v1396, 0.17677669
    %v1520 = vmul.f32 %v1482, 0.17677669
    %v1521 = vmul.f32 %v1485, 0.17677669
    %v1522 = vmul.f32 %v1490, 0.17677669
    %v1523 = vmul.f32 %v1493, 0.17677669
    %v1524 = vmul.f32 %v1498, 0.17677669
    %v1525 = vmul.f32 %v1501, 0.17677669
    %v1526 = vmul.f32 %v1506, 0.17677669
    %v1527 = vmul.f32 %v1509, 0.17677669
    %v1528 = vmul.f32 %v712, 0.099212565
    %v1529 = vmul.f32 %v713, 0.099212565
    %v1530 = vmul.f32 %v714, 0.099212565
    %v1531 = vmul.f32 %v715, 0.099212565
    %v1532 = vmul.f32 %v716, 0.099212565
    %v1533 = vmul.f32 %v717, 0.099212565
    %v1534 = vmul.f32 %v718, 0.099212565
    %v1535 = vmul.f32 %v719, 0.099212565
    %v1536 = vadd.f32 %v1512, %v1528
    %v1537 = vadd.f32 %v1513, %v1529
    %v1538 = vadd.f32 %v1514, %v1530
    %v1539 = vadd.f32 %v1515, %v1531
    %v1540 = vadd.f32 %v1516, %v1532
    %v1541 = vadd.f32 %v1517, %v1533
    %v1542 = vadd.f32 %v1518, %v1534
    %v1543 = vadd.f32 %v1519, %v1535
    %v1544 = vadd.f32 %v1520, %v1528
    %v1545 = vadd.f32 %v1521, %v1529
    %v1546 = vadd.f32 %v1522, %v1530
    %v1547 = vadd.f32 %v1523, %v1531
    %v1548 = vadd.f32 %v1524, %v1532
    %v1549 = vadd.f32 %v1525, %v1533
    %v1550 = vadd.f32 %v1526, %v1534
    %v1551 = vadd.f32 %v1527, %v1535
    %v1552 = vsel %vm939, %v1536, -inf
    %1553 = vmax.xlane.f32.xlu0 %v1552
    %v1554 = vpop.xlane.xlu0 %1553
    %v1555 = vsel %vm939, %v1537, -inf
    %1556 = vmax.xlane.f32.xlu0 %v1555
    %v1557 = vpop.xlane.xlu0 %1556
    %v1558 = vsel %vm939, %v1538, -inf
    %1559 = vmax.xlane.f32.xlu0 %v1558
    %v1560 = vpop.xlane.xlu0 %1559
    %v1561 = vsel %vm939, %v1539, -inf
    %1562 = vmax.xlane.f32.xlu0 %v1561
    %v1563 = vpop.xlane.xlu0 %1562
    %v1564 = vsel %vm939, %v1540, -inf
    %1565 = vmax.xlane.f32.xlu0 %v1564
    %v1566 = vpop.xlane.xlu0 %1565
    %v1567 = vsel %vm939, %v1541, -inf
    %1568 = vmax.xlane.f32.xlu0 %v1567
    %v1569 = vpop.xlane.xlu0 %1568
    %v1570 = vsel %vm939, %v1542, -inf
    %1571 = vmax.xlane.f32.xlu0 %v1570
    %v1572 = vpop.xlane.xlu0 %1571
    %v1573 = vsel %vm939, %v1543, -inf
    %1574 = vmax.xlane.f32.xlu0 %v1573
    %v1575 = vpop.xlane.xlu0 %1574
    %v1576 = vsel %vm939, %v1544, -inf
    %1577 = vmax.xlane.f32.xlu0 %v1576
    %v1578 = vpop.xlane.xlu0 %1577
    %v1579 = vsel %vm939, %v1545, -inf
    %1580 = vmax.xlane.f32.xlu0 %v1579
    %v1581 = vpop.xlane.xlu0 %1580
    %v1582 = vsel %vm939, %v1546, -inf
    %1583 = vmax.xlane.f32.xlu0 %v1582
    %v1584 = vpop.xlane.xlu0 %1583
    %v1585 = vsel %vm939, %v1547, -inf
    %1586 = vmax.xlane.f32.xlu0 %v1585
    %v1587 = vpop.xlane.xlu0 %1586
    %v1588 = vsel %vm939, %v1548, -inf
    %1589 = vmax.xlane.f32.xlu0 %v1588
    %v1590 = vpop.xlane.xlu0 %1589
    %v1591 = vsel %vm939, %v1549, -inf
    %1592 = vmax.xlane.f32.xlu0 %v1591
    %v1593 = vpop.xlane.xlu0 %1592
    %v1594 = vsel %vm939, %v1550, -inf
    %1595 = vmax.xlane.f32.xlu0 %v1594
    %v1596 = vpop.xlane.xlu0 %1595
    %v1597 = vsel %vm939, %v1551, -inf
    %1598 = vmax.xlane.f32.xlu0 %v1597
    %v1599 = vpop.xlane.xlu0 %1598
    %v1600 = vsub.f32 %v1536, %v1554
    %v1601 = vsub.f32 %v1537, %v1557
    %v1602 = vsub.f32 %v1538, %v1560
    %v1603 = vsub.f32 %v1539, %v1563
    %v1604 = vsub.f32 %v1540, %v1566
    %v1605 = vsub.f32 %v1541, %v1569
    %v1606 = vsub.f32 %v1542, %v1572
    %v1607 = vsub.f32 %v1543, %v1575
    %v1608 = vsub.f32 %v1544, %v1578
    %v1609 = vsub.f32 %v1545, %v1581
    %v1610 = vsub.f32 %v1546, %v1584
    %v1611 = vsub.f32 %v1547, %v1587
    %v1612 = vsub.f32 %v1548, %v1590
    %v1613 = vsub.f32 %v1549, %v1593
    %v1614 = vsub.f32 %v1550, %v1596
    %v1615 = vsub.f32 %v1551, %v1599
    %v1616 = vmul.f32 %v1600, 1.442695
    %v1617 = vpow.pop %v1616
    %v1618 = vmul.f32 %v1601, 1.442695
    %v1619 = vpow.pop %v1618
    %v1620 = vmul.f32 %v1602, 1.442695
    %v1621 = vpow.pop %v1620
    %v1622 = vmul.f32 %v1603, 1.442695
    %v1623 = vpow.pop %v1622
    %v1624 = vmul.f32 %v1604, 1.442695
    %v1625 = vpow.pop %v1624
    %v1626 = vmul.f32 %v1605, 1.442695
    %v1627 = vpow.pop %v1626
    %v1628 = vmul.f32 %v1606, 1.442695
    %v1629 = vpow.pop %v1628
    %v1630 = vmul.f32 %v1607, 1.442695
    %v1631 = vpow.pop %v1630
    %v1632 = vmul.f32 %v1608, 1.442695
    %v1633 = vpow.pop %v1632
    %v1634 = vmul.f32 %v1609, 1.442695
    %v1635 = vpow.pop %v1634
    %v1636 = vmul.f32 %v1610, 1.442695
    %v1637 = vpow.pop %v1636
    %v1638 = vmul.f32 %v1611, 1.442695
    %v1639 = vpow.pop %v1638
    %v1640 = vmul.f32 %v1612, 1.442695
    %v1641 = vpow.pop %v1640
    %v1642 = vmul.f32 %v1613, 1.442695
    %v1643 = vpow.pop %v1642
    %v1644 = vmul.f32 %v1614, 1.442695
    %v1645 = vpow.pop %v1644
    %v1646 = vmul.f32 %v1615, 1.442695
    %v1647 = vpow.pop %v1646
    %v1648 = vsel %vm939, %v1617, 0.0
    %1649 = vadd.xlane.f32.xlu0 %v1648
    %v1650 = vpop.xlane.xlu0 %1649
    %v1651 = vsel %vm939, %v1619, 0.0
    %1652 = vadd.xlane.f32.xlu0 %v1651
    %v1653 = vpop.xlane.xlu0 %1652
    %v1654 = vsel %vm939, %v1621, 0.0
    %1655 = vadd.xlane.f32.xlu0 %v1654
    %v1656 = vpop.xlane.xlu0 %1655
    %v1657 = vsel %vm939, %v1623, 0.0
    %1658 = vadd.xlane.f32.xlu0 %v1657
    %v1659 = vpop.xlane.xlu0 %1658
    %v1660 = vsel %vm939, %v1625, 0.0
    %1661 = vadd.xlane.f32.xlu0 %v1660
    %v1662 = vpop.xlane.xlu0 %1661
    %v1663 = vsel %vm939, %v1627, 0.0
    %1664 = vadd.xlane.f32.xlu0 %v1663
    %v1665 = vpop.xlane.xlu0 %1664
    %v1666 = vsel %vm939, %v1629, 0.0
    %1667 = vadd.xlane.f32.xlu0 %v1666
    %v1668 = vpop.xlane.xlu0 %1667
    %v1669 = vsel %vm939, %v1631, 0.0
    %1670 = vadd.xlane.f32.xlu0 %v1669
    %v1671 = vpop.xlane.xlu0 %1670
    %v1672 = vsel %vm939, %v1633, 0.0
    %1673 = vadd.xlane.f32.xlu0 %v1672
    %v1674 = vpop.xlane.xlu0 %1673
    %v1675 = vsel %vm939, %v1635, 0.0
    %1676 = vadd.xlane.f32.xlu0 %v1675
    %v1677 = vpop.xlane.xlu0 %1676
    %v1678 = vsel %vm939, %v1637, 0.0
    %1679 = vadd.xlane.f32.xlu0 %v1678
    %v1680 = vpop.xlane.xlu0 %1679
    %v1681 = vsel %vm939, %v1639, 0.0
    %1682 = vadd.xlane.f32.xlu0 %v1681
    %v1683 = vpop.xlane.xlu0 %1682
    %v1684 = vsel %vm939, %v1641, 0.0
    %1685 = vadd.xlane.f32.xlu0 %v1684
    %v1686 = vpop.xlane.xlu0 %1685
    %v1687 = vsel %vm939, %v1643, 0.0
    %1688 = vadd.xlane.f32.xlu0 %v1687
    %v1689 = vpop.xlane.xlu0 %1688
    %v1690 = vsel %vm939, %v1645, 0.0
    %1691 = vadd.xlane.f32.xlu0 %v1690
    %v1692 = vpop.xlane.xlu0 %1691
    %v1693 = vsel %vm939, %v1647, 0.0
    %1694 = vadd.xlane.f32.xlu0 %v1693
    %v1695 = vpop.xlane.xlu0 %1694
    %v1696 = vrcp.pop %v1650
    %v1697 = vrcp.pop %v1653
    %v1698 = vrcp.pop %v1656
    %v1699 = vrcp.pop %v1659
    %v1700 = vrcp.pop %v1662
    %v1701 = vrcp.pop %v1665
    %v1702 = vrcp.pop %v1668
    %v1703 = vrcp.pop %v1671
    %v1704 = vrcp.pop %v1674
    %v1705 = vrcp.pop %v1677
    %v1706 = vrcp.pop %v1680
    %v1707 = vrcp.pop %v1683
    %v1708 = vrcp.pop %v1686
    %v1709 = vrcp.pop %v1689
    %v1710 = vrcp.pop %v1692
    %v1711 = vrcp.pop %v1695
    %v1712 = vmul.f32 %v1617, %v1696
    %v1713 = vmul.f32 %v1619, %v1697
    %v1714 = vmul.f32 %v1621, %v1698
    %v1715 = vmul.f32 %v1623, %v1699
    %v1716 = vmul.f32 %v1625, %v1700
    %v1717 = vmul.f32 %v1627, %v1701
    %v1718 = vmul.f32 %v1629, %v1702
    %v1719 = vmul.f32 %v1631, %v1703
    %v1720 = vmul.f32 %v1633, %v1704
    %v1721 = vmul.f32 %v1635, %v1705
    %v1722 = vmul.f32 %v1637, %v1706
    %v1723 = vmul.f32 %v1639, %v1707
    %v1724 = vmul.f32 %v1641, %v1708
    %v1725 = vmul.f32 %v1643, %v1709
    %v1726 = vmul.f32 %v1645, %v1710
    %v1727 = vmul.f32 %v1647, %v1711
    %v1728 = vpack.c.bf16 %v1713, %v1712
    %v1729 = vpack.c.bf16 %v1715, %v1714
    %v1730 = vpack.c.bf16 %v1717, %v1716
    %v1731 = vpack.c.bf16 %v1719, %v1718
    %v1732 = vpack.c.bf16 %v1721, %v1720
    %v1733 = vpack.c.bf16 %v1723, %v1722
    %v1734 = vpack.c.bf16 %v1725, %v1724
    %v1735 = vpack.c.bf16 %v1727, %v1726
    %1740 = vrot.lane.b32.xlu0 %v623, 96
    %v1741 = vpop.permute.xlu0 %1740
    %1742 = vrot.lane.b32.xlu0 %v626, 96
    %v1743 = vpop.permute.xlu0 %1742
    %1744 = vrot.lane.b32.xlu0 %v629, 96
    %v1745 = vpop.permute.xlu0 %1744
    %1746 = vrot.lane.b32.xlu0 %v632, 96
    %v1747 = vpop.permute.xlu0 %1746
    %v1753 = vsel %vm939, %v1728, 0
    %v1756 = vsel %vm939, %v1729, 0
    %v1759 = vsel %vm939, %v1730, 0
    %v1762 = vsel %vm939, %v1731, 0
    %1764 = vmatprep.subr.bf16.mxu0 0
    %1765 = vmatpush1.bf16.msra.mxu0 %v1741
    %1766 = vmatprep.subr.bf16.mxu0 0
    %1767 = vmatpush1.bf16.msra.mxu0 %v1743
    %1768 = vmatprep.subr.bf16.mxu0 0
    %1769 = vmatpush1.bf16.msra.mxu0 %v1745
    %1770 = vmatprep.subr.bf16.mxu0 0
    %1771 = vmatpush1.bf16.msra.mxu0 %v1747
    %1772 = vmatprep.subr.bf16.mxu0 0
    %1773 = vmatpush1.bf16.msra.mxu0 0
    %1774 = vmatprep.subr.bf16.mxu0 0
    %1775 = vmatpush1.bf16.msra.mxu0 0
    %1776 = vmatprep.subr.bf16.mxu0 0
    %1777 = vmatpush1.bf16.msra.mxu0 0
    %1778 = vmatprep.subr.bf16.mxu0 0
    %1779 = vmatpush1.bf16.msra.mxu0 0
    %1780 = vmatprep.subr.bf16.mxu0 0
    %1781 = vmatpush1.bf16.msra.mxu0 0
    %1782 = vmatprep.subr.bf16.mxu0 0
    %1783 = vmatpush1.bf16.msra.mxu0 0
    %1784 = vmatprep.subr.bf16.mxu0 0
    %1785 = vmatpush1.bf16.msra.mxu0 0
    %1786 = vmatprep.subr.bf16.mxu0 0
    %1787 = vmatpush1.bf16.msra.mxu0 0
    %1788 = vmatprep.subr.bf16.mxu0 0
    %1789 = vmatpush1.bf16.msra.mxu0 0
    %1790 = vmatprep.subr.bf16.mxu0 0
    %1791 = vmatpush1.bf16.msra.mxu0 0
    %1792 = vmatprep.subr.bf16.mxu0 0
    %1793 = vmatpush1.bf16.msra.mxu0 0
    %1794 = vmatprep.subr.bf16.mxu0 0
    %1795 = vmatpush1.bf16.msra.mxu0 0
    %1796 = vmatprep.mubr.bf16.mxu0 0
    %1797 = vmatmul.mubr.bf16.gmra.mrb[0].mxu0 %v1753
    %v1798 = vpop.f32.mrb[0].mxu0
    %v1799 = vadd.f32 0.0, %v1798
    %v1800 = vpop.f32.mrb[0].mxu0
    %v1801 = vpop.f32.mrb[0].mxu0
    %v1802 = vadd.f32 0.0, %v1801
    %v1803 = vpop.f32.mrb[0].mxu0
    %1804 = vmatprep.mubr.bf16.mxu0 0
    %1805 = vmatmul.mubr.bf16.gmra.mrb[0].mxu0 %v1756
    %v1806 = vpop.f32.mrb[0].mxu0
    %v1807 = vadd.f32 0.0, %v1806
    %v1808 = vpop.f32.mrb[0].mxu0
    %v1809 = vpop.f32.mrb[0].mxu0
    %v1810 = vadd.f32 0.0, %v1809
    %v1811 = vpop.f32.mrb[0].mxu0
    %1812 = vmatprep.mubr.bf16.mxu0 0
    %1813 = vmatmul.mubr.bf16.gmra.mrb[0].mxu0 %v1759
    %v1814 = vpop.f32.mrb[0].mxu0
    %v1815 = vadd.f32 0.0, %v1814
    %v1816 = vpop.f32.mrb[0].mxu0
    %v1817 = vpop.f32.mrb[0].mxu0
    %v1818 = vadd.f32 0.0, %v1817
    %v1819 = vpop.f32.mrb[0].mxu0
    %1820 = vmatprep.mubr.bf16.mxu0 0
    %1821 = vmatmul.mubr.bf16.gmra.mrb[0].mxu0 %v1762
    %v1822 = vpop.f32.mrb[0].mxu0
    %v1823 = vadd.f32 0.0, %v1822
    %v1824 = vpop.f32.mrb[0].mxu0
    %v1825 = vpop.f32.mrb[0].mxu0
    %v1826 = vadd.f32 0.0, %v1825
    %v1827 = vpop.f32.mrb[0].mxu0
    %1828 = vdwg.mxu0
    %1833 = vrot.lane.b32.xlu0 %v635, 96
    %v1834 = vpop.permute.xlu0 %1833
    %1835 = vrot.lane.b32.xlu0 %v638, 96
    %v1836 = vpop.permute.xlu0 %1835
    %1837 = vrot.lane.b32.xlu0 %v641, 96
    %v1838 = vpop.permute.xlu0 %1837
    %1839 = vrot.lane.b32.xlu0 %v644, 96
    %v1840 = vpop.permute.xlu0 %1839
    %v1846 = vsel %vm939, %v1732, 0
    %v1849 = vsel %vm939, %v1733, 0
    %v1852 = vsel %vm939, %v1734, 0
    %v1855 = vsel %vm939, %v1735, 0
    %1857 = vmatprep.subr.bf16.mxu0 0
    %1858 = vmatpush1.bf16.msra.mxu0 %v1834
    %1859 = vmatprep.subr.bf16.mxu0 0
    %1860 = vmatpush1.bf16.msra.mxu0 %v1836
    %1861 = vmatprep.subr.bf16.mxu0 0
    %1862 = vmatpush1.bf16.msra.mxu0 %v1838
    %1863 = vmatprep.subr.bf16.mxu0 0
    %1864 = vmatpush1.bf16.msra.mxu0 %v1840
    %1865 = vmatprep.subr.bf16.mxu0 0
    %1866 = vmatpush1.bf16.msra.mxu0 0
    %1867 = vmatprep.subr.bf16.mxu0 0
    %1868 = vmatpush1.bf16.msra.mxu0 0
    %1869 = vmatprep.subr.bf16.mxu0 0
    %1870 = vmatpush1.bf16.msra.mxu0 0
    %1871 = vmatprep.subr.bf16.mxu0 0
    %1872 = vmatpush1.bf16.msra.mxu0 0
    %1873 = vmatprep.subr.bf16.mxu0 0
    %1874 = vmatpush1.bf16.msra.mxu0 0
    %1875 = vmatprep.subr.bf16.mxu0 0
    %1876 = vmatpush1.bf16.msra.mxu0 0
    %1877 = vmatprep.subr.bf16.mxu0 0
    %1878 = vmatpush1.bf16.msra.mxu0 0
    %1879 = vmatprep.subr.bf16.mxu0 0
    %1880 = vmatpush1.bf16.msra.mxu0 0
    %1881 = vmatprep.subr.bf16.mxu0 0
    %1882 = vmatpush1.bf16.msra.mxu0 0
    %1883 = vmatprep.subr.bf16.mxu0 0
    %1884 = vmatpush1.bf16.msra.mxu0 0
    %1885 = vmatprep.subr.bf16.mxu0 0
    %1886 = vmatpush1.bf16.msra.mxu0 0
    %1887 = vmatprep.subr.bf16.mxu0 0
    %1888 = vmatpush1.bf16.msra.mxu0 0
    %1889 = vmatprep.mubr.bf16.mxu0 0
    %1890 = vmatmul.mubr.bf16.gmra.mrb[0].mxu0 %v1846
    %v1891 = vpop.f32.mrb[0].mxu0
    %v1892 = vadd.f32 0.0, %v1891
    %v1893 = vpop.f32.mrb[0].mxu0
    %v1894 = vpop.f32.mrb[0].mxu0
    %v1895 = vadd.f32 0.0, %v1894
    %v1896 = vpop.f32.mrb[0].mxu0
    %1897 = vmatprep.mubr.bf16.mxu0 0
    %1898 = vmatmul.mubr.bf16.gmra.mrb[0].mxu0 %v1849
    %v1899 = vpop.f32.mrb[0].mxu0
    %v1900 = vadd.f32 0.0, %v1899
    %v1901 = vpop.f32.mrb[0].mxu0
    %v1902 = vpop.f32.mrb[0].mxu0
    %v1903 = vadd.f32 0.0, %v1902
    %v1904 = vpop.f32.mrb[0].mxu0
    %1905 = vmatprep.mubr.bf16.mxu0 0
    %1906 = vmatmul.mubr.bf16.gmra.mrb[0].mxu0 %v1852
    %v1907 = vpop.f32.mrb[0].mxu0
    %v1908 = vadd.f32 0.0, %v1907
    %v1909 = vpop.f32.mrb[0].mxu0
    %v1910 = vpop.f32.mrb[0].mxu0
    %v1911 = vadd.f32 0.0, %v1910
    %v1912 = vpop.f32.mrb[0].mxu0
    %1913 = vmatprep.mubr.bf16.mxu0 0
    %1914 = vmatmul.mubr.bf16.gmra.mrb[0].mxu0 %v1855
    %v1915 = vpop.f32.mrb[0].mxu0
    %v1916 = vadd.f32 0.0, %v1915
    %v1917 = vpop.f32.mrb[0].mxu0
    %v1918 = vpop.f32.mrb[0].mxu0
    %v1919 = vadd.f32 0.0, %v1918
    %v1920 = vpop.f32.mrb[0].mxu0
    %1921 = vdwg.mxu0
    %v1922 = vpack.c.bf16 %v1802, %v1799
    %v1923 = vpack.c.bf16 %v1810, %v1807
    %v1924 = vpack.c.bf16 %v1818, %v1815
    %v1925 = vpack.c.bf16 %v1826, %v1823
    %v1926 = vpack.c.bf16 %v1895, %v1892
    %v1927 = vpack.c.bf16 %v1903, %v1900
    %v1928 = vpack.c.bf16 %v1911, %v1908
    %v1929 = vpack.c.bf16 %v1919, %v1916
    %1930 = vrot.lane.b32.xlu0 %v621, 64
    %v1931 = vpop.permute.xlu0 %1930
    %1932 = vrot.lane.b32.xlu0 %v624, 64
    %v1933 = vpop.permute.xlu0 %1932
    %1934 = vrot.lane.b32.xlu0 %v627, 64
    %v1935 = vpop.permute.xlu0 %1934
    %1936 = vrot.lane.b32.xlu0 %v630, 64
    %v1937 = vpop.permute.xlu0 %1936
    %1938 = vrot.lane.b32.xlu0 %v622, 64
    %v1939 = vpop.permute.xlu0 %1938
    %1940 = vrot.lane.b32.xlu0 %v625, 64
    %v1941 = vpop.permute.xlu0 %1940
    %1942 = vrot.lane.b32.xlu0 %v628, 64
    %v1943 = vpop.permute.xlu0 %1942
    %1944 = vrot.lane.b32.xlu0 %v631, 64
    %v1945 = vpop.permute.xlu0 %1944
    %v1947 = vsel %vm720, %v1931, 0
    %v1950 = vsel %vm720, %v1933, 0
    %v1953 = vsel %vm720, %v1935, 0
    %v1956 = vsel %vm720, %v1937, 0
    %v1959 = vsel %vm720, %v1939, 0
    %v1962 = vsel %vm720, %v1941, 0
    %v1965 = vsel %vm720, %v1943, 0
    %v1968 = vsel %vm720, %v1945, 0
    %1970 = vmatprep.subr.bf16.mxu0 0
    %1971 = vmatpush1.bf16.xpose.msra.mxu0 %v1959
    %1972 = vmatprep.subr.bf16.mxu0 0
    %1973 = vmatpush1.bf16.xpose.msra.mxu0 %v1962
    %1974 = vmatprep.subr.bf16.mxu0 0
    %1975 = vmatpush1.bf16.xpose.msra.mxu0 %v1965
    %1976 = vmatprep.subr.bf16.mxu0 0
    %1977 = vmatpush1.bf16.xpose.msra.mxu0 %v1968
    %1978 = vmatprep.subr.bf16.mxu0 0
    %1979 = vmatpush1.bf16.xpose.msra.mxu0 0
    %1980 = vmatprep.subr.bf16.mxu0 0
    %1981 = vmatpush1.bf16.xpose.msra.mxu0 0
    %1982 = vmatprep.subr.bf16.mxu0 0
    %1983 = vmatpush1.bf16.xpose.msra.mxu0 0
    %1984 = vmatprep.subr.bf16.mxu0 0
    %1985 = vmatpush1.bf16.xpose.msra.mxu0 0
    %1986 = vmatprep.subr.bf16.mxu0 0
    %1987 = vmatpush1.bf16.xpose.msra.mxu0 0
    %1988 = vmatprep.subr.bf16.mxu0 0
    %1989 = vmatpush1.bf16.xpose.msra.mxu0 0
    %1990 = vmatprep.subr.bf16.mxu0 0
    %1991 = vmatpush1.bf16.xpose.msra.mxu0 0
    %1992 = vmatprep.subr.bf16.mxu0 0
    %1993 = vmatpush1.bf16.xpose.msra.mxu0 0
    %1994 = vmatprep.subr.bf16.mxu0 0
    %1995 = vmatpush1.bf16.xpose.msra.mxu0 0
    %1996 = vmatprep.subr.bf16.mxu0 0
    %1997 = vmatpush1.bf16.xpose.msra.mxu0 0
    %1998 = vmatprep.subr.bf16.mxu0 0
    %1999 = vmatpush1.bf16.xpose.msra.mxu0 0
    %2000 = vmatprep.subr.bf16.mxu0 0
    %2001 = vmatpush1.bf16.xpose.msra.mxu0 0
    %2002 = vmatprep.mubr.bf16.mxu0 0
    %2003 = vmatmul.mubr.bf16.gmra.mrb[0].mxu0 %v1947
    %v2004 = vpop.f32.mrb[0].mxu0
    %v2005 = vadd.f32 0.0, %v2004
    %v2006 = vpop.f32.mrb[0].mxu0
    %v2007 = vpop.f32.mrb[0].mxu0
    %v2008 = vadd.f32 0.0, %v2007
    %v2009 = vpop.f32.mrb[0].mxu0
    %2010 = vmatprep.mubr.bf16.mxu0 0
    %2011 = vmatmul.mubr.bf16.gmra.mrb[0].mxu0 %v1950
    %v2012 = vpop.f32.mrb[0].mxu0
    %v2013 = vadd.f32 0.0, %v2012
    %v2014 = vpop.f32.mrb[0].mxu0
    %v2015 = vpop.f32.mrb[0].mxu0
    %v2016 = vadd.f32 0.0, %v2015
    %v2017 = vpop.f32.mrb[0].mxu0
    %2018 = vmatprep.mubr.bf16.mxu0 0
    %2019 = vmatmul.mubr.bf16.gmra.mrb[0].mxu0 %v1953
    %v2020 = vpop.f32.mrb[0].mxu0
    %v2021 = vadd.f32 0.0, %v2020
    %v2022 = vpop.f32.mrb[0].mxu0
    %v2023 = vpop.f32.mrb[0].mxu0
    %v2024 = vadd.f32 0.0, %v2023
    %v2025 = vpop.f32.mrb[0].mxu0
    %2026 = vmatprep.mubr.bf16.mxu0 0
    %2027 = vmatmul.mubr.bf16.gmra.mrb[0].mxu0 %v1956
    %v2028 = vpop.f32.mrb[0].mxu0
    %v2029 = vadd.f32 0.0, %v2028
    %v2030 = vpop.f32.mrb[0].mxu0
    %v2031 = vpop.f32.mrb[0].mxu0
    %v2032 = vadd.f32 0.0, %v2031
    %v2033 = vpop.f32.mrb[0].mxu0
    %2034 = vdwg.mxu0
    %2035 = vrot.lane.b32.xlu0 %v633, 64
    %v2036 = vpop.permute.xlu0 %2035
    %2037 = vrot.lane.b32.xlu0 %v636, 64
    %v2038 = vpop.permute.xlu0 %2037
    %2039 = vrot.lane.b32.xlu0 %v639, 64
    %v2040 = vpop.permute.xlu0 %2039
    %2041 = vrot.lane.b32.xlu0 %v642, 64
    %v2042 = vpop.permute.xlu0 %2041
    %2043 = vrot.lane.b32.xlu0 %v634, 64
    %v2044 = vpop.permute.xlu0 %2043
    %2045 = vrot.lane.b32.xlu0 %v637, 64
    %v2046 = vpop.permute.xlu0 %2045
    %2047 = vrot.lane.b32.xlu0 %v640, 64
    %v2048 = vpop.permute.xlu0 %2047
    %2049 = vrot.lane.b32.xlu0 %v643, 64
    %v2050 = vpop.permute.xlu0 %2049
    %v2052 = vsel %vm720, %v2036, 0
    %v2055 = vsel %vm720, %v2038, 0
    %v2058 = vsel %vm720, %v2040, 0
    %v2061 = vsel %vm720, %v2042, 0
    %v2064 = vsel %vm720, %v2044, 0
    %v2067 = vsel %vm720, %v2046, 0
    %v2070 = vsel %vm720, %v2048, 0
    %v2073 = vsel %vm720, %v2050, 0
    %2075 = vmatprep.subr.bf16.mxu0 0
    %2076 = vmatpush1.bf16.xpose.msra.mxu0 %v2064
    %2077 = vmatprep.subr.bf16.mxu0 0
    %2078 = vmatpush1.bf16.xpose.msra.mxu0 %v2067
    %2079 = vmatprep.subr.bf16.mxu0 0
    %2080 = vmatpush1.bf16.xpose.msra.mxu0 %v2070
    %2081 = vmatprep.subr.bf16.mxu0 0
    %2082 = vmatpush1.bf16.xpose.msra.mxu0 %v2073
    %2083 = vmatprep.subr.bf16.mxu0 0
    %2084 = vmatpush1.bf16.xpose.msra.mxu0 0
    %2085 = vmatprep.subr.bf16.mxu0 0
    %2086 = vmatpush1.bf16.xpose.msra.mxu0 0
    %2087 = vmatprep.subr.bf16.mxu0 0
    %2088 = vmatpush1.bf16.xpose.msra.mxu0 0
    %2089 = vmatprep.subr.bf16.mxu0 0
    %2090 = vmatpush1.bf16.xpose.msra.mxu0 0
    %2091 = vmatprep.subr.bf16.mxu0 0
    %2092 = vmatpush1.bf16.xpose.msra.mxu0 0
    %2093 = vmatprep.subr.bf16.mxu0 0
    %2094 = vmatpush1.bf16.xpose.msra.mxu0 0
    %2095 = vmatprep.subr.bf16.mxu0 0
    %2096 = vmatpush1.bf16.xpose.msra.mxu0 0
    %2097 = vmatprep.subr.bf16.mxu0 0
    %2098 = vmatpush1.bf16.xpose.msra.mxu0 0
    %2099 = vmatprep.subr.bf16.mxu0 0
    %2100 = vmatpush1.bf16.xpose.msra.mxu0 0
    %2101 = vmatprep.subr.bf16.mxu0 0
    %2102 = vmatpush1.bf16.xpose.msra.mxu0 0
    %2103 = vmatprep.subr.bf16.mxu0 0
    %2104 = vmatpush1.bf16.xpose.msra.mxu0 0
    %2105 = vmatprep.subr.bf16.mxu0 0
    %2106 = vmatpush1.bf16.xpose.msra.mxu0 0
    %2107 = vmatprep.mubr.bf16.mxu0 0
    %2108 = vmatmul.mubr.bf16.gmra.mrb[0].mxu0 %v2052
    %v2109 = vpop.f32.mrb[0].mxu0
    %v2110 = vadd.f32 0.0, %v2109
    %v2111 = vpop.f32.mrb[0].mxu0
    %v2112 = vpop.f32.mrb[0].mxu0
    %v2113 = vadd.f32 0.0, %v2112
    %v2114 = vpop.f32.mrb[0].mxu0
    %2115 = vmatprep.mubr.bf16.mxu0 0
    %2116 = vmatmul.mubr.bf16.gmra.mrb[0].mxu0 %v2055
    %v2117 = vpop.f32.mrb[0].mxu0
    %v2118 = vadd.f32 0.0, %v2117
    %v2119 = vpop.f32.mrb[0].mxu0
    %v2120 = vpop.f32.mrb[0].mxu0
    %v2121 = vadd.f32 0.0, %v2120
    %v2122 = vpop.f32.mrb[0].mxu0
    %2123 = vmatprep.mubr.bf16.mxu0 0
    %2124 = vmatmul.mubr.bf16.gmra.mrb[0].mxu0 %v2058
    %v2125 = vpop.f32.mrb[0].mxu0
    %v2126 = vadd.f32 0.0, %v2125
    %v2127 = vpop.f32.mrb[0].mxu0
    %v2128 = vpop.f32.mrb[0].mxu0
    %v2129 = vadd.f32 0.0, %v2128
    %v2130 = vpop.f32.mrb[0].mxu0
    %2131 = vmatprep.mubr.bf16.mxu0 0
    %2132 = vmatmul.mubr.bf16.gmra.mrb[0].mxu0 %v2061
    %v2133 = vpop.f32.mrb[0].mxu0
    %v2134 = vadd.f32 0.0, %v2133
    %v2135 = vpop.f32.mrb[0].mxu0
    %v2136 = vpop.f32.mrb[0].mxu0
    %v2137 = vadd.f32 0.0, %v2136
    %v2138 = vpop.f32.mrb[0].mxu0
    %2139 = vdwg.mxu0
    %v2140 = vmul.f32 %v2005, 0.17677669
    %v2141 = vmul.f32 %v2008, 0.17677669
    %v2142 = vmul.f32 %v2013, 0.17677669
    %v2143 = vmul.f32 %v2016, 0.17677669
    %v2144 = vmul.f32 %v2021, 0.17677669
    %v2145 = vmul.f32 %v2024, 0.17677669
    %v2146 = vmul.f32 %v2029, 0.17677669
    %v2147 = vmul.f32 %v2032, 0.17677669
    %v2148 = vmul.f32 %v2110, 0.17677669
    %v2149 = vmul.f32 %v2113, 0.17677669
    %v2150 = vmul.f32 %v2118, 0.17677669
    %v2151 = vmul.f32 %v2121, 0.17677669
    %v2152 = vmul.f32 %v2126, 0.17677669
    %v2153 = vmul.f32 %v2129, 0.17677669
    %v2154 = vmul.f32 %v2134, 0.17677669
    %v2155 = vmul.f32 %v2137, 0.17677669
    %v2156 = vmul.f32 %v712, 0.019686267
    %v2157 = vmul.f32 %v713, 0.019686267
    %v2158 = vmul.f32 %v714, 0.019686267
    %v2159 = vmul.f32 %v715, 0.019686267
    %v2160 = vmul.f32 %v716, 0.019686267
    %v2161 = vmul.f32 %v717, 0.019686267
    %v2162 = vmul.f32 %v718, 0.019686267
    %v2163 = vmul.f32 %v719, 0.019686267
    %v2164 = vadd.f32 %v2140, %v2156
    %v2165 = vadd.f32 %v2141, %v2157
    %v2166 = vadd.f32 %v2142, %v2158
    %v2167 = vadd.f32 %v2143, %v2159
    %v2168 = vadd.f32 %v2144, %v2160
    %v2169 = vadd.f32 %v2145, %v2161
    %v2170 = vadd.f32 %v2146, %v2162
    %v2171 = vadd.f32 %v2147, %v2163
    %v2172 = vadd.f32 %v2148, %v2156
    %v2173 = vadd.f32 %v2149, %v2157
    %v2174 = vadd.f32 %v2150, %v2158
    %v2175 = vadd.f32 %v2151, %v2159
    %v2176 = vadd.f32 %v2152, %v2160
    %v2177 = vadd.f32 %v2153, %v2161
    %v2178 = vadd.f32 %v2154, %v2162
    %v2179 = vadd.f32 %v2155, %v2163
    %v2180 = vsel %vm939, %v2164, -inf
    %2181 = vmax.xlane.f32.xlu0 %v2180
    %v2182 = vpop.xlane.xlu0 %2181
    %v2183 = vsel %vm939, %v2165, -inf
    %2184 = vmax.xlane.f32.xlu0 %v2183
    %v2185 = vpop.xlane.xlu0 %2184
    %v2186 = vsel %vm939, %v2166, -inf
    %2187 = vmax.xlane.f32.xlu0 %v2186
    %v2188 = vpop.xlane.xlu0 %2187
    %v2189 = vsel %vm939, %v2167, -inf
    %2190 = vmax.xlane.f32.xlu0 %v2189
    %v2191 = vpop.xlane.xlu0 %2190
    %v2192 = vsel %vm939, %v2168, -inf
    %2193 = vmax.xlane.f32.xlu0 %v2192
    %v2194 = vpop.xlane.xlu0 %2193
    %v2195 = vsel %vm939, %v2169, -inf
    %2196 = vmax.xlane.f32.xlu0 %v2195
    %v2197 = vpop.xlane.xlu0 %2196
    %v2198 = vsel %vm939, %v2170, -inf
    %2199 = vmax.xlane.f32.xlu0 %v2198
    %v2200 = vpop.xlane.xlu0 %2199
    %v2201 = vsel %vm939, %v2171, -inf
    %2202 = vmax.xlane.f32.xlu0 %v2201
    %v2203 = vpop.xlane.xlu0 %2202
    %v2204 = vsel %vm939, %v2172, -inf
    %2205 = vmax.xlane.f32.xlu0 %v2204
    %v2206 = vpop.xlane.xlu0 %2205
    %v2207 = vsel %vm939, %v2173, -inf
    %2208 = vmax.xlane.f32.xlu0 %v2207
    %v2209 = vpop.xlane.xlu0 %2208
    %v2210 = vsel %vm939, %v2174, -inf
    %2211 = vmax.xlane.f32.xlu0 %v2210
    %v2212 = vpop.xlane.xlu0 %2211
    %v2213 = vsel %vm939, %v2175, -inf
    %2214 = vmax.xlane.f32.xlu0 %v2213
    %v2215 = vpop.xlane.xlu0 %2214
    %v2216 = vsel %vm939, %v2176, -inf
    %2217 = vmax.xlane.f32.xlu0 %v2216
    %v2218 = vpop.xlane.xlu0 %2217
    %v2219 = vsel %vm939, %v2177, -inf
    %2220 = vmax.xlane.f32.xlu0 %v2219
    %v2221 = vpop.xlane.xlu0 %2220
    %v2222 = vsel %vm939, %v2178, -inf
    %2223 = vmax.xlane.f32.xlu0 %v2222
    %v2224 = vpop.xlane.xlu0 %2223
    %v2225 = vsel %vm939, %v2179, -inf
    %2226 = vmax.xlane.f32.xlu0 %v2225
    %v2227 = vpop.xlane.xlu0 %2226
    %v2228 = vsub.f32 %v2164, %v2182
    %v2229 = vsub.f32 %v2165, %v2185
    %v2230 = vsub.f32 %v2166, %v2188
    %v2231 = vsub.f32 %v2167, %v2191
    %v2232 = vsub.f32 %v2168, %v2194
    %v2233 = vsub.f32 %v2169, %v2197
    %v2234 = vsub.f32 %v2170, %v2200
    %v2235 = vsub.f32 %v2171, %v2203
    %v2236 = vsub.f32 %v2172, %v2206
    %v2237 = vsub.f32 %v2173, %v2209
    %v2238 = vsub.f32 %v2174, %v2212
    %v2239 = vsub.f32 %v2175, %v2215
    %v2240 = vsub.f32 %v2176, %v2218
    %v2241 = vsub.f32 %v2177, %v2221
    %v2242 = vsub.f32 %v2178, %v2224
    %v2243 = vsub.f32 %v2179, %v2227
    %v2244 = vmul.f32 %v2228, 1.442695
    %v2245 = vpow.pop %v2244
    %v2246 = vmul.f32 %v2229, 1.442695
    %v2247 = vpow.pop %v2246
    %v2248 = vmul.f32 %v2230, 1.442695
    %v2249 = vpow.pop %v2248
    %v2250 = vmul.f32 %v2231, 1.442695
    %v2251 = vpow.pop %v2250
    %v2252 = vmul.f32 %v2232, 1.442695
    %v2253 = vpow.pop %v2252
    %v2254 = vmul.f32 %v2233, 1.442695
    %v2255 = vpow.pop %v2254
    %v2256 = vmul.f32 %v2234, 1.442695
    %v2257 = vpow.pop %v2256
    %v2258 = vmul.f32 %v2235, 1.442695
    %v2259 = vpow.pop %v2258
    %v2260 = vmul.f32 %v2236, 1.442695
    %v2261 = vpow.pop %v2260
    %v2262 = vmul.f32 %v2237, 1.442695
    %v2263 = vpow.pop %v2262
    %v2264 = vmul.f32 %v2238, 1.442695
    %v2265 = vpow.pop %v2264
    %v2266 = vmul.f32 %v2239, 1.442695
    %v2267 = vpow.pop %v2266
    %v2268 = vmul.f32 %v2240, 1.442695
    %v2269 = vpow.pop %v2268
    %v2270 = vmul.f32 %v2241, 1.442695
    %v2271 = vpow.pop %v2270
    %v2272 = vmul.f32 %v2242, 1.442695
    %v2273 = vpow.pop %v2272
    %v2274 = vmul.f32 %v2243, 1.442695
    %v2275 = vpow.pop %v2274
    %v2276 = vsel %vm939, %v2245, 0.0
    %2277 = vadd.xlane.f32.xlu0 %v2276
    %v2278 = vpop.xlane.xlu0 %2277
    %v2279 = vsel %vm939, %v2247, 0.0
    %2280 = vadd.xlane.f32.xlu0 %v2279
    %v2281 = vpop.xlane.xlu0 %2280
    %v2282 = vsel %vm939, %v2249, 0.0
    %2283 = vadd.xlane.f32.xlu0 %v2282
    %v2284 = vpop.xlane.xlu0 %2283
    %v2285 = vsel %vm939, %v2251, 0.0
    %2286 = vadd.xlane.f32.xlu0 %v2285
    %v2287 = vpop.xlane.xlu0 %2286
    %v2288 = vsel %vm939, %v2253, 0.0
    %2289 = vadd.xlane.f32.xlu0 %v2288
    %v2290 = vpop.xlane.xlu0 %2289
    %v2291 = vsel %vm939, %v2255, 0.0
    %2292 = vadd.xlane.f32.xlu0 %v2291
    %v2293 = vpop.xlane.xlu0 %2292
    %v2294 = vsel %vm939, %v2257, 0.0
    %2295 = vadd.xlane.f32.xlu0 %v2294
    %v2296 = vpop.xlane.xlu0 %2295
    %v2297 = vsel %vm939, %v2259, 0.0
    %2298 = vadd.xlane.f32.xlu0 %v2297
    %v2299 = vpop.xlane.xlu0 %2298
    %v2300 = vsel %vm939, %v2261, 0.0
    %2301 = vadd.xlane.f32.xlu0 %v2300
    %v2302 = vpop.xlane.xlu0 %2301
    %v2303 = vsel %vm939, %v2263, 0.0
    %2304 = vadd.xlane.f32.xlu0 %v2303
    %v2305 = vpop.xlane.xlu0 %2304
    %v2306 = vsel %vm939, %v2265, 0.0
    %2307 = vadd.xlane.f32.xlu0 %v2306
    %v2308 = vpop.xlane.xlu0 %2307
    %v2309 = vsel %vm939, %v2267, 0.0
    %2310 = vadd.xlane.f32.xlu0 %v2309
    %v2311 = vpop.xlane.xlu0 %2310
    %v2312 = vsel %vm939, %v2269, 0.0
    %2313 = vadd.xlane.f32.xlu0 %v2312
    %v2314 = vpop.xlane.xlu0 %2313
    %v2315 = vsel %vm939, %v2271, 0.0
    %2316 = vadd.xlane.f32.xlu0 %v2315
    %v2317 = vpop.xlane.xlu0 %2316
    %v2318 = vsel %vm939, %v2273, 0.0
    %2319 = vadd.xlane.f32.xlu0 %v2318
    %v2320 = vpop.xlane.xlu0 %2319
    %v2321 = vsel %vm939, %v2275, 0.0
    %2322 = vadd.xlane.f32.xlu0 %v2321
    %v2323 = vpop.xlane.xlu0 %2322
    %v2324 = vrcp.pop %v2278
    %v2325 = vrcp.pop %v2281
    %v2326 = vrcp.pop %v2284
    %v2327 = vrcp.pop %v2287
    %v2328 = vrcp.pop %v2290
    %v2329 = vrcp.pop %v2293
    %v2330 = vrcp.pop %v2296
    %v2331 = vrcp.pop %v2299
    %v2332 = vrcp.pop %v2302
    %v2333 = vrcp.pop %v2305
    %v2334 = vrcp.pop %v2308
    %v2335 = vrcp.pop %v2311
    %v2336 = vrcp.pop %v2314
    %v2337 = vrcp.pop %v2317
    %v2338 = vrcp.pop %v2320
    %v2339 = vrcp.pop %v2323
    %v2340 = vmul.f32 %v2245, %v2324
    %v2341 = vmul.f32 %v2247, %v2325
    %v2342 = vmul.f32 %v2249, %v2326
    %v2343 = vmul.f32 %v2251, %v2327
    %v2344 = vmul.f32 %v2253, %v2328
    %v2345 = vmul.f32 %v2255, %v2329
    %v2346 = vmul.f32 %v2257, %v2330
    %v2347 = vmul.f32 %v2259, %v2331
    %v2348 = vmul.f32 %v2261, %v2332
    %v2349 = vmul.f32 %v2263, %v2333
    %v2350 = vmul.f32 %v2265, %v2334
    %v2351 = vmul.f32 %v2267, %v2335
    %v2352 = vmul.f32 %v2269, %v2336
    %v2353 = vmul.f32 %v2271, %v2337
    %v2354 = vmul.f32 %v2273, %v2338
    %v2355 = vmul.f32 %v2275, %v2339
    %v2356 = vpack.c.bf16 %v2341, %v2340
    %v2357 = vpack.c.bf16 %v2343, %v2342
    %v2358 = vpack.c.bf16 %v2345, %v2344
    %v2359 = vpack.c.bf16 %v2347, %v2346
    %v2360 = vpack.c.bf16 %v2349, %v2348
    %v2361 = vpack.c.bf16 %v2351, %v2350
    %v2362 = vpack.c.bf16 %v2353, %v2352
    %v2363 = vpack.c.bf16 %v2355, %v2354
    %2364 = vrot.lane.b32.xlu0 %v623, 64
    %v2365 = vpop.permute.xlu0 %2364
    %2366 = vrot.lane.b32.xlu0 %v626, 64
    %v2367 = vpop.permute.xlu0 %2366
    %2368 = vrot.lane.b32.xlu0 %v629, 64
    %v2369 = vpop.permute.xlu0 %2368
    %2370 = vrot.lane.b32.xlu0 %v632, 64
    %v2371 = vpop.permute.xlu0 %2370
    %v2377 = vsel %vm939, %v2356, 0
    %v2380 = vsel %vm939, %v2357, 0
    %v2383 = vsel %vm939, %v2358, 0
    %v2386 = vsel %vm939, %v2359, 0
    %2388 = vmatprep.subr.bf16.mxu0 0
    %2389 = vmatpush1.bf16.msra.mxu0 %v2365
    %2390 = vmatprep.subr.bf16.mxu0 0
    %2391 = vmatpush1.bf16.msra.mxu0 %v2367
    %2392 = vmatprep.subr.bf16.mxu0 0
    %2393 = vmatpush1.bf16.msra.mxu0 %v2369
    %2394 = vmatprep.subr.bf16.mxu0 0
    %2395 = vmatpush1.bf16.msra.mxu0 %v2371
    %2396 = vmatprep.subr.bf16.mxu0 0
    %2397 = vmatpush1.bf16.msra.mxu0 0
    %2398 = vmatprep.subr.bf16.mxu0 0
    %2399 = vmatpush1.bf16.msra.mxu0 0
    %2400 = vmatprep.subr.bf16.mxu0 0
    %2401 = vmatpush1.bf16.msra.mxu0 0
    %2402 = vmatprep.subr.bf16.mxu0 0
    %2403 = vmatpush1.bf16.msra.mxu0 0
    %2404 = vmatprep.subr.bf16.mxu0 0
    %2405 = vmatpush1.bf16.msra.mxu0 0
    %2406 = vmatprep.subr.bf16.mxu0 0
    %2407 = vmatpush1.bf16.msra.mxu0 0
    %2408 = vmatprep.subr.bf16.mxu0 0
    %2409 = vmatpush1.bf16.msra.mxu0 0
    %2410 = vmatprep.subr.bf16.mxu0 0
    %2411 = vmatpush1.bf16.msra.mxu0 0
    %2412 = vmatprep.subr.bf16.mxu0 0
    %2413 = vmatpush1.bf16.msra.mxu0 0
    %2414 = vmatprep.subr.bf16.mxu0 0
    %2415 = vmatpush1.bf16.msra.mxu0 0
    %2416 = vmatprep.subr.bf16.mxu0 0
    %2417 = vmatpush1.bf16.msra.mxu0 0
    %2418 = vmatprep.subr.bf16.mxu0 0
    %2419 = vmatpush1.bf16.msra.mxu0 0
    %2420 = vmatprep.mubr.bf16.mxu0 0
    %2421 = vmatmul.mubr.bf16.gmra.mrb[0].mxu0 %v2377
    %v2422 = vpop.f32.mrb[0].mxu0
    %v2423 = vadd.f32 0.0, %v2422
    %v2424 = vpop.f32.mrb[0].mxu0
    %v2425 = vpop.f32.mrb[0].mxu0
    %v2426 = vadd.f32 0.0, %v2425
    %v2427 = vpop.f32.mrb[0].mxu0
    %2428 = vmatprep.mubr.bf16.mxu0 0
    %2429 = vmatmul.mubr.bf16.gmra.mrb[0].mxu0 %v2380
    %v2430 = vpop.f32.mrb[0].mxu0
    %v2431 = vadd.f32 0.0, %v2430
    %v2432 = vpop.f32.mrb[0].mxu0
    %v2433 = vpop.f32.mrb[0].mxu0
    %v2434 = vadd.f32 0.0, %v2433
    %v2435 = vpop.f32.mrb[0].mxu0
    %2436 = vmatprep.mubr.bf16.mxu0 0
    %2437 = vmatmul.mubr.bf16.gmra.mrb[0].mxu0 %v2383
    %v2438 = vpop.f32.mrb[0].mxu0
    %v2439 = vadd.f32 0.0, %v2438
    %v2440 = vpop.f32.mrb[0].mxu0
    %v2441 = vpop.f32.mrb[0].mxu0
    %v2442 = vadd.f32 0.0, %v2441
    %v2443 = vpop.f32.mrb[0].mxu0
    %2444 = vmatprep.mubr.bf16.mxu0 0
    %2445 = vmatmul.mubr.bf16.gmra.mrb[0].mxu0 %v2386
    %v2446 = vpop.f32.mrb[0].mxu0
    %v2447 = vadd.f32 0.0, %v2446
    %v2448 = vpop.f32.mrb[0].mxu0
    %v2449 = vpop.f32.mrb[0].mxu0
    %v2450 = vadd.f32 0.0, %v2449
    %v2451 = vpop.f32.mrb[0].mxu0
    %2452 = vdwg.mxu0
    %2453 = vrot.lane.b32.xlu0 %v635, 64
    %v2454 = vpop.permute.xlu0 %2453
    %2455 = vrot.lane.b32.xlu0 %v638, 64
    %v2456 = vpop.permute.xlu0 %2455
    %2457 = vrot.lane.b32.xlu0 %v641, 64
    %v2458 = vpop.permute.xlu0 %2457
    %2459 = vrot.lane.b32.xlu0 %v644, 64
    %v2460 = vpop.permute.xlu0 %2459
    %v2466 = vsel %vm939, %v2360, 0
    %v2469 = vsel %vm939, %v2361, 0
    %v2472 = vsel %vm939, %v2362, 0
    %v2475 = vsel %vm939, %v2363, 0
    %2477 = vmatprep.subr.bf16.mxu0 0
    %2478 = vmatpush1.bf16.msra.mxu0 %v2454
    %2479 = vmatprep.subr.bf16.mxu0 0
    %2480 = vmatpush1.bf16.msra.mxu0 %v2456
    %2481 = vmatprep.subr.bf16.mxu0 0
    %2482 = vmatpush1.bf16.msra.mxu0 %v2458
    %2483 = vmatprep.subr.bf16.mxu0 0
    %2484 = vmatpush1.bf16.msra.mxu0 %v2460
    %2485 = vmatprep.subr.bf16.mxu0 0
    %2486 = vmatpush1.bf16.msra.mxu0 0
    %2487 = vmatprep.subr.bf16.mxu0 0
    %2488 = vmatpush1.bf16.msra.mxu0 0
    %2489 = vmatprep.subr.bf16.mxu0 0
    %2490 = vmatpush1.bf16.msra.mxu0 0
    %2491 = vmatprep.subr.bf16.mxu0 0
    %2492 = vmatpush1.bf16.msra.mxu0 0
    %2493 = vmatprep.subr.bf16.mxu0 0
    %2494 = vmatpush1.bf16.msra.mxu0 0
    %2495 = vmatprep.subr.bf16.mxu0 0
    %2496 = vmatpush1.bf16.msra.mxu0 0
    %2497 = vmatprep.subr.bf16.mxu0 0
    %2498 = vmatpush1.bf16.msra.mxu0 0
    %2499 = vmatprep.subr.bf16.mxu0 0
    %2500 = vmatpush1.bf16.msra.mxu0 0
    %2501 = vmatprep.subr.bf16.mxu0 0
    %2502 = vmatpush1.bf16.msra.mxu0 0
    %2503 = vmatprep.subr.bf16.mxu0 0
    %2504 = vmatpush1.bf16.msra.mxu0 0
    %2505 = vmatprep.subr.bf16.mxu0 0
    %2506 = vmatpush1.bf16.msra.mxu0 0
    %2507 = vmatprep.subr.bf16.mxu0 0
    %2508 = vmatpush1.bf16.msra.mxu0 0
    %2509 = vmatprep.mubr.bf16.mxu0 0
    %2510 = vmatmul.mubr.bf16.gmra.mrb[0].mxu0 %v2466
    %v2511 = vpop.f32.mrb[0].mxu0
    %v2512 = vadd.f32 0.0, %v2511
    %v2513 = vpop.f32.mrb[0].mxu0
    %v2514 = vpop.f32.mrb[0].mxu0
    %v2515 = vadd.f32 0.0, %v2514
    %v2516 = vpop.f32.mrb[0].mxu0
    %2517 = vmatprep.mubr.bf16.mxu0 0
    %2518 = vmatmul.mubr.bf16.gmra.mrb[0].mxu0 %v2469
    %v2519 = vpop.f32.mrb[0].mxu0
    %v2520 = vadd.f32 0.0, %v2519
    %v2521 = vpop.f32.mrb[0].mxu0
    %v2522 = vpop.f32.mrb[0].mxu0
    %v2523 = vadd.f32 0.0, %v2522
    %v2524 = vpop.f32.mrb[0].mxu0
    %2525 = vmatprep.mubr.bf16.mxu0 0
    %2526 = vmatmul.mubr.bf16.gmra.mrb[0].mxu0 %v2472
    %v2527 = vpop.f32.mrb[0].mxu0
    %v2528 = vadd.f32 0.0, %v2527
    %v2529 = vpop.f32.mrb[0].mxu0
    %v2530 = vpop.f32.mrb[0].mxu0
    %v2531 = vadd.f32 0.0, %v2530
    %v2532 = vpop.f32.mrb[0].mxu0
    %2533 = vmatprep.mubr.bf16.mxu0 0
    %2534 = vmatmul.mubr.bf16.gmra.mrb[0].mxu0 %v2475
    %v2535 = vpop.f32.mrb[0].mxu0
    %v2536 = vadd.f32 0.0, %v2535
    %v2537 = vpop.f32.mrb[0].mxu0
    %v2538 = vpop.f32.mrb[0].mxu0
    %v2539 = vadd.f32 0.0, %v2538
    %v2540 = vpop.f32.mrb[0].mxu0
    %2541 = vdwg.mxu0
    %v2542 = vpack.c.bf16 %v2426, %v2423
    %v2543 = vpack.c.bf16 %v2434, %v2431
    %v2544 = vpack.c.bf16 %v2442, %v2439
    %v2545 = vpack.c.bf16 %v2450, %v2447
    %v2546 = vpack.c.bf16 %v2515, %v2512
    %v2547 = vpack.c.bf16 %v2523, %v2520
    %v2548 = vpack.c.bf16 %v2531, %v2528
    %v2549 = vpack.c.bf16 %v2539, %v2536
    %2550 = vrot.lane.b32.xlu0 %v621, 32
    %v2551 = vpop.permute.xlu0 %2550
    %2552 = vrot.lane.b32.xlu0 %v624, 32
    %v2553 = vpop.permute.xlu0 %2552
    %2554 = vrot.lane.b32.xlu0 %v627, 32
    %v2555 = vpop.permute.xlu0 %2554
    %2556 = vrot.lane.b32.xlu0 %v630, 32
    %v2557 = vpop.permute.xlu0 %2556
    %2558 = vrot.lane.b32.xlu0 %v622, 32
    %v2559 = vpop.permute.xlu0 %2558
    %2560 = vrot.lane.b32.xlu0 %v625, 32
    %v2561 = vpop.permute.xlu0 %2560
    %2562 = vrot.lane.b32.xlu0 %v628, 32
    %v2563 = vpop.permute.xlu0 %2562
    %2564 = vrot.lane.b32.xlu0 %v631, 32
    %v2565 = vpop.permute.xlu0 %2564
    %v2567 = vsel %vm720, %v2551, 0
    %v2570 = vsel %vm720, %v2553, 0
    %v2573 = vsel %vm720, %v2555, 0
    %v2576 = vsel %vm720, %v2557, 0
    %v2579 = vsel %vm720, %v2559, 0
    %v2582 = vsel %vm720, %v2561, 0
    %v2585 = vsel %vm720, %v2563, 0
    %v2588 = vsel %vm720, %v2565, 0
    %2590 = vmatprep.subr.bf16.mxu0 0
    %2591 = vmatpush1.bf16.xpose.msra.mxu0 %v2579
    %2592 = vmatprep.subr.bf16.mxu0 0
    %2593 = vmatpush1.bf16.xpose.msra.mxu0 %v2582
    %2594 = vmatprep.subr.bf16.mxu0 0
    %2595 = vmatpush1.bf16.xpose.msra.mxu0 %v2585
    %2596 = vmatprep.subr.bf16.mxu0 0
    %2597 = vmatpush1.bf16.xpose.msra.mxu0 %v2588
    %2598 = vmatprep.subr.bf16.mxu0 0
    %2599 = vmatpush1.bf16.xpose.msra.mxu0 0
    %2600 = vmatprep.subr.bf16.mxu0 0
    %2601 = vmatpush1.bf16.xpose.msra.mxu0 0
    %2602 = vmatprep.subr.bf16.mxu0 0
    %2603 = vmatpush1.bf16.xpose.msra.mxu0 0
    %2604 = vmatprep.subr.bf16.mxu0 0
    %2605 = vmatpush1.bf16.xpose.msra.mxu0 0
    %2606 = vmatprep.subr.bf16.mxu0 0
    %2607 = vmatpush1.bf16.xpose.msra.mxu0 0
    %2608 = vmatprep.subr.bf16.mxu0 0
    %2609 = vmatpush1.bf16.xpose.msra.mxu0 0
    %2610 = vmatprep.subr.bf16.mxu0 0
    %2611 = vmatpush1.bf16.xpose.msra.mxu0 0
    %2612 = vmatprep.subr.bf16.mxu0 0
    %2613 = vmatpush1.bf16.xpose.msra.mxu0 0
    %2614 = vmatprep.subr.bf16.mxu0 0
    %2615 = vmatpush1.bf16.xpose.msra.mxu0 0
    %2616 = vmatprep.subr.bf16.mxu0 0
    %2617 = vmatpush1.bf16.xpose.msra.mxu0 0
    %2618 = vmatprep.subr.bf16.mxu0 0
    %2619 = vmatpush1.bf16.xpose.msra.mxu0 0
    %2620 = vmatprep.subr.bf16.mxu0 0
    %2621 = vmatpush1.bf16.xpose.msra.mxu0 0
    %2622 = vmatprep.mubr.bf16.mxu0 0
    %2623 = vmatmul.mubr.bf16.gmra.mrb[0].mxu0 %v2567
    %v2624 = vpop.f32.mrb[0].mxu0
    %v2625 = vadd.f32 0.0, %v2624
    %v2626 = vpop.f32.mrb[0].mxu0
    %v2627 = vpop.f32.mrb[0].mxu0
    %v2628 = vadd.f32 0.0, %v2627
    %v2629 = vpop.f32.mrb[0].mxu0
    %2630 = vmatprep.mubr.bf16.mxu0 0
    %2631 = vmatmul.mubr.bf16.gmra.mrb[0].mxu0 %v2570
    %v2632 = vpop.f32.mrb[0].mxu0
    %v2633 = vadd.f32 0.0, %v2632
    %v2634 = vpop.f32.mrb[0].mxu0
    %v2635 = vpop.f32.mrb[0].mxu0
    %v2636 = vadd.f32 0.0, %v2635
    %v2637 = vpop.f32.mrb[0].mxu0
    %2638 = vmatprep.mubr.bf16.mxu0 0
    %2639 = vmatmul.mubr.bf16.gmra.mrb[0].mxu0 %v2573
    %v2640 = vpop.f32.mrb[0].mxu0
    %v2641 = vadd.f32 0.0, %v2640
    %v2642 = vpop.f32.mrb[0].mxu0
    %v2643 = vpop.f32.mrb[0].mxu0
    %v2644 = vadd.f32 0.0, %v2643
    %v2645 = vpop.f32.mrb[0].mxu0
    %2646 = vmatprep.mubr.bf16.mxu0 0
    %2647 = vmatmul.mubr.bf16.gmra.mrb[0].mxu0 %v2576
    %v2648 = vpop.f32.mrb[0].mxu0
    %v2649 = vadd.f32 0.0, %v2648
    %v2650 = vpop.f32.mrb[0].mxu0
    %v2651 = vpop.f32.mrb[0].mxu0
    %v2652 = vadd.f32 0.0, %v2651
    %v2653 = vpop.f32.mrb[0].mxu0
    %2654 = vdwg.mxu0
    %2655 = vrot.lane.b32.xlu0 %v633, 32
    %v2656 = vpop.permute.xlu0 %2655
    %2657 = vrot.lane.b32.xlu0 %v636, 32
    %v2658 = vpop.permute.xlu0 %2657
    %2659 = vrot.lane.b32.xlu0 %v639, 32
    %v2660 = vpop.permute.xlu0 %2659
    %2661 = vrot.lane.b32.xlu0 %v642, 32
    %v2662 = vpop.permute.xlu0 %2661
    %2663 = vrot.lane.b32.xlu0 %v634, 32
    %v2664 = vpop.permute.xlu0 %2663
    %2665 = vrot.lane.b32.xlu0 %v637, 32
    %v2666 = vpop.permute.xlu0 %2665
    %2667 = vrot.lane.b32.xlu0 %v640, 32
    %v2668 = vpop.permute.xlu0 %2667
    %2669 = vrot.lane.b32.xlu0 %v643, 32
    %v2670 = vpop.permute.xlu0 %2669
    %v2672 = vsel %vm720, %v2656, 0
    %v2675 = vsel %vm720, %v2658, 0
    %v2678 = vsel %vm720, %v2660, 0
    %v2681 = vsel %vm720, %v2662, 0
    %v2684 = vsel %vm720, %v2664, 0
    %v2687 = vsel %vm720, %v2666, 0
    %v2690 = vsel %vm720, %v2668, 0
    %v2693 = vsel %vm720, %v2670, 0
    %2695 = vmatprep.subr.bf16.mxu0 0
    %2696 = vmatpush1.bf16.xpose.msra.mxu0 %v2684
    %2697 = vmatprep.subr.bf16.mxu0 0
    %2698 = vmatpush1.bf16.xpose.msra.mxu0 %v2687
    %2699 = vmatprep.subr.bf16.mxu0 0
    %2700 = vmatpush1.bf16.xpose.msra.mxu0 %v2690
    %2701 = vmatprep.subr.bf16.mxu0 0
    %2702 = vmatpush1.bf16.xpose.msra.mxu0 %v2693
    %2703 = vmatprep.subr.bf16.mxu0 0
    %2704 = vmatpush1.bf16.xpose.msra.mxu0 0
    %2705 = vmatprep.subr.bf16.mxu0 0
    %2706 = vmatpush1.bf16.xpose.msra.mxu0 0
    %2707 = vmatprep.subr.bf16.mxu0 0
    %2708 = vmatpush1.bf16.xpose.msra.mxu0 0
    %2709 = vmatprep.subr.bf16.mxu0 0
    %2710 = vmatpush1.bf16.xpose.msra.mxu0 0
    %2711 = vmatprep.subr.bf16.mxu0 0
    %2712 = vmatpush1.bf16.xpose.msra.mxu0 0
    %2713 = vmatprep.subr.bf16.mxu0 0
    %2714 = vmatpush1.bf16.xpose.msra.mxu0 0
    %2715 = vmatprep.subr.bf16.mxu0 0
    %2716 = vmatpush1.bf16.xpose.msra.mxu0 0
    %2717 = vmatprep.subr.bf16.mxu0 0
    %2718 = vmatpush1.bf16.xpose.msra.mxu0 0
    %2719 = vmatprep.subr.bf16.mxu0 0
    %2720 = vmatpush1.bf16.xpose.msra.mxu0 0
    %2721 = vmatprep.subr.bf16.mxu0 0
    %2722 = vmatpush1.bf16.xpose.msra.mxu0 0
    %2723 = vmatprep.subr.bf16.mxu0 0
    %2724 = vmatpush1.bf16.xpose.msra.mxu0 0
    %2725 = vmatprep.subr.bf16.mxu0 0
    %2726 = vmatpush1.bf16.xpose.msra.mxu0 0
    %2727 = vmatprep.mubr.bf16.mxu0 0
    %2728 = vmatmul.mubr.bf16.gmra.mrb[0].mxu0 %v2672
    %v2729 = vpop.f32.mrb[0].mxu0
    %v2730 = vadd.f32 0.0, %v2729
    %v2731 = vpop.f32.mrb[0].mxu0
    %v2732 = vpop.f32.mrb[0].mxu0
    %v2733 = vadd.f32 0.0, %v2732
    %v2734 = vpop.f32.mrb[0].mxu0
    %2735 = vmatprep.mubr.bf16.mxu0 0
    %2736 = vmatmul.mubr.bf16.gmra.mrb[0].mxu0 %v2675
    %v2737 = vpop.f32.mrb[0].mxu0
    %v2738 = vadd.f32 0.0, %v2737
    %v2739 = vpop.f32.mrb[0].mxu0
    %v2740 = vpop.f32.mrb[0].mxu0
    %v2741 = vadd.f32 0.0, %v2740
    %v2742 = vpop.f32.mrb[0].mxu0
    %2743 = vmatprep.mubr.bf16.mxu0 0
    %2744 = vmatmul.mubr.bf16.gmra.mrb[0].mxu0 %v2678
    %v2745 = vpop.f32.mrb[0].mxu0
    %v2746 = vadd.f32 0.0, %v2745
    %v2747 = vpop.f32.mrb[0].mxu0
    %v2748 = vpop.f32.mrb[0].mxu0
    %v2749 = vadd.f32 0.0, %v2748
    %v2750 = vpop.f32.mrb[0].mxu0
    %2751 = vmatprep.mubr.bf16.mxu0 0
    %2752 = vmatmul.mubr.bf16.gmra.mrb[0].mxu0 %v2681
    %v2753 = vpop.f32.mrb[0].mxu0
    %v2754 = vadd.f32 0.0, %v2753
    %v2755 = vpop.f32.mrb[0].mxu0
    %v2756 = vpop.f32.mrb[0].mxu0
    %v2757 = vadd.f32 0.0, %v2756
    %v2758 = vpop.f32.mrb[0].mxu0
    %2759 = vdwg.mxu0
    %v2760 = vmul.f32 %v2625, 0.17677669
    %v2761 = vmul.f32 %v2628, 0.17677669
    %v2762 = vmul.f32 %v2633, 0.17677669
    %v2763 = vmul.f32 %v2636, 0.17677669
    %v2764 = vmul.f32 %v2641, 0.17677669
    %v2765 = vmul.f32 %v2644, 0.17677669
    %v2766 = vmul.f32 %v2649, 0.17677669
    %v2767 = vmul.f32 %v2652, 0.17677669
    %v2768 = vmul.f32 %v2730, 0.17677669
    %v2769 = vmul.f32 %v2733, 0.17677669
    %v2770 = vmul.f32 %v2738, 0.17677669
    %v2771 = vmul.f32 %v2741, 0.17677669
    %v2772 = vmul.f32 %v2746, 0.17677669
    %v2773 = vmul.f32 %v2749, 0.17677669
    %v2774 = vmul.f32 %v2754, 0.17677669
    %v2775 = vmul.f32 %v2757, 0.17677669
    %v2776 = vmul.f32 %v712, 0.00390625
    %v2777 = vmul.f32 %v713, 0.00390625
    %v2778 = vmul.f32 %v714, 0.00390625
    %v2779 = vmul.f32 %v715, 0.00390625
    %v2780 = vmul.f32 %v716, 0.00390625
    %v2781 = vmul.f32 %v717, 0.00390625
    %v2782 = vmul.f32 %v718, 0.00390625
    %v2783 = vmul.f32 %v719, 0.00390625
    %v2784 = vadd.f32 %v2760, %v2776
    %v2785 = vadd.f32 %v2761, %v2777
    %v2786 = vadd.f32 %v2762, %v2778
    %v2787 = vadd.f32 %v2763, %v2779
    %v2788 = vadd.f32 %v2764, %v2780
    %v2789 = vadd.f32 %v2765, %v2781
    %v2790 = vadd.f32 %v2766, %v2782
    %v2791 = vadd.f32 %v2767, %v2783
    %v2792 = vadd.f32 %v2768, %v2776
    %v2793 = vadd.f32 %v2769, %v2777
    %v2794 = vadd.f32 %v2770, %v2778
    %v2795 = vadd.f32 %v2771, %v2779
    %v2796 = vadd.f32 %v2772, %v2780
    %v2797 = vadd.f32 %v2773, %v2781
    %v2798 = vadd.f32 %v2774, %v2782
    %v2799 = vadd.f32 %v2775, %v2783
    %v2800 = vsel %vm939, %v2784, -inf
    %2801 = vmax.xlane.f32.xlu0 %v2800
    %v2802 = vpop.xlane.xlu0 %2801
    %v2803 = vsel %vm939, %v2785, -inf
    %2804 = vmax.xlane.f32.xlu0 %v2803
    %v2805 = vpop.xlane.xlu0 %2804
    %v2806 = vsel %vm939, %v2786, -inf
    %2807 = vmax.xlane.f32.xlu0 %v2806
    %v2808 = vpop.xlane.xlu0 %2807
    %v2809 = vsel %vm939, %v2787, -inf
    %2810 = vmax.xlane.f32.xlu0 %v2809
    %v2811 = vpop.xlane.xlu0 %2810
    %v2812 = vsel %vm939, %v2788, -inf
    %2813 = vmax.xlane.f32.xlu0 %v2812
    %v2814 = vpop.xlane.xlu0 %2813
    %v2815 = vsel %vm939, %v2789, -inf
    %2816 = vmax.xlane.f32.xlu0 %v2815
    %v2817 = vpop.xlane.xlu0 %2816
    %v2818 = vsel %vm939, %v2790, -inf
    %2819 = vmax.xlane.f32.xlu0 %v2818
    %v2820 = vpop.xlane.xlu0 %2819
    %v2821 = vsel %vm939, %v2791, -inf
    %2822 = vmax.xlane.f32.xlu0 %v2821
    %v2823 = vpop.xlane.xlu0 %2822
    %v2824 = vsel %vm939, %v2792, -inf
    %2825 = vmax.xlane.f32.xlu0 %v2824
    %v2826 = vpop.xlane.xlu0 %2825
    %v2827 = vsel %vm939, %v2793, -inf
    %2828 = vmax.xlane.f32.xlu0 %v2827
    %v2829 = vpop.xlane.xlu0 %2828
    %v2830 = vsel %vm939, %v2794, -inf
    %2831 = vmax.xlane.f32.xlu0 %v2830
    %v2832 = vpop.xlane.xlu0 %2831
    %v2833 = vsel %vm939, %v2795, -inf
    %2834 = vmax.xlane.f32.xlu0 %v2833
    %v2835 = vpop.xlane.xlu0 %2834
    %v2836 = vsel %vm939, %v2796, -inf
    %2837 = vmax.xlane.f32.xlu0 %v2836
    %v2838 = vpop.xlane.xlu0 %2837
    %v2839 = vsel %vm939, %v2797, -inf
    %2840 = vmax.xlane.f32.xlu0 %v2839
    %v2841 = vpop.xlane.xlu0 %2840
    %v2842 = vsel %vm939, %v2798, -inf
    %2843 = vmax.xlane.f32.xlu0 %v2842
    %v2844 = vpop.xlane.xlu0 %2843
    %v2845 = vsel %vm939, %v2799, -inf
    %2846 = vmax.xlane.f32.xlu0 %v2845
    %v2847 = vpop.xlane.xlu0 %2846
    %v2848 = vsub.f32 %v2784, %v2802
    %v2849 = vsub.f32 %v2785, %v2805
    %v2850 = vsub.f32 %v2786, %v2808
    %v2851 = vsub.f32 %v2787, %v2811
    %v2852 = vsub.f32 %v2788, %v2814
    %v2853 = vsub.f32 %v2789, %v2817
    %v2854 = vsub.f32 %v2790, %v2820
    %v2855 = vsub.f32 %v2791, %v2823
    %v2856 = vsub.f32 %v2792, %v2826
    %v2857 = vsub.f32 %v2793, %v2829
    %v2858 = vsub.f32 %v2794, %v2832
    %v2859 = vsub.f32 %v2795, %v2835
    %v2860 = vsub.f32 %v2796, %v2838
    %v2861 = vsub.f32 %v2797, %v2841
    %v2862 = vsub.f32 %v2798, %v2844
    %v2863 = vsub.f32 %v2799, %v2847
    %v2864 = vmul.f32 %v2848, 1.442695
    %v2865 = vpow.pop %v2864
    %v2866 = vmul.f32 %v2849, 1.442695
    %v2867 = vpow.pop %v2866
    %v2868 = vmul.f32 %v2850, 1.442695
    %v2869 = vpow.pop %v2868
    %v2870 = vmul.f32 %v2851, 1.442695
    %v2871 = vpow.pop %v2870
    %v2872 = vmul.f32 %v2852, 1.442695
    %v2873 = vpow.pop %v2872
    %v2874 = vmul.f32 %v2853, 1.442695
    %v2875 = vpow.pop %v2874
    %v2876 = vmul.f32 %v2854, 1.442695
    %v2877 = vpow.pop %v2876
    %v2878 = vmul.f32 %v2855, 1.442695
    %v2879 = vpow.pop %v2878
    %v2880 = vmul.f32 %v2856, 1.442695
    %v2881 = vpow.pop %v2880
    %v2882 = vmul.f32 %v2857, 1.442695
    %v2883 = vpow.pop %v2882
    %v2884 = vmul.f32 %v2858, 1.442695
    %v2885 = vpow.pop %v2884
    %v2886 = vmul.f32 %v2859, 1.442695
    %v2887 = vpow.pop %v2886
    %v2888 = vmul.f32 %v2860, 1.442695
    %v2889 = vpow.pop %v2888
    %v2890 = vmul.f32 %v2861, 1.442695
    %v2891 = vpow.pop %v2890
    %v2892 = vmul.f32 %v2862, 1.442695
    %v2893 = vpow.pop %v2892
    %v2894 = vmul.f32 %v2863, 1.442695
    %v2895 = vpow.pop %v2894
    %v2896 = vsel %vm939, %v2865, 0.0
    %2897 = vadd.xlane.f32.xlu0 %v2896
    %v2898 = vpop.xlane.xlu0 %2897
    %v2899 = vsel %vm939, %v2867, 0.0
    %2900 = vadd.xlane.f32.xlu0 %v2899
    %v2901 = vpop.xlane.xlu0 %2900
    %v2902 = vsel %vm939, %v2869, 0.0
    %2903 = vadd.xlane.f32.xlu0 %v2902
    %v2904 = vpop.xlane.xlu0 %2903
    %v2905 = vsel %vm939, %v2871, 0.0
    %2906 = vadd.xlane.f32.xlu0 %v2905
    %v2907 = vpop.xlane.xlu0 %2906
    %v2908 = vsel %vm939, %v2873, 0.0
    %2909 = vadd.xlane.f32.xlu0 %v2908
    %v2910 = vpop.xlane.xlu0 %2909
    %v2911 = vsel %vm939, %v2875, 0.0
    %2912 = vadd.xlane.f32.xlu0 %v2911
    %v2913 = vpop.xlane.xlu0 %2912
    %v2914 = vsel %vm939, %v2877, 0.0
    %2915 = vadd.xlane.f32.xlu0 %v2914
    %v2916 = vpop.xlane.xlu0 %2915
    %v2917 = vsel %vm939, %v2879, 0.0
    %2918 = vadd.xlane.f32.xlu0 %v2917
    %v2919 = vpop.xlane.xlu0 %2918
    %v2920 = vsel %vm939, %v2881, 0.0
    %2921 = vadd.xlane.f32.xlu0 %v2920
    %v2922 = vpop.xlane.xlu0 %2921
    %v2923 = vsel %vm939, %v2883, 0.0
    %2924 = vadd.xlane.f32.xlu0 %v2923
    %v2925 = vpop.xlane.xlu0 %2924
    %v2926 = vsel %vm939, %v2885, 0.0
    %2927 = vadd.xlane.f32.xlu0 %v2926
    %v2928 = vpop.xlane.xlu0 %2927
    %v2929 = vsel %vm939, %v2887, 0.0
    %2930 = vadd.xlane.f32.xlu0 %v2929
    %v2931 = vpop.xlane.xlu0 %2930
    %v2932 = vsel %vm939, %v2889, 0.0
    %2933 = vadd.xlane.f32.xlu0 %v2932
    %v2934 = vpop.xlane.xlu0 %2933
    %v2935 = vsel %vm939, %v2891, 0.0
    %2936 = vadd.xlane.f32.xlu0 %v2935
    %v2937 = vpop.xlane.xlu0 %2936
    %v2938 = vsel %vm939, %v2893, 0.0
    %2939 = vadd.xlane.f32.xlu0 %v2938
    %v2940 = vpop.xlane.xlu0 %2939
    %v2941 = vsel %vm939, %v2895, 0.0
    %2942 = vadd.xlane.f32.xlu0 %v2941
    %v2943 = vpop.xlane.xlu0 %2942
    %v2944 = vrcp.pop %v2898
    %v2945 = vrcp.pop %v2901
    %v2946 = vrcp.pop %v2904
    %v2947 = vrcp.pop %v2907
    %v2948 = vrcp.pop %v2910
    %v2949 = vrcp.pop %v2913
    %v2950 = vrcp.pop %v2916
    %v2951 = vrcp.pop %v2919
    %v2952 = vrcp.pop %v2922
    %v2953 = vrcp.pop %v2925
    %v2954 = vrcp.pop %v2928
    %v2955 = vrcp.pop %v2931
    %v2956 = vrcp.pop %v2934
    %v2957 = vrcp.pop %v2937
    %v2958 = vrcp.pop %v2940
    %v2959 = vrcp.pop %v2943
    %v2960 = vmul.f32 %v2865, %v2944
    %v2961 = vmul.f32 %v2867, %v2945
    %v2962 = vmul.f32 %v2869, %v2946
    %v2963 = vmul.f32 %v2871, %v2947
    %v2964 = vmul.f32 %v2873, %v2948
    %v2965 = vmul.f32 %v2875, %v2949
    %v2966 = vmul.f32 %v2877, %v2950
    %v2967 = vmul.f32 %v2879, %v2951
    %v2968 = vmul.f32 %v2881, %v2952
    %v2969 = vmul.f32 %v2883, %v2953
    %v2970 = vmul.f32 %v2885, %v2954
    %v2971 = vmul.f32 %v2887, %v2955
    %v2972 = vmul.f32 %v2889, %v2956
    %v2973 = vmul.f32 %v2891, %v2957
    %v2974 = vmul.f32 %v2893, %v2958
    %v2975 = vmul.f32 %v2895, %v2959
    %v2976 = vpack.c.bf16 %v2961, %v2960
    %v2977 = vpack.c.bf16 %v2963, %v2962
    %v2978 = vpack.c.bf16 %v2965, %v2964
    %v2979 = vpack.c.bf16 %v2967, %v2966
    %v2980 = vpack.c.bf16 %v2969, %v2968
    %v2981 = vpack.c.bf16 %v2971, %v2970
    %v2982 = vpack.c.bf16 %v2973, %v2972
    %v2983 = vpack.c.bf16 %v2975, %v2974
    %2984 = vrot.lane.b32.xlu0 %v623, 32
    %v2985 = vpop.permute.xlu0 %2984
    %2986 = vrot.lane.b32.xlu0 %v626, 32
    %v2987 = vpop.permute.xlu0 %2986
    %2988 = vrot.lane.b32.xlu0 %v629, 32
    %v2989 = vpop.permute.xlu0 %2988
    %2990 = vrot.lane.b32.xlu0 %v632, 32
    %v2991 = vpop.permute.xlu0 %2990
    %v2997 = vsel %vm939, %v2976, 0
    %v3000 = vsel %vm939, %v2977, 0
    %v3003 = vsel %vm939, %v2978, 0
    %v3006 = vsel %vm939, %v2979, 0
    %3008 = vmatprep.subr.bf16.mxu0 0
    %3009 = vmatpush1.bf16.msra.mxu0 %v2985
    %3010 = vmatprep.subr.bf16.mxu0 0
    %3011 = vmatpush1.bf16.msra.mxu0 %v2987
    %3012 = vmatprep.subr.bf16.mxu0 0
    %3013 = vmatpush1.bf16.msra.mxu0 %v2989
    %3014 = vmatprep.subr.bf16.mxu0 0
    %3015 = vmatpush1.bf16.msra.mxu0 %v2991
    %3016 = vmatprep.subr.bf16.mxu0 0
    %3017 = vmatpush1.bf16.msra.mxu0 0
    %3018 = vmatprep.subr.bf16.mxu0 0
    %3019 = vmatpush1.bf16.msra.mxu0 0
    %3020 = vmatprep.subr.bf16.mxu0 0
    %3021 = vmatpush1.bf16.msra.mxu0 0
    %3022 = vmatprep.subr.bf16.mxu0 0
    %3023 = vmatpush1.bf16.msra.mxu0 0
    %3024 = vmatprep.subr.bf16.mxu0 0
    %3025 = vmatpush1.bf16.msra.mxu0 0
    %3026 = vmatprep.subr.bf16.mxu0 0
    %3027 = vmatpush1.bf16.msra.mxu0 0
    %3028 = vmatprep.subr.bf16.mxu0 0
    %3029 = vmatpush1.bf16.msra.mxu0 0
    %3030 = vmatprep.subr.bf16.mxu0 0
    %3031 = vmatpush1.bf16.msra.mxu0 0
    %3032 = vmatprep.subr.bf16.mxu0 0
    %3033 = vmatpush1.bf16.msra.mxu0 0
    %3034 = vmatprep.subr.bf16.mxu0 0
    %3035 = vmatpush1.bf16.msra.mxu0 0
    %3036 = vmatprep.subr.bf16.mxu0 0
    %3037 = vmatpush1.bf16.msra.mxu0 0
    %3038 = vmatprep.subr.bf16.mxu0 0
    %3039 = vmatpush1.bf16.msra.mxu0 0
    %3040 = vmatprep.mubr.bf16.mxu0 0
    %3041 = vmatmul.mubr.bf16.gmra.mrb[0].mxu0 %v2997
    %v3042 = vpop.f32.mrb[0].mxu0
    %v3043 = vadd.f32 0.0, %v3042
    %v3044 = vpop.f32.mrb[0].mxu0
    %v3045 = vpop.f32.mrb[0].mxu0
    %v3046 = vadd.f32 0.0, %v3045
    %v3047 = vpop.f32.mrb[0].mxu0
    %3048 = vmatprep.mubr.bf16.mxu0 0
    %3049 = vmatmul.mubr.bf16.gmra.mrb[0].mxu0 %v3000
    %v3050 = vpop.f32.mrb[0].mxu0
    %v3051 = vadd.f32 0.0, %v3050
    %v3052 = vpop.f32.mrb[0].mxu0
    %v3053 = vpop.f32.mrb[0].mxu0
    %v3054 = vadd.f32 0.0, %v3053
    %v3055 = vpop.f32.mrb[0].mxu0
    %3056 = vmatprep.mubr.bf16.mxu0 0
    %3057 = vmatmul.mubr.bf16.gmra.mrb[0].mxu0 %v3003
    %v3058 = vpop.f32.mrb[0].mxu0
    %v3059 = vadd.f32 0.0, %v3058
    %v3060 = vpop.f32.mrb[0].mxu0
    %v3061 = vpop.f32.mrb[0].mxu0
    %v3062 = vadd.f32 0.0, %v3061
    %v3063 = vpop.f32.mrb[0].mxu0
    %3064 = vmatprep.mubr.bf16.mxu0 0
    %3065 = vmatmul.mubr.bf16.gmra.mrb[0].mxu0 %v3006
    %v3066 = vpop.f32.mrb[0].mxu0
    %v3067 = vadd.f32 0.0, %v3066
    %v3068 = vpop.f32.mrb[0].mxu0
    %v3069 = vpop.f32.mrb[0].mxu0
    %v3070 = vadd.f32 0.0, %v3069
    %v3071 = vpop.f32.mrb[0].mxu0
    %3072 = vdwg.mxu0
    %3073 = vrot.lane.b32.xlu0 %v635, 32
    %v3074 = vpop.permute.xlu0 %3073
    %3075 = vrot.lane.b32.xlu0 %v638, 32
    %v3076 = vpop.permute.xlu0 %3075
    %3077 = vrot.lane.b32.xlu0 %v641, 32
    %v3078 = vpop.permute.xlu0 %3077
    %3079 = vrot.lane.b32.xlu0 %v644, 32
    %v3080 = vpop.permute.xlu0 %3079
    %v3086 = vsel %vm939, %v2980, 0
    %v3089 = vsel %vm939, %v2981, 0
    %v3092 = vsel %vm939, %v2982, 0
    %v3095 = vsel %vm939, %v2983, 0
    %3097 = vmatprep.subr.bf16.mxu0 0
    %3098 = vmatpush1.bf16.msra.mxu0 %v3074
    %3099 = vmatprep.subr.bf16.mxu0 0
    %3100 = vmatpush1.bf16.msra.mxu0 %v3076
    %3101 = vmatprep.subr.bf16.mxu0 0
    %3102 = vmatpush1.bf16.msra.mxu0 %v3078
    %3103 = vmatprep.subr.bf16.mxu0 0
    %3104 = vmatpush1.bf16.msra.mxu0 %v3080
    %3105 = vmatprep.subr.bf16.mxu0 0
    %3106 = vmatpush1.bf16.msra.mxu0 0
    %3107 = vmatprep.subr.bf16.mxu0 0
    %3108 = vmatpush1.bf16.msra.mxu0 0
    %3109 = vmatprep.subr.bf16.mxu0 0
    %3110 = vmatpush1.bf16.msra.mxu0 0
    %3111 = vmatprep.subr.bf16.mxu0 0
    %3112 = vmatpush1.bf16.msra.mxu0 0
    %3113 = vmatprep.subr.bf16.mxu0 0
    %3114 = vmatpush1.bf16.msra.mxu0 0
    %3115 = vmatprep.subr.bf16.mxu0 0
    %3116 = vmatpush1.bf16.msra.mxu0 0
    %3117 = vmatprep.subr.bf16.mxu0 0
    %3118 = vmatpush1.bf16.msra.mxu0 0
    %3119 = vmatprep.subr.bf16.mxu0 0
    %3120 = vmatpush1.bf16.msra.mxu0 0
    %3121 = vmatprep.subr.bf16.mxu0 0
    %3122 = vmatpush1.bf16.msra.mxu0 0
    %3123 = vmatprep.subr.bf16.mxu0 0
    %3124 = vmatpush1.bf16.msra.mxu0 0
    %3125 = vmatprep.subr.bf16.mxu0 0
    %3126 = vmatpush1.bf16.msra.mxu0 0
    %3127 = vmatprep.subr.bf16.mxu0 0
    %3128 = vmatpush1.bf16.msra.mxu0 0
    %3129 = vmatprep.mubr.bf16.mxu0 0
    %3130 = vmatmul.mubr.bf16.gmra.mrb[0].mxu0 %v3086
    %v3131 = vpop.f32.mrb[0].mxu0
    %v3132 = vadd.f32 0.0, %v3131
    %v3133 = vpop.f32.mrb[0].mxu0
    %v3134 = vpop.f32.mrb[0].mxu0
    %v3135 = vadd.f32 0.0, %v3134
    %v3136 = vpop.f32.mrb[0].mxu0
    %3137 = vmatprep.mubr.bf16.mxu0 0
    %3138 = vmatmul.mubr.bf16.gmra.mrb[0].mxu0 %v3089
    %v3139 = vpop.f32.mrb[0].mxu0
    %v3140 = vadd.f32 0.0, %v3139
    %v3141 = vpop.f32.mrb[0].mxu0
    %v3142 = vpop.f32.mrb[0].mxu0
    %v3143 = vadd.f32 0.0, %v3142
    %v3144 = vpop.f32.mrb[0].mxu0
    %3145 = vmatprep.mubr.bf16.mxu0 0
    %3146 = vmatmul.mubr.bf16.gmra.mrb[0].mxu0 %v3092
    %v3147 = vpop.f32.mrb[0].mxu0
    %v3148 = vadd.f32 0.0, %v3147
    %v3149 = vpop.f32.mrb[0].mxu0
    %v3150 = vpop.f32.mrb[0].mxu0
    %v3151 = vadd.f32 0.0, %v3150
    %v3152 = vpop.f32.mrb[0].mxu0
    %3153 = vmatprep.mubr.bf16.mxu0 0
    %3154 = vmatmul.mubr.bf16.gmra.mrb[0].mxu0 %v3095
    %v3155 = vpop.f32.mrb[0].mxu0
    %v3156 = vadd.f32 0.0, %v3155
    %v3157 = vpop.f32.mrb[0].mxu0
    %v3158 = vpop.f32.mrb[0].mxu0
    %v3159 = vadd.f32 0.0, %v3158
    %v3160 = vpop.f32.mrb[0].mxu0
    %3161 = vdwg.mxu0
    %v3162 = vpack.c.bf16 %v3046, %v3043
    %v3163 = vpack.c.bf16 %v3054, %v3051
    %v3164 = vpack.c.bf16 %v3062, %v3059
    %v3165 = vpack.c.bf16 %v3070, %v3067
    %v3166 = vpack.c.bf16 %v3135, %v3132
    %v3167 = vpack.c.bf16 %v3143, %v3140
    %v3168 = vpack.c.bf16 %v3151, %v3148
    %v3169 = vpack.c.bf16 %v3159, %v3156
    %3178 = vrot.lane.b32.xlu0 %v1922, 32
    %v3179 = vpop.permute.xlu0 %3178
    %3180 = vrot.lane.b32.xlu0 %v1923, 32
    %v3181 = vpop.permute.xlu0 %3180
    %3182 = vrot.lane.b32.xlu0 %v1924, 32
    %v3183 = vpop.permute.xlu0 %3182
    %3184 = vrot.lane.b32.xlu0 %v1925, 32
    %v3185 = vpop.permute.xlu0 %3184
    %3186 = vrot.lane.b32.xlu0 %v1926, 32
    %v3187 = vpop.permute.xlu0 %3186
    %3188 = vrot.lane.b32.xlu0 %v1927, 32
    %v3189 = vpop.permute.xlu0 %3188
    %3190 = vrot.lane.b32.xlu0 %v1928, 32
    %v3191 = vpop.permute.xlu0 %3190
    %3192 = vrot.lane.b32.xlu0 %v1929, 32
    %v3193 = vpop.permute.xlu0 %3192
    %3202 = vrot.lane.b32.xlu0 %v2542, 64
    %v3203 = vpop.permute.xlu0 %3202
    %3204 = vrot.lane.b32.xlu0 %v2543, 64
    %v3205 = vpop.permute.xlu0 %3204
    %3206 = vrot.lane.b32.xlu0 %v2544, 64
    %v3207 = vpop.permute.xlu0 %3206
    %3208 = vrot.lane.b32.xlu0 %v2545, 64
    %v3209 = vpop.permute.xlu0 %3208
    %3210 = vrot.lane.b32.xlu0 %v2546, 64
    %v3211 = vpop.permute.xlu0 %3210
    %3212 = vrot.lane.b32.xlu0 %v2547, 64
    %v3213 = vpop.permute.xlu0 %3212
    %3214 = vrot.lane.b32.xlu0 %v2548, 64
    %v3215 = vpop.permute.xlu0 %3214
    %3216 = vrot.lane.b32.xlu0 %v2549, 64
    %v3217 = vpop.permute.xlu0 %3216
    %3226 = vrot.lane.b32.xlu0 %v3162, 96
    %v3227 = vpop.permute.xlu0 %3226
    %3228 = vrot.lane.b32.xlu0 %v3163, 96
    %v3229 = vpop.permute.xlu0 %3228
    %3230 = vrot.lane.b32.xlu0 %v3164, 96
    %v3231 = vpop.permute.xlu0 %3230
    %3232 = vrot.lane.b32.xlu0 %v3165, 96
    %v3233 = vpop.permute.xlu0 %3232
    %3234 = vrot.lane.b32.xlu0 %v3166, 96
    %v3235 = vpop.permute.xlu0 %3234
    %3236 = vrot.lane.b32.xlu0 %v3167, 96
    %v3237 = vpop.permute.xlu0 %3236
    %3238 = vrot.lane.b32.xlu0 %v3168, 96
    %v3239 = vpop.permute.xlu0 %3238
    %3240 = vrot.lane.b32.xlu0 %v3169, 96
    %v3241 = vpop.permute.xlu0 %3240
    %v3244 = vsel %vm720, %v1278, %v3179
    %v3247 = vsel %vm720, %v1279, %v3181
    %v3250 = vsel %vm720, %v1280, %v3183
    %v3253 = vsel %vm720, %v1281, %v3185
    %v3256 = vsel %vm720, %v1282, %v3187
    %v3259 = vsel %vm720, %v1283, %v3189
    %v3262 = vsel %vm720, %v1284, %v3191
    %v3265 = vsel %vm720, %v1285, %v3193
    %v3267 = vsel %vm939, %v3244, %v3203
    %v3269 = vsel %vm939, %v3247, %v3205
    %v3271 = vsel %vm939, %v3250, %v3207
    %v3273 = vsel %vm939, %v3253, %v3209
    %v3275 = vsel %vm939, %v3256, %v3211
    %v3277 = vsel %vm939, %v3259, %v3213
    %v3279 = vsel %vm939, %v3262, %v3215
    %v3281 = vsel %vm939, %v3265, %v3217
    %vm3282 = vcmask 785408
    %v3284 = vsel %vm3282, %v3267, %v3227
    %v3287 = vsel %vm3282, %v3269, %v3229
    %v3290 = vsel %vm3282, %v3271, %v3231
    %v3293 = vsel %vm3282, %v3273, %v3233
    %v3296 = vsel %vm3282, %v3275, %v3235
    %v3299 = vsel %vm3282, %v3277, %v3237
    %v3302 = vsel %vm3282, %v3279, %v3239
    %v3305 = vsel %vm3282, %v3281, %v3241
    %v3307 = vld [vmem:[#allocation7] sm:$0xf]
    %v3308 = vld [vmem:[#allocation7 + $0x4] sm:$0xf]
    %v3309 = vld [vmem:[#allocation7 + $0x8] sm:$0xf]
    %v3310 = vld [vmem:[#allocation7 + $0xc] sm:$0xf]
    %v3311 = vld [vmem:[#allocation7 + $0x10] sm:$0xf]
    %v3312 = vld [vmem:[#allocation7 + $0x14] sm:$0xf]
    %v3313 = vld [vmem:[#allocation7 + $0x18] sm:$0xf]
    %v3314 = vld [vmem:[#allocation7 + $0x1c] sm:$0xf]
    %v3315 = vld [vmem:[#allocation7 + $0x20] sm:$0xf]
    %v3316 = vld [vmem:[#allocation7 + $0x24] sm:$0xf]
    %v3317 = vld [vmem:[#allocation7 + $0x28] sm:$0xf]
    %v3318 = vld [vmem:[#allocation7 + $0x2c] sm:$0xf]
    %v3319 = vld [vmem:[#allocation7 + $0x30] sm:$0xf]
    %v3320 = vld [vmem:[#allocation7 + $0x34] sm:$0xf]
    %v3321 = vld [vmem:[#allocation7 + $0x38] sm:$0xf]
    %v3322 = vld [vmem:[#allocation7 + $0x3c] sm:$0xf]
    %v3323 = vld [vmem:[%s4] sm:$0x1]
    %v3325 = vlaneseq
    %v3326 = vshrl.u32 %v3325, 7
    %v3327 = vsub.s32 0, %v3326
    %v3328 = vrot.slane %v3323, %v3327
    %v3346 = vunpack.c.l.b16 %v3307
    %v3347 = vunpack.c.l.b16 %v3308
    %v3348 = vunpack.c.l.b16 %v3309
    %v3349 = vunpack.c.l.b16 %v3310
    %v3350 = vunpack.c.l.b16 %v3311
    %v3351 = vunpack.c.l.b16 %v3312
    %v3352 = vunpack.c.l.b16 %v3313
    %v3353 = vunpack.c.l.b16 %v3314
    %v3354 = vunpack.c.l.b16 %v3315
    %v3355 = vunpack.c.l.b16 %v3316
    %v3356 = vunpack.c.l.b16 %v3317
    %v3357 = vunpack.c.l.b16 %v3318
    %v3358 = vunpack.c.l.b16 %v3319
    %v3359 = vunpack.c.l.b16 %v3320
    %v3360 = vunpack.c.l.b16 %v3321
    %v3361 = vunpack.c.l.b16 %v3322
    %v3362 = vpack.c.b16 %v3347, %v3346
    %v3363 = vpack.c.b16 %v3349, %v3348
    %v3364 = vpack.c.b16 %v3351, %v3350
    %v3365 = vpack.c.b16 %v3353, %v3352
    %v3366 = vpack.c.b16 %v3355, %v3354
    %v3367 = vpack.c.b16 %v3357, %v3356
    %v3368 = vpack.c.b16 %v3359, %v3358
    %v3369 = vpack.c.b16 %v3361, %v3360
    %3378 = vmatprep.subr.bf16.mxu0 0
    %3379 = vmatpush1.bf16.msra.mxu0 %v3362
    %3380 = vmatprep.subr.bf16.mxu0 0
    %3381 = vmatpush1.bf16.msra.mxu0 %v3363
    %3382 = vmatprep.subr.bf16.mxu0 0
    %3383 = vmatpush1.bf16.msra.mxu0 %v3364
    %3384 = vmatprep.subr.bf16.mxu0 0
    %3385 = vmatpush1.bf16.msra.mxu0 %v3365
    %3386 = vmatprep.subr.bf16.mxu0 0
    %3387 = vmatpush1.bf16.msra.mxu0 %v3366
    %3388 = vmatprep.subr.bf16.mxu0 0
    %3389 = vmatpush1.bf16.msra.mxu0 %v3367
    %3390 = vmatprep.subr.bf16.mxu0 0
    %3391 = vmatpush1.bf16.msra.mxu0 %v3368
    %3392 = vmatprep.subr.bf16.mxu0 0
    %3393 = vmatpush1.bf16.msra.mxu0 %v3369
    %3394 = vmatprep.subr.bf16.mxu0 0
    %3395 = vmatpush1.bf16.msra.mxu0 0
    %3396 = vmatprep.subr.bf16.mxu0 0
    %3397 = vmatpush1.bf16.msra.mxu0 0
    %3398 = vmatprep.subr.bf16.mxu0 0
    %3399 = vmatpush1.bf16.msra.mxu0 0
    %3400 = vmatprep.subr.bf16.mxu0 0
    %3401 = vmatpush1.bf16.msra.mxu0 0
    %3402 = vmatprep.subr.bf16.mxu0 0
    %3403 = vmatpush1.bf16.msra.mxu0 0
    %3404 = vmatprep.subr.bf16.mxu0 0
    %3405 = vmatpush1.bf16.msra.mxu0 0
    %3406 = vmatprep.subr.bf16.mxu0 0
    %3407 = vmatpush1.bf16.msra.mxu0 0
    %3408 = vmatprep.subr.bf16.mxu0 0
    %3409 = vmatpush1.bf16.msra.mxu0 0
    %3410 = vmatprep.mubr.bf16.mxu0 0
    %3411 = vmatmul.mubr.bf16.gmra.mrb[0].mxu0 %v3284
    %v3412 = vpop.f32.mrb[0].mxu0
    %v3413 = vadd.f32 %v3328, %v3412
    %v3414 = vpop.f32.mrb[0].mxu0
    %v3415 = vpop.f32.mrb[0].mxu0
    %v3416 = vadd.f32 %v3328, %v3415
    %v3417 = vpop.f32.mrb[0].mxu0
    %3418 = vmatprep.mubr.bf16.mxu0 0
    %3419 = vmatmul.mubr.bf16.gmra.mrb[0].mxu0 %v3287
    %v3420 = vpop.f32.mrb[0].mxu0
    %v3421 = vadd.f32 %v3328, %v3420
    %v3422 = vpop.f32.mrb[0].mxu0
    %v3423 = vpop.f32.mrb[0].mxu0
    %v3424 = vadd.f32 %v3328, %v3423
    %v3425 = vpop.f32.mrb[0].mxu0
    %3426 = vmatprep.mubr.bf16.mxu0 0
    %3427 = vmatmul.mubr.bf16.gmra.mrb[0].mxu0 %v3290
    %v3428 = vpop.f32.mrb[0].mxu0
    %v3429 = vadd.f32 %v3328, %v3428
    %v3430 = vpop.f32.mrb[0].mxu0
    %v3431 = vpop.f32.mrb[0].mxu0
    %v3432 = vadd.f32 %v3328, %v3431
    %v3433 = vpop.f32.mrb[0].mxu0
    %3434 = vmatprep.mubr.bf16.mxu0 0
    %3435 = vmatmul.mubr.bf16.gmra.mrb[0].mxu0 %v3293
    %v3436 = vpop.f32.mrb[0].mxu0
    %v3437 = vadd.f32 %v3328, %v3436
    %v3438 = vpop.f32.mrb[0].mxu0
    %v3439 = vpop.f32.mrb[0].mxu0
    %v3440 = vadd.f32 %v3328, %v3439
    %v3441 = vpop.f32.mrb[0].mxu0
    %3442 = vmatprep.mubr.bf16.mxu0 0
    %3443 = vmatmul.mubr.bf16.gmra.mrb[0].mxu0 %v3296
    %v3444 = vpop.f32.mrb[0].mxu0
    %v3445 = vadd.f32 %v3328, %v3444
    %v3446 = vpop.f32.mrb[0].mxu0
    %v3447 = vpop.f32.mrb[0].mxu0
    %v3448 = vadd.f32 %v3328, %v3447
    %v3449 = vpop.f32.mrb[0].mxu0
    %3450 = vmatprep.mubr.bf16.mxu0 0
    %3451 = vmatmul.mubr.bf16.gmra.mrb[0].mxu0 %v3299
    %v3452 = vpop.f32.mrb[0].mxu0
    %v3453 = vadd.f32 %v3328, %v3452
    %v3454 = vpop.f32.mrb[0].mxu0
    %v3455 = vpop.f32.mrb[0].mxu0
    %v3456 = vadd.f32 %v3328, %v3455
    %v3457 = vpop.f32.mrb[0].mxu0
    %3458 = vmatprep.mubr.bf16.mxu0 0
    %3459 = vmatmul.mubr.bf16.gmra.mrb[0].mxu0 %v3302
    %v3460 = vpop.f32.mrb[0].mxu0
    %v3461 = vadd.f32 %v3328, %v3460
    %v3462 = vpop.f32.mrb[0].mxu0
    %v3463 = vpop.f32.mrb[0].mxu0
    %v3464 = vadd.f32 %v3328, %v3463
    %v3465 = vpop.f32.mrb[0].mxu0
    %3466 = vmatprep.mubr.bf16.mxu0 0
    %3467 = vmatmul.mubr.bf16.gmra.mrb[0].mxu0 %v3305
    %v3468 = vpop.f32.mrb[0].mxu0
    %v3469 = vadd.f32 %v3328, %v3468
    %v3470 = vpop.f32.mrb[0].mxu0
    %v3471 = vpop.f32.mrb[0].mxu0
    %v3472 = vadd.f32 %v3328, %v3471
    %v3473 = vpop.f32.mrb[0].mxu0
    %3474 = vdwg.mxu0
    %v3475 = vadd.f32 %v113, %v3413
    %v3476 = vadd.f32 %v114, %v3416
    %v3477 = vadd.f32 %v115, %v3421
    %v3478 = vadd.f32 %v116, %v3424
    %v3479 = vadd.f32 %v117, %v3429
    %v3480 = vadd.f32 %v118, %v3432
    %v3481 = vadd.f32 %v119, %v3437
    %v3482 = vadd.f32 %v120, %v3440
    %v3483 = vadd.f32 %v121, %v3445
    %v3484 = vadd.f32 %v122, %v3448
    %v3485 = vadd.f32 %v123, %v3453
    %v3486 = vadd.f32 %v124, %v3456
    %v3487 = vadd.f32 %v125, %v3461
    %v3488 = vadd.f32 %v126, %v3464
    %v3489 = vadd.f32 %v127, %v3469
    %v3490 = vadd.f32 %v128, %v3472
    %v3491 = vmul.f32 %v3475, %v3475
    %v3492 = vmul.f32 %v3476, %v3476
    %v3493 = vmul.f32 %v3477, %v3477
    %v3494 = vmul.f32 %v3478, %v3478
    %v3495 = vmul.f32 %v3479, %v3479
    %v3496 = vmul.f32 %v3480, %v3480
    %v3497 = vmul.f32 %v3481, %v3481
    %v3498 = vmul.f32 %v3482, %v3482
    %v3499 = vmul.f32 %v3483, %v3483
    %v3500 = vmul.f32 %v3484, %v3484
    %v3501 = vmul.f32 %v3485, %v3485
    %v3502 = vmul.f32 %v3486, %v3486
    %v3503 = vmul.f32 %v3487, %v3487
    %v3504 = vmul.f32 %v3488, %v3488
    %v3505 = vmul.f32 %v3489, %v3489
    %v3506 = vmul.f32 %v3490, %v3490
    %3507 = vadd.xlane.f32.xlu0 %v3491
    %v3508 = vpop.xlane.xlu0 %3507
    %3509 = vadd.xlane.f32.xlu0 %v3492
    %v3510 = vpop.xlane.xlu0 %3509
    %3511 = vadd.xlane.f32.xlu0 %v3493
    %v3512 = vpop.xlane.xlu0 %3511
    %3513 = vadd.xlane.f32.xlu0 %v3494
    %v3514 = vpop.xlane.xlu0 %3513
    %3515 = vadd.xlane.f32.xlu0 %v3495
    %v3516 = vpop.xlane.xlu0 %3515
    %3517 = vadd.xlane.f32.xlu0 %v3496
    %v3518 = vpop.xlane.xlu0 %3517
    %3519 = vadd.xlane.f32.xlu0 %v3497
    %v3520 = vpop.xlane.xlu0 %3519
    %3521 = vadd.xlane.f32.xlu0 %v3498
    %v3522 = vpop.xlane.xlu0 %3521
    %3523 = vadd.xlane.f32.xlu0 %v3499
    %v3524 = vpop.xlane.xlu0 %3523
    %3525 = vadd.xlane.f32.xlu0 %v3500
    %v3526 = vpop.xlane.xlu0 %3525
    %3527 = vadd.xlane.f32.xlu0 %v3501
    %v3528 = vpop.xlane.xlu0 %3527
    %3529 = vadd.xlane.f32.xlu0 %v3502
    %v3530 = vpop.xlane.xlu0 %3529
    %3531 = vadd.xlane.f32.xlu0 %v3503
    %v3532 = vpop.xlane.xlu0 %3531
    %3533 = vadd.xlane.f32.xlu0 %v3504
    %v3534 = vpop.xlane.xlu0 %3533
    %3535 = vadd.xlane.f32.xlu0 %v3505
    %v3536 = vpop.xlane.xlu0 %3535
    %3537 = vadd.xlane.f32.xlu0 %v3506
    %v3538 = vpop.xlane.xlu0 %3537
    %v3539 = vmul.f32 %v3508, %v177
    %v3540 = vmul.f32 %v3510, %v177
    %v3541 = vmul.f32 %v3512, %v177
    %v3542 = vmul.f32 %v3514, %v177
    %v3543 = vmul.f32 %v3516, %v177
    %v3544 = vmul.f32 %v3518, %v177
    %v3545 = vmul.f32 %v3520, %v177
    %v3546 = vmul.f32 %v3522, %v177
    %v3547 = vmul.f32 %v3524, %v177
    %v3548 = vmul.f32 %v3526, %v177
    %v3549 = vmul.f32 %v3528, %v177
    %v3550 = vmul.f32 %v3530, %v177
    %v3551 = vmul.f32 %v3532, %v177
    %v3552 = vmul.f32 %v3534, %v177
    %v3553 = vmul.f32 %v3536, %v177
    %v3554 = vmul.f32 %v3538, %v177
    %v3555 = vrsqrt.pop %v3539
    %v3556 = vrsqrt.pop %v3540
    %v3557 = vrsqrt.pop %v3541
    %v3558 = vrsqrt.pop %v3542
    %v3559 = vrsqrt.pop %v3543
    %v3560 = vrsqrt.pop %v3544
    %v3561 = vrsqrt.pop %v3545
    %v3562 = vrsqrt.pop %v3546
    %v3563 = vrsqrt.pop %v3547
    %v3564 = vrsqrt.pop %v3548
    %v3565 = vrsqrt.pop %v3549
    %v3566 = vrsqrt.pop %v3550
    %v3567 = vrsqrt.pop %v3551
    %v3568 = vrsqrt.pop %v3552
    %v3569 = vrsqrt.pop %v3553
    %v3570 = vrsqrt.pop %v3554
    %v3571 = vmul.f32 %v3475, %v3555
    %v3572 = vmul.f32 %v3476, %v3556
    %v3573 = vmul.f32 %v3477, %v3557
    %v3574 = vmul.f32 %v3478, %v3558
    %v3575 = vmul.f32 %v3479, %v3559
    %v3576 = vmul.f32 %v3480, %v3560
    %v3577 = vmul.f32 %v3481, %v3561
    %v3578 = vmul.f32 %v3482, %v3562
    %v3579 = vmul.f32 %v3483, %v3563
    %v3580 = vmul.f32 %v3484, %v3564
    %v3581 = vmul.f32 %v3485, %v3565
    %v3582 = vmul.f32 %v3486, %v3566
    %v3583 = vmul.f32 %v3487, %v3567
    %v3584 = vmul.f32 %v3488, %v3568
    %v3585 = vmul.f32 %v3489, %v3569
    %v3586 = vmul.f32 %v3490, %v3570
    %v3587 = vadd.f32 %v3475, %v3571
    %v3588 = vadd.f32 %v3476, %v3572
    %v3589 = vadd.f32 %v3477, %v3573
    %v3590 = vadd.f32 %v3478, %v3574
    %v3591 = vadd.f32 %v3479, %v3575
    %v3592 = vadd.f32 %v3480, %v3576
    %v3593 = vadd.f32 %v3481, %v3577
    %v3594 = vadd.f32 %v3482, %v3578
    %v3595 = vadd.f32 %v3483, %v3579
    %v3596 = vadd.f32 %v3484, %v3580
    %v3597 = vadd.f32 %v3485, %v3581
    %v3598 = vadd.f32 %v3486, %v3582
    %v3599 = vadd.f32 %v3487, %v3583
    %v3600 = vadd.f32 %v3488, %v3584
    %v3601 = vadd.f32 %v3489, %v3585
    %v3602 = vadd.f32 %v3490, %v3586
    %v3603 = vmul.f32 %v3587, %v3587
    %v3604 = vmul.f32 %v3588, %v3588
    %v3605 = vmul.f32 %v3589, %v3589
    %v3606 = vmul.f32 %v3590, %v3590
    %v3607 = vmul.f32 %v3591, %v3591
    %v3608 = vmul.f32 %v3592, %v3592
    %v3609 = vmul.f32 %v3593, %v3593
    %v3610 = vmul.f32 %v3594, %v3594
    %v3611 = vmul.f32 %v3595, %v3595
    %v3612 = vmul.f32 %v3596, %v3596
    %v3613 = vmul.f32 %v3597, %v3597
    %v3614 = vmul.f32 %v3598, %v3598
    %v3615 = vmul.f32 %v3599, %v3599
    %v3616 = vmul.f32 %v3600, %v3600
    %v3617 = vmul.f32 %v3601, %v3601
    %v3618 = vmul.f32 %v3602, %v3602
    %3619 = vadd.xlane.f32.xlu0 %v3603
    %v3620 = vpop.xlane.xlu0 %3619
    %3621 = vadd.xlane.f32.xlu0 %v3604
    %v3622 = vpop.xlane.xlu0 %3621
    %3623 = vadd.xlane.f32.xlu0 %v3605
    %v3624 = vpop.xlane.xlu0 %3623
    %3625 = vadd.xlane.f32.xlu0 %v3606
    %v3626 = vpop.xlane.xlu0 %3625
    %3627 = vadd.xlane.f32.xlu0 %v3607
    %v3628 = vpop.xlane.xlu0 %3627
    %3629 = vadd.xlane.f32.xlu0 %v3608
    %v3630 = vpop.xlane.xlu0 %3629
    %3631 = vadd.xlane.f32.xlu0 %v3609
    %v3632 = vpop.xlane.xlu0 %3631
    %3633 = vadd.xlane.f32.xlu0 %v3610
    %v3634 = vpop.xlane.xlu0 %3633
    %3635 = vadd.xlane.f32.xlu0 %v3611
    %v3636 = vpop.xlane.xlu0 %3635
    %3637 = vadd.xlane.f32.xlu0 %v3612
    %v3638 = vpop.xlane.xlu0 %3637
    %3639 = vadd.xlane.f32.xlu0 %v3613
    %v3640 = vpop.xlane.xlu0 %3639
    %3641 = vadd.xlane.f32.xlu0 %v3614
    %v3642 = vpop.xlane.xlu0 %3641
    %3643 = vadd.xlane.f32.xlu0 %v3615
    %v3644 = vpop.xlane.xlu0 %3643
    %3645 = vadd.xlane.f32.xlu0 %v3616
    %v3646 = vpop.xlane.xlu0 %3645
    %3647 = vadd.xlane.f32.xlu0 %v3617
    %v3648 = vpop.xlane.xlu0 %3647
    %3649 = vadd.xlane.f32.xlu0 %v3618
    %v3650 = vpop.xlane.xlu0 %3649
    %v3651 = vmul.f32 %v3620, %v177
    %v3652 = vmul.f32 %v3622, %v177
    %v3653 = vmul.f32 %v3624, %v177
    %v3654 = vmul.f32 %v3626, %v177
    %v3655 = vmul.f32 %v3628, %v177
    %v3656 = vmul.f32 %v3630, %v177
    %v3657 = vmul.f32 %v3632, %v177
    %v3658 = vmul.f32 %v3634, %v177
    %v3659 = vmul.f32 %v3636, %v177
    %v3660 = vmul.f32 %v3638, %v177
    %v3661 = vmul.f32 %v3640, %v177
    %v3662 = vmul.f32 %v3642, %v177
    %v3663 = vmul.f32 %v3644, %v177
    %v3664 = vmul.f32 %v3646, %v177
    %v3665 = vmul.f32 %v3648, %v177
    %v3666 = vmul.f32 %v3650, %v177
    %v3667 = vrsqrt.pop %v3651
    %v3668 = vrsqrt.pop %v3652
    %v3669 = vrsqrt.pop %v3653
    %v3670 = vrsqrt.pop %v3654
    %v3671 = vrsqrt.pop %v3655
    %v3672 = vrsqrt.pop %v3656
    %v3673 = vrsqrt.pop %v3657
    %v3674 = vrsqrt.pop %v3658
    %v3675 = vrsqrt.pop %v3659
    %v3676 = vrsqrt.pop %v3660
    %v3677 = vrsqrt.pop %v3661
    %v3678 = vrsqrt.pop %v3662
    %v3679 = vrsqrt.pop %v3663
    %v3680 = vrsqrt.pop %v3664
    %v3681 = vrsqrt.pop %v3665
    %v3682 = vrsqrt.pop %v3666
    %v3683 = vmul.f32 %v3587, %v3667
    %v3684 = vmul.f32 %v3588, %v3668
    %v3685 = vmul.f32 %v3589, %v3669
    %v3686 = vmul.f32 %v3590, %v3670
    %v3687 = vmul.f32 %v3591, %v3671
    %v3688 = vmul.f32 %v3592, %v3672
    %v3689 = vmul.f32 %v3593, %v3673
    %v3690 = vmul.f32 %v3594, %v3674
    %v3691 = vmul.f32 %v3595, %v3675
    %v3692 = vmul.f32 %v3596, %v3676
    %v3693 = vmul.f32 %v3597, %v3677
    %v3694 = vmul.f32 %v3598, %v3678
    %v3695 = vmul.f32 %v3599, %v3679
    %v3696 = vmul.f32 %v3600, %v3680
    %v3697 = vmul.f32 %v3601, %v3681
    %v3698 = vmul.f32 %v3602, %v3682
    %v3699 = vpack.c.bf16 %v3684, %v3683
    %v3700 = vpack.c.bf16 %v3686, %v3685
    %v3701 = vpack.c.bf16 %v3688, %v3687
    %v3702 = vpack.c.bf16 %v3690, %v3689
    %v3703 = vpack.c.bf16 %v3692, %v3691
    %v3704 = vpack.c.bf16 %v3694, %v3693
    %v3705 = vpack.c.bf16 %v3696, %v3695
    %v3706 = vpack.c.bf16 %v3698, %v3697
    %v3707 = vld [vmem:[#allocation8] sm:$0xff]
    %v3708 = vld [vmem:[#allocation8 + $0x8] sm:$0xff]
    %v3709 = vld [vmem:[#allocation8 + $0x10] sm:$0xff]
    %v3710 = vld [vmem:[#allocation8 + $0x18] sm:$0xff]
    %v3711 = vld [vmem:[#allocation8 + $0x20] sm:$0xff]
    %v3712 = vld [vmem:[#allocation8 + $0x28] sm:$0xff]
    %v3713 = vld [vmem:[#allocation8 + $0x30] sm:$0xff]
    %v3714 = vld [vmem:[#allocation8 + $0x38] sm:$0xff]
    %v3715 = vld [vmem:[#allocation8 + $0x40] sm:$0xff]
    %v3716 = vld [vmem:[#allocation8 + $0x48] sm:$0xff]
    %v3717 = vld [vmem:[#allocation8 + $0x50] sm:$0xff]
    %v3718 = vld [vmem:[#allocation8 + $0x58] sm:$0xff]
    %v3719 = vld [vmem:[#allocation8 + $0x60] sm:$0xff]
    %v3720 = vld [vmem:[#allocation8 + $0x68] sm:$0xff]
    %v3721 = vld [vmem:[#allocation8 + $0x70] sm:$0xff]
    %v3722 = vld [vmem:[#allocation8 + $0x78] sm:$0xff]
    %v3739 = vunpack.c.l.b16 %v3707
    %v3740 = vunpack.c.h.b16 %v3707
    %v3741 = vunpack.c.l.b16 %v3708
    %v3742 = vunpack.c.h.b16 %v3708
    %v3743 = vunpack.c.l.b16 %v3709
    %v3744 = vunpack.c.h.b16 %v3709
    %v3745 = vunpack.c.l.b16 %v3710
    %v3746 = vunpack.c.h.b16 %v3710
    %v3747 = vunpack.c.l.b16 %v3711
    %v3748 = vunpack.c.h.b16 %v3711
    %v3749 = vunpack.c.l.b16 %v3712
    %v3750 = vunpack.c.h.b16 %v3712
    %v3751 = vunpack.c.l.b16 %v3713
    %v3752 = vunpack.c.h.b16 %v3713
    %v3753 = vunpack.c.l.b16 %v3714
    %v3754 = vunpack.c.h.b16 %v3714
    %v3755 = vunpack.c.l.b16 %v3715
    %v3756 = vunpack.c.h.b16 %v3715
    %v3757 = vunpack.c.l.b16 %v3716
    %v3758 = vunpack.c.h.b16 %v3716
    %v3759 = vunpack.c.l.b16 %v3717
    %v3760 = vunpack.c.h.b16 %v3717
    %v3761 = vunpack.c.l.b16 %v3718
    %v3762 = vunpack.c.h.b16 %v3718
    %v3763 = vunpack.c.l.b16 %v3719
    %v3764 = vunpack.c.h.b16 %v3719
    %v3765 = vunpack.c.l.b16 %v3720
    %v3766 = vunpack.c.h.b16 %v3720
    %v3767 = vunpack.c.l.b16 %v3721
    %v3768 = vunpack.c.h.b16 %v3721
    %v3769 = vunpack.c.l.b16 %v3722
    %v3770 = vunpack.c.h.b16 %v3722
    %v3771 = vpack.c.b16 %v3741, %v3739
    %v3772 = vpack.c.b16 %v3742, %v3740
    %v3773 = vpack.c.b16 %v3745, %v3743
    %v3774 = vpack.c.b16 %v3746, %v3744
    %v3775 = vpack.c.b16 %v3749, %v3747
    %v3776 = vpack.c.b16 %v3750, %v3748
    %v3777 = vpack.c.b16 %v3753, %v3751
    %v3778 = vpack.c.b16 %v3754, %v3752
    %v3779 = vpack.c.b16 %v3757, %v3755
    %v3780 = vpack.c.b16 %v3758, %v3756
    %v3781 = vpack.c.b16 %v3761, %v3759
    %v3782 = vpack.c.b16 %v3762, %v3760
    %v3783 = vpack.c.b16 %v3765, %v3763
    %v3784 = vpack.c.b16 %v3766, %v3764
    %v3785 = vpack.c.b16 %v3769, %v3767
    %v3786 = vpack.c.b16 %v3770, %v3768
    %3803 = vmatprep.subr.bf16.mxu0 %v3772
    %3804 = vmatpush1.bf16.msra.mxu0 %v3771
    %3805 = vmatprep.subr.bf16.mxu0 %v3774
    %3806 = vmatpush1.bf16.msra.mxu0 %v3773
    %3807 = vmatprep.subr.bf16.mxu0 %v3776
    %3808 = vmatpush1.bf16.msra.mxu0 %v3775
    %3809 = vmatprep.subr.bf16.mxu0 %v3778
    %3810 = vmatpush1.bf16.msra.mxu0 %v3777
    %3811 = vmatprep.subr.bf16.mxu0 %v3780
    %3812 = vmatpush1.bf16.msra.mxu0 %v3779
    %3813 = vmatprep.subr.bf16.mxu0 %v3782
    %3814 = vmatpush1.bf16.msra.mxu0 %v3781
    %3815 = vmatprep.subr.bf16.mxu0 %v3784
    %3816 = vmatpush1.bf16.msra.mxu0 %v3783
    %3817 = vmatprep.subr.bf16.mxu0 %v3786
    %3818 = vmatpush1.bf16.msra.mxu0 %v3785
    %3819 = vmatprep.subr.bf16.mxu0 0
    %3820 = vmatpush1.bf16.msra.mxu0 0
    %3821 = vmatprep.subr.bf16.mxu0 0
    %3822 = vmatpush1.bf16.msra.mxu0 0
    %3823 = vmatprep.subr.bf16.mxu0 0
    %3824 = vmatpush1.bf16.msra.mxu0 0
    %3825 = vmatprep.subr.bf16.mxu0 0
    %3826 = vmatpush1.bf16.msra.mxu0 0
    %3827 = vmatprep.subr.bf16.mxu0 0
    %3828 = vmatpush1.bf16.msra.mxu0 0
    %3829 = vmatprep.subr.bf16.mxu0 0
    %3830 = vmatpush1.bf16.msra.mxu0 0
    %3831 = vmatprep.subr.bf16.mxu0 0
    %3832 = vmatpush1.bf16.msra.mxu0 0
    %3833 = vmatprep.subr.bf16.mxu0 0
    %3834 = vmatpush1.bf16.msra.mxu0 0
    %3835 = vmatprep.mubr.bf16.mxu0 0
    %3836 = vmatmul.mubr.bf16.gmra.mrb[0].mxu0 %v3699
    %v3837 = vpop.f32.mrb[0].mxu0
    %v3838 = vadd.f32 0.0, %v3837
    %v3839 = vpop.f32.mrb[0].mxu0
    %v3840 = vadd.f32 0.0, %v3839
    %v3841 = vpop.f32.mrb[0].mxu0
    %v3842 = vadd.f32 0.0, %v3841
    %v3843 = vpop.f32.mrb[0].mxu0
    %v3844 = vadd.f32 0.0, %v3843
    %3845 = vmatprep.mubr.bf16.mxu0 0
    %3846 = vmatmul.mubr.bf16.gmra.mrb[0].mxu0 %v3700
    %v3847 = vpop.f32.mrb[0].mxu0
    %v3848 = vadd.f32 0.0, %v3847
    %v3849 = vpop.f32.mrb[0].mxu0
    %v3850 = vadd.f32 0.0, %v3849
    %v3851 = vpop.f32.mrb[0].mxu0
    %v3852 = vadd.f32 0.0, %v3851
    %v3853 = vpop.f32.mrb[0].mxu0
    %v3854 = vadd.f32 0.0, %v3853
    %3855 = vmatprep.mubr.bf16.mxu0 0
    %3856 = vmatmul.mubr.bf16.gmra.mrb[0].mxu0 %v3701
    %v3857 = vpop.f32.mrb[0].mxu0
    %v3858 = vadd.f32 0.0, %v3857
    %v3859 = vpop.f32.mrb[0].mxu0
    %v3860 = vadd.f32 0.0, %v3859
    %v3861 = vpop.f32.mrb[0].mxu0
    %v3862 = vadd.f32 0.0, %v3861
    %v3863 = vpop.f32.mrb[0].mxu0
    %v3864 = vadd.f32 0.0, %v3863
    %3865 = vmatprep.mubr.bf16.mxu0 0
    %3866 = vmatmul.mubr.bf16.gmra.mrb[0].mxu0 %v3702
    %v3867 = vpop.f32.mrb[0].mxu0
    %v3868 = vadd.f32 0.0, %v3867
    %v3869 = vpop.f32.mrb[0].mxu0
    %v3870 = vadd.f32 0.0, %v3869
    %v3871 = vpop.f32.mrb[0].mxu0
    %v3872 = vadd.f32 0.0, %v3871
    %v3873 = vpop.f32.mrb[0].mxu0
    %v3874 = vadd.f32 0.0, %v3873
    %3875 = vmatprep.mubr.bf16.mxu0 0
    %3876 = vmatmul.mubr.bf16.gmra.mrb[0].mxu0 %v3703
    %v3877 = vpop.f32.mrb[0].mxu0
    %v3878 = vadd.f32 0.0, %v3877
    %v3879 = vpop.f32.mrb[0].mxu0
    %v3880 = vadd.f32 0.0, %v3879
    %v3881 = vpop.f32.mrb[0].mxu0
    %v3882 = vadd.f32 0.0, %v3881
    %v3883 = vpop.f32.mrb[0].mxu0
    %v3884 = vadd.f32 0.0, %v3883
    %3885 = vmatprep.mubr.bf16.mxu0 0
    %3886 = vmatmul.mubr.bf16.gmra.mrb[0].mxu0 %v3704
    %v3887 = vpop.f32.mrb[0].mxu0
    %v3888 = vadd.f32 0.0, %v3887
    %v3889 = vpop.f32.mrb[0].mxu0
    %v3890 = vadd.f32 0.0, %v3889
    %v3891 = vpop.f32.mrb[0].mxu0
    %v3892 = vadd.f32 0.0, %v3891
    %v3893 = vpop.f32.mrb[0].mxu0
    %v3894 = vadd.f32 0.0, %v3893
    %3895 = vmatprep.mubr.bf16.mxu0 0
    %3896 = vmatmul.mubr.bf16.gmra.mrb[0].mxu0 %v3705
    %v3897 = vpop.f32.mrb[0].mxu0
    %v3898 = vadd.f32 0.0, %v3897
    %v3899 = vpop.f32.mrb[0].mxu0
    %v3900 = vadd.f32 0.0, %v3899
    %v3901 = vpop.f32.mrb[0].mxu0
    %v3902 = vadd.f32 0.0, %v3901
    %v3903 = vpop.f32.mrb[0].mxu0
    %v3904 = vadd.f32 0.0, %v3903
    %3905 = vmatprep.mubr.bf16.mxu0 0
    %3906 = vmatmul.mubr.bf16.gmra.mrb[0].mxu0 %v3706
    %v3907 = vpop.f32.mrb[0].mxu0
    %v3908 = vadd.f32 0.0, %v3907
    %v3909 = vpop.f32.mrb[0].mxu0
    %v3910 = vadd.f32 0.0, %v3909
    %v3911 = vpop.f32.mrb[0].mxu0
    %v3912 = vadd.f32 0.0, %v3911
    %v3913 = vpop.f32.mrb[0].mxu0
    %v3914 = vadd.f32 0.0, %v3913
    %3915 = vdwg.mxu0
    %v3916 = vld [vmem:[#allocation10] sm:$0xff]
    %v3917 = vld [vmem:[#allocation10 + $0x8] sm:$0xff]
    %v3918 = vld [vmem:[#allocation10 + $0x10] sm:$0xff]
    %v3919 = vld [vmem:[#allocation10 + $0x18] sm:$0xff]
    %v3920 = vld [vmem:[#allocation10 + $0x20] sm:$0xff]
    %v3921 = vld [vmem:[#allocation10 + $0x28] sm:$0xff]
    %v3922 = vld [vmem:[#allocation10 + $0x30] sm:$0xff]
    %v3923 = vld [vmem:[#allocation10 + $0x38] sm:$0xff]
    %v3924 = vld [vmem:[#allocation10 + $0x40] sm:$0xff]
    %v3925 = vld [vmem:[#allocation10 + $0x48] sm:$0xff]
    %v3926 = vld [vmem:[#allocation10 + $0x50] sm:$0xff]
    %v3927 = vld [vmem:[#allocation10 + $0x58] sm:$0xff]
    %v3928 = vld [vmem:[#allocation10 + $0x60] sm:$0xff]
    %v3929 = vld [vmem:[#allocation10 + $0x68] sm:$0xff]
    %v3930 = vld [vmem:[#allocation10 + $0x70] sm:$0xff]
    %v3931 = vld [vmem:[#allocation10 + $0x78] sm:$0xff]
    %v3948 = vunpack.c.l.b16 %v3916
    %v3949 = vunpack.c.h.b16 %v3916
    %v3950 = vunpack.c.l.b16 %v3917
    %v3951 = vunpack.c.h.b16 %v3917
    %v3952 = vunpack.c.l.b16 %v3918
    %v3953 = vunpack.c.h.b16 %v3918
    %v3954 = vunpack.c.l.b16 %v3919
    %v3955 = vunpack.c.h.b16 %v3919
    %v3956 = vunpack.c.l.b16 %v3920
    %v3957 = vunpack.c.h.b16 %v3920
    %v3958 = vunpack.c.l.b16 %v3921
    %v3959 = vunpack.c.h.b16 %v3921
    %v3960 = vunpack.c.l.b16 %v3922
    %v3961 = vunpack.c.h.b16 %v3922
    %v3962 = vunpack.c.l.b16 %v3923
    %v3963 = vunpack.c.h.b16 %v3923
    %v3964 = vunpack.c.l.b16 %v3924
    %v3965 = vunpack.c.h.b16 %v3924
    %v3966 = vunpack.c.l.b16 %v3925
    %v3967 = vunpack.c.h.b16 %v3925
    %v3968 = vunpack.c.l.b16 %v3926
    %v3969 = vunpack.c.h.b16 %v3926
    %v3970 = vunpack.c.l.b16 %v3927
    %v3971 = vunpack.c.h.b16 %v3927
    %v3972 = vunpack.c.l.b16 %v3928
    %v3973 = vunpack.c.h.b16 %v3928
    %v3974 = vunpack.c.l.b16 %v3929
    %v3975 = vunpack.c.h.b16 %v3929
    %v3976 = vunpack.c.l.b16 %v3930
    %v3977 = vunpack.c.h.b16 %v3930
    %v3978 = vunpack.c.l.b16 %v3931
    %v3979 = vunpack.c.h.b16 %v3931
    %v3980 = vpack.c.b16 %v3950, %v3948
    %v3981 = vpack.c.b16 %v3951, %v3949
    %v3982 = vpack.c.b16 %v3954, %v3952
    %v3983 = vpack.c.b16 %v3955, %v3953
    %v3984 = vpack.c.b16 %v3958, %v3956
    %v3985 = vpack.c.b16 %v3959, %v3957
    %v3986 = vpack.c.b16 %v3962, %v3960
    %v3987 = vpack.c.b16 %v3963, %v3961
    %v3988 = vpack.c.b16 %v3966, %v3964
    %v3989 = vpack.c.b16 %v3967, %v3965
    %v3990 = vpack.c.b16 %v3970, %v3968
    %v3991 = vpack.c.b16 %v3971, %v3969
    %v3992 = vpack.c.b16 %v3974, %v3972
    %v3993 = vpack.c.b16 %v3975, %v3973
    %v3994 = vpack.c.b16 %v3978, %v3976
    %v3995 = vpack.c.b16 %v3979, %v3977
    %4012 = vmatprep.subr.bf16.mxu0 %v3981
    %4013 = vmatpush1.bf16.msra.mxu0 %v3980
    %4014 = vmatprep.subr.bf16.mxu0 %v3983
    %4015 = vmatpush1.bf16.msra.mxu0 %v3982
    %4016 = vmatprep.subr.bf16.mxu0 %v3985
    %4017 = vmatpush1.bf16.msra.mxu0 %v3984
    %4018 = vmatprep.subr.bf16.mxu0 %v3987
    %4019 = vmatpush1.bf16.msra.mxu0 %v3986
    %4020 = vmatprep.subr.bf16.mxu0 %v3989
    %4021 = vmatpush1.bf16.msra.mxu0 %v3988
    %4022 = vmatprep.subr.bf16.mxu0 %v3991
    %4023 = vmatpush1.bf16.msra.mxu0 %v3990
    %4024 = vmatprep.subr.bf16.mxu0 %v3993
    %4025 = vmatpush1.bf16.msra.mxu0 %v3992
    %4026 = vmatprep.subr.bf16.mxu0 %v3995
    %4027 = vmatpush1.bf16.msra.mxu0 %v3994
    %4028 = vmatprep.subr.bf16.mxu0 0
    %4029 = vmatpush1.bf16.msra.mxu0 0
    %4030 = vmatprep.subr.bf16.mxu0 0
    %4031 = vmatpush1.bf16.msra.mxu0 0
    %4032 = vmatprep.subr.bf16.mxu0 0
    %4033 = vmatpush1.bf16.msra.mxu0 0
    %4034 = vmatprep.subr.bf16.mxu0 0
    %4035 = vmatpush1.bf16.msra.mxu0 0
    %4036 = vmatprep.subr.bf16.mxu0 0
    %4037 = vmatpush1.bf16.msra.mxu0 0
    %4038 = vmatprep.subr.bf16.mxu0 0
    %4039 = vmatpush1.bf16.msra.mxu0 0
    %4040 = vmatprep.subr.bf16.mxu0 0
    %4041 = vmatpush1.bf16.msra.mxu0 0
    %4042 = vmatprep.subr.bf16.mxu0 0
    %4043 = vmatpush1.bf16.msra.mxu0 0
    %4044 = vmatprep.mubr.bf16.mxu0 0
    %4045 = vmatmul.mubr.bf16.gmra.mrb[0].mxu0 %v3699
    %v4046 = vpop.f32.mrb[0].mxu0
    %v4047 = vadd.f32 0.0, %v4046
    %v4048 = vpop.f32.mrb[0].mxu0
    %v4049 = vadd.f32 0.0, %v4048
    %v4050 = vpop.f32.mrb[0].mxu0
    %v4051 = vadd.f32 0.0, %v4050
    %v4052 = vpop.f32.mrb[0].mxu0
    %v4053 = vadd.f32 0.0, %v4052
    %4054 = vmatprep.mubr.bf16.mxu0 0
    %4055 = vmatmul.mubr.bf16.gmra.mrb[0].mxu0 %v3700
    %v4056 = vpop.f32.mrb[0].mxu0
    %v4057 = vadd.f32 0.0, %v4056
    %v4058 = vpop.f32.mrb[0].mxu0
    %v4059 = vadd.f32 0.0, %v4058
    %v4060 = vpop.f32.mrb[0].mxu0
    %v4061 = vadd.f32 0.0, %v4060
    %v4062 = vpop.f32.mrb[0].mxu0
    %v4063 = vadd.f32 0.0, %v4062
    %4064 = vmatprep.mubr.bf16.mxu0 0
    %4065 = vmatmul.mubr.bf16.gmra.mrb[0].mxu0 %v3701
    %v4066 = vpop.f32.mrb[0].mxu0
    %v4067 = vadd.f32 0.0, %v4066
    %v4068 = vpop.f32.mrb[0].mxu0
    %v4069 = vadd.f32 0.0, %v4068
    %v4070 = vpop.f32.mrb[0].mxu0
    %v4071 = vadd.f32 0.0, %v4070
    %v4072 = vpop.f32.mrb[0].mxu0
    %v4073 = vadd.f32 0.0, %v4072
    %4074 = vmatprep.mubr.bf16.mxu0 0
    %4075 = vmatmul.mubr.bf16.gmra.mrb[0].mxu0 %v3702
    %v4076 = vpop.f32.mrb[0].mxu0
    %v4077 = vadd.f32 0.0, %v4076
    %v4078 = vpop.f32.mrb[0].mxu0
    %v4079 = vadd.f32 0.0, %v4078
    %v4080 = vpop.f32.mrb[0].mxu0
    %v4081 = vadd.f32 0.0, %v4080
    %v4082 = vpop.f32.mrb[0].mxu0
    %v4083 = vadd.f32 0.0, %v4082
    %4084 = vmatprep.mubr.bf16.mxu0 0
    %4085 = vmatmul.mubr.bf16.gmra.mrb[0].mxu0 %v3703
    %v4086 = vpop.f32.mrb[0].mxu0
    %v4087 = vadd.f32 0.0, %v4086
    %v4088 = vpop.f32.mrb[0].mxu0
    %v4089 = vadd.f32 0.0, %v4088
    %v4090 = vpop.f32.mrb[0].mxu0
    %v4091 = vadd.f32 0.0, %v4090
    %v4092 = vpop.f32.mrb[0].mxu0
    %v4093 = vadd.f32 0.0, %v4092
    %4094 = vmatprep.mubr.bf16.mxu0 0
    %4095 = vmatmul.mubr.bf16.gmra.mrb[0].mxu0 %v3704
    %v4096 = vpop.f32.mrb[0].mxu0
    %v4097 = vadd.f32 0.0, %v4096
    %v4098 = vpop.f32.mrb[0].mxu0
    %v4099 = vadd.f32 0.0, %v4098
    %v4100 = vpop.f32.mrb[0].mxu0
    %v4101 = vadd.f32 0.0, %v4100
    %v4102 = vpop.f32.mrb[0].mxu0
    %v4103 = vadd.f32 0.0, %v4102
    %4104 = vmatprep.mubr.bf16.mxu0 0
    %4105 = vmatmul.mubr.bf16.gmra.mrb[0].mxu0 %v3705
    %v4106 = vpop.f32.mrb[0].mxu0
    %v4107 = vadd.f32 0.0, %v4106
    %v4108 = vpop.f32.mrb[0].mxu0
    %v4109 = vadd.f32 0.0, %v4108
    %v4110 = vpop.f32.mrb[0].mxu0
    %v4111 = vadd.f32 0.0, %v4110
    %v4112 = vpop.f32.mrb[0].mxu0
    %v4113 = vadd.f32 0.0, %v4112
    %4114 = vmatprep.mubr.bf16.mxu0 0
    %4115 = vmatmul.mubr.bf16.gmra.mrb[0].mxu0 %v3706
    %v4116 = vpop.f32.mrb[0].mxu0
    %v4117 = vadd.f32 0.0, %v4116
    %v4118 = vpop.f32.mrb[0].mxu0
    %v4119 = vadd.f32 0.0, %v4118
    %v4120 = vpop.f32.mrb[0].mxu0
    %v4121 = vadd.f32 0.0, %v4120
    %v4122 = vpop.f32.mrb[0].mxu0
    %v4123 = vadd.f32 0.0, %v4122
    %4124 = vdwg.mxu0
    %v4125 = vmul.f32 %v3838, 0.5
    %v4126 = vmul.f32 %v3840, 0.5
    %v4127 = vmul.f32 %v3842, 0.5
    %v4128 = vmul.f32 %v3844, 0.5
    %v4129 = vmul.f32 %v3848, 0.5
    %v4130 = vmul.f32 %v3850, 0.5
    %v4131 = vmul.f32 %v3852, 0.5
    %v4132 = vmul.f32 %v3854, 0.5
    %v4133 = vmul.f32 %v3858, 0.5
    %v4134 = vmul.f32 %v3860, 0.5
    %v4135 = vmul.f32 %v3862, 0.5
    %v4136 = vmul.f32 %v3864, 0.5
    %v4137 = vmul.f32 %v3868, 0.5
    %v4138 = vmul.f32 %v3870, 0.5
    %v4139 = vmul.f32 %v3872, 0.5
    %v4140 = vmul.f32 %v3874, 0.5
    %v4141 = vmul.f32 %v3878, 0.5
    %v4142 = vmul.f32 %v3880, 0.5
    %v4143 = vmul.f32 %v3882, 0.5
    %v4144 = vmul.f32 %v3884, 0.5
    %v4145 = vmul.f32 %v3888, 0.5
    %v4146 = vmul.f32 %v3890, 0.5
    %v4147 = vmul.f32 %v3892, 0.5
    %v4148 = vmul.f32 %v3894, 0.5
    %v4149 = vmul.f32 %v3898, 0.5
    %v4150 = vmul.f32 %v3900, 0.5
    %v4151 = vmul.f32 %v3902, 0.5
    %v4152 = vmul.f32 %v3904, 0.5
    %v4153 = vmul.f32 %v3908, 0.5
    %v4154 = vmul.f32 %v3910, 0.5
    %v4155 = vmul.f32 %v3912, 0.5
    %v4156 = vmul.f32 %v3914, 0.5
    %v4157 = vmul.f32 %v3838, 0.70710677
    %v4158 = vmul.f32 %v3840, 0.70710677
    %v4159 = vmul.f32 %v3842, 0.70710677
    %v4160 = vmul.f32 %v3844, 0.70710677
    %v4161 = vmul.f32 %v3848, 0.70710677
    %v4162 = vmul.f32 %v3850, 0.70710677
    %v4163 = vmul.f32 %v3852, 0.70710677
    %v4164 = vmul.f32 %v3854, 0.70710677
    %v4165 = vmul.f32 %v3858, 0.70710677
    %v4166 = vmul.f32 %v3860, 0.70710677
    %v4167 = vmul.f32 %v3862, 0.70710677
    %v4168 = vmul.f32 %v3864, 0.70710677
    %v4169 = vmul.f32 %v3868, 0.70710677
    %v4170 = vmul.f32 %v3870, 0.70710677
    %v4171 = vmul.f32 %v3872, 0.70710677
    %v4172 = vmul.f32 %v3874, 0.70710677
    %v4173 = vmul.f32 %v3878, 0.70710677
    %v4174 = vmul.f32 %v3880, 0.70710677
    %v4175 = vmul.f32 %v3882, 0.70710677
    %v4176 = vmul.f32 %v3884, 0.70710677
    %v4177 = vmul.f32 %v3888, 0.70710677
    %v4178 = vmul.f32 %v3890, 0.70710677
    %v4179 = vmul.f32 %v3892, 0.70710677
    %v4180 = vmul.f32 %v3894, 0.70710677
    %v4181 = vmul.f32 %v3898, 0.70710677
    %v4182 = vmul.f32 %v3900, 0.70710677
    %v4183 = vmul.f32 %v3902, 0.70710677
    %v4184 = vmul.f32 %v3904, 0.70710677
    %v4185 = vmul.f32 %v3908, 0.70710677
    %v4186 = vmul.f32 %v3910, 0.70710677
    %v4187 = vmul.f32 %v3912, 0.70710677
    %v4188 = vmul.f32 %v3914, 0.70710677
    %v4189 = verf.f32.pop %v4157
    %v4190 = verf.f32.pop %v4158
    %v4191 = verf.f32.pop %v4159
    %v4192 = verf.f32.pop %v4160
    %v4193 = verf.f32.pop %v4161
    %v4194 = verf.f32.pop %v4162
    %v4195 = verf.f32.pop %v4163
    %v4196 = verf.f32.pop %v4164
    %v4197 = verf.f32.pop %v4165
    %v4198 = verf.f32.pop %v4166
    %v4199 = verf.f32.pop %v4167
    %v4200 = verf.f32.pop %v4168
    %v4201 = verf.f32.pop %v4169
    %v4202 = verf.f32.pop %v4170
    %v4203 = verf.f32.pop %v4171
    %v4204 = verf.f32.pop %v4172
    %v4205 = verf.f32.pop %v4173
    %v4206 = verf.f32.pop %v4174
    %v4207 = verf.f32.pop %v4175
    %v4208 = verf.f32.pop %v4176
    %v4209 = verf.f32.pop %v4177
    %v4210 = verf.f32.pop %v4178
    %v4211 = verf.f32.pop %v4179
    %v4212 = verf.f32.pop %v4180
    %v4213 = verf.f32.pop %v4181
    %v4214 = verf.f32.pop %v4182
    %v4215 = verf.f32.pop %v4183
    %v4216 = verf.f32.pop %v4184
    %v4217 = verf.f32.pop %v4185
    %v4218 = verf.f32.pop %v4186
    %v4219 = verf.f32.pop %v4187
    %v4220 = verf.f32.pop %v4188
    %v4221 = vadd.f32 %v4189, 1.0
    %v4222 = vadd.f32 %v4190, 1.0
    %v4223 = vadd.f32 %v4191, 1.0
    %v4224 = vadd.f32 %v4192, 1.0
    %v4225 = vadd.f32 %v4193, 1.0
    %v4226 = vadd.f32 %v4194, 1.0
    %v4227 = vadd.f32 %v4195, 1.0
    %v4228 = vadd.f32 %v4196, 1.0
    %v4229 = vadd.f32 %v4197, 1.0
    %v4230 = vadd.f32 %v4198, 1.0
    %v4231 = vadd.f32 %v4199, 1.0
    %v4232 = vadd.f32 %v4200, 1.0
    %v4233 = vadd.f32 %v4201, 1.0
    %v4234 = vadd.f32 %v4202, 1.0
    %v4235 = vadd.f32 %v4203, 1.0
    %v4236 = vadd.f32 %v4204, 1.0
    %v4237 = vadd.f32 %v4205, 1.0
    %v4238 = vadd.f32 %v4206, 1.0
    %v4239 = vadd.f32 %v4207, 1.0
    %v4240 = vadd.f32 %v4208, 1.0
    %v4241 = vadd.f32 %v4209, 1.0
    %v4242 = vadd.f32 %v4210, 1.0
    %v4243 = vadd.f32 %v4211, 1.0
    %v4244 = vadd.f32 %v4212, 1.0
    %v4245 = vadd.f32 %v4213, 1.0
    %v4246 = vadd.f32 %v4214, 1.0
    %v4247 = vadd.f32 %v4215, 1.0
    %v4248 = vadd.f32 %v4216, 1.0
    %v4249 = vadd.f32 %v4217, 1.0
    %v4250 = vadd.f32 %v4218, 1.0
    %v4251 = vadd.f32 %v4219, 1.0
    %v4252 = vadd.f32 %v4220, 1.0
    %v4253 = vmul.f32 %v4125, %v4221
    %v4254 = vmul.f32 %v4126, %v4222
    %v4255 = vmul.f32 %v4127, %v4223
    %v4256 = vmul.f32 %v4128, %v4224
    %v4257 = vmul.f32 %v4129, %v4225
    %v4258 = vmul.f32 %v4130, %v4226
    %v4259 = vmul.f32 %v4131, %v4227
    %v4260 = vmul.f32 %v4132, %v4228
    %v4261 = vmul.f32 %v4133, %v4229
    %v4262 = vmul.f32 %v4134, %v4230
    %v4263 = vmul.f32 %v4135, %v4231
    %v4264 = vmul.f32 %v4136, %v4232
    %v4265 = vmul.f32 %v4137, %v4233
    %v4266 = vmul.f32 %v4138, %v4234
    %v4267 = vmul.f32 %v4139, %v4235
    %v4268 = vmul.f32 %v4140, %v4236
    %v4269 = vmul.f32 %v4141, %v4237
    %v4270 = vmul.f32 %v4142, %v4238
    %v4271 = vmul.f32 %v4143, %v4239
    %v4272 = vmul.f32 %v4144, %v4240
    %v4273 = vmul.f32 %v4145, %v4241
    %v4274 = vmul.f32 %v4146, %v4242
    %v4275 = vmul.f32 %v4147, %v4243
    %v4276 = vmul.f32 %v4148, %v4244
    %v4277 = vmul.f32 %v4149, %v4245
    %v4278 = vmul.f32 %v4150, %v4246
    %v4279 = vmul.f32 %v4151, %v4247
    %v4280 = vmul.f32 %v4152, %v4248
    %v4281 = vmul.f32 %v4153, %v4249
    %v4282 = vmul.f32 %v4154, %v4250
    %v4283 = vmul.f32 %v4155, %v4251
    %v4284 = vmul.f32 %v4156, %v4252
    %v4285 = vmul.f32 %v4253, %v4047
    %v4286 = vmul.f32 %v4254, %v4049
    %v4287 = vmul.f32 %v4255, %v4051
    %v4288 = vmul.f32 %v4256, %v4053
    %v4289 = vmul.f32 %v4257, %v4057
    %v4290 = vmul.f32 %v4258, %v4059
    %v4291 = vmul.f32 %v4259, %v4061
    %v4292 = vmul.f32 %v4260, %v4063
    %v4293 = vmul.f32 %v4261, %v4067
    %v4294 = vmul.f32 %v4262, %v4069
    %v4295 = vmul.f32 %v4263, %v4071
    %v4296 = vmul.f32 %v4264, %v4073
    %v4297 = vmul.f32 %v4265, %v4077
    %v4298 = vmul.f32 %v4266, %v4079
    %v4299 = vmul.f32 %v4267, %v4081
    %v4300 = vmul.f32 %v4268, %v4083
    %v4301 = vmul.f32 %v4269, %v4087
    %v4302 = vmul.f32 %v4270, %v4089
    %v4303 = vmul.f32 %v4271, %v4091
    %v4304 = vmul.f32 %v4272, %v4093
    %v4305 = vmul.f32 %v4273, %v4097
    %v4306 = vmul.f32 %v4274, %v4099
    %v4307 = vmul.f32 %v4275, %v4101
    %v4308 = vmul.f32 %v4276, %v4103
    %v4309 = vmul.f32 %v4277, %v4107
    %v4310 = vmul.f32 %v4278, %v4109
    %v4311 = vmul.f32 %v4279, %v4111
    %v4312 = vmul.f32 %v4280, %v4113
    %v4313 = vmul.f32 %v4281, %v4117
    %v4314 = vmul.f32 %v4282, %v4119
    %v4315 = vmul.f32 %v4283, %v4121
    %v4316 = vmul.f32 %v4284, %v4123
    %v4317 = vpack.c.bf16 %v4287, %v4285
    %v4318 = vpack.c.bf16 %v4288, %v4286
    %v4319 = vpack.c.bf16 %v4291, %v4289
    %v4320 = vpack.c.bf16 %v4292, %v4290
    %v4321 = vpack.c.bf16 %v4295, %v4293
    %v4322 = vpack.c.bf16 %v4296, %v4294
    %v4323 = vpack.c.bf16 %v4299, %v4297
    %v4324 = vpack.c.bf16 %v4300, %v4298
    %v4325 = vpack.c.bf16 %v4303, %v4301
    %v4326 = vpack.c.bf16 %v4304, %v4302
    %v4327 = vpack.c.bf16 %v4307, %v4305
    %v4328 = vpack.c.bf16 %v4308, %v4306
    %v4329 = vpack.c.bf16 %v4311, %v4309
    %v4330 = vpack.c.bf16 %v4312, %v4310
    %v4331 = vpack.c.bf16 %v4315, %v4313
    %v4332 = vpack.c.bf16 %v4316, %v4314
    %v4333 = vld [vmem:[#allocation11] sm:$0xf]
    %v4334 = vld [vmem:[#allocation11 + $0x4] sm:$0xf]
    %v4335 = vld [vmem:[#allocation11 + $0x8] sm:$0xf]
    %v4336 = vld [vmem:[#allocation11 + $0xc] sm:$0xf]
    %v4337 = vld [vmem:[#allocation11 + $0x10] sm:$0xf]
    %v4338 = vld [vmem:[#allocation11 + $0x14] sm:$0xf]
    %v4339 = vld [vmem:[#allocation11 + $0x18] sm:$0xf]
    %v4340 = vld [vmem:[#allocation11 + $0x1c] sm:$0xf]
    %v4341 = vld [vmem:[#allocation11 + $0x20] sm:$0xf]
    %v4342 = vld [vmem:[#allocation11 + $0x24] sm:$0xf]
    %v4343 = vld [vmem:[#allocation11 + $0x28] sm:$0xf]
    %v4344 = vld [vmem:[#allocation11 + $0x2c] sm:$0xf]
    %v4345 = vld [vmem:[#allocation11 + $0x30] sm:$0xf]
    %v4346 = vld [vmem:[#allocation11 + $0x34] sm:$0xf]
    %v4347 = vld [vmem:[#allocation11 + $0x38] sm:$0xf]
    %v4348 = vld [vmem:[#allocation11 + $0x3c] sm:$0xf]
    %v4349 = vld [vmem:[#allocation11 + $0x40] sm:$0xf]
    %v4350 = vld [vmem:[#allocation11 + $0x44] sm:$0xf]
    %v4351 = vld [vmem:[#allocation11 + $0x48] sm:$0xf]
    %v4352 = vld [vmem:[#allocation11 + $0x4c] sm:$0xf]
    %v4353 = vld [vmem:[#allocation11 + $0x50] sm:$0xf]
    %v4354 = vld [vmem:[#allocation11 + $0x54] sm:$0xf]
    %v4355 = vld [vmem:[#allocation11 + $0x58] sm:$0xf]
    %v4356 = vld [vmem:[#allocation11 + $0x5c] sm:$0xf]
    %v4357 = vld [vmem:[#allocation11 + $0x60] sm:$0xf]
    %v4358 = vld [vmem:[#allocation11 + $0x64] sm:$0xf]
    %v4359 = vld [vmem:[#allocation11 + $0x68] sm:$0xf]
    %v4360 = vld [vmem:[#allocation11 + $0x6c] sm:$0xf]
    %v4361 = vld [vmem:[#allocation11 + $0x70] sm:$0xf]
    %v4362 = vld [vmem:[#allocation11 + $0x74] sm:$0xf]
    %v4363 = vld [vmem:[#allocation11 + $0x78] sm:$0xf]
    %v4364 = vld [vmem:[#allocation11 + $0x7c] sm:$0xf]
    %v4397 = vunpack.c.l.b16 %v4333
    %v4398 = vunpack.c.l.b16 %v4334
    %v4399 = vunpack.c.l.b16 %v4335
    %v4400 = vunpack.c.l.b16 %v4336
    %v4401 = vunpack.c.l.b16 %v4337
    %v4402 = vunpack.c.l.b16 %v4338
    %v4403 = vunpack.c.l.b16 %v4339
    %v4404 = vunpack.c.l.b16 %v4340
    %v4405 = vunpack.c.l.b16 %v4341
    %v4406 = vunpack.c.l.b16 %v4342
    %v4407 = vunpack.c.l.b16 %v4343
    %v4408 = vunpack.c.l.b16 %v4344
    %v4409 = vunpack.c.l.b16 %v4345
    %v4410 = vunpack.c.l.b16 %v4346
    %v4411 = vunpack.c.l.b16 %v4347
    %v4412 = vunpack.c.l.b16 %v4348
    %v4413 = vunpack.c.l.b16 %v4349
    %v4414 = vunpack.c.l.b16 %v4350
    %v4415 = vunpack.c.l.b16 %v4351
    %v4416 = vunpack.c.l.b16 %v4352
    %v4417 = vunpack.c.l.b16 %v4353
    %v4418 = vunpack.c.l.b16 %v4354
    %v4419 = vunpack.c.l.b16 %v4355
    %v4420 = vunpack.c.l.b16 %v4356
    %v4421 = vunpack.c.l.b16 %v4357
    %v4422 = vunpack.c.l.b16 %v4358
    %v4423 = vunpack.c.l.b16 %v4359
    %v4424 = vunpack.c.l.b16 %v4360
    %v4425 = vunpack.c.l.b16 %v4361
    %v4426 = vunpack.c.l.b16 %v4362
    %v4427 = vunpack.c.l.b16 %v4363
    %v4428 = vunpack.c.l.b16 %v4364
    %v4429 = vpack.c.b16 %v4398, %v4397
    %v4430 = vpack.c.b16 %v4400, %v4399
    %v4431 = vpack.c.b16 %v4402, %v4401
    %v4432 = vpack.c.b16 %v4404, %v4403
    %v4433 = vpack.c.b16 %v4406, %v4405
    %v4434 = vpack.c.b16 %v4408, %v4407
    %v4435 = vpack.c.b16 %v4410, %v4409
    %v4436 = vpack.c.b16 %v4412, %v4411
    %v4437 = vpack.c.b16 %v4414, %v4413
    %v4438 = vpack.c.b16 %v4416, %v4415
    %v4439 = vpack.c.b16 %v4418, %v4417
    %v4440 = vpack.c.b16 %v4420, %v4419
    %v4441 = vpack.c.b16 %v4422, %v4421
    %v4442 = vpack.c.b16 %v4424, %v4423
    %v4443 = vpack.c.b16 %v4426, %v4425
    %v4444 = vpack.c.b16 %v4428, %v4427
    %4461 = vmatprep.subr.bf16.mxu0 0
    %4462 = vmatpush1.bf16.msra.mxu0 %v4429
    %4463 = vmatprep.subr.bf16.mxu0 0
    %4464 = vmatpush1.bf16.msra.mxu0 %v4430
    %4465 = vmatprep.subr.bf16.mxu0 0
    %4466 = vmatpush1.bf16.msra.mxu0 %v4431
    %4467 = vmatprep.subr.bf16.mxu0 0
    %4468 = vmatpush1.bf16.msra.mxu0 %v4432
    %4469 = vmatprep.subr.bf16.mxu0 0
    %4470 = vmatpush1.bf16.msra.mxu0 %v4433
    %4471 = vmatprep.subr.bf16.mxu0 0
    %4472 = vmatpush1.bf16.msra.mxu0 %v4434
    %4473 = vmatprep.subr.bf16.mxu0 0
    %4474 = vmatpush1.bf16.msra.mxu0 %v4435
    %4475 = vmatprep.subr.bf16.mxu0 0
    %4476 = vmatpush1.bf16.msra.mxu0 %v4436
    %4477 = vmatprep.subr.bf16.mxu0 0
    %4478 = vmatpush1.bf16.msra.mxu0 %v4437
    %4479 = vmatprep.subr.bf16.mxu0 0
    %4480 = vmatpush1.bf16.msra.mxu0 %v4438
    %4481 = vmatprep.subr.bf16.mxu0 0
    %4482 = vmatpush1.bf16.msra.mxu0 %v4439
    %4483 = vmatprep.subr.bf16.mxu0 0
    %4484 = vmatpush1.bf16.msra.mxu0 %v4440
    %4485 = vmatprep.subr.bf16.mxu0 0
    %4486 = vmatpush1.bf16.msra.mxu0 %v4441
    %4487 = vmatprep.subr.bf16.mxu0 0
    %4488 = vmatpush1.bf16.msra.mxu0 %v4442
    %4489 = vmatprep.subr.bf16.mxu0 0
    %4490 = vmatpush1.bf16.msra.mxu0 %v4443
    %4491 = vmatprep.subr.bf16.mxu0 0
    %4492 = vmatpush1.bf16.msra.mxu0 %v4444
    %4493 = vmatprep.mubr.bf16.mxu0 %v4318
    %4494 = vmatmul.mubr.bf16.gmra.mrb[0].mxu0 %v4317
    %v4495 = vpop.f32.mrb[0].mxu0
    %v4496 = vadd.f32 0.0, %v4495
    %v4497 = vpop.f32.mrb[0].mxu0
    %v4498 = vpop.f32.mrb[0].mxu0
    %v4499 = vadd.f32 0.0, %v4498
    %v4500 = vpop.f32.mrb[0].mxu0
    %4501 = vmatprep.mubr.bf16.mxu0 %v4320
    %4502 = vmatmul.mubr.bf16.gmra.mrb[0].mxu0 %v4319
    %v4503 = vpop.f32.mrb[0].mxu0
    %v4504 = vadd.f32 0.0, %v4503
    %v4505 = vpop.f32.mrb[0].mxu0
    %v4506 = vpop.f32.mrb[0].mxu0
    %v4507 = vadd.f32 0.0, %v4506
    %v4508 = vpop.f32.mrb[0].mxu0
    %4509 = vmatprep.mubr.bf16.mxu0 %v4322
    %4510 = vmatmul.mubr.bf16.gmra.mrb[0].mxu0 %v4321
    %v4511 = vpop.f32.mrb[0].mxu0
    %v4512 = vadd.f32 0.0, %v4511
    %v4513 = vpop.f32.mrb[0].mxu0
    %v4514 = vpop.f32.mrb[0].mxu0
    %v4515 = vadd.f32 0.0, %v4514
    %v4516 = vpop.f32.mrb[0].mxu0
    %4517 = vmatprep.mubr.bf16.mxu0 %v4324
    %4518 = vmatmul.mubr.bf16.gmra.mrb[0].mxu0 %v4323
    %v4519 = vpop.f32.mrb[0].mxu0
    %v4520 = vadd.f32 0.0, %v4519
    %v4521 = vpop.f32.mrb[0].mxu0
    %v4522 = vpop.f32.mrb[0].mxu0
    %v4523 = vadd.f32 0.0, %v4522
    %v4524 = vpop.f32.mrb[0].mxu0
    %4525 = vmatprep.mubr.bf16.mxu0 %v4326
    %4526 = vmatmul.mubr.bf16.gmra.mrb[0].mxu0 %v4325
    %v4527 = vpop.f32.mrb[0].mxu0
    %v4528 = vadd.f32 0.0, %v4527
    %v4529 = vpop.f32.mrb[0].mxu0
    %v4530 = vpop.f32.mrb[0].mxu0
    %v4531 = vadd.f32 0.0, %v4530
    %v4532 = vpop.f32.mrb[0].mxu0
    %4533 = vmatprep.mubr.bf16.mxu0 %v4328
    %4534 = vmatmul.mubr.bf16.gmra.mrb[0].mxu0 %v4327
    %v4535 = vpop.f32.mrb[0].mxu0
    %v4536 = vadd.f32 0.0, %v4535
    %v4537 = vpop.f32.mrb[0].mxu0
    %v4538 = vpop.f32.mrb[0].mxu0
    %v4539 = vadd.f32 0.0, %v4538
    %v4540 = vpop.f32.mrb[0].mxu0
    %4541 = vmatprep.mubr.bf16.mxu0 %v4330
    %4542 = vmatmul.mubr.bf16.gmra.mrb[0].mxu0 %v4329
    %v4543 = vpop.f32.mrb[0].mxu0
    %v4544 = vadd.f32 0.0, %v4543
    %v4545 = vpop.f32.mrb[0].mxu0
    %v4546 = vpop.f32.mrb[0].mxu0
    %v4547 = vadd.f32 0.0, %v4546
    %v4548 = vpop.f32.mrb[0].mxu0
    %4549 = vmatprep.mubr.bf16.mxu0 %v4332
    %4550 = vmatmul.mubr.bf16.gmra.mrb[0].mxu0 %v4331
    %v4551 = vpop.f32.mrb[0].mxu0
    %v4552 = vadd.f32 0.0, %v4551
    %v4553 = vpop.f32.mrb[0].mxu0
    %v4554 = vpop.f32.mrb[0].mxu0
    %v4555 = vadd.f32 0.0, %v4554
    %v4556 = vpop.f32.mrb[0].mxu0
    %4557 = vdwg.mxu0
    %v4558 = vadd.f32 %v3587, %v4496
    %v4559 = vadd.f32 %v3588, %v4499
    %v4560 = vadd.f32 %v3589, %v4504
    %v4561 = vadd.f32 %v3590, %v4507
    %v4562 = vadd.f32 %v3591, %v4512
    %v4563 = vadd.f32 %v3592, %v4515
    %v4564 = vadd.f32 %v3593, %v4520
    %v4565 = vadd.f32 %v3594, %v4523
    %v4566 = vadd.f32 %v3595, %v4528
    %v4567 = vadd.f32 %v3596, %v4531
    %v4568 = vadd.f32 %v3597, %v4536
    %v4569 = vadd.f32 %v3598, %v4539
    %v4570 = vadd.f32 %v3599, %v4544
    %v4571 = vadd.f32 %v3600, %v4547
    %v4572 = vadd.f32 %v3601, %v4552
    %v4573 = vadd.f32 %v3602, %v4555
    %4574 = vst [vmem:[#allocation13] sm:$0xff] %v4558
    %4575 = vst [vmem:[#allocation13 + $0x8] sm:$0xff] %v4559
    %4576 = vst [vmem:[#allocation13 + $0x10] sm:$0xff] %v4560
    %4577 = vst [vmem:[#allocation13 + $0x18] sm:$0xff] %v4561
    %4578 = vst [vmem:[#allocation13 + $0x20] sm:$0xff] %v4562
    %4579 = vst [vmem:[#allocation13 + $0x28] sm:$0xff] %v4563
    %4580 = vst [vmem:[#allocation13 + $0x30] sm:$0xff] %v4564
    %4581 = vst [vmem:[#allocation13 + $0x38] sm:$0xff] %v4565
    %4582 = vst [vmem:[#allocation13 + $0x40] sm:$0xff] %v4566
    %4583 = vst [vmem:[#allocation13 + $0x48] sm:$0xff] %v4567
    %4584 = vst [vmem:[#allocation13 + $0x50] sm:$0xff] %v4568
    %4585 = vst [vmem:[#allocation13 + $0x58] sm:$0xff] %v4569
    %4586 = vst [vmem:[#allocation13 + $0x60] sm:$0xff] %v4570
    %4587 = vst [vmem:[#allocation13 + $0x68] sm:$0xff] %v4571
    %4588 = vst [vmem:[#allocation13 + $0x70] sm:$0xff] %v4572
    %4589 = vst [vmem:[#allocation13 + $0x78] sm:$0xff] %v4573
    // Predicated region
    $region58: #{tpu_custom_call.1} parent=1 // pred_check
      _
    $region59: #{tpu_custom_call.1} parent=1 // pred_check_branch
      %4591 = sbr.rel (0) target = $region61
    $region60: #{tpu_custom_call.1} parent=1 // pred_region
      %s4593 = ssub.s32 2048, 2048
      %4594 = vsyncadd [#allocation4], %s4593
      %s4595 = sshll.u32 [#allocation13], 4
      %s4596 = int_to_ptr.vmem [resolvable:$true] %s4595
      %4601 = dma.vmem_to_hbm [thread:$0]  %s4596, 2048, %s8, [#allocation4], 128, 128, 8
    $region61: #{tpu_custom_call.1} parent=1 // pred_fallthru
      _
    // Predicated region
    $region62: #{tpu_custom_call.1} parent=1 // pred_check
      _
    $region63: #{tpu_custom_call.1} parent=1 // pred_check_branch
      %4603 = sbr.rel (0) target = $region65
    $region64: #{tpu_custom_call.1} parent=1 // pred_region
      %4604 = dma.done [#allocation4], 2048
    $region65: #{tpu_custom_call.1} parent=1 // pred_fallthru
      _
    %4605 = vsyncpa [#allocation3], 1
    %4606 = vsyncpa [#allocation6], 1
    %4607 = vsyncpa [#allocation9], 1
    %4608 = vsyncpa [#allocation12], 1
    %4609 = vsyncpa [#allocation4], 1

// kernel: tpu_custom_call.1
$region0: #{tpu_custom_call.1}
  #allocation0 [shape = 'u32[]', space=smem, size = 0x4, offset = 0x4, fixed_abs, tag = 'smem constant byte address 0x4 - core index']
  #allocation1 [shape = 'u32[144,128]{1,0:T(1,128)}', space=vmem, size = 0x12000, scoped, tag = 'internal scratch']
  %s0 = inlined_call_operand.hbm [shape: f32[2,64,128], index: 0, kind: input, shape index: {}]
  %s1 = inlined_call_operand.hbm [shape: bf16[128,384], index: 1, kind: input, shape index: {}]
  %s2 = inlined_call_operand.vmem [shape: f32[1,384], index: 2, kind: input, shape index: {}]
  %s3 = inlined_call_operand.hbm [shape: bf16[128,128], index: 3, kind: input, shape index: {}]
  %s4 = inlined_call_operand.vmem [shape: f32[1,128], index: 4, kind: input, shape index: {}]
  %s5 = inlined_call_operand.hbm [shape: bf16[128,256], index: 5, kind: input, shape index: {}]
  %s6 = inlined_call_operand.hbm [shape: bf16[128,256], index: 6, kind: input, shape index: {}]
  %s7 = inlined_call_operand.hbm [shape: bf16[256,128], index: 7, kind: input, shape index: {}]
  %s8 = inlined_call_operand.hbm [shape: f32[2,64,128], index: 8, kind: output, shape index: {}]
  %s9 = sld [smem:[#allocation0]]
  $region66: #{tpu_custom_call.1} parent=0
    _
  %s11 = ssub.s32 1, %s9
  %s12 = scalar_select 0, %s11, %s9
  $region1: #{tpu_custom_call.1} parent=0
    #allocation2 [shape = 'u8[65536]{0}', space=vmem, size = 0x10000, scoped, tag = 'input window, operand 0, single buffered']
    #allocation3 [shape = 's32[1]{0}', space=sflag, size = 0x4, scoped, tag = 'scoped memory for tpu_custom_call.1']
    #allocation4 [shape = 's32[1]{0}', space=sflag, size = 0x4, scoped, tag = 'scoped memory for tpu_custom_call.1']
    #allocation5 [shape = 'u8[98304]{0}', space=vmem, size = 0x18000, scoped, tag = 'input window, operand 1, single buffered']
    #allocation6 [shape = 's32[1]{0}', space=sflag, size = 0x4, scoped, tag = 'scoped memory for tpu_custom_call.1']
    #allocation7 [shape = 'u8[32768]{0}', space=vmem, size = 0x8000, scoped, tag = 'input window, operand 3, single buffered']
    #allocation8 [shape = 'u8[65536]{0}', space=vmem, size = 0x10000, scoped, tag = 'input window, operand 5, single buffered']
    #allocation9 [shape = 's32[1]{0}', space=sflag, size = 0x4, scoped, tag = 'scoped memory for tpu_custom_call.1']
    #allocation10 [shape = 'u8[65536]{0}', space=vmem, size = 0x10000, scoped, tag = 'input window, operand 6, single buffered']
    #allocation11 [shape = 'u8[65536]{0}', space=vmem, size = 0x10000, scoped, tag = 'input window, operand 7, single buffered']
    #allocation12 [shape = 's32[1]{0}', space=sflag, size = 0x4, scoped, tag = 'scoped memory for tpu_custom_call.1']
    #allocation13 [shape = 'u8[65536]{0}', space=vmem, size = 0x10000, scoped, tag = 'output window, operand 0, single buffered']
    %13 = vsyncpa [#allocation3], 0
    %14 = vsyncpa [#allocation6], 0
    %15 = vsyncpa [#allocation9], 0
    %16 = vsyncpa [#allocation12], 0
    %17 = vsyncpa [#allocation4], 0
    // Predicated region
    $region2: #{tpu_custom_call.1} parent=1 // pred_check
      _
    $region3: #{tpu_custom_call.1} parent=1 // pred_check_branch
      %19 = sbr.rel (0) target = $region5
    $region4: #{tpu_custom_call.1} parent=1 // pred_region
      %s21 = ssub.s32 2048, 2048
      %22 = vsyncadd [#allocation3], %s21
      %s23 = sshll.u32 [#allocation2], 4
      %s24 = int_to_ptr.vmem [resolvable:$true] %s23
      %29 = dma.hbm_to_vmem [thread:$0]  %s0, 2048, %s24, [#allocation3], 128, 128, 8
    $region5: #{tpu_custom_call.1} parent=1 // pred_fallthru
      _
    // Predicated region
    $region6: #{tpu_custom_call.1} parent=1 // pred_check
      _
    $region7: #{tpu_custom_call.1} parent=1 // pred_check_branch
      %31 = sbr.rel (0) target = $region9
    $region8: #{tpu_custom_call.1} parent=1 // pred_region
      %s33 = ssub.s32 3072, 3072
      %34 = vsyncadd [#allocation6], %s33
      %s35 = sshll.u32 [#allocation5], 4
      %s36 = int_to_ptr.vmem [resolvable:$true] %s35
      %41 = dma.hbm_to_vmem [thread:$0]  %s1, 3072, %s36, [#allocation6], 192, 192, 12
    $region9: #{tpu_custom_call.1} parent=1 // pred_fallthru
      _
    // Predicated region
    $region10: #{tpu_custom_call.1} parent=1 // pred_check
      _
    $region11: #{tpu_custom_call.1} parent=1 // pred_check_branch
      %43 = sbr.rel (0) target = $region13
    $region12: #{tpu_custom_call.1} parent=1 // pred_region
      _
    $region13: #{tpu_custom_call.1} parent=1 // pred_fallthru
      _
    // Predicated region
    $region14: #{tpu_custom_call.1} parent=1 // pred_check
      _
    $region15: #{tpu_custom_call.1} parent=1 // pred_check_branch
      %45 = sbr.rel (0) target = $region17
    $region16: #{tpu_custom_call.1} parent=1 // pred_region
      %s47 = ssub.s32 1024, 1024
      %48 = vsyncadd [#allocation6], %s47
      %s49 = sshll.u32 [#allocation7], 4
      %s50 = int_to_ptr.vmem [resolvable:$true] %s49
      %55 = dma.hbm_to_vmem [thread:$0]  %s3, 1024, %s50, [#allocation6], 64, 64, 4
    $region17: #{tpu_custom_call.1} parent=1 // pred_fallthru
      _
    // Predicated region
    $region18: #{tpu_custom_call.1} parent=1 // pred_check
      _
    $region19: #{tpu_custom_call.1} parent=1 // pred_check_branch
      %57 = sbr.rel (0) target = $region21
    $region20: #{tpu_custom_call.1} parent=1 // pred_region
      _
    $region21: #{tpu_custom_call.1} parent=1 // pred_fallthru
      _
    // Predicated region
    $region22: #{tpu_custom_call.1} parent=1 // pred_check
      _
    $region23: #{tpu_custom_call.1} parent=1 // pred_check_branch
      %59 = sbr.rel (0) target = $region25
    $region24: #{tpu_custom_call.1} parent=1 // pred_region
      %s61 = ssub.s32 2048, 2048
      %62 = vsyncadd [#allocation9], %s61
      %s63 = sshll.u32 [#allocation8], 4
      %s64 = int_to_ptr.vmem [resolvable:$true] %s63
      %69 = dma.hbm_to_vmem [thread:$0]  %s5, 2048, %s64, [#allocation9], 128, 128, 8
    $region25: #{tpu_custom_call.1} parent=1 // pred_fallthru
      _
    // Predicated region
    $region26: #{tpu_custom_call.1} parent=1 // pred_check
      _
    $region27: #{tpu_custom_call.1} parent=1 // pred_check_branch
      %71 = sbr.rel (0) target = $region29
    $region28: #{tpu_custom_call.1} parent=1 // pred_region
      %s73 = ssub.s32 2048, 2048
      %74 = vsyncadd [#allocation9], %s73
      %s75 = sshll.u32 [#allocation10], 4
      %s76 = int_to_ptr.vmem [resolvable:$true] %s75
      %81 = dma.hbm_to_vmem [thread:$0]  %s6, 2048, %s76, [#allocation9], 128, 128, 8
    $region29: #{tpu_custom_call.1} parent=1 // pred_fallthru
      _
    // Predicated region
    $region30: #{tpu_custom_call.1} parent=1 // pred_check
      _
    $region31: #{tpu_custom_call.1} parent=1 // pred_check_branch
      %83 = sbr.rel (0) target = $region33
    $region32: #{tpu_custom_call.1} parent=1 // pred_region
      %s85 = ssub.s32 2048, 2048
      %86 = vsyncadd [#allocation12], %s85
      %s87 = sshll.u32 [#allocation11], 4
      %s88 = int_to_ptr.vmem [resolvable:$true] %s87
      %93 = dma.hbm_to_vmem [thread:$0]  %s7, 2048, %s88, [#allocation12], 64, 64, 4
    $region33: #{tpu_custom_call.1} parent=1 // pred_fallthru
      _
    // Predicated region
    $region34: #{tpu_custom_call.1} parent=1 // pred_check
      _
    $region35: #{tpu_custom_call.1} parent=1 // pred_check_branch
      %95 = sbr.rel (0) target = $region37
    $region36: #{tpu_custom_call.1} parent=1 // pred_region
      %96 = dma.done [#allocation3], 2048
    $region37: #{tpu_custom_call.1} parent=1 // pred_fallthru
      _
    // Predicated region
    $region38: #{tpu_custom_call.1} parent=1 // pred_check
      _
    $region39: #{tpu_custom_call.1} parent=1 // pred_check_branch
      %98 = sbr.rel (0) target = $region41
    $region40: #{tpu_custom_call.1} parent=1 // pred_region
      %99 = dma.done [#allocation6], 3072
    $region41: #{tpu_custom_call.1} parent=1 // pred_fallthru
      _
    // Predicated region
    $region42: #{tpu_custom_call.1} parent=1 // pred_check
      _
    $region43: #{tpu_custom_call.1} parent=1 // pred_check_branch
      %101 = sbr.rel (0) target = $region45
    $region44: #{tpu_custom_call.1} parent=1 // pred_region
      %102 = dma.done [#allocation6], 1024
    $region45: #{tpu_custom_call.1} parent=1 // pred_fallthru
      _
    // Predicated region
    $region46: #{tpu_custom_call.1} parent=1 // pred_check
      _
    $region47: #{tpu_custom_call.1} parent=1 // pred_check_branch
      %104 = sbr.rel (0) target = $region49
    $region48: #{tpu_custom_call.1} parent=1 // pred_region
      %105 = dma.done [#allocation9], 2048
    $region49: #{tpu_custom_call.1} parent=1 // pred_fallthru
      _
    // Predicated region
    $region50: #{tpu_custom_call.1} parent=1 // pred_check
      _
    $region51: #{tpu_custom_call.1} parent=1 // pred_check_branch
      %107 = sbr.rel (0) target = $region53
    $region52: #{tpu_custom_call.1} parent=1 // pred_region
      %108 = dma.done [#allocation9], 2048
    $region53: #{tpu_custom_call.1} parent=1 // pred_fallthru
      _
    // Predicated region
    $region54: #{tpu_custom_call.1} parent=1 // pred_check
      _
    $region55: #{tpu_custom_call.1} parent=1 // pred_check_branch
      %110 = sbr.rel (0) target = $region57
    $region56: #{tpu_custom_call.1} parent=1 // pred_region
      %111 = dma.done [#allocation12], 2048
    $region57: #{tpu_custom_call.1} parent=1 // pred_fallthru
      _
    %v113 = vld [vmem:[#allocation2] sm:$0xff]
    %v114 = vld [vmem:[#allocation2 + $0x8] sm:$0xff]
    %v115 = vld [vmem:[#allocation2 + $0x10] sm:$0xff]
    %v116 = vld [vmem:[#allocation2 + $0x18] sm:$0xff]
    %v117 = vld [vmem:[#allocation2 + $0x20] sm:$0xff]
    %v118 = vld [vmem:[#allocation2 + $0x28] sm:$0xff]
    %v119 = vld [vmem:[#allocation2 + $0x30] sm:$0xff]
    %v120 = vld [vmem:[#allocation2 + $0x38] sm:$0xff]
    %v121 = vld [vmem:[#allocation2 + $0x40] sm:$0xff]
    %v122 = vld [vmem:[#allocation2 + $0x48] sm:$0xff]
    %v123 = vld [vmem:[#allocation2 + $0x50] sm:$0xff]
    %v124 = vld [vmem:[#allocation2 + $0x58] sm:$0xff]
    %v125 = vld [vmem:[#allocation2 + $0x60] sm:$0xff]
    %v126 = vld [vmem:[#allocation2 + $0x68] sm:$0xff]
    %v127 = vld [vmem:[#allocation2 + $0x70] sm:$0xff]
    %v128 = vld [vmem:[#allocation2 + $0x78] sm:$0xff]
    %v129 = vmul.f32 %v113, %v113
    %v130 = vmul.f32 %v114, %v114
    %v131 = vmul.f32 %v115, %v115
    %v132 = vmul.f32 %v116, %v116
    %v133 = vmul.f32 %v117, %v117
    %v134 = vmul.f32 %v118, %v118
    %v135 = vmul.f32 %v119, %v119
    %v136 = vmul.f32 %v120, %v120
    %v137 = vmul.f32 %v121, %v121
    %v138 = vmul.f32 %v122, %v122
    %v139 = vmul.f32 %v123, %v123
    %v140 = vmul.f32 %v124, %v124
    %v141 = vmul.f32 %v125, %v125
    %v142 = vmul.f32 %v126, %v126
    %v143 = vmul.f32 %v127, %v127
    %v144 = vmul.f32 %v128, %v128
    %145 = vadd.xlane.f32.xlu0 %v129
    %v146 = vpop.xlane.xlu0 %145
    %147 = vadd.xlane.f32.xlu0 %v130
    %v148 = vpop.xlane.xlu0 %147
    %149 = vadd.xlane.f32.xlu0 %v131
    %v150 = vpop.xlane.xlu0 %149
    %151 = vadd.xlane.f32.xlu0 %v132
    %v152 = vpop.xlane.xlu0 %151
    %153 = vadd.xlane.f32.xlu0 %v133
    %v154 = vpop.xlane.xlu0 %153
    %155 = vadd.xlane.f32.xlu0 %v134
    %v156 = vpop.xlane.xlu0 %155
    %157 = vadd.xlane.f32.xlu0 %v135
    %v158 = vpop.xlane.xlu0 %157
    %159 = vadd.xlane.f32.xlu0 %v136
    %v160 = vpop.xlane.xlu0 %159
    %161 = vadd.xlane.f32.xlu0 %v137
    %v162 = vpop.xlane.xlu0 %161
    %163 = vadd.xlane.f32.xlu0 %v138
    %v164 = vpop.xlane.xlu0 %163
    %165 = vadd.xlane.f32.xlu0 %v139
    %v166 = vpop.xlane.xlu0 %165
    %167 = vadd.xlane.f32.xlu0 %v140
    %v168 = vpop.xlane.xlu0 %167
    %169 = vadd.xlane.f32.xlu0 %v141
    %v170 = vpop.xlane.xlu0 %169
    %171 = vadd.xlane.f32.xlu0 %v142
    %v172 = vpop.xlane.xlu0 %171
    %173 = vadd.xlane.f32.xlu0 %v143
    %v174 = vpop.xlane.xlu0 %173
    %175 = vadd.xlane.f32.xlu0 %v144
    %v176 = vpop.xlane.xlu0 %175
    %v177 = vrcp.pop 128.0
    %v178 = vmul.f32 %v146, %v177
    %v179 = vmul.f32 %v148, %v177
    %v180 = vmul.f32 %v150, %v177
    %v181 = vmul.f32 %v152, %v177
    %v182 = vmul.f32 %v154, %v177
    %v183 = vmul.f32 %v156, %v177
    %v184 = vmul.f32 %v158, %v177
    %v185 = vmul.f32 %v160, %v177
    %v186 = vmul.f32 %v162, %v177
    %v187 = vmul.f32 %v164, %v177
    %v188 = vmul.f32 %v166, %v177
    %v189 = vmul.f32 %v168, %v177
    %v190 = vmul.f32 %v170, %v177
    %v191 = vmul.f32 %v172, %v177
    %v192 = vmul.f32 %v174, %v177
    %v193 = vmul.f32 %v176, %v177
    %v194 = vrsqrt.pop %v178
    %v195 = vrsqrt.pop %v179
    %v196 = vrsqrt.pop %v180
    %v197 = vrsqrt.pop %v181
    %v198 = vrsqrt.pop %v182
    %v199 = vrsqrt.pop %v183
    %v200 = vrsqrt.pop %v184
    %v201 = vrsqrt.pop %v185
    %v202 = vrsqrt.pop %v186
    %v203 = vrsqrt.pop %v187
    %v204 = vrsqrt.pop %v188
    %v205 = vrsqrt.pop %v189
    %v206 = vrsqrt.pop %v190
    %v207 = vrsqrt.pop %v191
    %v208 = vrsqrt.pop %v192
    %v209 = vrsqrt.pop %v193
    %v210 = vmul.f32 %v113, %v194
    %v211 = vmul.f32 %v114, %v195
    %v212 = vmul.f32 %v115, %v196
    %v213 = vmul.f32 %v116, %v197
    %v214 = vmul.f32 %v117, %v198
    %v215 = vmul.f32 %v118, %v199
    %v216 = vmul.f32 %v119, %v200
    %v217 = vmul.f32 %v120, %v201
    %v218 = vmul.f32 %v121, %v202
    %v219 = vmul.f32 %v122, %v203
    %v220 = vmul.f32 %v123, %v204
    %v221 = vmul.f32 %v124, %v205
    %v222 = vmul.f32 %v125, %v206
    %v223 = vmul.f32 %v126, %v207
    %v224 = vmul.f32 %v127, %v208
    %v225 = vmul.f32 %v128, %v209
    %v226 = vpack.c.bf16 %v211, %v210
    %v227 = vpack.c.bf16 %v213, %v212
    %v228 = vpack.c.bf16 %v215, %v214
    %v229 = vpack.c.bf16 %v217, %v216
    %v230 = vpack.c.bf16 %v219, %v218
    %v231 = vpack.c.bf16 %v221, %v220
    %v232 = vpack.c.bf16 %v223, %v222
    %v233 = vpack.c.bf16 %v225, %v224
    %v234 = vld [vmem:[#allocation5] sm:$0xff]
    %v235 = vld [vmem:[#allocation5 + $0x8] sm:$0xf]
    %v236 = vld [vmem:[#allocation5 + $0xc] sm:$0xff]
    %v237 = vld [vmem:[#allocation5 + $0x14] sm:$0xf]
    %v238 = vld [vmem:[#allocation5 + $0x18] sm:$0xff]
    %v239 = vld [vmem:[#allocation5 + $0x20] sm:$0xf]
    %v240 = vld [vmem:[#allocation5 + $0x24] sm:$0xff]
    %v241 = vld [vmem:[#allocation5 + $0x2c] sm:$0xf]
    %v242 = vld [vmem:[#allocation5 + $0x30] sm:$0xff]
    %v243 = vld [vmem:[#allocation5 + $0x38] sm:$0xf]
    %v244 = vld [vmem:[#allocation5 + $0x3c] sm:$0xff]
    %v245 = vld [vmem:[#allocation5 + $0x44] sm:$0xf]
    %v246 = vld [vmem:[#allocation5 + $0x48] sm:$0xff]
    %v247 = vld [vmem:[#allocation5 + $0x50] sm:$0xf]
    %v248 = vld [vmem:[#allocation5 + $0x54] sm:$0xff]
    %v249 = vld [vmem:[#allocation5 + $0x5c] sm:$0xf]
    %v250 = vld [vmem:[#allocation5 + $0x60] sm:$0xff]
    %v251 = vld [vmem:[#allocation5 + $0x68] sm:$0xf]
    %v252 = vld [vmem:[#allocation5 + $0x6c] sm:$0xff]
    %v253 = vld [vmem:[#allocation5 + $0x74] sm:$0xf]
    %v254 = vld [vmem:[#allocation5 + $0x78] sm:$0xff]
    %v255 = vld [vmem:[#allocation5 + $0x80] sm:$0xf]
    %v256 = vld [vmem:[#allocation5 + $0x84] sm:$0xff]
    %v257 = vld [vmem:[#allocation5 + $0x8c] sm:$0xf]
    %v258 = vld [vmem:[#allocation5 + $0x90] sm:$0xff]
    %v259 = vld [vmem:[#allocation5 + $0x98] sm:$0xf]
    %v260 = vld [vmem:[#allocation5 + $0x9c] sm:$0xff]
    %v261 = vld [vmem:[#allocation5 + $0xa4] sm:$0xf]
    %v262 = vld [vmem:[#allocation5 + $0xa8] sm:$0xff]
    %v263 = vld [vmem:[#allocation5 + $0xb0] sm:$0xf]
    %v264 = vld [vmem:[#allocation5 + $0xb4] sm:$0xff]
    %v265 = vld [vmem:[#allocation5 + $0xbc] sm:$0xf]
    %v266 = vld [vmem:[%s2] sm:$0x7]
    %v268 = vlaneseq
    %v269 = vshrl.u32 %v268, 7
    %v270 = vsub.s32 0, %v269
    %v271 = vrot.slane %v266, %v270
    %v272 = vlaneseq
    %v273 = vshrl.u32 %v272, 7
    %v274 = vsub.s32 1, %v273
    %v275 = vrot.slane %v266, %v274
    %v276 = vlaneseq
    %v277 = vshrl.u32 %v276, 7
    %v278 = vsub.s32 2, %v277
    %v279 = vrot.slane %v266, %v278
    %v315 = vunpack.c.l.b16 %v234
    %v316 = vunpack.c.h.b16 %v234
    %v317 = vunpack.c.l.b16 %v235
    %v318 = vunpack.c.l.b16 %v236
    %v319 = vunpack.c.h.b16 %v236
    %v320 = vunpack.c.l.b16 %v237
    %v321 = vunpack.c.l.b16 %v238
    %v322 = vunpack.c.h.b16 %v238
    %v323 = vunpack.c.l.b16 %v239
    %v324 = vunpack.c.l.b16 %v240
    %v325 = vunpack.c.h.b16 %v240
    %v326 = vunpack.c.l.b16 %v241
    %v327 = vunpack.c.l.b16 %v242
    %v328 = vunpack.c.h.b16 %v242
    %v329 = vunpack.c.l.b16 %v243
    %v330 = vunpack.c.l.b16 %v244
    %v331 = vunpack.c.h.b16 %v244
    %v332 = vunpack.c.l.b16 %v245
    %v333 = vunpack.c.l.b16 %v246
    %v334 = vunpack.c.h.b16 %v246
    %v335 = vunpack.c.l.b16 %v247
    %v336 = vunpack.c.l.b16 %v248
    %v337 = vunpack.c.h.b16 %v248
    %v338 = vunpack.c.l.b16 %v249
    %v339 = vunpack.c.l.b16 %v250
    %v340 = vunpack.c.h.b16 %v250
    %v341 = vunpack.c.l.b16 %v251
    %v342 = vunpack.c.l.b16 %v252
    %v343 = vunpack.c.h.b16 %v252
    %v344 = vunpack.c.l.b16 %v253
    %v345 = vunpack.c.l.b16 %v254
    %v346 = vunpack.c.h.b16 %v254
    %v347 = vunpack.c.l.b16 %v255
    %v348 = vunpack.c.l.b16 %v256
    %v349 = vunpack.c.h.b16 %v256
    %v350 = vunpack.c.l.b16 %v257
    %v351 = vunpack.c.l.b16 %v258
    %v352 = vunpack.c.h.b16 %v258
    %v353 = vunpack.c.l.b16 %v259
    %v354 = vunpack.c.l.b16 %v260
    %v355 = vunpack.c.h.b16 %v260
    %v356 = vunpack.c.l.b16 %v261
    %v357 = vunpack.c.l.b16 %v262
    %v358 = vunpack.c.h.b16 %v262
    %v359 = vunpack.c.l.b16 %v263
    %v360 = vunpack.c.l.b16 %v264
    %v361 = vunpack.c.h.b16 %v264
    %v362 = vunpack.c.l.b16 %v265
    %v363 = vpack.c.b16 %v318, %v315
    %v364 = vpack.c.b16 %v319, %v316
    %v365 = vpack.c.b16 %v320, %v317
    %v366 = vpack.c.b16 %v324, %v321
    %v367 = vpack.c.b16 %v325, %v322
    %v368 = vpack.c.b16 %v326, %v323
    %v369 = vpack.c.b16 %v330, %v327
    %v370 = vpack.c.b16 %v331, %v328
    %v371 = vpack.c.b16 %v332, %v329
    %v372 = vpack.c.b16 %v336, %v333
    %v373 = vpack.c.b16 %v337, %v334
    %v374 = vpack.c.b16 %v338, %v335
    %v375 = vpack.c.b16 %v342, %v339
    %v376 = vpack.c.b16 %v343, %v340
    %v377 = vpack.c.b16 %v344, %v341
    %v378 = vpack.c.b16 %v348, %v345
    %v379 = vpack.c.b16 %v349, %v346
    %v380 = vpack.c.b16 %v350, %v347
    %v381 = vpack.c.b16 %v354, %v351
    %v382 = vpack.c.b16 %v355, %v352
    %v383 = vpack.c.b16 %v356, %v353
    %v384 = vpack.c.b16 %v360, %v357
    %v385 = vpack.c.b16 %v361, %v358
    %v386 = vpack.c.b16 %v362, %v359
    %411 = vmatprep.subr.bf16.mxu0 %v364
    %412 = vmatpush1.bf16.msra.mxu0 %v363
    %413 = vmatprep.subr.bf16.mxu0 %v367
    %414 = vmatpush1.bf16.msra.mxu0 %v366
    %415 = vmatprep.subr.bf16.mxu0 %v370
    %416 = vmatpush1.bf16.msra.mxu0 %v369
    %417 = vmatprep.subr.bf16.mxu0 %v373
    %418 = vmatpush1.bf16.msra.mxu0 %v372
    %419 = vmatprep.subr.bf16.mxu0 %v376
    %420 = vmatpush1.bf16.msra.mxu0 %v375
    %421 = vmatprep.subr.bf16.mxu0 %v379
    %422 = vmatpush1.bf16.msra.mxu0 %v378
    %423 = vmatprep.subr.bf16.mxu0 %v382
    %424 = vmatpush1.bf16.msra.mxu0 %v381
    %425 = vmatprep.subr.bf16.mxu0 %v385
    %426 = vmatpush1.bf16.msra.mxu0 %v384
    %427 = vmatprep.subr.bf16.mxu0 0
    %428 = vmatpush1.bf16.msra.mxu0 0
    %429 = vmatprep.subr.bf16.mxu0 0
    %430 = vmatpush1.bf16.msra.mxu0 0
    %431 = vmatprep.subr.bf16.mxu0 0
    %432 = vmatpush1.bf16.msra.mxu0 0
    %433 = vmatprep.subr.bf16.mxu0 0
    %434 = vmatpush1.bf16.msra.mxu0 0
    %435 = vmatprep.subr.bf16.mxu0 0
    %436 = vmatpush1.bf16.msra.mxu0 0
    %437 = vmatprep.subr.bf16.mxu0 0
    %438 = vmatpush1.bf16.msra.mxu0 0
    %439 = vmatprep.subr.bf16.mxu0 0
    %440 = vmatpush1.bf16.msra.mxu0 0
    %441 = vmatprep.subr.bf16.mxu0 0
    %442 = vmatpush1.bf16.msra.mxu0 0
    %443 = vmatprep.mubr.bf16.mxu0 0
    %444 = vmatmul.mubr.bf16.gmra.mrb[0].mxu0 %v226
    %v445 = vpop.f32.mrb[0].mxu0
    %v446 = vadd.f32 %v271, %v445
    %v447 = vpop.f32.mrb[0].mxu0
    %v448 = vadd.f32 %v275, %v447
    %v449 = vpop.f32.mrb[0].mxu0
    %v450 = vadd.f32 %v271, %v449
    %v451 = vpop.f32.mrb[0].mxu0
    %v452 = vadd.f32 %v275, %v451
    %453 = vmatprep.mubr.bf16.mxu0 0
    %454 = vmatmul.mubr.bf16.gmra.mrb[0].mxu0 %v227
    %v455 = vpop.f32.mrb[0].mxu0
    %v456 = vadd.f32 %v271, %v455
    %v457 = vpop.f32.mrb[0].mxu0
    %v458 = vadd.f32 %v275, %v457
    %v459 = vpop.f32.mrb[0].mxu0
    %v460 = vadd.f32 %v271, %v459
    %v461 = vpop.f32.mrb[0].mxu0
    %v462 = vadd.f32 %v275, %v461
    %463 = vmatprep.mubr.bf16.mxu0 0
    %464 = vmatmul.mubr.bf16.gmra.mrb[0].mxu0 %v228
    %v465 = vpop.f32.mrb[0].mxu0
    %v466 = vadd.f32 %v271, %v465
    %v467 = vpop.f32.mrb[0].mxu0
    %v468 = vadd.f32 %v275, %v467
    %v469 = vpop.f32.mrb[0].mxu0
    %v470 = vadd.f32 %v271, %v469
    %v471 = vpop.f32.mrb[0].mxu0
    %v472 = vadd.f32 %v275, %v471
    %473 = vmatprep.mubr.bf16.mxu0 0
    %474 = vmatmul.mubr.bf16.gmra.mrb[0].mxu0 %v229
    %v475 = vpop.f32.mrb[0].mxu0
    %v476 = vadd.f32 %v271, %v475
    %v477 = vpop.f32.mrb[0].mxu0
    %v478 = vadd.f32 %v275, %v477
    %v479 = vpop.f32.mrb[0].mxu0
    %v480 = vadd.f32 %v271, %v479
    %v481 = vpop.f32.mrb[0].mxu0
    %v482 = vadd.f32 %v275, %v481
    %483 = vmatprep.mubr.bf16.mxu0 0
    %484 = vmatmul.mubr.bf16.gmra.mrb[0].mxu0 %v230
    %v485 = vpop.f32.mrb[0].mxu0
    %v486 = vadd.f32 %v271, %v485
    %v487 = vpop.f32.mrb[0].mxu0
    %v488 = vadd.f32 %v275, %v487
    %v489 = vpop.f32.mrb[0].mxu0
    %v490 = vadd.f32 %v271, %v489
    %v491 = vpop.f32.mrb[0].mxu0
    %v492 = vadd.f32 %v275, %v491
    %493 = vmatprep.mubr.bf16.mxu0 0
    %494 = vmatmul.mubr.bf16.gmra.mrb[0].mxu0 %v231
    %v495 = vpop.f32.mrb[0].mxu0
    %v496 = vadd.f32 %v271, %v495
    %v497 = vpop.f32.mrb[0].mxu0
    %v498 = vadd.f32 %v275, %v497
    %v499 = vpop.f32.mrb[0].mxu0
    %v500 = vadd.f32 %v271, %v499
    %v501 = vpop.f32.mrb[0].mxu0
    %v502 = vadd.f32 %v275, %v501
    %503 = vmatprep.mubr.bf16.mxu0 0
    %504 = vmatmul.mubr.bf16.gmra.mrb[0].mxu0 %v232
    %v505 = vpop.f32.mrb[0].mxu0
    %v506 = vadd.f32 %v271, %v505
    %v507 = vpop.f32.mrb[0].mxu0
    %v508 = vadd.f32 %v275, %v507
    %v509 = vpop.f32.mrb[0].mxu0
    %v510 = vadd.f32 %v271, %v509
    %v511 = vpop.f32.mrb[0].mxu0
    %v512 = vadd.f32 %v275, %v511
    %513 = vmatprep.mubr.bf16.mxu0 0
    %514 = vmatmul.mubr.bf16.gmra.mrb[0].mxu0 %v233
    %v515 = vpop.f32.mrb[0].mxu0
    %v516 = vadd.f32 %v271, %v515
    %v517 = vpop.f32.mrb[0].mxu0
    %v518 = vadd.f32 %v275, %v517
    %v519 = vpop.f32.mrb[0].mxu0
    %v520 = vadd.f32 %v271, %v519
    %v521 = vpop.f32.mrb[0].mxu0
    %v522 = vadd.f32 %v275, %v521
    %523 = vdwg.mxu0
    %524 = vmatprep.subr.bf16.mxu0 0
    %525 = vmatpush1.bf16.msra.mxu0 %v365
    %526 = vmatprep.subr.bf16.mxu0 0
    %527 = vmatpush1.bf16.msra.mxu0 %v368
    %528 = vmatprep.subr.bf16.mxu0 0
    %529 = vmatpush1.bf16.msra.mxu0 %v371
    %530 = vmatprep.subr.bf16.mxu0 0
    %531 = vmatpush1.bf16.msra.mxu0 %v374
    %532 = vmatprep.subr.bf16.mxu0 0
    %533 = vmatpush1.bf16.msra.mxu0 %v377
    %534 = vmatprep.subr.bf16.mxu0 0
    %535 = vmatpush1.bf16.msra.mxu0 %v380
    %536 = vmatprep.subr.bf16.mxu0 0
    %537 = vmatpush1.bf16.msra.mxu0 %v383
    %538 = vmatprep.subr.bf16.mxu0 0
    %539 = vmatpush1.bf16.msra.mxu0 %v386
    %540 = vmatprep.subr.bf16.mxu0 0
    %541 = vmatpush1.bf16.msra.mxu0 0
    %542 = vmatprep.subr.bf16.mxu0 0
    %543 = vmatpush1.bf16.msra.mxu0 0
    %544 = vmatprep.subr.bf16.mxu0 0
    %545 = vmatpush1.bf16.msra.mxu0 0
    %546 = vmatprep.subr.bf16.mxu0 0
    %547 = vmatpush1.bf16.msra.mxu0 0
    %548 = vmatprep.subr.bf16.mxu0 0
    %549 = vmatpush1.bf16.msra.mxu0 0
    %550 = vmatprep.subr.bf16.mxu0 0
    %551 = vmatpush1.bf16.msra.mxu0 0
    %552 = vmatprep.subr.bf16.mxu0 0
    %553 = vmatpush1.bf16.msra.mxu0 0
    %554 = vmatprep.subr.bf16.mxu0 0
    %555 = vmatpush1.bf16.msra.mxu0 0
    %556 = vmatprep.mubr.bf16.mxu0 0
    %557 = vmatmul.mubr.bf16.gmra.mrb[0].mxu0 %v226
    %v558 = vpop.f32.mrb[0].mxu0
    %v559 = vadd.f32 %v279, %v558
    %v560 = vpop.f32.mrb[0].mxu0
    %v561 = vpop.f32.mrb[0].mxu0
    %v562 = vadd.f32 %v279, %v561
    %v563 = vpop.f32.mrb[0].mxu0
    %564 = vmatprep.mubr.bf16.mxu0 0
    %565 = vmatmul.mubr.bf16.gmra.mrb[0].mxu0 %v227
    %v566 = vpop.f32.mrb[0].mxu0
    %v567 = vadd.f32 %v279, %v566
    %v568 = vpop.f32.mrb[0].mxu0
    %v569 = vpop.f32.mrb[0].mxu0
    %v570 = vadd.f32 %v279, %v569
    %v571 = vpop.f32.mrb[0].mxu0
    %572 = vmatprep.mubr.bf16.mxu0 0
    %573 = vmatmul.mubr.bf16.gmra.mrb[0].mxu0 %v228
    %v574 = vpop.f32.mrb[0].mxu0
    %v575 = vadd.f32 %v279, %v574
    %v576 = vpop.f32.mrb[0].mxu0
    %v577 = vpop.f32.mrb[0].mxu0
    %v578 = vadd.f32 %v279, %v577
    %v579 = vpop.f32.mrb[0].mxu0
    %580 = vmatprep.mubr.bf16.mxu0 0
    %581 = vmatmul.mubr.bf16.gmra.mrb[0].mxu0 %v229
    %v582 = vpop.f32.mrb[0].mxu0
    %v583 = vadd.f32 %v279, %v582
    %v584 = vpop.f32.mrb[0].mxu0
    %v585 = vpop.f32.mrb[0].mxu0
    %v586 = vadd.f32 %v279, %v585
    %v587 = vpop.f32.mrb[0].mxu0
    %588 = vmatprep.mubr.bf16.mxu0 0
    %589 = vmatmul.mubr.bf16.gmra.mrb[0].mxu0 %v230
    %v590 = vpop.f32.mrb[0].mxu0
    %v591 = vadd.f32 %v279, %v590
    %v592 = vpop.f32.mrb[0].mxu0
    %v593 = vpop.f32.mrb[0].mxu0
    %v594 = vadd.f32 %v279, %v593
    %v595 = vpop.f32.mrb[0].mxu0
    %596 = vmatprep.mubr.bf16.mxu0 0
    %597 = vmatmul.mubr.bf16.gmra.mrb[0].mxu0 %v231
    %v598 = vpop.f32.mrb[0].mxu0
    %v599 = vadd.f32 %v279, %v598
    %v600 = vpop.f32.mrb[0].mxu0
    %v601 = vpop.f32.mrb[0].mxu0
    %v602 = vadd.f32 %v279, %v601
    %v603 = vpop.f32.mrb[0].mxu0
    %604 = vmatprep.mubr.bf16.mxu0 0
    %605 = vmatmul.mubr.bf16.gmra.mrb[0].mxu0 %v232
    %v606 = vpop.f32.mrb[0].mxu0
    %v607 = vadd.f32 %v279, %v606
    %v608 = vpop.f32.mrb[0].mxu0
    %v609 = vpop.f32.mrb[0].mxu0
    %v610 = vadd.f32 %v279, %v609
    %v611 = vpop.f32.mrb[0].mxu0
    %612 = vmatprep.mubr.bf16.mxu0 0
    %613 = vmatmul.mubr.bf16.gmra.mrb[0].mxu0 %v233
    %v614 = vpop.f32.mrb[0].mxu0
    %v615 = vadd.f32 %v279, %v614
    %v616 = vpop.f32.mrb[0].mxu0
    %v617 = vpop.f32.mrb[0].mxu0
    %v618 = vadd.f32 %v279, %v617
    %v619 = vpop.f32.mrb[0].mxu0
    %620 = vdwg.mxu0
    %v621 = vpack.c.bf16 %v450, %v446
    %v622 = vpack.c.bf16 %v452, %v448
    %v623 = vpack.c.bf16 %v562, %v559
    %v624 = vpack.c.bf16 %v460, %v456
    %v625 = vpack.c.bf16 %v462, %v458
    %v626 = vpack.c.bf16 %v570, %v567
    %v627 = vpack.c.bf16 %v470, %v466
    %v628 = vpack.c.bf16 %v472, %v468
    %v629 = vpack.c.bf16 %v578, %v575
    %v630 = vpack.c.bf16 %v480, %v476
    %v631 = vpack.c.bf16 %v482, %v478
    %v632 = vpack.c.bf16 %v586, %v583
    %v633 = vpack.c.bf16 %v490, %v486
    %v634 = vpack.c.bf16 %v492, %v488
    %v635 = vpack.c.bf16 %v594, %v591
    %v636 = vpack.c.bf16 %v500, %v496
    %v637 = vpack.c.bf16 %v502, %v498
    %v638 = vpack.c.bf16 %v602, %v599
    %v639 = vpack.c.bf16 %v510, %v506
    %v640 = vpack.c.bf16 %v512, %v508
    %v641 = vpack.c.bf16 %v610, %v607
    %v642 = vpack.c.bf16 %v520, %v516
    %v643 = vpack.c.bf16 %v522, %v518
    %v644 = vpack.c.bf16 %v618, %v615
    %v645 = vlaneseq
    %v646 = vshrl.u32 %v645, 7
    %v647 = vadd.s32 %v646, 8
    %v648 = vadd.s32 %v646, 16
    %v649 = vadd.s32 %v646, 24
    %v650 = vadd.s32 %v646, 32
    %v651 = vadd.s32 %v646, 40
    %v652 = vadd.s32 %v646, 48
    %v653 = vadd.s32 %v646, 56
    %v654 = vlaneseq
    %v655 = vand.u32 %v654, 127
    %v656 = vsub.s32 %v655, %v646
    %v657 = vsub.s32 %v655, %v647
    %v658 = vsub.s32 %v655, %v648
    %v659 = vsub.s32 %v655, %v649
    %v660 = vsub.s32 %v655, %v650
    %v661 = vsub.s32 %v655, %v651
    %v662 = vsub.s32 %v655, %v652
    %v663 = vsub.s32 %v655, %v653
    %vm664 = vcmp.lt.s32.totalorder %v656, 0
    %v665 = vsub.s32 0, %v656
    %v666 = vsel %vm664, %v665, %v656
    %vm667 = vcmp.lt.s32.totalorder %v657, 0
    %v668 = vsub.s32 0, %v657
    %v669 = vsel %vm667, %v668, %v657
    %vm670 = vcmp.lt.s32.totalorder %v658, 0
    %v671 = vsub.s32 0, %v658
    %v672 = vsel %vm670, %v671, %v658
    %vm673 = vcmp.lt.s32.totalorder %v659, 0
    %v674 = vsub.s32 0, %v659
    %v675 = vsel %vm673, %v674, %v659
    %vm676 = vcmp.lt.s32.totalorder %v660, 0
    %v677 = vsub.s32 0, %v660
    %v678 = vsel %vm676, %v677, %v660
    %vm679 = vcmp.lt.s32.totalorder %v661, 0
    %v680 = vsub.s32 0, %v661
    %v681 = vsel %vm679, %v680, %v661
    %vm682 = vcmp.lt.s32.totalorder %v662, 0
    %v683 = vsub.s32 0, %v662
    %v684 = vsel %vm682, %v683, %v662
    %vm685 = vcmp.lt.s32.totalorder %v663, 0
    %v686 = vsub.s32 0, %v663
    %v687 = vsel %vm685, %v686, %v663
    %v688 = vcvt.s32.f32 %v666
    %v689 = vcvt.s32.f32 %v669
    %v690 = vcvt.s32.f32 %v672
    %v691 = vcvt.s32.f32 %v675
    %v692 = vcvt.s32.f32 %v678
    %v693 = vcvt.s32.f32 %v681
    %v694 = vcvt.s32.f32 %v684
    %v695 = vcvt.s32.f32 %v687
    %v696 = vsub.f32 0.0, %v688
    %v697 = vsub.f32 0.0, %v689
    %v698 = vsub.f32 0.0, %v690
    %v699 = vsub.f32 0.0, %v691
    %v700 = vsub.f32 0.0, %v692
    %v701 = vsub.f32 0.0, %v693
    %v702 = vsub.f32 0.0, %v694
    %v703 = vsub.f32 0.0, %v695
    %vm704 = vcmp.le.s32.totalorder %v655, %v646
    %vm705 = vcmp.le.s32.totalorder %v655, %v647
    %vm706 = vcmp.le.s32.totalorder %v655, %v648
    %vm707 = vcmp.le.s32.totalorder %v655, %v649
    %vm708 = vcmp.le.s32.totalorder %v655, %v650
    %vm709 = vcmp.le.s32.totalorder %v655, %v651
    %vm710 = vcmp.le.s32.totalorder %v655, %v652
    %vm711 = vcmp.le.s32.totalorder %v655, %v653
    %v712 = vsel %vm704, %v696, -inf
    %v713 = vsel %vm705, %v697, -inf
    %v714 = vsel %vm706, %v698, -inf
    %v715 = vsel %vm707, %v699, -inf
    %v716 = vsel %vm708, %v700, -inf
    %v717 = vsel %vm709, %v701, -inf
    %v718 = vsel %vm710, %v702, -inf
    %v719 = vsel %vm711, %v703, -inf
    %vm720 = vcmask 261120
    %v722 = vsel %vm720, %v621, 0
    %v725 = vsel %vm720, %v624, 0
    %v728 = vsel %vm720, %v627, 0
    %v731 = vsel %vm720, %v630, 0
    %v734 = vsel %vm720, %v622, 0
    %v737 = vsel %vm720, %v625, 0
    %v740 = vsel %vm720, %v628, 0
    %v743 = vsel %vm720, %v631, 0
    %745 = vmatprep.subr.bf16.mxu0 0
    %746 = vmatpush1.bf16.xpose.msra.mxu0 %v734
    %747 = vmatprep.subr.bf16.mxu0 0
    %748 = vmatpush1.bf16.xpose.msra.mxu0 %v737
    %749 = vmatprep.subr.bf16.mxu0 0
    %750 = vmatpush1.bf16.xpose.msra.mxu0 %v740
    %751 = vmatprep.subr.bf16.mxu0 0
    %752 = vmatpush1.bf16.xpose.msra.mxu0 %v743
    %753 = vmatprep.subr.bf16.mxu0 0
    %754 = vmatpush1.bf16.xpose.msra.mxu0 0
    %755 = vmatprep.subr.bf16.mxu0 0
    %756 = vmatpush1.bf16.xpose.msra.mxu0 0
    %757 = vmatprep.subr.bf16.mxu0 0
    %758 = vmatpush1.bf16.xpose.msra.mxu0 0
    %759 = vmatprep.subr.bf16.mxu0 0
    %760 = vmatpush1.bf16.xpose.msra.mxu0 0
    %761 = vmatprep.subr.bf16.mxu0 0
    %762 = vmatpush1.bf16.xpose.msra.mxu0 0
    %763 = vmatprep.subr.bf16.mxu0 0
    %764 = vmatpush1.bf16.xpose.msra.mxu0 0
    %765 = vmatprep.subr.bf16.mxu0 0
    %766 = vmatpush1.bf16.xpose.msra.mxu0 0
    %767 = vmatprep.subr.bf16.mxu0 0
    %768 = vmatpush1.bf16.xpose.msra.mxu0 0
    %769 = vmatprep.subr.bf16.mxu0 0
    %770 = vmatpush1.bf16.xpose.msra.mxu0 0
    %771 = vmatprep.subr.bf16.mxu0 0
    %772 = vmatpush1.bf16.xpose.msra.mxu0 0
    %773 = vmatprep.subr.bf16.mxu0 0
    %774 = vmatpush1.bf16.xpose.msra.mxu0 0
    %775 = vmatprep.subr.bf16.mxu0 0
    %776 = vmatpush1.bf16.xpose.msra.mxu0 0
    %777 = vmatprep.mubr.bf16.mxu0 0
    %778 = vmatmul.mubr.bf16.gmra.mrb[0].mxu0 %v722
    %v779 = vpop.f32.mrb[0].mxu0
    %v780 = vadd.f32 0.0, %v779
    %v781 = vpop.f32.mrb[0].mxu0
    %v782 = vpop.f32.mrb[0].mxu0
    %v783 = vadd.f32 0.0, %v782
    %v784 = vpop.f32.mrb[0].mxu0
    %785 = vmatprep.mubr.bf16.mxu0 0
    %786 = vmatmul.mubr.bf16.gmra.mrb[0].mxu0 %v725
    %v787 = vpop.f32.mrb[0].mxu0
    %v788 = vadd.f32 0.0, %v787
    %v789 = vpop.f32.mrb[0].mxu0
    %v790 = vpop.f32.mrb[0].mxu0
    %v791 = vadd.f32 0.0, %v790
    %v792 = vpop.f32.mrb[0].mxu0
    %793 = vmatprep.mubr.bf16.mxu0 0
    %794 = vmatmul.mubr.bf16.gmra.mrb[0].mxu0 %v728
    %v795 = vpop.f32.mrb[0].mxu0
    %v796 = vadd.f32 0.0, %v795
    %v797 = vpop.f32.mrb[0].mxu0
    %v798 = vpop.f32.mrb[0].mxu0
    %v799 = vadd.f32 0.0, %v798
    %v800 = vpop.f32.mrb[0].mxu0
    %801 = vmatprep.mubr.bf16.mxu0 0
    %802 = vmatmul.mubr.bf16.gmra.mrb[0].mxu0 %v731
    %v803 = vpop.f32.mrb[0].mxu0
    %v804 = vadd.f32 0.0, %v803
    %v805 = vpop.f32.mrb[0].mxu0
    %v806 = vpop.f32.mrb[0].mxu0
    %v807 = vadd.f32 0.0, %v806
    %v808 = vpop.f32.mrb[0].mxu0
    %809 = vdwg.mxu0
    %v811 = vsel %vm720, %v633, 0
    %v814 = vsel %vm720, %v636, 0
    %v817 = vsel %vm720, %v639, 0
    %v820 = vsel %vm720, %v642, 0
    %v823 = vsel %vm720, %v634, 0
    %v826 = vsel %vm720, %v637, 0
    %v829 = vsel %vm720, %v640, 0
    %v832 = vsel %vm720, %v643, 0
    %834 = vmatprep.subr.bf16.mxu0 0
    %835 = vmatpush1.bf16.xpose.msra.mxu0 %v823
    %836 = vmatprep.subr.bf16.mxu0 0
    %837 = vmatpush1.bf16.xpose.msra.mxu0 %v826
    %838 = vmatprep.subr.bf16.mxu0 0
    %839 = vmatpush1.bf16.xpose.msra.mxu0 %v829
    %840 = vmatprep.subr.bf16.mxu0 0
    %841 = vmatpush1.bf16.xpose.msra.mxu0 %v832
    %842 = vmatprep.subr.bf16.mxu0 0
    %843 = vmatpush1.bf16.xpose.msra.mxu0 0
    %844 = vmatprep.subr.bf16.mxu0 0
    %845 = vmatpush1.bf16.xpose.msra.mxu0 0
    %846 = vmatprep.subr.bf16.mxu0 0
    %847 = vmatpush1.bf16.xpose.msra.mxu0 0
    %848 = vmatprep.subr.bf16.mxu0 0
    %849 = vmatpush1.bf16.xpose.msra.mxu0 0
    %850 = vmatprep.subr.bf16.mxu0 0
    %851 = vmatpush1.bf16.xpose.msra.mxu0 0
    %852 = vmatprep.subr.bf16.mxu0 0
    %853 = vmatpush1.bf16.xpose.msra.mxu0 0
    %854 = vmatprep.subr.bf16.mxu0 0
    %855 = vmatpush1.bf16.xpose.msra.mxu0 0
    %856 = vmatprep.subr.bf16.mxu0 0
    %857 = vmatpush1.bf16.xpose.msra.mxu0 0
    %858 = vmatprep.subr.bf16.mxu0 0
    %859 = vmatpush1.bf16.xpose.msra.mxu0 0
    %860 = vmatprep.subr.bf16.mxu0 0
    %861 = vmatpush1.bf16.xpose.msra.mxu0 0
    %862 = vmatprep.subr.bf16.mxu0 0
    %863 = vmatpush1.bf16.xpose.msra.mxu0 0
    %864 = vmatprep.subr.bf16.mxu0 0
    %865 = vmatpush1.bf16.xpose.msra.mxu0 0
    %866 = vmatprep.mubr.bf16.mxu0 0
    %867 = vmatmul.mubr.bf16.gmra.mrb[0].mxu0 %v811
    %v868 = vpop.f32.mrb[0].mxu0
    %v869 = vadd.f32 0.0, %v868
    %v870 = vpop.f32.mrb[0].mxu0
    %v871 = vpop.f32.mrb[0].mxu0
    %v872 = vadd.f32 0.0, %v871
    %v873 = vpop.f32.mrb[0].mxu0
    %874 = vmatprep.mubr.bf16.mxu0 0
    %875 = vmatmul.mubr.bf16.gmra.mrb[0].mxu0 %v814
    %v876 = vpop.f32.mrb[0].mxu0
    %v877 = vadd.f32 0.0, %v876
    %v878 = vpop.f32.mrb[0].mxu0
    %v879 = vpop.f32.mrb[0].mxu0
    %v880 = vadd.f32 0.0, %v879
    %v881 = vpop.f32.mrb[0].mxu0
    %882 = vmatprep.mubr.bf16.mxu0 0
    %883 = vmatmul.mubr.bf16.gmra.mrb[0].mxu0 %v817
    %v884 = vpop.f32.mrb[0].mxu0
    %v885 = vadd.f32 0.0, %v884
    %v886 = vpop.f32.mrb[0].mxu0
    %v887 = vpop.f32.mrb[0].mxu0
    %v888 = vadd.f32 0.0, %v887
    %v889 = vpop.f32.mrb[0].mxu0
    %890 = vmatprep.mubr.bf16.mxu0 0
    %891 = vmatmul.mubr.bf16.gmra.mrb[0].mxu0 %v820
    %v892 = vpop.f32.mrb[0].mxu0
    %v893 = vadd.f32 0.0, %v892
    %v894 = vpop.f32.mrb[0].mxu0
    %v895 = vpop.f32.mrb[0].mxu0
    %v896 = vadd.f32 0.0, %v895
    %v897 = vpop.f32.mrb[0].mxu0
    %898 = vdwg.mxu0
    %v899 = vmul.f32 %v780, 0.17677669
    %v900 = vmul.f32 %v783, 0.17677669
    %v901 = vmul.f32 %v788, 0.17677669
    %v902 = vmul.f32 %v791, 0.17677669
    %v903 = vmul.f32 %v796, 0.17677669
    %v904 = vmul.f32 %v799, 0.17677669
    %v905 = vmul.f32 %v804, 0.17677669
    %v906 = vmul.f32 %v807, 0.17677669
    %v907 = vmul.f32 %v869, 0.17677669
    %v908 = vmul.f32 %v872, 0.17677669
    %v909 = vmul.f32 %v877, 0.17677669
    %v910 = vmul.f32 %v880, 0.17677669
    %v911 = vmul.f32 %v885, 0.17677669
    %v912 = vmul.f32 %v888, 0.17677669
    %v913 = vmul.f32 %v893, 0.17677669
    %v914 = vmul.f32 %v896, 0.17677669
    %v915 = vmul.f32 %v712, 0.5
    %v916 = vmul.f32 %v713, 0.5
    %v917 = vmul.f32 %v714, 0.5
    %v918 = vmul.f32 %v715, 0.5
    %v919 = vmul.f32 %v716, 0.5
    %v920 = vmul.f32 %v717, 0.5
    %v921 = vmul.f32 %v718, 0.5
    %v922 = vmul.f32 %v719, 0.5
    %v923 = vadd.f32 %v899, %v915
    %v924 = vadd.f32 %v900, %v916
    %v925 = vadd.f32 %v901, %v917
    %v926 = vadd.f32 %v902, %v918
    %v927 = vadd.f32 %v903, %v919
    %v928 = vadd.f32 %v904, %v920
    %v929 = vadd.f32 %v905, %v921
    %v930 = vadd.f32 %v906, %v922
    %v931 = vadd.f32 %v907, %v915
    %v932 = vadd.f32 %v908, %v916
    %v933 = vadd.f32 %v909, %v917
    %v934 = vadd.f32 %v910, %v918
    %v935 = vadd.f32 %v911, %v919
    %v936 = vadd.f32 %v912, %v920
    %v937 = vadd.f32 %v913, %v921
    %v938 = vadd.f32 %v914, %v922
    %vm939 = vcmask 523264
    %v940 = vsel %vm939, %v923, -inf
    %941 = vmax.xlane.f32.xlu0 %v940
    %v942 = vpop.xlane.xlu0 %941
    %v943 = vsel %vm939, %v924, -inf
    %944 = vmax.xlane.f32.xlu0 %v943
    %v945 = vpop.xlane.xlu0 %944
    %v946 = vsel %vm939, %v925, -inf
    %947 = vmax.xlane.f32.xlu0 %v946
    %v948 = vpop.xlane.xlu0 %947
    %v949 = vsel %vm939, %v926, -inf
    %950 = vmax.xlane.f32.xlu0 %v949
    %v951 = vpop.xlane.xlu0 %950
    %v952 = vsel %vm939, %v927, -inf
    %953 = vmax.xlane.f32.xlu0 %v952
    %v954 = vpop.xlane.xlu0 %953
    %v955 = vsel %vm939, %v928, -inf
    %956 = vmax.xlane.f32.xlu0 %v955
    %v957 = vpop.xlane.xlu0 %956
    %v958 = vsel %vm939, %v929, -inf
    %959 = vmax.xlane.f32.xlu0 %v958
    %v960 = vpop.xlane.xlu0 %959
    %v961 = vsel %vm939, %v930, -inf
    %962 = vmax.xlane.f32.xlu0 %v961
    %v963 = vpop.xlane.xlu0 %962
    %v964 = vsel %vm939, %v931, -inf
    %965 = vmax.xlane.f32.xlu0 %v964
    %v966 = vpop.xlane.xlu0 %965
    %v967 = vsel %vm939, %v932, -inf
    %968 = vmax.xlane.f32.xlu0 %v967
    %v969 = vpop.xlane.xlu0 %968
    %v970 = vsel %vm939, %v933, -inf
    %971 = vmax.xlane.f32.xlu0 %v970
    %v972 = vpop.xlane.xlu0 %971
    %v973 = vsel %vm939, %v934, -inf
    %974 = vmax.xlane.f32.xlu0 %v973
    %v975 = vpop.xlane.xlu0 %974
    %v976 = vsel %vm939, %v935, -inf
    %977 = vmax.xlane.f32.xlu0 %v976
    %v978 = vpop.xlane.xlu0 %977
    %v979 = vsel %vm939, %v936, -inf
    %980 = vmax.xlane.f32.xlu0 %v979
    %v981 = vpop.xlane.xlu0 %980
    %v982 = vsel %vm939, %v937, -inf
    %983 = vmax.xlane.f32.xlu0 %v982
    %v984 = vpop.xlane.xlu0 %983
    %v985 = vsel %vm939, %v938, -inf
    %986 = vmax.xlane.f32.xlu0 %v985
    %v987 = vpop.xlane.xlu0 %986
    %v988 = vsub.f32 %v923, %v942
    %v989 = vsub.f32 %v924, %v945
    %v990 = vsub.f32 %v925, %v948
    %v991 = vsub.f32 %v926, %v951
    %v992 = vsub.f32 %v927, %v954
    %v993 = vsub.f32 %v928, %v957
    %v994 = vsub.f32 %v929, %v960
    %v995 = vsub.f32 %v930, %v963
    %v996 = vsub.f32 %v931, %v966
    %v997 = vsub.f32 %v932, %v969
    %v998 = vsub.f32 %v933, %v972
    %v999 = vsub.f32 %v934, %v975
    %v1000 = vsub.f32 %v935, %v978
    %v1001 = vsub.f32 %v936, %v981
    %v1002 = vsub.f32 %v937, %v984
    %v1003 = vsub.f32 %v938, %v987
    %v1004 = vmul.f32 %v988, 1.442695
    %v1005 = vpow.pop %v1004
    %v1006 = vmul.f32 %v989, 1.442695
    %v1007 = vpow.pop %v1006
    %v1008 = vmul.f32 %v990, 1.442695
    %v1009 = vpow.pop %v1008
    %v1010 = vmul.f32 %v991, 1.442695
    %v1011 = vpow.pop %v1010
    %v1012 = vmul.f32 %v992, 1.442695
    %v1013 = vpow.pop %v1012
    %v1014 = vmul.f32 %v993, 1.442695
    %v1015 = vpow.pop %v1014
    %v1016 = vmul.f32 %v994, 1.442695
    %v1017 = vpow.pop %v1016
    %v1018 = vmul.f32 %v995, 1.442695
    %v1019 = vpow.pop %v1018
    %v1020 = vmul.f32 %v996, 1.442695
    %v1021 = vpow.pop %v1020
    %v1022 = vmul.f32 %v997, 1.442695
    %v1023 = vpow.pop %v1022
    %v1024 = vmul.f32 %v998, 1.442695
    %v1025 = vpow.pop %v1024
    %v1026 = vmul.f32 %v999, 1.442695
    %v1027 = vpow.pop %v1026
    %v1028 = vmul.f32 %v1000, 1.442695
    %v1029 = vpow.pop %v1028
    %v1030 = vmul.f32 %v1001, 1.442695
    %v1031 = vpow.pop %v1030
    %v1032 = vmul.f32 %v1002, 1.442695
    %v1033 = vpow.pop %v1032
    %v1034 = vmul.f32 %v1003, 1.442695
    %v1035 = vpow.pop %v1034
    %v1036 = vsel %vm939, %v1005, 0.0
    %1037 = vadd.xlane.f32.xlu0 %v1036
    %v1038 = vpop.xlane.xlu0 %1037
    %v1039 = vsel %vm939, %v1007, 0.0
    %1040 = vadd.xlane.f32.xlu0 %v1039
    %v1041 = vpop.xlane.xlu0 %1040
    %v1042 = vsel %vm939, %v1009, 0.0
    %1043 = vadd.xlane.f32.xlu0 %v1042
    %v1044 = vpop.xlane.xlu0 %1043
    %v1045 = vsel %vm939, %v1011, 0.0
    %1046 = vadd.xlane.f32.xlu0 %v1045
    %v1047 = vpop.xlane.xlu0 %1046
    %v1048 = vsel %vm939, %v1013, 0.0
    %1049 = vadd.xlane.f32.xlu0 %v1048
    %v1050 = vpop.xlane.xlu0 %1049
    %v1051 = vsel %vm939, %v1015, 0.0
    %1052 = vadd.xlane.f32.xlu0 %v1051
    %v1053 = vpop.xlane.xlu0 %1052
    %v1054 = vsel %vm939, %v1017, 0.0
    %1055 = vadd.xlane.f32.xlu0 %v1054
    %v1056 = vpop.xlane.xlu0 %1055
    %v1057 = vsel %vm939, %v1019, 0.0
    %1058 = vadd.xlane.f32.xlu0 %v1057
    %v1059 = vpop.xlane.xlu0 %1058
    %v1060 = vsel %vm939, %v1021, 0.0
    %1061 = vadd.xlane.f32.xlu0 %v1060
    %v1062 = vpop.xlane.xlu0 %1061
    %v1063 = vsel %vm939, %v1023, 0.0
    %1064 = vadd.xlane.f32.xlu0 %v1063
    %v1065 = vpop.xlane.xlu0 %1064
    %v1066 = vsel %vm939, %v1025, 0.0
    %1067 = vadd.xlane.f32.xlu0 %v1066
    %v1068 = vpop.xlane.xlu0 %1067
    %v1069 = vsel %vm939, %v1027, 0.0
    %1070 = vadd.xlane.f32.xlu0 %v1069
    %v1071 = vpop.xlane.xlu0 %1070
    %v1072 = vsel %vm939, %v1029, 0.0
    %1073 = vadd.xlane.f32.xlu0 %v1072
    %v1074 = vpop.xlane.xlu0 %1073
    %v1075 = vsel %vm939, %v1031, 0.0
    %1076 = vadd.xlane.f32.xlu0 %v1075
    %v1077 = vpop.xlane.xlu0 %1076
    %v1078 = vsel %vm939, %v1033, 0.0
    %1079 = vadd.xlane.f32.xlu0 %v1078
    %v1080 = vpop.xlane.xlu0 %1079
    %v1081 = vsel %vm939, %v1035, 0.0
    %1082 = vadd.xlane.f32.xlu0 %v1081
    %v1083 = vpop.xlane.xlu0 %1082
    %v1084 = vrcp.pop %v1038
    %v1085 = vrcp.pop %v1041
    %v1086 = vrcp.pop %v1044
    %v1087 = vrcp.pop %v1047
    %v1088 = vrcp.pop %v1050
    %v1089 = vrcp.pop %v1053
    %v1090 = vrcp.pop %v1056
    %v1091 = vrcp.pop %v1059
    %v1092 = vrcp.pop %v1062
    %v1093 = vrcp.pop %v1065
    %v1094 = vrcp.pop %v1068
    %v1095 = vrcp.pop %v1071
    %v1096 = vrcp.pop %v1074
    %v1097 = vrcp.pop %v1077
    %v1098 = vrcp.pop %v1080
    %v1099 = vrcp.pop %v1083
    %v1100 = vmul.f32 %v1005, %v1084
    %v1101 = vmul.f32 %v1007, %v1085
    %v1102 = vmul.f32 %v1009, %v1086
    %v1103 = vmul.f32 %v1011, %v1087
    %v1104 = vmul.f32 %v1013, %v1088
    %v1105 = vmul.f32 %v1015, %v1089
    %v1106 = vmul.f32 %v1017, %v1090
    %v1107 = vmul.f32 %v1019, %v1091
    %v1108 = vmul.f32 %v1021, %v1092
    %v1109 = vmul.f32 %v1023, %v1093
    %v1110 = vmul.f32 %v1025, %v1094
    %v1111 = vmul.f32 %v1027, %v1095
    %v1112 = vmul.f32 %v1029, %v1096
    %v1113 = vmul.f32 %v1031, %v1097
    %v1114 = vmul.f32 %v1033, %v1098
    %v1115 = vmul.f32 %v1035, %v1099
    %v1116 = vpack.c.bf16 %v1101, %v1100
    %v1117 = vpack.c.bf16 %v1103, %v1102
    %v1118 = vpack.c.bf16 %v1105, %v1104
    %v1119 = vpack.c.bf16 %v1107, %v1106
    %v1120 = vpack.c.bf16 %v1109, %v1108
    %v1121 = vpack.c.bf16 %v1111, %v1110
    %v1122 = vpack.c.bf16 %v1113, %v1112
    %v1123 = vpack.c.bf16 %v1115, %v1114
    %v1125 = vsel %vm939, %v1116, 0
    %v1128 = vsel %vm939, %v1117, 0
    %v1131 = vsel %vm939, %v1118, 0
    %v1134 = vsel %vm939, %v1119, 0
    %1136 = vmatprep.subr.bf16.mxu0 0
    %1137 = vmatpush1.bf16.msra.mxu0 %v623
    %1138 = vmatprep.subr.bf16.mxu0 0
    %1139 = vmatpush1.bf16.msra.mxu0 %v626
    %1140 = vmatprep.subr.bf16.mxu0 0
    %1141 = vmatpush1.bf16.msra.mxu0 %v629
    %1142 = vmatprep.subr.bf16.mxu0 0
    %1143 = vmatpush1.bf16.msra.mxu0 %v632
    %1144 = vmatprep.subr.bf16.mxu0 0
    %1145 = vmatpush1.bf16.msra.mxu0 0
    %1146 = vmatprep.subr.bf16.mxu0 0
    %1147 = vmatpush1.bf16.msra.mxu0 0
    %1148 = vmatprep.subr.bf16.mxu0 0
    %1149 = vmatpush1.bf16.msra.mxu0 0
    %1150 = vmatprep.subr.bf16.mxu0 0
    %1151 = vmatpush1.bf16.msra.mxu0 0
    %1152 = vmatprep.subr.bf16.mxu0 0
    %1153 = vmatpush1.bf16.msra.mxu0 0
    %1154 = vmatprep.subr.bf16.mxu0 0
    %1155 = vmatpush1.bf16.msra.mxu0 0
    %1156 = vmatprep.subr.bf16.mxu0 0
    %1157 = vmatpush1.bf16.msra.mxu0 0
    %1158 = vmatprep.subr.bf16.mxu0 0
    %1159 = vmatpush1.bf16.msra.mxu0 0
    %1160 = vmatprep.subr.bf16.mxu0 0
    %1161 = vmatpush1.bf16.msra.mxu0 0
    %1162 = vmatprep.subr.bf16.mxu0 0
    %1163 = vmatpush1.bf16.msra.mxu0 0
    %1164 = vmatprep.subr.bf16.mxu0 0
    %1165 = vmatpush1.bf16.msra.mxu0 0
    %1166 = vmatprep.subr.bf16.mxu0 0
    %1167 = vmatpush1.bf16.msra.mxu0 0
    %1168 = vmatprep.mubr.bf16.mxu0 0
    %1169 = vmatmul.mubr.bf16.gmra.mrb[0].mxu0 %v1125
    %v1170 = vpop.f32.mrb[0].mxu0
    %v1171 = vadd.f32 0.0, %v1170
    %v1172 = vpop.f32.mrb[0].mxu0
    %v1173 = vpop.f32.mrb[0].mxu0
    %v1174 = vadd.f32 0.0, %v1173
    %v1175 = vpop.f32.mrb[0].mxu0
    %1176 = vmatprep.mubr.bf16.mxu0 0
    %1177 = vmatmul.mubr.bf16.gmra.mrb[0].mxu0 %v1128
    %v1178 = vpop.f32.mrb[0].mxu0
    %v1179 = vadd.f32 0.0, %v1178
    %v1180 = vpop.f32.mrb[0].mxu0
    %v1181 = vpop.f32.mrb[0].mxu0
    %v1182 = vadd.f32 0.0, %v1181
    %v1183 = vpop.f32.mrb[0].mxu0
    %1184 = vmatprep.mubr.bf16.mxu0 0
    %1185 = vmatmul.mubr.bf16.gmra.mrb[0].mxu0 %v1131
    %v1186 = vpop.f32.mrb[0].mxu0
    %v1187 = vadd.f32 0.0, %v1186
    %v1188 = vpop.f32.mrb[0].mxu0
    %v1189 = vpop.f32.mrb[0].mxu0
    %v1190 = vadd.f32 0.0, %v1189
    %v1191 = vpop.f32.mrb[0].mxu0
    %1192 = vmatprep.mubr.bf16.mxu0 0
    %1193 = vmatmul.mubr.bf16.gmra.mrb[0].mxu0 %v1134
    %v1194 = vpop.f32.mrb[0].mxu0
    %v1195 = vadd.f32 0.0, %v1194
    %v1196 = vpop.f32.mrb[0].mxu0
    %v1197 = vpop.f32.mrb[0].mxu0
    %v1198 = vadd.f32 0.0, %v1197
    %v1199 = vpop.f32.mrb[0].mxu0
    %1200 = vdwg.mxu0
    %v1202 = vsel %vm939, %v1120, 0
    %v1205 = vsel %vm939, %v1121, 0
    %v1208 = vsel %vm939, %v1122, 0
    %v1211 = vsel %vm939, %v1123, 0
    %1213 = vmatprep.subr.bf16.mxu0 0
    %1214 = vmatpush1.bf16.msra.mxu0 %v635
    %1215 = vmatprep.subr.bf16.mxu0 0
    %1216 = vmatpush1.bf16.msra.mxu0 %v638
    %1217 = vmatprep.subr.bf16.mxu0 0
    %1218 = vmatpush1.bf16.msra.mxu0 %v641
    %1219 = vmatprep.subr.bf16.mxu0 0
    %1220 = vmatpush1.bf16.msra.mxu0 %v644
    %1221 = vmatprep.subr.bf16.mxu0 0
    %1222 = vmatpush1.bf16.msra.mxu0 0
    %1223 = vmatprep.subr.bf16.mxu0 0
    %1224 = vmatpush1.bf16.msra.mxu0 0
    %1225 = vmatprep.subr.bf16.mxu0 0
    %1226 = vmatpush1.bf16.msra.mxu0 0
    %1227 = vmatprep.subr.bf16.mxu0 0
    %1228 = vmatpush1.bf16.msra.mxu0 0
    %1229 = vmatprep.subr.bf16.mxu0 0
    %1230 = vmatpush1.bf16.msra.mxu0 0
    %1231 = vmatprep.subr.bf16.mxu0 0
    %1232 = vmatpush1.bf16.msra.mxu0 0
    %1233 = vmatprep.subr.bf16.mxu0 0
    %1234 = vmatpush1.bf16.msra.mxu0 0
    %1235 = vmatprep.subr.bf16.mxu0 0
    %1236 = vmatpush1.bf16.msra.mxu0 0
    %1237 = vmatprep.subr.bf16.mxu0 0
    %1238 = vmatpush1.bf16.msra.mxu0 0
    %1239 = vmatprep.subr.bf16.mxu0 0
    %1240 = vmatpush1.bf16.msra.mxu0 0
    %1241 = vmatprep.subr.bf16.mxu0 0
    %1242 = vmatpush1.bf16.msra.mxu0 0
    %1243 = vmatprep.subr.bf16.mxu0 0
    %1244 = vmatpush1.bf16.msra.mxu0 0
    %1245 = vmatprep.mubr.bf16.mxu0 0
    %1246 = vmatmul.mubr.bf16.gmra.mrb[0].mxu0 %v1202
    %v1247 = vpop.f32.mrb[0].mxu0
    %v1248 = vadd.f32 0.0, %v1247
    %v1249 = vpop.f32.mrb[0].mxu0
    %v1250 = vpop.f32.mrb[0].mxu0
    %v1251 = vadd.f32 0.0, %v1250
    %v1252 = vpop.f32.mrb[0].mxu0
    %1253 = vmatprep.mubr.bf16.mxu0 0
    %1254 = vmatmul.mubr.bf16.gmra.mrb[0].mxu0 %v1205
    %v1255 = vpop.f32.mrb[0].mxu0
    %v1256 = vadd.f32 0.0, %v1255
    %v1257 = vpop.f32.mrb[0].mxu0
    %v1258 = vpop.f32.mrb[0].mxu0
    %v1259 = vadd.f32 0.0, %v1258
    %v1260 = vpop.f32.mrb[0].mxu0
    %1261 = vmatprep.mubr.bf16.mxu0 0
    %1262 = vmatmul.mubr.bf16.gmra.mrb[0].mxu0 %v1208
    %v1263 = vpop.f32.mrb[0].mxu0
    %v1264 = vadd.f32 0.0, %v1263
    %v1265 = vpop.f32.mrb[0].mxu0
    %v1266 = vpop.f32.mrb[0].mxu0
    %v1267 = vadd.f32 0.0, %v1266
    %v1268 = vpop.f32.mrb[0].mxu0
    %1269 = vmatprep.mubr.bf16.mxu0 0
    %1270 = vmatmul.mubr.bf16.gmra.mrb[0].mxu0 %v1211
    %v1271 = vpop.f32.mrb[0].mxu0
    %v1272 = vadd.f32 0.0, %v1271
    %v1273 = vpop.f32.mrb[0].mxu0
    %v1274 = vpop.f32.mrb[0].mxu0
    %v1275 = vadd.f32 0.0, %v1274
    %v1276 = vpop.f32.mrb[0].mxu0
    %1277 = vdwg.mxu0
    %v1278 = vpack.c.bf16 %v1174, %v1171
    %v1279 = vpack.c.bf16 %v1182, %v1179
    %v1280 = vpack.c.bf16 %v1190, %v1187
    %v1281 = vpack.c.bf16 %v1198, %v1195
    %v1282 = vpack.c.bf16 %v1251, %v1248
    %v1283 = vpack.c.bf16 %v1259, %v1256
    %v1284 = vpack.c.bf16 %v1267, %v1264
    %v1285 = vpack.c.bf16 %v1275, %v1272
    %1290 = vrot.lane.b32.xlu0 %v621, 96
    %v1291 = vpop.permute.xlu0 %1290
    %1292 = vrot.lane.b32.xlu0 %v624, 96
    %v1293 = vpop.permute.xlu0 %1292
    %1294 = vrot.lane.b32.xlu0 %v627, 96
    %v1295 = vpop.permute.xlu0 %1294
    %1296 = vrot.lane.b32.xlu0 %v630, 96
    %v1297 = vpop.permute.xlu0 %1296
    %1302 = vrot.lane.b32.xlu0 %v622, 96
    %v1303 = vpop.permute.xlu0 %1302
    %1304 = vrot.lane.b32.xlu0 %v625, 96
    %v1305 = vpop.permute.xlu0 %1304
    %1306 = vrot.lane.b32.xlu0 %v628, 96
    %v1307 = vpop.permute.xlu0 %1306
    %1308 = vrot.lane.b32.xlu0 %v631, 96
    %v1309 = vpop.permute.xlu0 %1308
    %v1311 = vsel %vm720, %v1291, 0
    %v1314 = vsel %vm720, %v1293, 0
    %v1317 = vsel %vm720, %v1295, 0
    %v1320 = vsel %vm720, %v1297, 0
    %v1323 = vsel %vm720, %v1303, 0
    %v1326 = vsel %vm720, %v1305, 0
    %v1329 = vsel %vm720, %v1307, 0
    %v1332 = vsel %vm720, %v1309, 0
    %1334 = vmatprep.subr.bf16.mxu0 0
    %1335 = vmatpush1.bf16.xpose.msra.mxu0 %v1323
    %1336 = vmatprep.subr.bf16.mxu0 0
    %1337 = vmatpush1.bf16.xpose.msra.mxu0 %v1326
    %1338 = vmatprep.subr.bf16.mxu0 0
    %1339 = vmatpush1.bf16.xpose.msra.mxu0 %v1329
    %1340 = vmatprep.subr.bf16.mxu0 0
    %1341 = vmatpush1.bf16.xpose.msra.mxu0 %v1332
    %1342 = vmatprep.subr.bf16.mxu0 0
    %1343 = vmatpush1.bf16.xpose.msra.mxu0 0
    %1344 = vmatprep.subr.bf16.mxu0 0
    %1345 = vmatpush1.bf16.xpose.msra.mxu0 0
    %1346 = vmatprep.subr.bf16.mxu0 0
    %1347 = vmatpush1.bf16.xpose.msra.mxu0 0
    %1348 = vmatprep.subr.bf16.mxu0 0
    %1349 = vmatpush1.bf16.xpose.msra.mxu0 0
    %1350 = vmatprep.subr.bf16.mxu0 0
    %1351 = vmatpush1.bf16.xpose.msra.mxu0 0
    %1352 = vmatprep.subr.bf16.mxu0 0
    %1353 = vmatpush1.bf16.xpose.msra.mxu0 0
    %1354 = vmatprep.subr.bf16.mxu0 0
    %1355 = vmatpush1.bf16.xpose.msra.mxu0 0
    %1356 = vmatprep.subr.bf16.mxu0 0
    %1357 = vmatpush1.bf16.xpose.msra.mxu0 0
    %1358 = vmatprep.subr.bf16.mxu0 0
    %1359 = vmatpush1.bf16.xpose.msra.mxu0 0
    %1360 = vmatprep.subr.bf16.mxu0 0
    %1361 = vmatpush1.bf16.xpose.msra.mxu0 0
    %1362 = vmatprep.subr.bf16.mxu0 0
    %1363 = vmatpush1.bf16.xpose.msra.mxu0 0
    %1364 = vmatprep.subr.bf16.mxu0 0
    %1365 = vmatpush1.bf16.xpose.msra.mxu0 0
    %1366 = vmatprep.mubr.bf16.mxu0 0
    %1367 = vmatmul.mubr.bf16.gmra.mrb[0].mxu0 %v1311
    %v1368 = vpop.f32.mrb[0].mxu0
    %v1369 = vadd.f32 0.0, %v1368
    %v1370 = vpop.f32.mrb[0].mxu0
    %v1371 = vpop.f32.mrb[0].mxu0
    %v1372 = vadd.f32 0.0, %v1371
    %v1373 = vpop.f32.mrb[0].mxu0
    %1374 = vmatprep.mubr.bf16.mxu0 0
    %1375 = vmatmul.mubr.bf16.gmra.mrb[0].mxu0 %v1314
    %v1376 = vpop.f32.mrb[0].mxu0
    %v1377 = vadd.f32 0.0, %v1376
    %v1378 = vpop.f32.mrb[0].mxu0
    %v1379 = vpop.f32.mrb[0].mxu0
    %v1380 = vadd.f32 0.0, %v1379
    %v1381 = vpop.f32.mrb[0].mxu0
    %1382 = vmatprep.mubr.bf16.mxu0 0
    %1383 = vmatmul.mubr.bf16.gmra.mrb[0].mxu0 %v1317
    %v1384 = vpop.f32.mrb[0].mxu0
    %v1385 = vadd.f32 0.0, %v1384
    %v1386 = vpop.f32.mrb[0].mxu0
    %v1387 = vpop.f32.mrb[0].mxu0
    %v1388 = vadd.f32 0.0, %v1387
    %v1389 = vpop.f32.mrb[0].mxu0
    %1390 = vmatprep.mubr.bf16.mxu0 0
    %1391 = vmatmul.mubr.bf16.gmra.mrb[0].mxu0 %v1320
    %v1392 = vpop.f32.mrb[0].mxu0
    %v1393 = vadd.f32 0.0, %v1392
    %v1394 = vpop.f32.mrb[0].mxu0
    %v1395 = vpop.f32.mrb[0].mxu0
    %v1396 = vadd.f32 0.0, %v1395
    %v1397 = vpop.f32.mrb[0].mxu0
    %1398 = vdwg.mxu0
    %1403 = vrot.lane.b32.xlu0 %v633, 96
    %v1404 = vpop.permute.xlu0 %1403
    %1405 = vrot.lane.b32.xlu0 %v636, 96
    %v1406 = vpop.permute.xlu0 %1405
    %1407 = vrot.lane.b32.xlu0 %v639, 96
    %v1408 = vpop.permute.xlu0 %1407
    %1409 = vrot.lane.b32.xlu0 %v642, 96
    %v1410 = vpop.permute.xlu0 %1409
    %1415 = vrot.lane.b32.xlu0 %v634, 96
    %v1416 = vpop.permute.xlu0 %1415
    %1417 = vrot.lane.b32.xlu0 %v637, 96
    %v1418 = vpop.permute.xlu0 %1417
    %1419 = vrot.lane.b32.xlu0 %v640, 96
    %v1420 = vpop.permute.xlu0 %1419
    %1421 = vrot.lane.b32.xlu0 %v643, 96
    %v1422 = vpop.permute.xlu0 %1421
    %v1424 = vsel %vm720, %v1404, 0
    %v1427 = vsel %vm720, %v1406, 0
    %v1430 = vsel %vm720, %v1408, 0
    %v1433 = vsel %vm720, %v1410, 0
    %v1436 = vsel %vm720, %v1416, 0
    %v1439 = vsel %vm720, %v1418, 0
    %v1442 = vsel %vm720, %v1420, 0
    %v1445 = vsel %vm720, %v1422, 0
    %1447 = vmatprep.subr.bf16.mxu0 0
    %1448 = vmatpush1.bf16.xpose.msra.mxu0 %v1436
    %1449 = vmatprep.subr.bf16.mxu0 0
    %1450 = vmatpush1.bf16.xpose.msra.mxu0 %v1439
    %1451 = vmatprep.subr.bf16.mxu0 0
    %1452 = vmatpush1.bf16.xpose.msra.mxu0 %v1442
    %1453 = vmatprep.subr.bf16.mxu0 0
    %1454 = vmatpush1.bf16.xpose.msra.mxu0 %v1445
    %1455 = vmatprep.subr.bf16.mxu0 0
    %1456 = vmatpush1.bf16.xpose.msra.mxu0 0
    %1457 = vmatprep.subr.bf16.mxu0 0
    %1458 = vmatpush1.bf16.xpose.msra.mxu0 0
    %1459 = vmatprep.subr.bf16.mxu0 0
    %1460 = vmatpush1.bf16.xpose.msra.mxu0 0
    %1461 = vmatprep.subr.bf16.mxu0 0
    %1462 = vmatpush1.bf16.xpose.msra.mxu0 0
    %1463 = vmatprep.subr.bf16.mxu0 0
    %1464 = vmatpush1.bf16.xpose.msra.mxu0 0
    %1465 = vmatprep.subr.bf16.mxu0 0
    %1466 = vmatpush1.bf16.xpose.msra.mxu0 0
    %1467 = vmatprep.subr.bf16.mxu0 0
    %1468 = vmatpush1.bf16.xpose.msra.mxu0 0
    %1469 = vmatprep.subr.bf16.mxu0 0
    %1470 = vmatpush1.bf16.xpose.msra.mxu0 0
    %1471 = vmatprep.subr.bf16.mxu0 0
    %1472 = vmatpush1.bf16.xpose.msra.mxu0 0
    %1473 = vmatprep.subr.bf16.mxu0 0
    %1474 = vmatpush1.bf16.xpose.msra.mxu0 0
    %1475 = vmatprep.subr.bf16.mxu0 0
    %1476 = vmatpush1.bf16.xpose.msra.mxu0 0
    %1477 = vmatprep.subr.bf16.mxu0 0
    %1478 = vmatpush1.bf16.xpose.msra.mxu0 0
    %1479 = vmatprep.mubr.bf16.mxu0 0
    %1480 = vmatmul.mubr.bf16.gmra.mrb[0].mxu0 %v1424
    %v1481 = vpop.f32.mrb[0].mxu0
    %v1482 = vadd.f32 0.0, %v1481
    %v1483 = vpop.f32.mrb[0].mxu0
    %v1484 = vpop.f32.mrb[0].mxu0
    %v1485 = vadd.f32 0.0, %v1484
    %v1486 = vpop.f32.mrb[0].mxu0
    %1487 = vmatprep.mubr.bf16.mxu0 0
    %1488 = vmatmul.mubr.bf16.gmra.mrb[0].mxu0 %v1427
    %v1489 = vpop.f32.mrb[0].mxu0
    %v1490 = vadd.f32 0.0, %v1489
    %v1491 = vpop.f32.mrb[0].mxu0
    %v1492 = vpop.f32.mrb[0].mxu0
    %v1493 = vadd.f32 0.0, %v1492
    %v1494 = vpop.f32.mrb[0].mxu0
    %1495 = vmatprep.mubr.bf16.mxu0 0
    %1496 = vmatmul.mubr.bf16.gmra.mrb[0].mxu0 %v1430
    %v1497 = vpop.f32.mrb[0].mxu0
    %v1498 = vadd.f32 0.0, %v1497
    %v1499 = vpop.f32.mrb[0].mxu0
    %v1500 = vpop.f32.mrb[0].mxu0
    %v1501 = vadd.f32 0.0, %v1500
    %v1502 = vpop.f32.mrb[0].mxu0
    %1503 = vmatprep.mubr.bf16.mxu0 0
    %1504 = vmatmul.mubr.bf16.gmra.mrb[0].mxu0 %v1433
    %v1505 = vpop.f32.mrb[0].mxu0
    %v1506 = vadd.f32 0.0, %v1505
    %v1507 = vpop.f32.mrb[0].mxu0
    %v1508 = vpop.f32.mrb[0].mxu0
    %v1509 = vadd.f32 0.0, %v1508
    %v1510 = vpop.f32.mrb[0].mxu0
    %1511 = vdwg.mxu0
    %v1512 = vmul.f32 %v1369, 0.17677669
    %v1513 = vmul.f32 %v1372, 0.17677669
    %v1514 = vmul.f32 %v1377, 0.17677669
    %v1515 = vmul.f32 %v1380, 0.17677669
    %v1516 = vmul.f32 %v1385, 0.17677669
    %v1517 = vmul.f32 %v1388, 0.17677669
    %v1518 = vmul.f32 %v1393, 0.17677669
    %v1519 = vmul.f32 %v1396, 0.17677669
    %v1520 = vmul.f32 %v1482, 0.17677669
    %v1521 = vmul.f32 %v1485, 0.17677669
    %v1522 = vmul.f32 %v1490, 0.17677669
    %v1523 = vmul.f32 %v1493, 0.17677669
    %v1524 = vmul.f32 %v1498, 0.17677669
    %v1525 = vmul.f32 %v1501, 0.17677669
    %v1526 = vmul.f32 %v1506, 0.17677669
    %v1527 = vmul.f32 %v1509, 0.17677669
    %v1528 = vmul.f32 %v712, 0.099212565
    %v1529 = vmul.f32 %v713, 0.099212565
    %v1530 = vmul.f32 %v714, 0.099212565
    %v1531 = vmul.f32 %v715, 0.099212565
    %v1532 = vmul.f32 %v716, 0.099212565
    %v1533 = vmul.f32 %v717, 0.099212565
    %v1534 = vmul.f32 %v718, 0.099212565
    %v1535 = vmul.f32 %v719, 0.099212565
    %v1536 = vadd.f32 %v1512, %v1528
    %v1537 = vadd.f32 %v1513, %v1529
    %v1538 = vadd.f32 %v1514, %v1530
    %v1539 = vadd.f32 %v1515, %v1531
    %v1540 = vadd.f32 %v1516, %v1532
    %v1541 = vadd.f32 %v1517, %v1533
    %v1542 = vadd.f32 %v1518, %v1534
    %v1543 = vadd.f32 %v1519, %v1535
    %v1544 = vadd.f32 %v1520, %v1528
    %v1545 = vadd.f32 %v1521, %v1529
    %v1546 = vadd.f32 %v1522, %v1530
    %v1547 = vadd.f32 %v1523, %v1531
    %v1548 = vadd.f32 %v1524, %v1532
    %v1549 = vadd.f32 %v1525, %v1533
    %v1550 = vadd.f32 %v1526, %v1534
    %v1551 = vadd.f32 %v1527, %v1535
    %v1552 = vsel %vm939, %v1536, -inf
    %1553 = vmax.xlane.f32.xlu0 %v1552
    %v1554 = vpop.xlane.xlu0 %1553
    %v1555 = vsel %vm939, %v1537, -inf
    %1556 = vmax.xlane.f32.xlu0 %v1555
    %v1557 = vpop.xlane.xlu0 %1556
    %v1558 = vsel %vm939, %v1538, -inf
    %1559 = vmax.xlane.f32.xlu0 %v1558
    %v1560 = vpop.xlane.xlu0 %1559
    %v1561 = vsel %vm939, %v1539, -inf
    %1562 = vmax.xlane.f32.xlu0 %v1561
    %v1563 = vpop.xlane.xlu0 %1562
    %v1564 = vsel %vm939, %v1540, -inf
    %1565 = vmax.xlane.f32.xlu0 %v1564
    %v1566 = vpop.xlane.xlu0 %1565
    %v1567 = vsel %vm939, %v1541, -inf
    %1568 = vmax.xlane.f32.xlu0 %v1567
    %v1569 = vpop.xlane.xlu0 %1568
    %v1570 = vsel %vm939, %v1542, -inf
    %1571 = vmax.xlane.f32.xlu0 %v1570
    %v1572 = vpop.xlane.xlu0 %1571
    %v1573 = vsel %vm939, %v1543, -inf
    %1574 = vmax.xlane.f32.xlu0 %v1573
    %v1575 = vpop.xlane.xlu0 %1574
    %v1576 = vsel %vm939, %v1544, -inf
    %1577 = vmax.xlane.f32.xlu0 %v1576
    %v1578 = vpop.xlane.xlu0 %1577
    %v1579 = vsel %vm939, %v1545, -inf
    %1580 = vmax.xlane.f32.xlu0 %v1579
    %v1581 = vpop.xlane.xlu0 %1580
    %v1582 = vsel %vm939, %v1546, -inf
    %1583 = vmax.xlane.f32.xlu0 %v1582
    %v1584 = vpop.xlane.xlu0 %1583
    %v1585 = vsel %vm939, %v1547, -inf
    %1586 = vmax.xlane.f32.xlu0 %v1585
    %v1587 = vpop.xlane.xlu0 %1586
    %v1588 = vsel %vm939, %v1548, -inf
    %1589 = vmax.xlane.f32.xlu0 %v1588
    %v1590 = vpop.xlane.xlu0 %1589
    %v1591 = vsel %vm939, %v1549, -inf
    %1592 = vmax.xlane.f32.xlu0 %v1591
    %v1593 = vpop.xlane.xlu0 %1592
    %v1594 = vsel %vm939, %v1550, -inf
    %1595 = vmax.xlane.f32.xlu0 %v1594
    %v1596 = vpop.xlane.xlu0 %1595
    %v1597 = vsel %vm939, %v1551, -inf
    %1598 = vmax.xlane.f32.xlu0 %v1597
    %v1599 = vpop.xlane.xlu0 %1598
    %v1600 = vsub.f32 %v1536, %v1554
    %v1601 = vsub.f32 %v1537, %v1557
    %v1602 = vsub.f32 %v1538, %v1560
    %v1603 = vsub.f32 %v1539, %v1563
    %v1604 = vsub.f32 %v1540, %v1566
    %v1605 = vsub.f32 %v1541, %v1569
    %v1606 = vsub.f32 %v1542, %v1572
    %v1607 = vsub.f32 %v1543, %v1575
    %v1608 = vsub.f32 %v1544, %v1578
    %v1609 = vsub.f32 %v1545, %v1581
    %v1610 = vsub.f32 %v1546, %v1584
    %v1611 = vsub.f32 %v1547, %v1587
    %v1612 = vsub.f32 %v1548, %v1590
    %v1613 = vsub.f32 %v1549, %v1593
    %v1614 = vsub.f32 %v1550, %v1596
    %v1615 = vsub.f32 %v1551, %v1599
    %v1616 = vmul.f32 %v1600, 1.442695
    %v1617 = vpow.pop %v1616
    %v1618 = vmul.f32 %v1601, 1.442695
    %v1619 = vpow.pop %v1618
    %v1620 = vmul.f32 %v1602, 1.442695
    %v1621 = vpow.pop %v1620
    %v1622 = vmul.f32 %v1603, 1.442695
    %v1623 = vpow.pop %v1622
    %v1624 = vmul.f32 %v1604, 1.442695
    %v1625 = vpow.pop %v1624
    %v1626 = vmul.f32 %v1605, 1.442695
    %v1627 = vpow.pop %v1626
    %v1628 = vmul.f32 %v1606, 1.442695
    %v1629 = vpow.pop %v1628
    %v1630 = vmul.f32 %v1607, 1.442695
    %v1631 = vpow.pop %v1630
    %v1632 = vmul.f32 %v1608, 1.442695
    %v1633 = vpow.pop %v1632
    %v1634 = vmul.f32 %v1609, 1.442695
    %v1635 = vpow.pop %v1634
    %v1636 = vmul.f32 %v1610, 1.442695
    %v1637 = vpow.pop %v1636
    %v1638 = vmul.f32 %v1611, 1.442695
    %v1639 = vpow.pop %v1638
    %v1640 = vmul.f32 %v1612, 1.442695
    %v1641 = vpow.pop %v1640
    %v1642 = vmul.f32 %v1613, 1.442695
    %v1643 = vpow.pop %v1642
    %v1644 = vmul.f32 %v1614, 1.442695
    %v1645 = vpow.pop %v1644
    %v1646 = vmul.f32 %v1615, 1.442695
    %v1647 = vpow.pop %v1646
    %v1648 = vsel %vm939, %v1617, 0.0
    %1649 = vadd.xlane.f32.xlu0 %v1648
    %v1650 = vpop.xlane.xlu0 %1649
    %v1651 = vsel %vm939, %v1619, 0.0
    %1652 = vadd.xlane.f32.xlu0 %v1651
    %v1653 = vpop.xlane.xlu0 %1652
    %v1654 = vsel %vm939, %v1621, 0.0
    %1655 = vadd.xlane.f32.xlu0 %v1654
    %v1656 = vpop.xlane.xlu0 %1655
    %v1657 = vsel %vm939, %v1623, 0.0
    %1658 = vadd.xlane.f32.xlu0 %v1657
    %v1659 = vpop.xlane.xlu0 %1658
    %v1660 = vsel %vm939, %v1625, 0.0
    %1661 = vadd.xlane.f32.xlu0 %v1660
    %v1662 = vpop.xlane.xlu0 %1661
    %v1663 = vsel %vm939, %v1627, 0.0
    %1664 = vadd.xlane.f32.xlu0 %v1663
    %v1665 = vpop.xlane.xlu0 %1664
    %v1666 = vsel %vm939, %v1629, 0.0
    %1667 = vadd.xlane.f32.xlu0 %v1666
    %v1668 = vpop.xlane.xlu0 %1667
    %v1669 = vsel %vm939, %v1631, 0.0
    %1670 = vadd.xlane.f32.xlu0 %v1669
    %v1671 = vpop.xlane.xlu0 %1670
    %v1672 = vsel %vm939, %v1633, 0.0
    %1673 = vadd.xlane.f32.xlu0 %v1672
    %v1674 = vpop.xlane.xlu0 %1673
    %v1675 = vsel %vm939, %v1635, 0.0
    %1676 = vadd.xlane.f32.xlu0 %v1675
    %v1677 = vpop.xlane.xlu0 %1676
    %v1678 = vsel %vm939, %v1637, 0.0
    %1679 = vadd.xlane.f32.xlu0 %v1678
    %v1680 = vpop.xlane.xlu0 %1679
    %v1681 = vsel %vm939, %v1639, 0.0
    %1682 = vadd.xlane.f32.xlu0 %v1681
    %v1683 = vpop.xlane.xlu0 %1682
    %v1684 = vsel %vm939, %v1641, 0.0
    %1685 = vadd.xlane.f32.xlu0 %v1684
    %v1686 = vpop.xlane.xlu0 %1685
    %v1687 = vsel %vm939, %v1643, 0.0
    %1688 = vadd.xlane.f32.xlu0 %v1687
    %v1689 = vpop.xlane.xlu0 %1688
    %v1690 = vsel %vm939, %v1645, 0.0
    %1691 = vadd.xlane.f32.xlu0 %v1690
    %v1692 = vpop.xlane.xlu0 %1691
    %v1693 = vsel %vm939, %v1647, 0.0
    %1694 = vadd.xlane.f32.xlu0 %v1693
    %v1695 = vpop.xlane.xlu0 %1694
    %v1696 = vrcp.pop %v1650
    %v1697 = vrcp.pop %v1653
    %v1698 = vrcp.pop %v1656
    %v1699 = vrcp.pop %v1659
    %v1700 = vrcp.pop %v1662
    %v1701 = vrcp.pop %v1665
    %v1702 = vrcp.pop %v1668
    %v1703 = vrcp.pop %v1671
    %v1704 = vrcp.pop %v1674
    %v1705 = vrcp.pop %v1677
    %v1706 = vrcp.pop %v1680
    %v1707 = vrcp.pop %v1683
    %v1708 = vrcp.pop %v1686
    %v1709 = vrcp.pop %v1689
    %v1710 = vrcp.pop %v1692
    %v1711 = vrcp.pop %v1695
    %v1712 = vmul.f32 %v1617, %v1696
    %v1713 = vmul.f32 %v1619, %v1697
    %v1714 = vmul.f32 %v1621, %v1698
    %v1715 = vmul.f32 %v1623, %v1699
    %v1716 = vmul.f32 %v1625, %v1700
    %v1717 = vmul.f32 %v1627, %v1701
    %v1718 = vmul.f32 %v1629, %v1702
    %v1719 = vmul.f32 %v1631, %v1703
    %v1720 = vmul.f32 %v1633, %v1704
    %v1721 = vmul.f32 %v1635, %v1705
    %v1722 = vmul.f32 %v1637, %v1706
    %v1723 = vmul.f32 %v1639, %v1707
    %v1724 = vmul.f32 %v1641, %v1708
    %v1725 = vmul.f32 %v1643, %v1709
    %v1726 = vmul.f32 %v1645, %v1710
    %v1727 = vmul.f32 %v1647, %v1711
    %v1728 = vpack.c.bf16 %v1713, %v1712
    %v1729 = vpack.c.bf16 %v1715, %v1714
    %v1730 = vpack.c.bf16 %v1717, %v1716
    %v1731 = vpack.c.bf16 %v1719, %v1718
    %v1732 = vpack.c.bf16 %v1721, %v1720
    %v1733 = vpack.c.bf16 %v1723, %v1722
    %v1734 = vpack.c.bf16 %v1725, %v1724
    %v1735 = vpack.c.bf16 %v1727, %v1726
    %1740 = vrot.lane.b32.xlu0 %v623, 96
    %v1741 = vpop.permute.xlu0 %1740
    %1742 = vrot.lane.b32.xlu0 %v626, 96
    %v1743 = vpop.permute.xlu0 %1742
    %1744 = vrot.lane.b32.xlu0 %v629, 96
    %v1745 = vpop.permute.xlu0 %1744
    %1746 = vrot.lane.b32.xlu0 %v632, 96
    %v1747 = vpop.permute.xlu0 %1746
    %v1753 = vsel %vm939, %v1728, 0
    %v1756 = vsel %vm939, %v1729, 0
    %v1759 = vsel %vm939, %v1730, 0
    %v1762 = vsel %vm939, %v1731, 0
    %1764 = vmatprep.subr.bf16.mxu0 0
    %1765 = vmatpush1.bf16.msra.mxu0 %v1741
    %1766 = vmatprep.subr.bf16.mxu0 0
    %1767 = vmatpush1.bf16.msra.mxu0 %v1743
    %1768 = vmatprep.subr.bf16.mxu0 0
    %1769 = vmatpush1.bf16.msra.mxu0 %v1745
    %1770 = vmatprep.subr.bf16.mxu0 0
    %1771 = vmatpush1.bf16.msra.mxu0 %v1747
    %1772 = vmatprep.subr.bf16.mxu0 0
    %1773 = vmatpush1.bf16.msra.mxu0 0
    %1774 = vmatprep.subr.bf16.mxu0 0
    %1775 = vmatpush1.bf16.msra.mxu0 0
    %1776 = vmatprep.subr.bf16.mxu0 0
    %1777 = vmatpush1.bf16.msra.mxu0 0
    %1778 = vmatprep.subr.bf16.mxu0 0
    %1779 = vmatpush1.bf16.msra.mxu0 0
    %1780 = vmatprep.subr.bf16.mxu0 0
    %1781 = vmatpush1.bf16.msra.mxu0 0
    %1782 = vmatprep.subr.bf16.mxu0 0
    %1783 = vmatpush1.bf16.msra.mxu0 0
    %1784 = vmatprep.subr.bf16.mxu0 0
    %1785 = vmatpush1.bf16.msra.mxu0 0
    %1786 = vmatprep.subr.bf16.mxu0 0
    %1787 = vmatpush1.bf16.msra.mxu0 0
    %1788 = vmatprep.subr.bf16.mxu0 0
    %1789 = vmatpush1.bf16.msra.mxu0 0
    %1790 = vmatprep.subr.bf16.mxu0 0
    %1791 = vmatpush1.bf16.msra.mxu0 0
    %1792 = vmatprep.subr.bf16.mxu0 0
    %1793 = vmatpush1.bf16.msra.mxu0 0
    %1794 = vmatprep.subr.bf16.mxu0 0
    %1795 = vmatpush1.bf16.msra.mxu0 0
    %1796 = vmatprep.mubr.bf16.mxu0 0
    %1797 = vmatmul.mubr.bf16.gmra.mrb[0].mxu0 %v1753
    %v1798 = vpop.f32.mrb[0].mxu0
    %v1799 = vadd.f32 0.0, %v1798
    %v1800 = vpop.f32.mrb[0].mxu0
    %v1801 = vpop.f32.mrb[0].mxu0
    %v1802 = vadd.f32 0.0, %v1801
    %v1803 = vpop.f32.mrb[0].mxu0
    %1804 = vmatprep.mubr.bf16.mxu0 0
    %1805 = vmatmul.mubr.bf16.gmra.mrb[0].mxu0 %v1756
    %v1806 = vpop.f32.mrb[0].mxu0
    %v1807 = vadd.f32 0.0, %v1806
    %v1808 = vpop.f32.mrb[0].mxu0
    %v1809 = vpop.f32.mrb[0].mxu0
    %v1810 = vadd.f32 0.0, %v1809
    %v1811 = vpop.f32.mrb[0].mxu0
    %1812 = vmatprep.mubr.bf16.mxu0 0
    %1813 = vmatmul.mubr.bf16.gmra.mrb[0].mxu0 %v1759
    %v1814 = vpop.f32.mrb[0].mxu0
    %v1815 = vadd.f32 0.0, %v1814
    %v1816 = vpop.f32.mrb[0].mxu0
    %v1817 = vpop.f32.mrb[0].mxu0
    %v1818 = vadd.f32 0.0, %v1817
    %v1819 = vpop.f32.mrb[0].mxu0
    %1820 = vmatprep.mubr.bf16.mxu0 0
    %1821 = vmatmul.mubr.bf16.gmra.mrb[0].mxu0 %v1762
    %v1822 = vpop.f32.mrb[0].mxu0
    %v1823 = vadd.f32 0.0, %v1822
    %v1824 = vpop.f32.mrb[0].mxu0
    %v1825 = vpop.f32.mrb[0].mxu0
    %v1826 = vadd.f32 0.0, %v1825
    %v1827 = vpop.f32.mrb[0].mxu0
    %1828 = vdwg.mxu0
    %1833 = vrot.lane.b32.xlu0 %v635, 96
    %v1834 = vpop.permute.xlu0 %1833
    %1835 = vrot.lane.b32.xlu0 %v638, 96
    %v1836 = vpop.permute.xlu0 %1835
    %1837 = vrot.lane.b32.xlu0 %v641, 96
    %v1838 = vpop.permute.xlu0 %1837
    %1839 = vrot.lane.b32.xlu0 %v644, 96
    %v1840 = vpop.permute.xlu0 %1839
    %v1846 = vsel %vm939, %v1732, 0
    %v1849 = vsel %vm939, %v1733, 0
    %v1852 = vsel %vm939, %v1734, 0
    %v1855 = vsel %vm939, %v1735, 0
    %1857 = vmatprep.subr.bf16.mxu0 0
    %1858 = vmatpush1.bf16.msra.mxu0 %v1834
    %1859 = vmatprep.subr.bf16.mxu0 0
    %1860 = vmatpush1.bf16.msra.mxu0 %v1836
    %1861 = vmatprep.subr.bf16.mxu0 0
    %1862 = vmatpush1.bf16.msra.mxu0 %v1838
    %1863 = vmatprep.subr.bf16.mxu0 0
    %1864 = vmatpush1.bf16.msra.mxu0 %v1840
    %1865 = vmatprep.subr.bf16.mxu0 0
    %1866 = vmatpush1.bf16.msra.mxu0 0
    %1867 = vmatprep.subr.bf16.mxu0 0
    %1868 = vmatpush1.bf16.msra.mxu0 0
    %1869 = vmatprep.subr.bf16.mxu0 0
    %1870 = vmatpush1.bf16.msra.mxu0 0
    %1871 = vmatprep.subr.bf16.mxu0 0
    %1872 = vmatpush1.bf16.msra.mxu0 0
    %1873 = vmatprep.subr.bf16.mxu0 0
    %1874 = vmatpush1.bf16.msra.mxu0 0
    %1875 = vmatprep.subr.bf16.mxu0 0
    %1876 = vmatpush1.bf16.msra.mxu0 0
    %1877 = vmatprep.subr.bf16.mxu0 0
    %1878 = vmatpush1.bf16.msra.mxu0 0
    %1879 = vmatprep.subr.bf16.mxu0 0
    %1880 = vmatpush1.bf16.msra.mxu0 0
    %1881 = vmatprep.subr.bf16.mxu0 0
    %1882 = vmatpush1.bf16.msra.mxu0 0
    %1883 = vmatprep.subr.bf16.mxu0 0
    %1884 = vmatpush1.bf16.msra.mxu0 0
    %1885 = vmatprep.subr.bf16.mxu0 0
    %1886 = vmatpush1.bf16.msra.mxu0 0
    %1887 = vmatprep.subr.bf16.mxu0 0
    %1888 = vmatpush1.bf16.msra.mxu0 0
    %1889 = vmatprep.mubr.bf16.mxu0 0
    %1890 = vmatmul.mubr.bf16.gmra.mrb[0].mxu0 %v1846
    %v1891 = vpop.f32.mrb[0].mxu0
    %v1892 = vadd.f32 0.0, %v1891
    %v1893 = vpop.f32.mrb[0].mxu0
    %v1894 = vpop.f32.mrb[0].mxu0
    %v1895 = vadd.f32 0.0, %v1894
    %v1896 = vpop.f32.mrb[0].mxu0
    %1897 = vmatprep.mubr.bf16.mxu0 0
    %1898 = vmatmul.mubr.bf16.gmra.mrb[0].mxu0 %v1849
    %v1899 = vpop.f32.mrb[0].mxu0
    %v1900 = vadd.f32 0.0, %v1899
    %v1901 = vpop.f32.mrb[0].mxu0
    %v1902 = vpop.f32.mrb[0].mxu0
    %v1903 = vadd.f32 0.0, %v1902
    %v1904 = vpop.f32.mrb[0].mxu0
    %1905 = vmatprep.mubr.bf16.mxu0 0
    %1906 = vmatmul.mubr.bf16.gmra.mrb[0].mxu0 %v1852
    %v1907 = vpop.f32.mrb[0].mxu0
    %v1908 = vadd.f32 0.0, %v1907
    %v1909 = vpop.f32.mrb[0].mxu0
    %v1910 = vpop.f32.mrb[0].mxu0
    %v1911 = vadd.f32 0.0, %v1910
    %v1912 = vpop.f32.mrb[0].mxu0
    %1913 = vmatprep.mubr.bf16.mxu0 0
    %1914 = vmatmul.mubr.bf16.gmra.mrb[0].mxu0 %v1855
    %v1915 = vpop.f32.mrb[0].mxu0
    %v1916 = vadd.f32 0.0, %v1915
    %v1917 = vpop.f32.mrb[0].mxu0
    %v1918 = vpop.f32.mrb[0].mxu0
    %v1919 = vadd.f32 0.0, %v1918
    %v1920 = vpop.f32.mrb[0].mxu0
    %1921 = vdwg.mxu0
    %v1922 = vpack.c.bf16 %v1802, %v1799
    %v1923 = vpack.c.bf16 %v1810, %v1807
    %v1924 = vpack.c.bf16 %v1818, %v1815
    %v1925 = vpack.c.bf16 %v1826, %v1823
    %v1926 = vpack.c.bf16 %v1895, %v1892
    %v1927 = vpack.c.bf16 %v1903, %v1900
    %v1928 = vpack.c.bf16 %v1911, %v1908
    %v1929 = vpack.c.bf16 %v1919, %v1916
    %1930 = vrot.lane.b32.xlu0 %v621, 64
    %v1931 = vpop.permute.xlu0 %1930
    %1932 = vrot.lane.b32.xlu0 %v624, 64
    %v1933 = vpop.permute.xlu0 %1932
    %1934 = vrot.lane.b32.xlu0 %v627, 64
    %v1935 = vpop.permute.xlu0 %1934
    %1936 = vrot.lane.b32.xlu0 %v630, 64
    %v1937 = vpop.permute.xlu0 %1936
    %1938 = vrot.lane.b32.xlu0 %v622, 64
    %v1939 = vpop.permute.xlu0 %1938
    %1940 = vrot.lane.b32.xlu0 %v625, 64
    %v1941 = vpop.permute.xlu0 %1940
    %1942 = vrot.lane.b32.xlu0 %v628, 64
    %v1943 = vpop.permute.xlu0 %1942
    %1944 = vrot.lane.b32.xlu0 %v631, 64
    %v1945 = vpop.permute.xlu0 %1944
    %v1947 = vsel %vm720, %v1931, 0
    %v1950 = vsel %vm720, %v1933, 0
    %v1953 = vsel %vm720, %v1935, 0
    %v1956 = vsel %vm720, %v1937, 0
    %v1959 = vsel %vm720, %v1939, 0
    %v1962 = vsel %vm720, %v1941, 0
    %v1965 = vsel %vm720, %v1943, 0
    %v1968 = vsel %vm720, %v1945, 0
    %1970 = vmatprep.subr.bf16.mxu0 0
    %1971 = vmatpush1.bf16.xpose.msra.mxu0 %v1959
    %1972 = vmatprep.subr.bf16.mxu0 0
    %1973 = vmatpush1.bf16.xpose.msra.mxu0 %v1962
    %1974 = vmatprep.subr.bf16.mxu0 0
    %1975 = vmatpush1.bf16.xpose.msra.mxu0 %v1965
    %1976 = vmatprep.subr.bf16.mxu0 0
    %1977 = vmatpush1.bf16.xpose.msra.mxu0 %v1968
    %1978 = vmatprep.subr.bf16.mxu0 0
    %1979 = vmatpush1.bf16.xpose.msra.mxu0 0
    %1980 = vmatprep.subr.bf16.mxu0 0
    %1981 = vmatpush1.bf16.xpose.msra.mxu0 0
    %1982 = vmatprep.subr.bf16.mxu0 0
    %1983 = vmatpush1.bf16.xpose.msra.mxu0 0
    %1984 = vmatprep.subr.bf16.mxu0 0
    %1985 = vmatpush1.bf16.xpose.msra.mxu0 0
    %1986 = vmatprep.subr.bf16.mxu0 0
    %1987 = vmatpush1.bf16.xpose.msra.mxu0 0
    %1988 = vmatprep.subr.bf16.mxu0 0
    %1989 = vmatpush1.bf16.xpose.msra.mxu0 0
    %1990 = vmatprep.subr.bf16.mxu0 0
    %1991 = vmatpush1.bf16.xpose.msra.mxu0 0
    %1992 = vmatprep.subr.bf16.mxu0 0
    %1993 = vmatpush1.bf16.xpose.msra.mxu0 0
    %1994 = vmatprep.subr.bf16.mxu0 0
    %1995 = vmatpush1.bf16.xpose.msra.mxu0 0
    %1996 = vmatprep.subr.bf16.mxu0 0
    %1997 = vmatpush1.bf16.xpose.msra.mxu0 0
    %1998 = vmatprep.subr.bf16.mxu0 0
    %1999 = vmatpush1.bf16.xpose.msra.mxu0 0
    %2000 = vmatprep.subr.bf16.mxu0 0
    %2001 = vmatpush1.bf16.xpose.msra.mxu0 0
    %2002 = vmatprep.mubr.bf16.mxu0 0
    %2003 = vmatmul.mubr.bf16.gmra.mrb[0].mxu0 %v1947
    %v2004 = vpop.f32.mrb[0].mxu0
    %v2005 = vadd.f32 0.0, %v2004
    %v2006 = vpop.f32.mrb[0].mxu0
    %v2007 = vpop.f32.mrb[0].mxu0
    %v2008 = vadd.f32 0.0, %v2007
    %v2009 = vpop.f32.mrb[0].mxu0
    %2010 = vmatprep.mubr.bf16.mxu0 0
    %2011 = vmatmul.mubr.bf16.gmra.mrb[0].mxu0 %v1950
    %v2012 = vpop.f32.mrb[0].mxu0
    %v2013 = vadd.f32 0.0, %v2012
    %v2014 = vpop.f32.mrb[0].mxu0
    %v2015 = vpop.f32.mrb[0].mxu0
    %v2016 = vadd.f32 0.0, %v2015
    %v2017 = vpop.f32.mrb[0].mxu0
    %2018 = vmatprep.mubr.bf16.mxu0 0
    %2019 = vmatmul.mubr.bf16.gmra.mrb[0].mxu0 %v1953
    %v2020 = vpop.f32.mrb[0].mxu0
    %v2021 = vadd.f32 0.0, %v2020
    %v2022 = vpop.f32.mrb[0].mxu0
    %v2023 = vpop.f32.mrb[0].mxu0
    %v2024 = vadd.f32 0.0, %v2023
    %v2025 = vpop.f32.mrb[0].mxu0
    %2026 = vmatprep.mubr.bf16.mxu0 0
    %2027 = vmatmul.mubr.bf16.gmra.mrb[0].mxu0 %v1956
    %v2028 = vpop.f32.mrb[0].mxu0
    %v2029 = vadd.f32 0.0, %v2028
    %v2030 = vpop.f32.mrb[0].mxu0
    %v2031 = vpop.f32.mrb[0].mxu0
    %v2032 = vadd.f32 0.0, %v2031
    %v2033 = vpop.f32.mrb[0].mxu0
    %2034 = vdwg.mxu0
    %2035 = vrot.lane.b32.xlu0 %v633, 64
    %v2036 = vpop.permute.xlu0 %2035
    %2037 = vrot.lane.b32.xlu0 %v636, 64
    %v2038 = vpop.permute.xlu0 %2037
    %2039 = vrot.lane.b32.xlu0 %v639, 64
    %v2040 = vpop.permute.xlu0 %2039
    %2041 = vrot.lane.b32.xlu0 %v642, 64
    %v2042 = vpop.permute.xlu0 %2041
    %2043 = vrot.lane.b32.xlu0 %v634, 64
    %v2044 = vpop.permute.xlu0 %2043
    %2045 = vrot.lane.b32.xlu0 %v637, 64
    %v2046 = vpop.permute.xlu0 %2045
    %2047 = vrot.lane.b32.xlu0 %v640, 64
    %v2048 = vpop.permute.xlu0 %2047
    %2049 = vrot.lane.b32.xlu0 %v643, 64
    %v2050 = vpop.permute.xlu0 %2049
    %v2052 = vsel %vm720, %v2036, 0
    %v2055 = vsel %vm720, %v2038, 0
    %v2058 = vsel %vm720, %v2040, 0
    %v2061 = vsel %vm720, %v2042, 0
    %v2064 = vsel %vm720, %v2044, 0
    %v2067 = vsel %vm720, %v2046, 0
    %v2070 = vsel %vm720, %v2048, 0
    %v2073 = vsel %vm720, %v2050, 0
    %2075 = vmatprep.subr.bf16.mxu0 0
    %2076 = vmatpush1.bf16.xpose.msra.mxu0 %v2064
    %2077 = vmatprep.subr.bf16.mxu0 0
    %2078 = vmatpush1.bf16.xpose.msra.mxu0 %v2067
    %2079 = vmatprep.subr.bf16.mxu0 0
    %2080 = vmatpush1.bf16.xpose.msra.mxu0 %v2070
    %2081 = vmatprep.subr.bf16.mxu0 0
    %2082 = vmatpush1.bf16.xpose.msra.mxu0 %v2073
    %2083 = vmatprep.subr.bf16.mxu0 0
    %2084 = vmatpush1.bf16.xpose.msra.mxu0 0
    %2085 = vmatprep.subr.bf16.mxu0 0
    %2086 = vmatpush1.bf16.xpose.msra.mxu0 0
    %2087 = vmatprep.subr.bf16.mxu0 0
    %2088 = vmatpush1.bf16.xpose.msra.mxu0 0
    %2089 = vmatprep.subr.bf16.mxu0 0
    %2090 = vmatpush1.bf16.xpose.msra.mxu0 0
    %2091 = vmatprep.subr.bf16.mxu0 0
    %2092 = vmatpush1.bf16.xpose.msra.mxu0 0
    %2093 = vmatprep.subr.bf16.mxu0 0
    %2094 = vmatpush1.bf16.xpose.msra.mxu0 0
    %2095 = vmatprep.subr.bf16.mxu0 0
    %2096 = vmatpush1.bf16.xpose.msra.mxu0 0
    %2097 = vmatprep.subr.bf16.mxu0 0
    %2098 = vmatpush1.bf16.xpose.msra.mxu0 0
    %2099 = vmatprep.subr.bf16.mxu0 0
    %2100 = vmatpush1.bf16.xpose.msra.mxu0 0
    %2101 = vmatprep.subr.bf16.mxu0 0
    %2102 = vmatpush1.bf16.xpose.msra.mxu0 0
    %2103 = vmatprep.subr.bf16.mxu0 0
    %2104 = vmatpush1.bf16.xpose.msra.mxu0 0
    %2105 = vmatprep.subr.bf16.mxu0 0
    %2106 = vmatpush1.bf16.xpose.msra.mxu0 0
    %2107 = vmatprep.mubr.bf16.mxu0 0
    %2108 = vmatmul.mubr.bf16.gmra.mrb[0].mxu0 %v2052
    %v2109 = vpop.f32.mrb[0].mxu0
    %v2110 = vadd.f32 0.0, %v2109
    %v2111 = vpop.f32.mrb[0].mxu0
    %v2112 = vpop.f32.mrb[0].mxu0
    %v2113 = vadd.f32 0.0, %v2112
    %v2114 = vpop.f32.mrb[0].mxu0
    %2115 = vmatprep.mubr.bf16.mxu0 0
    %2116 = vmatmul.mubr.bf16.gmra.mrb[0].mxu0 %v2055
    %v2117 = vpop.f32.mrb[0].mxu0
    %v2118 = vadd.f32 0.0, %v2117
    %v2119 = vpop.f32.mrb[0].mxu0
    %v2120 = vpop.f32.mrb[0].mxu0
    %v2121 = vadd.f32 0.0, %v2120
    %v2122 = vpop.f32.mrb[0].mxu0
    %2123 = vmatprep.mubr.bf16.mxu0 0
    %2124 = vmatmul.mubr.bf16.gmra.mrb[0].mxu0 %v2058
    %v2125 = vpop.f32.mrb[0].mxu0
    %v2126 = vadd.f32 0.0, %v2125
    %v2127 = vpop.f32.mrb[0].mxu0
    %v2128 = vpop.f32.mrb[0].mxu0
    %v2129 = vadd.f32 0.0, %v2128
    %v2130 = vpop.f32.mrb[0].mxu0
    %2131 = vmatprep.mubr.bf16.mxu0 0
    %2132 = vmatmul.mubr.bf16.gmra.mrb[0].mxu0 %v2061
    %v2133 = vpop.f32.mrb[0].mxu0
    %v2134 = vadd.f32 0.0, %v2133
    %v2135 = vpop.f32.mrb[0].mxu0
    %v2136 = vpop.f32.mrb[0].mxu0
    %v2137 = vadd.f32 0.0, %v2136
    %v2138 = vpop.f32.mrb[0].mxu0
    %2139 = vdwg.mxu0
    %v2140 = vmul.f32 %v2005, 0.17677669
    %v2141 = vmul.f32 %v2008, 0.17677669
    %v2142 = vmul.f32 %v2013, 0.17677669
    %v2143 = vmul.f32 %v2016, 0.17677669
    %v2144 = vmul.f32 %v2021, 0.17677669
    %v2145 = vmul.f32 %v2024, 0.17677669
    %v2146 = vmul.f32 %v2029, 0.17677669
    %v2147 = vmul.f32 %v2032, 0.17677669
    %v2148 = vmul.f32 %v2110, 0.17677669
    %v2149 = vmul.f32 %v2113, 0.17677669
    %v2150 = vmul.f32 %v2118, 0.17677669
    %v2151 = vmul.f32 %v2121, 0.17677669
    %v2152 = vmul.f32 %v2126, 0.17677669
    %v2153 = vmul.f32 %v2129, 0.17677669
    %v2154 = vmul.f32 %v2134, 0.17677669
    %v2155 = vmul.f32 %v2137, 0.17677669
    %v2156 = vmul.f32 %v712, 0.019686267
    %v2157 = vmul.f32 %v713, 0.019686267
    %v2158 = vmul.f32 %v714, 0.019686267
    %v2159 = vmul.f32 %v715, 0.019686267
    %v2160 = vmul.f32 %v716, 0.019686267
    %v2161 = vmul.f32 %v717, 0.019686267
    %v2162 = vmul.f32 %v718, 0.019686267
    %v2163 = vmul.f32 %v719, 0.019686267
    %v2164 = vadd.f32 %v2140, %v2156
    %v2165 = vadd.f32 %v2141, %v2157
    %v2166 = vadd.f32 %v2142, %v2158
    %v2167 = vadd.f32 %v2143, %v2159
    %v2168 = vadd.f32 %v2144, %v2160
    %v2169 = vadd.f32 %v2145, %v2161
    %v2170 = vadd.f32 %v2146, %v2162
    %v2171 = vadd.f32 %v2147, %v2163
    %v2172 = vadd.f32 %v2148, %v2156
    %v2173 = vadd.f32 %v2149, %v2157
    %v2174 = vadd.f32 %v2150, %v2158
    %v2175 = vadd.f32 %v2151, %v2159
    %v2176 = vadd.f32 %v2152, %v2160
    %v2177 = vadd.f32 %v2153, %v2161
    %v2178 = vadd.f32 %v2154, %v2162
    %v2179 = vadd.f32 %v2155, %v2163
    %v2180 = vsel %vm939, %v2164, -inf
    %2181 = vmax.xlane.f32.xlu0 %v2180
    %v2182 = vpop.xlane.xlu0 %2181
    %v2183 = vsel %vm939, %v2165, -inf
    %2184 = vmax.xlane.f32.xlu0 %v2183
    %v2185 = vpop.xlane.xlu0 %2184
    %v2186 = vsel %vm939, %v2166, -inf
    %2187 = vmax.xlane.f32.xlu0 %v2186
    %v2188 = vpop.xlane.xlu0 %2187
    %v2189 = vsel %vm939, %v2167, -inf
    %2190 = vmax.xlane.f32.xlu0 %v2189
    %v2191 = vpop.xlane.xlu0 %2190
    %v2192 = vsel %vm939, %v2168, -inf
    %2193 = vmax.xlane.f32.xlu0 %v2192
    %v2194 = vpop.xlane.xlu0 %2193
    %v2195 = vsel %vm939, %v2169, -inf
    %2196 = vmax.xlane.f32.xlu0 %v2195
    %v2197 = vpop.xlane.xlu0 %2196
    %v2198 = vsel %vm939, %v2170, -inf
    %2199 = vmax.xlane.f32.xlu0 %v2198
    %v2200 = vpop.xlane.xlu0 %2199
    %v2201 = vsel %vm939, %v2171, -inf
    %2202 = vmax.xlane.f32.xlu0 %v2201
    %v2203 = vpop.xlane.xlu0 %2202
    %v2204 = vsel %vm939, %v2172, -inf
    %2205 = vmax.xlane.f32.xlu0 %v2204
    %v2206 = vpop.xlane.xlu0 %2205
    %v2207 = vsel %vm939, %v2173, -inf
    %2208 = vmax.xlane.f32.xlu0 %v2207
    %v2209 = vpop.xlane.xlu0 %2208
    %v2210 = vsel %vm939, %v2174, -inf
    %2211 = vmax.xlane.f32.xlu0 %v2210
    %v2212 = vpop.xlane.xlu0 %2211
    %v2213 = vsel %vm939, %v2175, -inf
    %2214 = vmax.xlane.f32.xlu0 %v2213
    %v2215 = vpop.xlane.xlu0 %2214
    %v2216 = vsel %vm939, %v2176, -inf
    %2217 = vmax.xlane.f32.xlu0 %v2216
    %v2218 = vpop.xlane.xlu0 %2217
    %v2219 = vsel %vm939, %v2177, -inf
    %2220 = vmax.xlane.f32.xlu0 %v2219
    %v2221 = vpop.xlane.xlu0 %2220
    %v2222 = vsel %vm939, %v2178, -inf
    %2223 = vmax.xlane.f32.xlu0 %v2222
    %v2224 = vpop.xlane.xlu0 %2223
    %v2225 = vsel %vm939, %v2179, -inf
    %2226 = vmax.xlane.f32.xlu0 %v2225
    %v2227 = vpop.xlane.xlu0 %2226
    %v2228 = vsub.f32 %v2164, %v2182
    %v2229 = vsub.f32 %v2165, %v2185
    %v2230 = vsub.f32 %v2166, %v2188
    %v2231 = vsub.f32 %v2167, %v2191
    %v2232 = vsub.f32 %v2168, %v2194
    %v2233 = vsub.f32 %v2169, %v2197
    %v2234 = vsub.f32 %v2170, %v2200
    %v2235 = vsub.f32 %v2171, %v2203
    %v2236 = vsub.f32 %v2172, %v2206
    %v2237 = vsub.f32 %v2173, %v2209
    %v2238 = vsub.f32 %v2174, %v2212
    %v2239 = vsub.f32 %v2175, %v2215
    %v2240 = vsub.f32 %v2176, %v2218
    %v2241 = vsub.f32 %v2177, %v2221
    %v2242 = vsub.f32 %v2178, %v2224
    %v2243 = vsub.f32 %v2179, %v2227
    %v2244 = vmul.f32 %v2228, 1.442695
    %v2245 = vpow.pop %v2244
    %v2246 = vmul.f32 %v2229, 1.442695
    %v2247 = vpow.pop %v2246
    %v2248 = vmul.f32 %v2230, 1.442695
    %v2249 = vpow.pop %v2248
    %v2250 = vmul.f32 %v2231, 1.442695
    %v2251 = vpow.pop %v2250
    %v2252 = vmul.f32 %v2232, 1.442695
    %v2253 = vpow.pop %v2252
    %v2254 = vmul.f32 %v2233, 1.442695
    %v2255 = vpow.pop %v2254
    %v2256 = vmul.f32 %v2234, 1.442695
    %v2257 = vpow.pop %v2256
    %v2258 = vmul.f32 %v2235, 1.442695
    %v2259 = vpow.pop %v2258
    %v2260 = vmul.f32 %v2236, 1.442695
    %v2261 = vpow.pop %v2260
    %v2262 = vmul.f32 %v2237, 1.442695
    %v2263 = vpow.pop %v2262
    %v2264 = vmul.f32 %v2238, 1.442695
    %v2265 = vpow.pop %v2264
    %v2266 = vmul.f32 %v2239, 1.442695
    %v2267 = vpow.pop %v2266
    %v2268 = vmul.f32 %v2240, 1.442695
    %v2269 = vpow.pop %v2268
    %v2270 = vmul.f32 %v2241, 1.442695
    %v2271 = vpow.pop %v2270
    %v2272 = vmul.f32 %v2242, 1.442695
    %v2273 = vpow.pop %v2272
    %v2274 = vmul.f32 %v2243, 1.442695
    %v2275 = vpow.pop %v2274
    %v2276 = vsel %vm939, %v2245, 0.0
    %2277 = vadd.xlane.f32.xlu0 %v2276
    %v2278 = vpop.xlane.xlu0 %2277
    %v2279 = vsel %vm939, %v2247, 0.0
    %2280 = vadd.xlane.f32.xlu0 %v2279
    %v2281 = vpop.xlane.xlu0 %2280
    %v2282 = vsel %vm939, %v2249, 0.0
    %2283 = vadd.xlane.f32.xlu0 %v2282
    %v2284 = vpop.xlane.xlu0 %2283
    %v2285 = vsel %vm939, %v2251, 0.0
    %2286 = vadd.xlane.f32.xlu0 %v2285
    %v2287 = vpop.xlane.xlu0 %2286
    %v2288 = vsel %vm939, %v2253, 0.0
    %2289 = vadd.xlane.f32.xlu0 %v2288
    %v2290 = vpop.xlane.xlu0 %2289
    %v2291 = vsel %vm939, %v2255, 0.0
    %2292 = vadd.xlane.f32.xlu0 %v2291
    %v2293 = vpop.xlane.xlu0 %2292
    %v2294 = vsel %vm939, %v2257, 0.0
    %2295 = vadd.xlane.f32.xlu0 %v2294
    %v2296 = vpop.xlane.xlu0 %2295
    %v2297 = vsel %vm939, %v2259, 0.0
    %2298 = vadd.xlane.f32.xlu0 %v2297
    %v2299 = vpop.xlane.xlu0 %2298
    %v2300 = vsel %vm939, %v2261, 0.0
    %2301 = vadd.xlane.f32.xlu0 %v2300
    %v2302 = vpop.xlane.xlu0 %2301
    %v2303 = vsel %vm939, %v2263, 0.0
    %2304 = vadd.xlane.f32.xlu0 %v2303
    %v2305 = vpop.xlane.xlu0 %2304
    %v2306 = vsel %vm939, %v2265, 0.0
    %2307 = vadd.xlane.f32.xlu0 %v2306
    %v2308 = vpop.xlane.xlu0 %2307
    %v2309 = vsel %vm939, %v2267, 0.0
    %2310 = vadd.xlane.f32.xlu0 %v2309
    %v2311 = vpop.xlane.xlu0 %2310
    %v2312 = vsel %vm939, %v2269, 0.0
    %2313 = vadd.xlane.f32.xlu0 %v2312
    %v2314 = vpop.xlane.xlu0 %2313
    %v2315 = vsel %vm939, %v2271, 0.0
    %2316 = vadd.xlane.f32.xlu0 %v2315
    %v2317 = vpop.xlane.xlu0 %2316
    %v2318 = vsel %vm939, %v2273, 0.0
    %2319 = vadd.xlane.f32.xlu0 %v2318
    %v2320 = vpop.xlane.xlu0 %2319
    %v2321 = vsel %vm939, %v2275, 0.0
    %2322 = vadd.xlane.f32.xlu0 %v2321
    %v2323 = vpop.xlane.xlu0 %2322
    %v2324 = vrcp.pop %v2278
    %v2325 = vrcp.pop %v2281
    %v2326 = vrcp.pop %v2284
    %v2327 = vrcp.pop %v2287
    %v2328 = vrcp.pop %v2290
    %v2329 = vrcp.pop %v2293
    %v2330 = vrcp.pop %v2296
    %v2331 = vrcp.pop %v2299
    %v2332 = vrcp.pop %v2302
    %v2333 = vrcp.pop %v2305
    %v2334 = vrcp.pop %v2308
    %v2335 = vrcp.pop %v2311
    %v2336 = vrcp.pop %v2314
    %v2337 = vrcp.pop %v2317
    %v2338 = vrcp.pop %v2320
    %v2339 = vrcp.pop %v2323
    %v2340 = vmul.f32 %v2245, %v2324
    %v2341 = vmul.f32 %v2247, %v2325
    %v2342 = vmul.f32 %v2249, %v2326
    %v2343 = vmul.f32 %v2251, %v2327
    %v2344 = vmul.f32 %v2253, %v2328
    %v2345 = vmul.f32 %v2255, %v2329
    %v2346 = vmul.f32 %v2257, %v2330
    %v2347 = vmul.f32 %v2259, %v2331
    %v2348 = vmul.f32 %v2261, %v2332
    %v2349 = vmul.f32 %v2263, %v2333
    %v2350 = vmul.f32 %v2265, %v2334
    %v2351 = vmul.f32 %v2267, %v2335
    %v2352 = vmul.f32 %v2269, %v2336
    %v2353 = vmul.f32 %v2271, %v2337
    %v2354 = vmul.f32 %v2273, %v2338
    %v2355 = vmul.f32 %v2275, %v2339
    %v2356 = vpack.c.bf16 %v2341, %v2340
    %v2357 = vpack.c.bf16 %v2343, %v2342
    %v2358 = vpack.c.bf16 %v2345, %v2344
    %v2359 = vpack.c.bf16 %v2347, %v2346
    %v2360 = vpack.c.bf16 %v2349, %v2348
    %v2361 = vpack.c.bf16 %v2351, %v2350
    %v2362 = vpack.c.bf16 %v2353, %v2352
    %v2363 = vpack.c.bf16 %v2355, %v2354
    %2364 = vrot.lane.b32.xlu0 %v623, 64
    %v2365 = vpop.permute.xlu0 %2364
    %2366 = vrot.lane.b32.xlu0 %v626, 64
    %v2367 = vpop.permute.xlu0 %2366
    %2368 = vrot.lane.b32.xlu0 %v629, 64
    %v2369 = vpop.permute.xlu0 %2368
    %2370 = vrot.lane.b32.xlu0 %v632, 64
    %v2371 = vpop.permute.xlu0 %2370
    %v2377 = vsel %vm939, %v2356, 0
    %v2380 = vsel %vm939, %v2357, 0
    %v2383 = vsel %vm939, %v2358, 0
    %v2386 = vsel %vm939, %v2359, 0
    %2388 = vmatprep.subr.bf16.mxu0 0
    %2389 = vmatpush1.bf16.msra.mxu0 %v2365
    %2390 = vmatprep.subr.bf16.mxu0 0
    %2391 = vmatpush1.bf16.msra.mxu0 %v2367
    %2392 = vmatprep.subr.bf16.mxu0 0
    %2393 = vmatpush1.bf16.msra.mxu0 %v2369
    %2394 = vmatprep.subr.bf16.mxu0 0
    %2395 = vmatpush1.bf16.msra.mxu0 %v2371
    %2396 = vmatprep.subr.bf16.mxu0 0
    %2397 = vmatpush1.bf16.msra.mxu0 0
    %2398 = vmatprep.subr.bf16.mxu0 0
    %2399 = vmatpush1.bf16.msra.mxu0 0
    %2400 = vmatprep.subr.bf16.mxu0 0
    %2401 = vmatpush1.bf16.msra.mxu0 0
    %2402 = vmatprep.subr.bf16.mxu0 0
    %2403 = vmatpush1.bf16.msra.mxu0 0
    %2404 = vmatprep.subr.bf16.mxu0 0
    %2405 = vmatpush1.bf16.msra.mxu0 0
    %2406 = vmatprep.subr.bf16.mxu0 0
    %2407 = vmatpush1.bf16.msra.mxu0 0
    %2408 = vmatprep.subr.bf16.mxu0 0
    %2409 = vmatpush1.bf16.msra.mxu0 0
    %2410 = vmatprep.subr.bf16.mxu0 0
    %2411 = vmatpush1.bf16.msra.mxu0 0
    %2412 = vmatprep.subr.bf16.mxu0 0
    %2413 = vmatpush1.bf16.msra.mxu0 0
    %2414 = vmatprep.subr.bf16.mxu0 0
    %2415 = vmatpush1.bf16.msra.mxu0 0
    %2416 = vmatprep.subr.bf16.mxu0 0
    %2417 = vmatpush1.bf16.msra.mxu0 0
    %2418 = vmatprep.subr.bf16.mxu0 0
    %2419 = vmatpush1.bf16.msra.mxu0 0
    %2420 = vmatprep.mubr.bf16.mxu0 0
    %2421 = vmatmul.mubr.bf16.gmra.mrb[0].mxu0 %v2377
    %v2422 = vpop.f32.mrb[0].mxu0
    %v2423 = vadd.f32 0.0, %v2422
    %v2424 = vpop.f32.mrb[0].mxu0
    %v2425 = vpop.f32.mrb[0].mxu0
    %v2426 = vadd.f32 0.0, %v2425
    %v2427 = vpop.f32.mrb[0].mxu0
    %2428 = vmatprep.mubr.bf16.mxu0 0
    %2429 = vmatmul.mubr.bf16.gmra.mrb[0].mxu0 %v2380
    %v2430 = vpop.f32.mrb[0].mxu0
    %v2431 = vadd.f32 0.0, %v2430
    %v2432 = vpop.f32.mrb[0].mxu0
    %v2433 = vpop.f32.mrb[0].mxu0
    %v2434 = vadd.f32 0.0, %v2433
    %v2435 = vpop.f32.mrb[0].mxu0
    %2436 = vmatprep.mubr.bf16.mxu0 0
    %2437 = vmatmul.mubr.bf16.gmra.mrb[0].mxu0 %v2383
    %v2438 = vpop.f32.mrb[0].mxu0
    %v2439 = vadd.f32 0.0, %v2438
    %v2440 = vpop.f32.mrb[0].mxu0
    %v2441 = vpop.f32.mrb[0].mxu0
    %v2442 = vadd.f32 0.0, %v2441
    %v2443 = vpop.f32.mrb[0].mxu0
    %2444 = vmatprep.mubr.bf16.mxu0 0
    %2445 = vmatmul.mubr.bf16.gmra.mrb[0].mxu0 %v2386
    %v2446 = vpop.f32.mrb[0].mxu0
    %v2447 = vadd.f32 0.0, %v2446
    %v2448 = vpop.f32.mrb[0].mxu0
    %v2449 = vpop.f32.mrb[0].mxu0
    %v2450 = vadd.f32 0.0, %v2449
    %v2451 = vpop.f32.mrb[0].mxu0
    %2452 = vdwg.mxu0
    %2453 = vrot.lane.b32.xlu0 %v635, 64
    %v2454 = vpop.permute.xlu0 %2453
    %2455 = vrot.lane.b32.xlu0 %v638, 64
    %v2456 = vpop.permute.xlu0 %2455
    %2457 = vrot.lane.b32.xlu0 %v641, 64
    %v2458 = vpop.permute.xlu0 %2457
    %2459 = vrot.lane.b32.xlu0 %v644, 64
    %v2460 = vpop.permute.xlu0 %2459
    %v2466 = vsel %vm939, %v2360, 0
    %v2469 = vsel %vm939, %v2361, 0
    %v2472 = vsel %vm939, %v2362, 0
    %v2475 = vsel %vm939, %v2363, 0
    %2477 = vmatprep.subr.bf16.mxu0 0
    %2478 = vmatpush1.bf16.msra.mxu0 %v2454
    %2479 = vmatprep.subr.bf16.mxu0 0
    %2480 = vmatpush1.bf16.msra.mxu0 %v2456
    %2481 = vmatprep.subr.bf16.mxu0 0
    %2482 = vmatpush1.bf16.msra.mxu0 %v2458
    %2483 = vmatprep.subr.bf16.mxu0 0
    %2484 = vmatpush1.bf16.msra.mxu0 %v2460
    %2485 = vmatprep.subr.bf16.mxu0 0
    %2486 = vmatpush1.bf16.msra.mxu0 0
    %2487 = vmatprep.subr.bf16.mxu0 0
    %2488 = vmatpush1.bf16.msra.mxu0 0
    %2489 = vmatprep.subr.bf16.mxu0 0
    %2490 = vmatpush1.bf16.msra.mxu0 0
    %2491 = vmatprep.subr.bf16.mxu0 0
    %2492 = vmatpush1.bf16.msra.mxu0 0
    %2493 = vmatprep.subr.bf16.mxu0 0
    %2494 = vmatpush1.bf16.msra.mxu0 0
    %2495 = vmatprep.subr.bf16.mxu0 0
    %2496 = vmatpush1.bf16.msra.mxu0 0
    %2497 = vmatprep.subr.bf16.mxu0 0
    %2498 = vmatpush1.bf16.msra.mxu0 0
    %2499 = vmatprep.subr.bf16.mxu0 0
    %2500 = vmatpush1.bf16.msra.mxu0 0
    %2501 = vmatprep.subr.bf16.mxu0 0
    %2502 = vmatpush1.bf16.msra.mxu0 0
    %2503 = vmatprep.subr.bf16.mxu0 0
    %2504 = vmatpush1.bf16.msra.mxu0 0
    %2505 = vmatprep.subr.bf16.mxu0 0
    %2506 = vmatpush1.bf16.msra.mxu0 0
    %2507 = vmatprep.subr.bf16.mxu0 0
    %2508 = vmatpush1.bf16.msra.mxu0 0
    %2509 = vmatprep.mubr.bf16.mxu0 0
    %2510 = vmatmul.mubr.bf16.gmra.mrb[0].mxu0 %v2466
    %v2511 = vpop.f32.mrb[0].mxu0
    %v2512 = vadd.f32 0.0, %v2511
    %v2513 = vpop.f32.mrb[0].mxu0
    %v2514 = vpop.f32.mrb[0].mxu0
    %v2515 = vadd.f32 0.0, %v2514
    %v2516 = vpop.f32.mrb[0].mxu0
    %2517 = vmatprep.mubr.bf16.mxu0 0
    %2518 = vmatmul.mubr.bf16.gmra.mrb[0].mxu0 %v2469
    %v2519 = vpop.f32.mrb[0].mxu0
    %v2520 = vadd.f32 0.0, %v2519
    %v2521 = vpop.f32.mrb[0].mxu0
    %v2522 = vpop.f32.mrb[0].mxu0
    %v2523 = vadd.f32 0.0, %v2522
    %v2524 = vpop.f32.mrb[0].mxu0
    %2525 = vmatprep.mubr.bf16.mxu0 0
    %2526 = vmatmul.mubr.bf16.gmra.mrb[0].mxu0 %v2472
    %v2527 = vpop.f32.mrb[0].mxu0
    %v2528 = vadd.f32 0.0, %v2527
    %v2529 = vpop.f32.mrb[0].mxu0
    %v2530 = vpop.f32.mrb[0].mxu0
    %v2531 = vadd.f32 0.0, %v2530
    %v2532 = vpop.f32.mrb[0].mxu0
    %2533 = vmatprep.mubr.bf16.mxu0 0
    %2534 = vmatmul.mubr.bf16.gmra.mrb[0].mxu0 %v2475
    %v2535 = vpop.f32.mrb[0].mxu0
    %v2536 = vadd.f32 0.0, %v2535
    %v2537 = vpop.f32.mrb[0].mxu0
    %v2538 = vpop.f32.mrb[0].mxu0
    %v2539 = vadd.f32 0.0, %v2538
    %v2540 = vpop.f32.mrb[0].mxu0
    %2541 = vdwg.mxu0
    %v2542 = vpack.c.bf16 %v2426, %v2423
    %v2543 = vpack.c.bf16 %v2434, %v2431
    %v2544 = vpack.c.bf16 %v2442, %v2439
    %v2545 = vpack.c.bf16 %v2450, %v2447
    %v2546 = vpack.c.bf16 %v2515, %v2512
    %v2547 = vpack.c.bf16 %v2523, %v2520
    %v2548 = vpack.c.bf16 %v2531, %v2528
    %v2549 = vpack.c.bf16 %v2539, %v2536
    %2550 = vrot.lane.b32.xlu0 %v621, 32
    %v2551 = vpop.permute.xlu0 %2550
    %2552 = vrot.lane.b32.xlu0 %v624, 32
    %v2553 = vpop.permute.xlu0 %2552
    %2554 = vrot.lane.b32.xlu0 %v627, 32
    %v2555 = vpop.permute.xlu0 %2554
    %2556 = vrot.lane.b32.xlu0 %v630, 32
    %v2557 = vpop.permute.xlu0 %2556
    %2558 = vrot.lane.b32.xlu0 %v622, 32
    %v2559 = vpop.permute.xlu0 %2558
    %2560 = vrot.lane.b32.xlu0 %v625, 32
    %v2561 = vpop.permute.xlu0 %2560
    %2562 = vrot.lane.b32.xlu0 %v628, 32
    %v2563 = vpop.permute.xlu0 %2562
    %2564 = vrot.lane.b32.xlu0 %v631, 32
    %v2565 = vpop.permute.xlu0 %2564
    %v2567 = vsel %vm720, %v2551, 0
    %v2570 = vsel %vm720, %v2553, 0
    %v2573 = vsel %vm720, %v2555, 0
    %v2576 = vsel %vm720, %v2557, 0
    %v2579 = vsel %vm720, %v2559, 0
    %v2582 = vsel %vm720, %v2561, 0
    %v2585 = vsel %vm720, %v2563, 0
    %v2588 = vsel %vm720, %v2565, 0
    %2590 = vmatprep.subr.bf16.mxu0 0
    %2591 = vmatpush1.bf16.xpose.msra.mxu0 %v2579
    %2592 = vmatprep.subr.bf16.mxu0 0
    %2593 = vmatpush1.bf16.xpose.msra.mxu0 %v2582
    %2594 = vmatprep.subr.bf16.mxu0 0
    %2595 = vmatpush1.bf16.xpose.msra.mxu0 %v2585
    %2596 = vmatprep.subr.bf16.mxu0 0
    %2597 = vmatpush1.bf16.xpose.msra.mxu0 %v2588
    %2598 = vmatprep.subr.bf16.mxu0 0
    %2599 = vmatpush1.bf16.xpose.msra.mxu0 0
    %2600 = vmatprep.subr.bf16.mxu0 0
    %2601 = vmatpush1.bf16.xpose.msra.mxu0 0
    %2602 = vmatprep.subr.bf16.mxu0 0
    %2603 = vmatpush1.bf16.xpose.msra.mxu0 0
    %2604 = vmatprep.subr.bf16.mxu0 0
    %2605 = vmatpush1.bf16.xpose.msra.mxu0 0
    %2606 = vmatprep.subr.bf16.mxu0 0
    %2607 = vmatpush1.bf16.xpose.msra.mxu0 0
    %2608 = vmatprep.subr.bf16.mxu0 0
    %2609 = vmatpush1.bf16.xpose.msra.mxu0 0
    %2610 = vmatprep.subr.bf16.mxu0 0
    %2611 = vmatpush1.bf16.xpose.msra.mxu0 0
    %2612 = vmatprep.subr.bf16.mxu0 0
    %2613 = vmatpush1.bf16.xpose.msra.mxu0 0
    %2614 = vmatprep.subr.bf16.mxu0 0
    %2615 = vmatpush1.bf16.xpose.msra.mxu0 0
    %2616 = vmatprep.subr.bf16.mxu0 0
    %2617 = vmatpush1.bf16.xpose.msra.mxu0 0
    %2618 = vmatprep.subr.bf16.mxu0 0
    %2619 = vmatpush1.bf16.xpose.msra.mxu0 0
    %2620 = vmatprep.subr.bf16.mxu0 0
    %2621 = vmatpush1.bf16.xpose.msra.mxu0 0
    %2622 = vmatprep.mubr.bf16.mxu0 0
    %2623 = vmatmul.mubr.bf16.gmra.mrb[0].mxu0 %v2567
    %v2624 = vpop.f32.mrb[0].mxu0
    %v2625 = vadd.f32 0.0, %v2624
    %v2626 = vpop.f32.mrb[0].mxu0
    %v2627 = vpop.f32.mrb[0].mxu0
    %v2628 = vadd.f32 0.0, %v2627
    %v2629 = vpop.f32.mrb[0].mxu0
    %2630 = vmatprep.mubr.bf16.mxu0 0
    %2631 = vmatmul.mubr.bf16.gmra.mrb[0].mxu0 %v2570
    %v2632 = vpop.f32.mrb[0].mxu0
    %v2633 = vadd.f32 0.0, %v2632
    %v2634 = vpop.f32.mrb[0].mxu0
    %v2635 = vpop.f32.mrb[0].mxu0
    %v2636 = vadd.f32 0.0, %v2635
    %v2637 = vpop.f32.mrb[0].mxu0
    %2638 = vmatprep.mubr.bf16.mxu0 0
    %2639 = vmatmul.mubr.bf16.gmra.mrb[0].mxu0 %v2573
    %v2640 = vpop.f32.mrb[0].mxu0
    %v2641 = vadd.f32 0.0, %v2640
    %v2642 = vpop.f32.mrb[0].mxu0
    %v2643 = vpop.f32.mrb[0].mxu0
    %v2644 = vadd.f32 0.0, %v2643
    %v2645 = vpop.f32.mrb[0].mxu0
    %2646 = vmatprep.mubr.bf16.mxu0 0
    %2647 = vmatmul.mubr.bf16.gmra.mrb[0].mxu0 %v2576
    %v2648 = vpop.f32.mrb[0].mxu0
    %v2649 = vadd.f32 0.0, %v2648
    %v2650 = vpop.f32.mrb[0].mxu0
    %v2651 = vpop.f32.mrb[0].mxu0
    %v2652 = vadd.f32 0.0, %v2651
    %v2653 = vpop.f32.mrb[0].mxu0
    %2654 = vdwg.mxu0
    %2655 = vrot.lane.b32.xlu0 %v633, 32
    %v2656 = vpop.permute.xlu0 %2655
    %2657 = vrot.lane.b32.xlu0 %v636, 32
    %v2658 = vpop.permute.xlu0 %2657
    %2659 = vrot.lane.b32.xlu0 %v639, 32
    %v2660 = vpop.permute.xlu0 %2659
    %2661 = vrot.lane.b32.xlu0 %v642, 32
    %v2662 = vpop.permute.xlu0 %2661
    %2663 = vrot.lane.b32.xlu0 %v634, 32
    %v2664 = vpop.permute.xlu0 %2663
    %2665 = vrot.lane.b32.xlu0 %v637, 32
    %v2666 = vpop.permute.xlu0 %2665
    %2667 = vrot.lane.b32.xlu0 %v640, 32
    %v2668 = vpop.permute.xlu0 %2667
    %2669 = vrot.lane.b32.xlu0 %v643, 32
    %v2670 = vpop.permute.xlu0 %2669
    %v2672 = vsel %vm720, %v2656, 0
    %v2675 = vsel %vm720, %v2658, 0
    %v2678 = vsel %vm720, %v2660, 0
    %v2681 = vsel %vm720, %v2662, 0
    %v2684 = vsel %vm720, %v2664, 0
    %v2687 = vsel %vm720, %v2666, 0
    %v2690 = vsel %vm720, %v2668, 0
    %v2693 = vsel %vm720, %v2670, 0
    %2695 = vmatprep.subr.bf16.mxu0 0
    %2696 = vmatpush1.bf16.xpose.msra.mxu0 %v2684
    %2697 = vmatprep.subr.bf16.mxu0 0
    %2698 = vmatpush1.bf16.xpose.msra.mxu0 %v2687
    %2699 = vmatprep.subr.bf16.mxu0 0
    %2700 = vmatpush1.bf16.xpose.msra.mxu0 %v2690
    %2701 = vmatprep.subr.bf16.mxu0 0
    %2702 = vmatpush1.bf16.xpose.msra.mxu0 %v2693
    %2703 = vmatprep.subr.bf16.mxu0 0
    %2704 = vmatpush1.bf16.xpose.msra.mxu0 0
    %2705 = vmatprep.subr.bf16.mxu0 0
    %2706 = vmatpush1.bf16.xpose.msra.mxu0 0
    %2707 = vmatprep.subr.bf16.mxu0 0
    %2708 = vmatpush1.bf16.xpose.msra.mxu0 0
    %2709 = vmatprep.subr.bf16.mxu0 0
    %2710 = vmatpush1.bf16.xpose.msra.mxu0 0
    %2711 = vmatprep.subr.bf16.mxu0 0
    %2712 = vmatpush1.bf16.xpose.msra.mxu0 0
    %2713 = vmatprep.subr.bf16.mxu0 0
    %2714 = vmatpush1.bf16.xpose.msra.mxu0 0
    %2715 = vmatprep.subr.bf16.mxu0 0
    %2716 = vmatpush1.bf16.xpose.msra.mxu0 0
    %2717 = vmatprep.subr.bf16.mxu0 0
    %2718 = vmatpush1.bf16.xpose.msra.mxu0 0
    %2719 = vmatprep.subr.bf16.mxu0 0
    %2720 = vmatpush1.bf16.xpose.msra.mxu0 0
    %2721 = vmatprep.subr.bf16.mxu0 0
    %2722 = vmatpush1.bf16.xpose.msra.mxu0 0
    %2723 = vmatprep.subr.bf16.mxu0 0
    %2724 = vmatpush1.bf16.xpose.msra.mxu0 0
    %2725 = vmatprep.subr.bf16.mxu0 0
    %2726 = vmatpush1.bf16.xpose.msra.mxu0 0
    %2727 = vmatprep.mubr.bf16.mxu0 0
    %2728 = vmatmul.mubr.bf16.gmra.mrb[0].mxu0 %v2672
    %v2729 = vpop.f32.mrb[0].mxu0
    %v2730 = vadd.f32 0.0, %v2729
    %v2731 = vpop.f32.mrb[0].mxu0
    %v2732 = vpop.f32.mrb[0].mxu0
    %v2733 = vadd.f32 0.0, %v2732
    %v2734 = vpop.f32.mrb[0].mxu0
    %2735 = vmatprep.mubr.bf16.mxu0 0
    %2736 = vmatmul.mubr.bf16.gmra.mrb[0].mxu0 %v2675
    %v2737 = vpop.f32.mrb[0].mxu0
    %v2738 = vadd.f32 0.0, %v2737
    %v2739 = vpop.f32.mrb[0].mxu0
    %v2740 = vpop.f32.mrb[0].mxu0
    %v2741 = vadd.f32 0.0, %v2740
    %v2742 = vpop.f32.mrb[0].mxu0
    %2743 = vmatprep.mubr.bf16.mxu0 0
    %2744 = vmatmul.mubr.bf16.gmra.mrb[0].mxu0 %v2678
    %v2745 = vpop.f32.mrb[0].mxu0
    %v2746 = vadd.f32 0.0, %v2745
    %v2747 = vpop.f32.mrb[0].mxu0
    %v2748 = vpop.f32.mrb[0].mxu0
    %v2749 = vadd.f32 0.0, %v2748
    %v2750 = vpop.f32.mrb[0].mxu0
    %2751 = vmatprep.mubr.bf16.mxu0 0
    %2752 = vmatmul.mubr.bf16.gmra.mrb[0].mxu0 %v2681
    %v2753 = vpop.f32.mrb[0].mxu0
    %v2754 = vadd.f32 0.0, %v2753
    %v2755 = vpop.f32.mrb[0].mxu0
    %v2756 = vpop.f32.mrb[0].mxu0
    %v2757 = vadd.f32 0.0, %v2756
    %v2758 = vpop.f32.mrb[0].mxu0
    %2759 = vdwg.mxu0
    %v2760 = vmul.f32 %v2625, 0.17677669
    %v2761 = vmul.f32 %v2628, 0.17677669
    %v2762 = vmul.f32 %v2633, 0.17677669
    %v2763 = vmul.f32 %v2636, 0.17677669
    %v2764 = vmul.f32 %v2641, 0.17677669
    %v2765 = vmul.f32 %v2644, 0.17677669
    %v2766 = vmul.f32 %v2649, 0.17677669
    %v2767 = vmul.f32 %v2652, 0.17677669
    %v2768 = vmul.f32 %v2730, 0.17677669
    %v2769 = vmul.f32 %v2733, 0.17677669
    %v2770 = vmul.f32 %v2738, 0.17677669
    %v2771 = vmul.f32 %v2741, 0.17677669
    %v2772 = vmul.f32 %v2746, 0.17677669
    %v2773 = vmul.f32 %v2749, 0.17677669
    %v2774 = vmul.f32 %v2754, 0.17677669
    %v2775 = vmul.f32 %v2757, 0.17677669
    %v2776 = vmul.f32 %v712, 0.00390625
    %v2777 = vmul.f32 %v713, 0.00390625
    %v2778 = vmul.f32 %v714, 0.00390625
    %v2779 = vmul.f32 %v715, 0.00390625
    %v2780 = vmul.f32 %v716, 0.00390625
    %v2781 = vmul.f32 %v717, 0.00390625
    %v2782 = vmul.f32 %v718, 0.00390625
    %v2783 = vmul.f32 %v719, 0.00390625
    %v2784 = vadd.f32 %v2760, %v2776
    %v2785 = vadd.f32 %v2761, %v2777
    %v2786 = vadd.f32 %v2762, %v2778
    %v2787 = vadd.f32 %v2763, %v2779
    %v2788 = vadd.f32 %v2764, %v2780
    %v2789 = vadd.f32 %v2765, %v2781
    %v2790 = vadd.f32 %v2766, %v2782
    %v2791 = vadd.f32 %v2767, %v2783
    %v2792 = vadd.f32 %v2768, %v2776
    %v2793 = vadd.f32 %v2769, %v2777
    %v2794 = vadd.f32 %v2770, %v2778
    %v2795 = vadd.f32 %v2771, %v2779
    %v2796 = vadd.f32 %v2772, %v2780
    %v2797 = vadd.f32 %v2773, %v2781
    %v2798 = vadd.f32 %v2774, %v2782
    %v2799 = vadd.f32 %v2775, %v2783
    %v2800 = vsel %vm939, %v2784, -inf
    %2801 = vmax.xlane.f32.xlu0 %v2800
    %v2802 = vpop.xlane.xlu0 %2801
    %v2803 = vsel %vm939, %v2785, -inf
    %2804 = vmax.xlane.f32.xlu0 %v2803
    %v2805 = vpop.xlane.xlu0 %2804
    %v2806 = vsel %vm939, %v2786, -inf
    %2807 = vmax.xlane.f32.xlu0 %v2806
    %v2808 = vpop.xlane.xlu0 %2807
    %v2809 = vsel %vm939, %v2787, -inf
    %2810 = vmax.xlane.f32.xlu0 %v2809
    %v2811 = vpop.xlane.xlu0 %2810
    %v2812 = vsel %vm939, %v2788, -inf
    %2813 = vmax.xlane.f32.xlu0 %v2812
    %v2814 = vpop.xlane.xlu0 %2813
    %v2815 = vsel %vm939, %v2789, -inf
    %2816 = vmax.xlane.f32.xlu0 %v2815
    %v2817 = vpop.xlane.xlu0 %2816
    %v2818 = vsel %vm939, %v2790, -inf
    %2819 = vmax.xlane.f32.xlu0 %v2818
    %v2820 = vpop.xlane.xlu0 %2819
    %v2821 = vsel %vm939, %v2791, -inf
    %2822 = vmax.xlane.f32.xlu0 %v2821
    %v2823 = vpop.xlane.xlu0 %2822
    %v2824 = vsel %vm939, %v2792, -inf
    %2825 = vmax.xlane.f32.xlu0 %v2824
    %v2826 = vpop.xlane.xlu0 %2825
    %v2827 = vsel %vm939, %v2793, -inf
    %2828 = vmax.xlane.f32.xlu0 %v2827
    %v2829 = vpop.xlane.xlu0 %2828
    %v2830 = vsel %vm939, %v2794, -inf
    %2831 = vmax.xlane.f32.xlu0 %v2830
    %v2832 = vpop.xlane.xlu0 %2831
    %v2833 = vsel %vm939, %v2795, -inf
    %2834 = vmax.xlane.f32.xlu0 %v2833
    %v2835 = vpop.xlane.xlu0 %2834
    %v2836 = vsel %vm939, %v2796, -inf
    %2837 = vmax.xlane.f32.xlu0 %v2836
    %v2838 = vpop.xlane.xlu0 %2837
    %v2839 = vsel %vm939, %v2797, -inf
    %2840 = vmax.xlane.f32.xlu0 %v2839
    %v2841 = vpop.xlane.xlu0 %2840
    %v2842 = vsel %vm939, %v2798, -inf
    %2843 = vmax.xlane.f32.xlu0 %v2842
    %v2844 = vpop.xlane.xlu0 %2843
    %v2845 = vsel %vm939, %v2799, -inf
    %2846 = vmax.xlane.f32.xlu0 %v2845
    %v2847 = vpop.xlane.xlu0 %2846
    %v2848 = vsub.f32 %v2784, %v2802
    %v2849 = vsub.f32 %v2785, %v2805
    %v2850 = vsub.f32 %v2786, %v2808
    %v2851 = vsub.f32 %v2787, %v2811
    %v2852 = vsub.f32 %v2788, %v2814
    %v2853 = vsub.f32 %v2789, %v2817
    %v2854 = vsub.f32 %v2790, %v2820
    %v2855 = vsub.f32 %v2791, %v2823
    %v2856 = vsub.f32 %v2792, %v2826
    %v2857 = vsub.f32 %v2793, %v2829
    %v2858 = vsub.f32 %v2794, %v2832
    %v2859 = vsub.f32 %v2795, %v2835
    %v2860 = vsub.f32 %v2796, %v2838
    %v2861 = vsub.f32 %v2797, %v2841
    %v2862 = vsub.f32 %v2798, %v2844
    %v2863 = vsub.f32 %v2799, %v2847
    %v2864 = vmul.f32 %v2848, 1.442695
    %v2865 = vpow.pop %v2864
    %v2866 = vmul.f32 %v2849, 1.442695
    %v2867 = vpow.pop %v2866
    %v2868 = vmul.f32 %v2850, 1.442695
    %v2869 = vpow.pop %v2868
    %v2870 = vmul.f32 %v2851, 1.442695
    %v2871 = vpow.pop %v2870
    %v2872 = vmul.f32 %v2852, 1.442695
    %v2873 = vpow.pop %v2872
    %v2874 = vmul.f32 %v2853, 1.442695
    %v2875 = vpow.pop %v2874
    %v2876 = vmul.f32 %v2854, 1.442695
    %v2877 = vpow.pop %v2876
    %v2878 = vmul.f32 %v2855, 1.442695
    %v2879 = vpow.pop %v2878
    %v2880 = vmul.f32 %v2856, 1.442695
    %v2881 = vpow.pop %v2880
    %v2882 = vmul.f32 %v2857, 1.442695
    %v2883 = vpow.pop %v2882
    %v2884 = vmul.f32 %v2858, 1.442695
    %v2885 = vpow.pop %v2884
    %v2886 = vmul.f32 %v2859, 1.442695
    %v2887 = vpow.pop %v2886
    %v2888 = vmul.f32 %v2860, 1.442695
    %v2889 = vpow.pop %v2888
    %v2890 = vmul.f32 %v2861, 1.442695
    %v2891 = vpow.pop %v2890
    %v2892 = vmul.f32 %v2862, 1.442695
    %v2893 = vpow.pop %v2892
    %v2894 = vmul.f32 %v2863, 1.442695
    %v2895 = vpow.pop %v2894
    %v2896 = vsel %vm939, %v2865, 0.0
    %2897 = vadd.xlane.f32.xlu0 %v2896
    %v2898 = vpop.xlane.xlu0 %2897
    %v2899 = vsel %vm939, %v2867, 0.0
    %2900 = vadd.xlane.f32.xlu0 %v2899
    %v2901 = vpop.xlane.xlu0 %2900
    %v2902 = vsel %vm939, %v2869, 0.0
    %2903 = vadd.xlane.f32.xlu0 %v2902
    %v2904 = vpop.xlane.xlu0 %2903
    %v2905 = vsel %vm939, %v2871, 0.0
    %2906 = vadd.xlane.f32.xlu0 %v2905
    %v2907 = vpop.xlane.xlu0 %2906
    %v2908 = vsel %vm939, %v2873, 0.0
    %2909 = vadd.xlane.f32.xlu0 %v2908
    %v2910 = vpop.xlane.xlu0 %2909
    %v2911 = vsel %vm939, %v2875, 0.0
    %2912 = vadd.xlane.f32.xlu0 %v2911
    %v2913 = vpop.xlane.xlu0 %2912
    %v2914 = vsel %vm939, %v2877, 0.0
    %2915 = vadd.xlane.f32.xlu0 %v2914
    %v2916 = vpop.xlane.xlu0 %2915
    %v2917 = vsel %vm939, %v2879, 0.0
    %2918 = vadd.xlane.f32.xlu0 %v2917
    %v2919 = vpop.xlane.xlu0 %2918
    %v2920 = vsel %vm939, %v2881, 0.0
    %2921 = vadd.xlane.f32.xlu0 %v2920
    %v2922 = vpop.xlane.xlu0 %2921
    %v2923 = vsel %vm939, %v2883, 0.0
    %2924 = vadd.xlane.f32.xlu0 %v2923
    %v2925 = vpop.xlane.xlu0 %2924
    %v2926 = vsel %vm939, %v2885, 0.0
    %2927 = vadd.xlane.f32.xlu0 %v2926
    %v2928 = vpop.xlane.xlu0 %2927
    %v2929 = vsel %vm939, %v2887, 0.0
    %2930 = vadd.xlane.f32.xlu0 %v2929
    %v2931 = vpop.xlane.xlu0 %2930
    %v2932 = vsel %vm939, %v2889, 0.0
    %2933 = vadd.xlane.f32.xlu0 %v2932
    %v2934 = vpop.xlane.xlu0 %2933
    %v2935 = vsel %vm939, %v2891, 0.0
    %2936 = vadd.xlane.f32.xlu0 %v2935
    %v2937 = vpop.xlane.xlu0 %2936
    %v2938 = vsel %vm939, %v2893, 0.0
    %2939 = vadd.xlane.f32.xlu0 %v2938
    %v2940 = vpop.xlane.xlu0 %2939
    %v2941 = vsel %vm939, %v2895, 0.0
    %2942 = vadd.xlane.f32.xlu0 %v2941
    %v2943 = vpop.xlane.xlu0 %2942
    %v2944 = vrcp.pop %v2898
    %v2945 = vrcp.pop %v2901
    %v2946 = vrcp.pop %v2904
    %v2947 = vrcp.pop %v2907
    %v2948 = vrcp.pop %v2910
    %v2949 = vrcp.pop %v2913
    %v2950 = vrcp.pop %v2916
    %v2951 = vrcp.pop %v2919
    %v2952 = vrcp.pop %v2922
    %v2953 = vrcp.pop %v2925
    %v2954 = vrcp.pop %v2928
    %v2955 = vrcp.pop %v2931
    %v2956 = vrcp.pop %v2934
    %v2957 = vrcp.pop %v2937
    %v2958 = vrcp.pop %v2940
    %v2959 = vrcp.pop %v2943
    %v2960 = vmul.f32 %v2865, %v2944
    %v2961 = vmul.f32 %v2867, %v2945
    %v2962 = vmul.f32 %v2869, %v2946
    %v2963 = vmul.f32 %v2871, %v2947
    %v2964 = vmul.f32 %v2873, %v2948
    %v2965 = vmul.f32 %v2875, %v2949
    %v2966 = vmul.f32 %v2877, %v2950
    %v2967 = vmul.f32 %v2879, %v2951
    %v2968 = vmul.f32 %v2881, %v2952
    %v2969 = vmul.f32 %v2883, %v2953
    %v2970 = vmul.f32 %v2885, %v2954
    %v2971 = vmul.f32 %v2887, %v2955
    %v2972 = vmul.f32 %v2889, %v2956
    %v2973 = vmul.f32 %v2891, %v2957
    %v2974 = vmul.f32 %v2893, %v2958
    %v2975 = vmul.f32 %v2895, %v2959
    %v2976 = vpack.c.bf16 %v2961, %v2960
    %v2977 = vpack.c.bf16 %v2963, %v2962
    %v2978 = vpack.c.bf16 %v2965, %v2964
    %v2979 = vpack.c.bf16 %v2967, %v2966
    %v2980 = vpack.c.bf16 %v2969, %v2968
    %v2981 = vpack.c.bf16 %v2971, %v2970
    %v2982 = vpack.c.bf16 %v2973, %v2972
    %v2983 = vpack.c.bf16 %v2975, %v2974
    %2984 = vrot.lane.b32.xlu0 %v623, 32
    %v2985 = vpop.permute.xlu0 %2984
    %2986 = vrot.lane.b32.xlu0 %v626, 32
    %v2987 = vpop.permute.xlu0 %2986
    %2988 = vrot.lane.b32.xlu0 %v629, 32
    %v2989 = vpop.permute.xlu0 %2988
    %2990 = vrot.lane.b32.xlu0 %v632, 32
    %v2991 = vpop.permute.xlu0 %2990
    %v2997 = vsel %vm939, %v2976, 0
    %v3000 = vsel %vm939, %v2977, 0
    %v3003 = vsel %vm939, %v2978, 0
    %v3006 = vsel %vm939, %v2979, 0
    %3008 = vmatprep.subr.bf16.mxu0 0
    %3009 = vmatpush1.bf16.msra.mxu0 %v2985
    %3010 = vmatprep.subr.bf16.mxu0 0
    %3011 = vmatpush1.bf16.msra.mxu0 %v2987
    %3012 = vmatprep.subr.bf16.mxu0 0
    %3013 = vmatpush1.bf16.msra.mxu0 %v2989
    %3014 = vmatprep.subr.bf16.mxu0 0
    %3015 = vmatpush1.bf16.msra.mxu0 %v2991
    %3016 = vmatprep.subr.bf16.mxu0 0
    %3017 = vmatpush1.bf16.msra.mxu0 0
    %3018 = vmatprep.subr.bf16.mxu0 0
    %3019 = vmatpush1.bf16.msra.mxu0 0
    %3020 = vmatprep.subr.bf16.mxu0 0
    %3021 = vmatpush1.bf16.msra.mxu0 0
    %3022 = vmatprep.subr.bf16.mxu0 0
    %3023 = vmatpush1.bf16.msra.mxu0 0
    %3024 = vmatprep.subr.bf16.mxu0 0
    %3025 = vmatpush1.bf16.msra.mxu0 0
    %3026 = vmatprep.subr.bf16.mxu0 0
    %3027 = vmatpush1.bf16.msra.mxu0 0
    %3028 = vmatprep.subr.bf16.mxu0 0
    %3029 = vmatpush1.bf16.msra.mxu0 0
    %3030 = vmatprep.subr.bf16.mxu0 0
    %3031 = vmatpush1.bf16.msra.mxu0 0
    %3032 = vmatprep.subr.bf16.mxu0 0
    %3033 = vmatpush1.bf16.msra.mxu0 0
    %3034 = vmatprep.subr.bf16.mxu0 0
    %3035 = vmatpush1.bf16.msra.mxu0 0
    %3036 = vmatprep.subr.bf16.mxu0 0
    %3037 = vmatpush1.bf16.msra.mxu0 0
    %3038 = vmatprep.subr.bf16.mxu0 0
    %3039 = vmatpush1.bf16.msra.mxu0 0
    %3040 = vmatprep.mubr.bf16.mxu0 0
    %3041 = vmatmul.mubr.bf16.gmra.mrb[0].mxu0 %v2997
    %v3042 = vpop.f32.mrb[0].mxu0
    %v3043 = vadd.f32 0.0, %v3042
    %v3044 = vpop.f32.mrb[0].mxu0
    %v3045 = vpop.f32.mrb[0].mxu0
    %v3046 = vadd.f32 0.0, %v3045
    %v3047 = vpop.f32.mrb[0].mxu0
    %3048 = vmatprep.mubr.bf16.mxu0 0
    %3049 = vmatmul.mubr.bf16.gmra.mrb[0].mxu0 %v3000
    %v3050 = vpop.f32.mrb[0].mxu0
    %v3051 = vadd.f32 0.0, %v3050
    %v3052 = vpop.f32.mrb[0].mxu0
    %v3053 = vpop.f32.mrb[0].mxu0
    %v3054 = vadd.f32 0.0, %v3053
    %v3055 = vpop.f32.mrb[0].mxu0
    %3056 = vmatprep.mubr.bf16.mxu0 0
    %3057 = vmatmul.mubr.bf16.gmra.mrb[0].mxu0 %v3003
    %v3058 = vpop.f32.mrb[0].mxu0
    %v3059 = vadd.f32 0.0, %v3058
    %v3060 = vpop.f32.mrb[0].mxu0
    %v3061 = vpop.f32.mrb[0].mxu0
    %v3062 = vadd.f32 0.0, %v3061
    %v3063 = vpop.f32.mrb[0].mxu0
    %3064 = vmatprep.mubr.bf16.mxu0 0
    %3065 = vmatmul.mubr.bf16.gmra.mrb[0].mxu0 %v3006
    %v3066 = vpop.f32.mrb[0].mxu0
    %v3067 = vadd.f32 0.0, %v3066
    %v3068 = vpop.f32.mrb[0].mxu0
    %v3069 = vpop.f32.mrb[0].mxu0
    %v3070 = vadd.f32 0.0, %v3069
    %v3071 = vpop.f32.mrb[0].mxu0
    %3072 = vdwg.mxu0
    %3073 = vrot.lane.b32.xlu0 %v635, 32
    %v3074 = vpop.permute.xlu0 %3073
    %3075 = vrot.lane.b32.xlu0 %v638, 32
    %v3076 = vpop.permute.xlu0 %3075
    %3077 = vrot.lane.b32.xlu0 %v641, 32
    %v3078 = vpop.permute.xlu0 %3077
    %3079 = vrot.lane.b32.xlu0 %v644, 32
    %v3080 = vpop.permute.xlu0 %3079
    %v3086 = vsel %vm939, %v2980, 0
    %v3089 = vsel %vm939, %v2981, 0
    %v3092 = vsel %vm939, %v2982, 0
    %v3095 = vsel %vm939, %v2983, 0
    %3097 = vmatprep.subr.bf16.mxu0 0
    %3098 = vmatpush1.bf16.msra.mxu0 %v3074
    %3099 = vmatprep.subr.bf16.mxu0 0
    %3100 = vmatpush1.bf16.msra.mxu0 %v3076
    %3101 = vmatprep.subr.bf16.mxu0 0
    %3102 = vmatpush1.bf16.msra.mxu0 %v3078
    %3103 = vmatprep.subr.bf16.mxu0 0
    %3104 = vmatpush1.bf16.msra.mxu0 %v3080
    %3105 = vmatprep.subr.bf16.mxu0 0
    %3106 = vmatpush1.bf16.msra.mxu0 0
    %3107 = vmatprep.subr.bf16.mxu0 0
    %3108 = vmatpush1.bf16.msra.mxu0 0
    %3109 = vmatprep.subr.bf16.mxu0 0
    %3110 = vmatpush1.bf16.msra.mxu0 0
    %3111 = vmatprep.subr.bf16.mxu0 0
    %3112 = vmatpush1.bf16.msra.mxu0 0
    %3113 = vmatprep.subr.bf16.mxu0 0
    %3114 = vmatpush1.bf16.msra.mxu0 0
    %3115 = vmatprep.subr.bf16.mxu0 0
    %3116 = vmatpush1.bf16.msra.mxu0 0
    %3117 = vmatprep.subr.bf16.mxu0 0
    %3118 = vmatpush1.bf16.msra.mxu0 0
    %3119 = vmatprep.subr.bf16.mxu0 0
    %3120 = vmatpush1.bf16.msra.mxu0 0
    %3121 = vmatprep.subr.bf16.mxu0 0
    %3122 = vmatpush1.bf16.msra.mxu0 0
    %3123 = vmatprep.subr.bf16.mxu0 0
    %3124 = vmatpush1.bf16.msra.mxu0 0
    %3125 = vmatprep.subr.bf16.mxu0 0
    %3126 = vmatpush1.bf16.msra.mxu0 0
    %3127 = vmatprep.subr.bf16.mxu0 0
    %3128 = vmatpush1.bf16.msra.mxu0 0
    %3129 = vmatprep.mubr.bf16.mxu0 0
    %3130 = vmatmul.mubr.bf16.gmra.mrb[0].mxu0 %v3086
    %v3131 = vpop.f32.mrb[0].mxu0
    %v3132 = vadd.f32 0.0, %v3131
    %v3133 = vpop.f32.mrb[0].mxu0
    %v3134 = vpop.f32.mrb[0].mxu0
    %v3135 = vadd.f32 0.0, %v3134
    %v3136 = vpop.f32.mrb[0].mxu0
    %3137 = vmatprep.mubr.bf16.mxu0 0
    %3138 = vmatmul.mubr.bf16.gmra.mrb[0].mxu0 %v3089
    %v3139 = vpop.f32.mrb[0].mxu0
    %v3140 = vadd.f32 0.0, %v3139
    %v3141 = vpop.f32.mrb[0].mxu0
    %v3142 = vpop.f32.mrb[0].mxu0
    %v3143 = vadd.f32 0.0, %v3142
    %v3144 = vpop.f32.mrb[0].mxu0
    %3145 = vmatprep.mubr.bf16.mxu0 0
    %3146 = vmatmul.mubr.bf16.gmra.mrb[0].mxu0 %v3092
    %v3147 = vpop.f32.mrb[0].mxu0
    %v3148 = vadd.f32 0.0, %v3147
    %v3149 = vpop.f32.mrb[0].mxu0
    %v3150 = vpop.f32.mrb[0].mxu0
    %v3151 = vadd.f32 0.0, %v3150
    %v3152 = vpop.f32.mrb[0].mxu0
    %3153 = vmatprep.mubr.bf16.mxu0 0
    %3154 = vmatmul.mubr.bf16.gmra.mrb[0].mxu0 %v3095
    %v3155 = vpop.f32.mrb[0].mxu0
    %v3156 = vadd.f32 0.0, %v3155
    %v3157 = vpop.f32.mrb[0].mxu0
    %v3158 = vpop.f32.mrb[0].mxu0
    %v3159 = vadd.f32 0.0, %v3158
    %v3160 = vpop.f32.mrb[0].mxu0
    %3161 = vdwg.mxu0
    %v3162 = vpack.c.bf16 %v3046, %v3043
    %v3163 = vpack.c.bf16 %v3054, %v3051
    %v3164 = vpack.c.bf16 %v3062, %v3059
    %v3165 = vpack.c.bf16 %v3070, %v3067
    %v3166 = vpack.c.bf16 %v3135, %v3132
    %v3167 = vpack.c.bf16 %v3143, %v3140
    %v3168 = vpack.c.bf16 %v3151, %v3148
    %v3169 = vpack.c.bf16 %v3159, %v3156
    %3178 = vrot.lane.b32.xlu0 %v1922, 32
    %v3179 = vpop.permute.xlu0 %3178
    %3180 = vrot.lane.b32.xlu0 %v1923, 32
    %v3181 = vpop.permute.xlu0 %3180
    %3182 = vrot.lane.b32.xlu0 %v1924, 32
    %v3183 = vpop.permute.xlu0 %3182
    %3184 = vrot.lane.b32.xlu0 %v1925, 32
    %v3185 = vpop.permute.xlu0 %3184
    %3186 = vrot.lane.b32.xlu0 %v1926, 32
    %v3187 = vpop.permute.xlu0 %3186
    %3188 = vrot.lane.b32.xlu0 %v1927, 32
    %v3189 = vpop.permute.xlu0 %3188
    %3190 = vrot.lane.b32.xlu0 %v1928, 32
    %v3191 = vpop.permute.xlu0 %3190
    %3192 = vrot.lane.b32.xlu0 %v1929, 32
    %v3193 = vpop.permute.xlu0 %3192
    %3202 = vrot.lane.b32.xlu0 %v2542, 64
    %v3203 = vpop.permute.xlu0 %3202
    %3204 = vrot.lane.b32.xlu0 %v2543, 64
    %v3205 = vpop.permute.xlu0 %3204
    %3206 = vrot.lane.b32.xlu0 %v2544, 64
    %v3207 = vpop.permute.xlu0 %3206
    %3208 = vrot.lane.b32.xlu0 %v2545, 64
    %v3209 = vpop.permute.xlu0 %3208
    %3210 = vrot.lane.b32.xlu0 %v2546, 64
    %v3211 = vpop.permute.xlu0 %3210
    %3212 = vrot.lane.b32.xlu0 %v2547, 64
    %v3213 = vpop.permute.xlu0 %3212
    %3214 = vrot.lane.b32.xlu0 %v2548, 64
    %v3215 = vpop.permute.xlu0 %3214
    %3216 = vrot.lane.b32.xlu0 %v2549, 64
    %v3217 = vpop.permute.xlu0 %3216
    %3226 = vrot.lane.b32.xlu0 %v3162, 96
    %v3227 = vpop.permute.xlu0 %3226
    %3228 = vrot.lane.b32.xlu0 %v3163, 96
    %v3229 = vpop.permute.xlu0 %3228
    %3230 = vrot.lane.b32.xlu0 %v3164, 96
    %v3231 = vpop.permute.xlu0 %3230
    %3232 = vrot.lane.b32.xlu0 %v3165, 96
    %v3233 = vpop.permute.xlu0 %3232
    %3234 = vrot.lane.b32.xlu0 %v3166, 96
    %v3235 = vpop.permute.xlu0 %3234
    %3236 = vrot.lane.b32.xlu0 %v3167, 96
    %v3237 = vpop.permute.xlu0 %3236
    %3238 = vrot.lane.b32.xlu0 %v3168, 96
    %v3239 = vpop.permute.xlu0 %3238
    %3240 = vrot.lane.b32.xlu0 %v3169, 96
    %v3241 = vpop.permute.xlu0 %3240
    %v3244 = vsel %vm720, %v1278, %v3179
    %v3247 = vsel %vm720, %v1279, %v3181
    %v3250 = vsel %vm720, %v1280, %v3183
    %v3253 = vsel %vm720, %v1281, %v3185
    %v3256 = vsel %vm720, %v1282, %v3187
    %v3259 = vsel %vm720, %v1283, %v3189
    %v3262 = vsel %vm720, %v1284, %v3191
    %v3265 = vsel %vm720, %v1285, %v3193
    %v3267 = vsel %vm939, %v3244, %v3203
    %v3269 = vsel %vm939, %v3247, %v3205
    %v3271 = vsel %vm939, %v3250, %v3207
    %v3273 = vsel %vm939, %v3253, %v3209
    %v3275 = vsel %vm939, %v3256, %v3211
    %v3277 = vsel %vm939, %v3259, %v3213
    %v3279 = vsel %vm939, %v3262, %v3215
    %v3281 = vsel %vm939, %v3265, %v3217
    %vm3282 = vcmask 785408
    %v3284 = vsel %vm3282, %v3267, %v3227
    %v3287 = vsel %vm3282, %v3269, %v3229
    %v3290 = vsel %vm3282, %v3271, %v3231
    %v3293 = vsel %vm3282, %v3273, %v3233
    %v3296 = vsel %vm3282, %v3275, %v3235
    %v3299 = vsel %vm3282, %v3277, %v3237
    %v3302 = vsel %vm3282, %v3279, %v3239
    %v3305 = vsel %vm3282, %v3281, %v3241
    %v3307 = vld [vmem:[#allocation7] sm:$0xf]
    %v3308 = vld [vmem:[#allocation7 + $0x4] sm:$0xf]
    %v3309 = vld [vmem:[#allocation7 + $0x8] sm:$0xf]
    %v3310 = vld [vmem:[#allocation7 + $0xc] sm:$0xf]
    %v3311 = vld [vmem:[#allocation7 + $0x10] sm:$0xf]
    %v3312 = vld [vmem:[#allocation7 + $0x14] sm:$0xf]
    %v3313 = vld [vmem:[#allocation7 + $0x18] sm:$0xf]
    %v3314 = vld [vmem:[#allocation7 + $0x1c] sm:$0xf]
    %v3315 = vld [vmem:[#allocation7 + $0x20] sm:$0xf]
    %v3316 = vld [vmem:[#allocation7 + $0x24] sm:$0xf]
    %v3317 = vld [vmem:[#allocation7 + $0x28] sm:$0xf]
    %v3318 = vld [vmem:[#allocation7 + $0x2c] sm:$0xf]
    %v3319 = vld [vmem:[#allocation7 + $0x30] sm:$0xf]
    %v3320 = vld [vmem:[#allocation7 + $0x34] sm:$0xf]
    %v3321 = vld [vmem:[#allocation7 + $0x38] sm:$0xf]
    %v3322 = vld [vmem:[#allocation7 + $0x3c] sm:$0xf]
    %v3323 = vld [vmem:[%s4] sm:$0x1]
    %v3325 = vlaneseq
    %v3326 = vshrl.u32 %v3325, 7
    %v3327 = vsub.s32 0, %v3326
    %v3328 = vrot.slane %v3323, %v3327
    %v3346 = vunpack.c.l.b16 %v3307
    %v3347 = vunpack.c.l.b16 %v3308
    %v3348 = vunpack.c.l.b16 %v3309
    %v3349 = vunpack.c.l.b16 %v3310
    %v3350 = vunpack.c.l.b16 %v3311
    %v3351 = vunpack.c.l.b16 %v3312
    %v3352 = vunpack.c.l.b16 %v3313
    %v3353 = vunpack.c.l.b16 %v3314
    %v3354 = vunpack.c.l.b16 %v3315
    %v3355 = vunpack.c.l.b16 %v3316
    %v3356 = vunpack.c.l.b16 %v3317
    %v3357 = vunpack.c.l.b16 %v3318
    %v3358 = vunpack.c.l.b16 %v3319
    %v3359 = vunpack.c.l.b16 %v3320
    %v3360 = vunpack.c.l.b16 %v3321
    %v3361 = vunpack.c.l.b16 %v3322
    %v3362 = vpack.c.b16 %v3347, %v3346
    %v3363 = vpack.c.b16 %v3349, %v3348
    %v3364 = vpack.c.b16 %v3351, %v3350
    %v3365 = vpack.c.b16 %v3353, %v3352
    %v3366 = vpack.c.b16 %v3355, %v3354
    %v3367 = vpack.c.b16 %v3357, %v3356
    %v3368 = vpack.c.b16 %v3359, %v3358
    %v3369 = vpack.c.b16 %v3361, %v3360
    %3378 = vmatprep.subr.bf16.mxu0 0
    %3379 = vmatpush1.bf16.msra.mxu0 %v3362
    %3380 = vmatprep.subr.bf16.mxu0 0
    %3381 = vmatpush1.bf16.msra.mxu0 %v3363
    %3382 = vmatprep.subr.bf16.mxu0 0
    %3383 = vmatpush1.bf16.msra.mxu0 %v3364
    %3384 = vmatprep.subr.bf16.mxu0 0
    %3385 = vmatpush1.bf16.msra.mxu0 %v3365
    %3386 = vmatprep.subr.bf16.mxu0 0
    %3387 = vmatpush1.bf16.msra.mxu0 %v3366
    %3388 = vmatprep.subr.bf16.mxu0 0
    %3389 = vmatpush1.bf16.msra.mxu0 %v3367
    %3390 = vmatprep.subr.bf16.mxu0 0
    %3391 = vmatpush1.bf16.msra.mxu0 %v3368
    %3392 = vmatprep.subr.bf16.mxu0 0
    %3393 = vmatpush1.bf16.msra.mxu0 %v3369
    %3394 = vmatprep.subr.bf16.mxu0 0
    %3395 = vmatpush1.bf16.msra.mxu0 0
    %3396 = vmatprep.subr.bf16.mxu0 0
    %3397 = vmatpush1.bf16.msra.mxu0 0
    %3398 = vmatprep.subr.bf16.mxu0 0
    %3399 = vmatpush1.bf16.msra.mxu0 0
    %3400 = vmatprep.subr.bf16.mxu0 0
    %3401 = vmatpush1.bf16.msra.mxu0 0
    %3402 = vmatprep.subr.bf16.mxu0 0
    %3403 = vmatpush1.bf16.msra.mxu0 0
    %3404 = vmatprep.subr.bf16.mxu0 0
    %3405 = vmatpush1.bf16.msra.mxu0 0
    %3406 = vmatprep.subr.bf16.mxu0 0
    %3407 = vmatpush1.bf16.msra.mxu0 0
    %3408 = vmatprep.subr.bf16.mxu0 0
    %3409 = vmatpush1.bf16.msra.mxu0 0
    %3410 = vmatprep.mubr.bf16.mxu0 0
    %3411 = vmatmul.mubr.bf16.gmra.mrb[0].mxu0 %v3284
    %v3412 = vpop.f32.mrb[0].mxu0
    %v3413 = vadd.f32 %v3328, %v3412
    %v3414 = vpop.f32.mrb[0].mxu0
    %v3415 = vpop.f32.mrb[0].mxu0
    %v3416 = vadd.f32 %v3328, %v3415
    %v3417 = vpop.f32.mrb[0].mxu0
    %3418 = vmatprep.mubr.bf16.mxu0 0
    %3419 = vmatmul.mubr.bf16.gmra.mrb[0].mxu0 %v3287
    %v3420 = vpop.f32.mrb[0].mxu0
    %v3421 = vadd.f32 %v3328, %v3420
    %v3422 = vpop.f32.mrb[0].mxu0
    %v3423 = vpop.f32.mrb[0].mxu0
    %v3424 = vadd.f32 %v3328, %v3423
    %v3425 = vpop.f32.mrb[0].mxu0
    %3426 = vmatprep.mubr.bf16.mxu0 0
    %3427 = vmatmul.mubr.bf16.gmra.mrb[0].mxu0 %v3290
    %v3428 = vpop.f32.mrb[0].mxu0
    %v3429 = vadd.f32 %v3328, %v3428
    %v3430 = vpop.f32.mrb[0].mxu0
    %v3431 = vpop.f32.mrb[0].mxu0
    %v3432 = vadd.f32 %v3328, %v3431
    %v3433 = vpop.f32.mrb[0].mxu0
    %3434 = vmatprep.mubr.bf16.mxu0 0
    %3435 = vmatmul.mubr.bf16.gmra.mrb[0].mxu0 %v3293
    %v3436 = vpop.f32.mrb[0].mxu0
    %v3437 = vadd.f32 %v3328, %v3436
    %v3438 = vpop.f32.mrb[0].mxu0
    %v3439 = vpop.f32.mrb[0].mxu0
    %v3440 = vadd.f32 %v3328, %v3439
    %v3441 = vpop.f32.mrb[0].mxu0
    %3442 = vmatprep.mubr.bf16.mxu0 0
    %3443 = vmatmul.mubr.bf16.gmra.mrb[0].mxu0 %v3296
    %v3444 = vpop.f32.mrb[0].mxu0
    %v3445 = vadd.f32 %v3328, %v3444
    %v3446 = vpop.f32.mrb[0].mxu0
    %v3447 = vpop.f32.mrb[0].mxu0
    %v3448 = vadd.f32 %v3328, %v3447
    %v3449 = vpop.f32.mrb[0].mxu0
    %3450 = vmatprep.mubr.bf16.mxu0 0
    %3451 = vmatmul.mubr.bf16.gmra.mrb[0].mxu0 %v3299
    %v3452 = vpop.f32.mrb[0].mxu0
    %v3453 = vadd.f32 %v3328, %v3452
    %v3454 = vpop.f32.mrb[0].mxu0
    %v3455 = vpop.f32.mrb[0].mxu0
    %v3456 = vadd.f32 %v3328, %v3455
    %v3457 = vpop.f32.mrb[0].mxu0
    %3458 = vmatprep.mubr.bf16.mxu0 0
    %3459 = vmatmul.mubr.bf16.gmra.mrb[0].mxu0 %v3302
    %v3460 = vpop.f32.mrb[0].mxu0
    %v3461 = vadd.f32 %v3328, %v3460
    %v3462 = vpop.f32.mrb[0].mxu0
    %v3463 = vpop.f32.mrb[0].mxu0
    %v3464 = vadd.f32 %v3328, %v3463
    %v3465 = vpop.f32.mrb[0].mxu0
    %3466 = vmatprep.mubr.bf16.mxu0 0
    %3467 = vmatmul.mubr.bf16.gmra.mrb[0].mxu0 %v3305
    %v3468 = vpop.f32.mrb[0].mxu0
    %v3469 = vadd.f32 %v3328, %v3468
    %v3470 = vpop.f32.mrb[0].mxu0
    %v3471 = vpop.f32.mrb[0].mxu0
    %v3472 = vadd.f32 %v3328, %v3471
    %v3473 = vpop.f32.mrb[0].mxu0
    %3474 = vdwg.mxu0
    %v3475 = vadd.f32 %v113, %v3413
    %v3476 = vadd.f32 %v114, %v3416
    %v3477 = vadd.f32 %v115, %v3421
    %v3478 = vadd.f32 %v116, %v3424
    %v3479 = vadd.f32 %v117, %v3429
    %v3480 = vadd.f32 %v118, %v3432
    %v3481 = vadd.f32 %v119, %v3437
    %v3482 = vadd.f32 %v120, %v3440
    %v3483 = vadd.f32 %v121, %v3445
    %v3484 = vadd.f32 %v122, %v3448
    %v3485 = vadd.f32 %v123, %v3453
    %v3486 = vadd.f32 %v124, %v3456
    %v3487 = vadd.f32 %v125, %v3461
    %v3488 = vadd.f32 %v126, %v3464
    %v3489 = vadd.f32 %v127, %v3469
    %v3490 = vadd.f32 %v128, %v3472
    %v3491 = vmul.f32 %v3475, %v3475
    %v3492 = vmul.f32 %v3476, %v3476
    %v3493 = vmul.f32 %v3477, %v3477
    %v3494 = vmul.f32 %v3478, %v3478
    %v3495 = vmul.f32 %v3479, %v3479
    %v3496 = vmul.f32 %v3480, %v3480
    %v3497 = vmul.f32 %v3481, %v3481
    %v3498 = vmul.f32 %v3482, %v3482
    %v3499 = vmul.f32 %v3483, %v3483
    %v3500 = vmul.f32 %v3484, %v3484
    %v3501 = vmul.f32 %v3485, %v3485
    %v3502 = vmul.f32 %v3486, %v3486
    %v3503 = vmul.f32 %v3487, %v3487
    %v3504 = vmul.f32 %v3488, %v3488
    %v3505 = vmul.f32 %v3489, %v3489
    %v3506 = vmul.f32 %v3490, %v3490
    %3507 = vadd.xlane.f32.xlu0 %v3491
    %v3508 = vpop.xlane.xlu0 %3507
    %3509 = vadd.xlane.f32.xlu0 %v3492
    %v3510 = vpop.xlane.xlu0 %3509
    %3511 = vadd.xlane.f32.xlu0 %v3493
    %v3512 = vpop.xlane.xlu0 %3511
    %3513 = vadd.xlane.f32.xlu0 %v3494
    %v3514 = vpop.xlane.xlu0 %3513
    %3515 = vadd.xlane.f32.xlu0 %v3495
    %v3516 = vpop.xlane.xlu0 %3515
    %3517 = vadd.xlane.f32.xlu0 %v3496
    %v3518 = vpop.xlane.xlu0 %3517
    %3519 = vadd.xlane.f32.xlu0 %v3497
    %v3520 = vpop.xlane.xlu0 %3519
    %3521 = vadd.xlane.f32.xlu0 %v3498
    %v3522 = vpop.xlane.xlu0 %3521
    %3523 = vadd.xlane.f32.xlu0 %v3499
    %v3524 = vpop.xlane.xlu0 %3523
    %3525 = vadd.xlane.f32.xlu0 %v3500
    %v3526 = vpop.xlane.xlu0 %3525
    %3527 = vadd.xlane.f32.xlu0 %v3501
    %v3528 = vpop.xlane.xlu0 %3527
    %3529 = vadd.xlane.f32.xlu0 %v3502
    %v3530 = vpop.xlane.xlu0 %3529
    %3531 = vadd.xlane.f32.xlu0 %v3503
    %v3532 = vpop.xlane.xlu0 %3531
    %3533 = vadd.xlane.f32.xlu0 %v3504
    %v3534 = vpop.xlane.xlu0 %3533
    %3535 = vadd.xlane.f32.xlu0 %v3505
    %v3536 = vpop.xlane.xlu0 %3535
    %3537 = vadd.xlane.f32.xlu0 %v3506
    %v3538 = vpop.xlane.xlu0 %3537
    %v3539 = vmul.f32 %v3508, %v177
    %v3540 = vmul.f32 %v3510, %v177
    %v3541 = vmul.f32 %v3512, %v177
    %v3542 = vmul.f32 %v3514, %v177
    %v3543 = vmul.f32 %v3516, %v177
    %v3544 = vmul.f32 %v3518, %v177
    %v3545 = vmul.f32 %v3520, %v177
    %v3546 = vmul.f32 %v3522, %v177
    %v3547 = vmul.f32 %v3524, %v177
    %v3548 = vmul.f32 %v3526, %v177
    %v3549 = vmul.f32 %v3528, %v177
    %v3550 = vmul.f32 %v3530, %v177
    %v3551 = vmul.f32 %v3532, %v177
    %v3552 = vmul.f32 %v3534, %v177
    %v3553 = vmul.f32 %v3536, %v177
    %v3554 = vmul.f32 %v3538, %v177
    %v3555 = vrsqrt.pop %v3539
    %v3556 = vrsqrt.pop %v3540
    %v3557 = vrsqrt.pop %v3541
    %v3558 = vrsqrt.pop %v3542
    %v3559 = vrsqrt.pop %v3543
    %v3560 = vrsqrt.pop %v3544
    %v3561 = vrsqrt.pop %v3545
    %v3562 = vrsqrt.pop %v3546
    %v3563 = vrsqrt.pop %v3547
    %v3564 = vrsqrt.pop %v3548
    %v3565 = vrsqrt.pop %v3549
    %v3566 = vrsqrt.pop %v3550
    %v3567 = vrsqrt.pop %v3551
    %v3568 = vrsqrt.pop %v3552
    %v3569 = vrsqrt.pop %v3553
    %v3570 = vrsqrt.pop %v3554
    %v3571 = vmul.f32 %v3475, %v3555
    %v3572 = vmul.f32 %v3476, %v3556
    %v3573 = vmul.f32 %v3477, %v3557
    %v3574 = vmul.f32 %v3478, %v3558
    %v3575 = vmul.f32 %v3479, %v3559
    %v3576 = vmul.f32 %v3480, %v3560
    %v3577 = vmul.f32 %v3481, %v3561
    %v3578 = vmul.f32 %v3482, %v3562
    %v3579 = vmul.f32 %v3483, %v3563
    %v3580 = vmul.f32 %v3484, %v3564
    %v3581 = vmul.f32 %v3485, %v3565
    %v3582 = vmul.f32 %v3486, %v3566
    %v3583 = vmul.f32 %v3487, %v3567
    %v3584 = vmul.f32 %v3488, %v3568
    %v3585 = vmul.f32 %v3489, %v3569
    %v3586 = vmul.f32 %v3490, %v3570
    %v3587 = vadd.f32 %v3475, %v3571
    %v3588 = vadd.f32 %v3476, %v3572
    %v3589 = vadd.f32 %v3477, %v3573
    %v3590 = vadd.f32 %v3478, %v3574
    %v3591 = vadd.f32 %v3479, %v3575
    %v3592 = vadd.f32 %v3480, %v3576
    %v3593 = vadd.f32 %v3481, %v3577
    %v3594 = vadd.f32 %v3482, %v3578
    %v3595 = vadd.f32 %v3483, %v3579
    %v3596 = vadd.f32 %v3484, %v3580
    %v3597 = vadd.f32 %v3485, %v3581
    %v3598 = vadd.f32 %v3486, %v3582
    %v3599 = vadd.f32 %v3487, %v3583
    %v3600 = vadd.f32 %v3488, %v3584
    %v3601 = vadd.f32 %v3489, %v3585
    %v3602 = vadd.f32 %v3490, %v3586
    %v3603 = vmul.f32 %v3587, %v3587
    %v3604 = vmul.f32 %v3588, %v3588
    %v3605 = vmul.f32 %v3589, %v3589
    %v3606 = vmul.f32 %v3590, %v3590
    %v3607 = vmul.f32 %v3591, %v3591
    %v3608 = vmul.f32 %v3592, %v3592
    %v3609 = vmul.f32 %v3593, %v3593
    %v3610 = vmul.f32 %v3594, %v3594
    %v3611 = vmul.f32 %v3595, %v3595
    %v3612 = vmul.f32 %v3596, %v3596
    %v3613 = vmul.f32 %v3597, %v3597
    %v3614 = vmul.f32 %v3598, %v3598
    %v3615 = vmul.f32 %v3599, %v3599
    %v3616 = vmul.f32 %v3600, %v3600
    %v3617 = vmul.f32 %v3601, %v3601
    %v3618 = vmul.f32 %v3602, %v3602
    %3619 = vadd.xlane.f32.xlu0 %v3603
    %v3620 = vpop.xlane.xlu0 %3619
    %3621 = vadd.xlane.f32.xlu0 %v3604
    %v3622 = vpop.xlane.xlu0 %3621
    %3623 = vadd.xlane.f32.xlu0 %v3605
    %v3624 = vpop.xlane.xlu0 %3623
    %3625 = vadd.xlane.f32.xlu0 %v3606
    %v3626 = vpop.xlane.xlu0 %3625
    %3627 = vadd.xlane.f32.xlu0 %v3607
    %v3628 = vpop.xlane.xlu0 %3627
    %3629 = vadd.xlane.f32.xlu0 %v3608
    %v3630 = vpop.xlane.xlu0 %3629
    %3631 = vadd.xlane.f32.xlu0 %v3609
    %v3632 = vpop.xlane.xlu0 %3631
    %3633 = vadd.xlane.f32.xlu0 %v3610
    %v3634 = vpop.xlane.xlu0 %3633
    %3635 = vadd.xlane.f32.xlu0 %v3611
    %v3636 = vpop.xlane.xlu0 %3635
    %3637 = vadd.xlane.f32.xlu0 %v3612
    %v3638 = vpop.xlane.xlu0 %3637
    %3639 = vadd.xlane.f32.xlu0 %v3613
    %v3640 = vpop.xlane.xlu0 %3639
    %3641 = vadd.xlane.f32.xlu0 %v3614
    %v3642 = vpop.xlane.xlu0 %3641
    %3643 = vadd.xlane.f32.xlu0 %v3615
    %v3644 = vpop.xlane.xlu0 %3643
    %3645 = vadd.xlane.f32.xlu0 %v3616
    %v3646 = vpop.xlane.xlu0 %3645
    %3647 = vadd.xlane.f32.xlu0 %v3617
    %v3648 = vpop.xlane.xlu0 %3647
    %3649 = vadd.xlane.f32.xlu0 %v3618
    %v3650 = vpop.xlane.xlu0 %3649
    %v3651 = vmul.f32 %v3620, %v177
    %v3652 = vmul.f32 %v3622, %v177
    %v3653 = vmul.f32 %v3624, %v177
    %v3654 = vmul.f32 %v3626, %v177
    %v3655 = vmul.f32 %v3628, %v177
    %v3656 = vmul.f32 %v3630, %v177
    %v3657 = vmul.f32 %v3632, %v177
    %v3658 = vmul.f32 %v3634, %v177
    %v3659 = vmul.f32 %v3636, %v177
    %v3660 = vmul.f32 %v3638, %v177
    %v3661 = vmul.f32 %v3640, %v177
    %v3662 = vmul.f32 %v3642, %v177
    %v3663 = vmul.f32 %v3644, %v177
    %v3664 = vmul.f32 %v3646, %v177
    %v3665 = vmul.f32 %v3648, %v177
    %v3666 = vmul.f32 %v3650, %v177
    %v3667 = vrsqrt.pop %v3651
    %v3668 = vrsqrt.pop %v3652
    %v3669 = vrsqrt.pop %v3653
    %v3670 = vrsqrt.pop %v3654
    %v3671 = vrsqrt.pop %v3655
    %v3672 = vrsqrt.pop %v3656
    %v3673 = vrsqrt.pop %v3657
    %v3674 = vrsqrt.pop %v3658
    %v3675 = vrsqrt.pop %v3659
    %v3676 = vrsqrt.pop %v3660
    %v3677 = vrsqrt.pop %v3661
    %v3678 = vrsqrt.pop %v3662
    %v3679 = vrsqrt.pop %v3663
    %v3680 = vrsqrt.pop %v3664
    %v3681 = vrsqrt.pop %v3665
    %v3682 = vrsqrt.pop %v3666
    %v3683 = vmul.f32 %v3587, %v3667
    %v3684 = vmul.f32 %v3588, %v3668
    %v3685 = vmul.f32 %v3589, %v3669
    %v3686 = vmul.f32 %v3590, %v3670
    %v3687 = vmul.f32 %v3591, %v3671
    %v3688 = vmul.f32 %v3592, %v3672
    %v3689 = vmul.f32 %v3593, %v3673
    %v3690 = vmul.f32 %v3594, %v3674
    %v3691 = vmul.f32 %v3595, %v3675
    %v3692 = vmul.f32 %v3596, %v3676
    %v3693 = vmul.f32 %v3597, %v3677
    %v3694 = vmul.f32 %v3598, %v3678
    %v3695 = vmul.f32 %v3599, %v3679
    %v3696 = vmul.f32 %v3600, %v3680
    %v3697 = vmul.f32 %v3601, %v3681
    %v3698 = vmul.f32 %v3602, %v3682
    %v3699 = vpack.c.bf16 %v3684, %v3683
    %v3700 = vpack.c.bf16 %v3686, %v3685
    %v3701 = vpack.c.bf16 %v3688, %v3687
    %v3702 = vpack.c.bf16 %v3690, %v3689
    %v3703 = vpack.c.bf16 %v3692, %v3691
    %v3704 = vpack.c.bf16 %v3694, %v3693
    %v3705 = vpack.c.bf16 %v3696, %v3695
    %v3706 = vpack.c.bf16 %v3698, %v3697
    %v3707 = vld [vmem:[#allocation8] sm:$0xff]
    %v3708 = vld [vmem:[#allocation8 + $0x8] sm:$0xff]
    %v3709 = vld [vmem:[#allocation8 + $0x10] sm:$0xff]
    %v3710 = vld [vmem:[#allocation8 + $0x18] sm:$0xff]
    %v3711 = vld [vmem:[#allocation8 + $0x20] sm:$0xff]
    %v3712 = vld [vmem:[#allocation8 + $0x28] sm:$0xff]
    %v3713 = vld [vmem:[#allocation8 + $0x30] sm:$0xff]
    %v3714 = vld [vmem:[#allocation8 + $0x38] sm:$0xff]
    %v3715 = vld [vmem:[#allocation8 + $0x40] sm:$0xff]
    %v3716 = vld [vmem:[#allocation8 + $0x48] sm:$0xff]
    %v3717 = vld [vmem:[#allocation8 + $0x50] sm:$0xff]
    %v3718 = vld [vmem:[#allocation8 + $0x58] sm:$0xff]
    %v3719 = vld [vmem:[#allocation8 + $0x60] sm:$0xff]
    %v3720 = vld [vmem:[#allocation8 + $0x68] sm:$0xff]
    %v3721 = vld [vmem:[#allocation8 + $0x70] sm:$0xff]
    %v3722 = vld [vmem:[#allocation8 + $0x78] sm:$0xff]
    %v3739 = vunpack.c.l.b16 %v3707
    %v3740 = vunpack.c.h.b16 %v3707
    %v3741 = vunpack.c.l.b16 %v3708
    %v3742 = vunpack.c.h.b16 %v3708
    %v3743 = vunpack.c.l.b16 %v3709
    %v3744 = vunpack.c.h.b16 %v3709
    %v3745 = vunpack.c.l.b16 %v3710
    %v3746 = vunpack.c.h.b16 %v3710
    %v3747 = vunpack.c.l.b16 %v3711
    %v3748 = vunpack.c.h.b16 %v3711
    %v3749 = vunpack.c.l.b16 %v3712
    %v3750 = vunpack.c.h.b16 %v3712
    %v3751 = vunpack.c.l.b16 %v3713
    %v3752 = vunpack.c.h.b16 %v3713
    %v3753 = vunpack.c.l.b16 %v3714
    %v3754 = vunpack.c.h.b16 %v3714
    %v3755 = vunpack.c.l.b16 %v3715
    %v3756 = vunpack.c.h.b16 %v3715
    %v3757 = vunpack.c.l.b16 %v3716
    %v3758 = vunpack.c.h.b16 %v3716
    %v3759 = vunpack.c.l.b16 %v3717
    %v3760 = vunpack.c.h.b16 %v3717
    %v3761 = vunpack.c.l.b16 %v3718
    %v3762 = vunpack.c.h.b16 %v3718
    %v3763 = vunpack.c.l.b16 %v3719
    %v3764 = vunpack.c.h.b16 %v3719
    %v3765 = vunpack.c.l.b16 %v3720
    %v3766 = vunpack.c.h.b16 %v3720
    %v3767 = vunpack.c.l.b16 %v3721
    %v3768 = vunpack.c.h.b16 %v3721
    %v3769 = vunpack.c.l.b16 %v3722
    %v3770 = vunpack.c.h.b16 %v3722
    %v3771 = vpack.c.b16 %v3741, %v3739
    %v3772 = vpack.c.b16 %v3742, %v3740
    %v3773 = vpack.c.b16 %v3745, %v3743
    %v3774 = vpack.c.b16 %v3746, %v3744
    %v3775 = vpack.c.b16 %v3749, %v3747
    %v3776 = vpack.c.b16 %v3750, %v3748
    %v3777 = vpack.c.b16 %v3753, %v3751
    %v3778 = vpack.c.b16 %v3754, %v3752
    %v3779 = vpack.c.b16 %v3757, %v3755
    %v3780 = vpack.c.b16 %v3758, %v3756
    %v3781 = vpack.c.b16 %v3761, %v3759
    %v3782 = vpack.c.b16 %v3762, %v3760
    %v3783 = vpack.c.b16 %v3765, %v3763
    %v3784 = vpack.c.b16 %v3766, %v3764
    %v3785 = vpack.c.b16 %v3769, %v3767
    %v3786 = vpack.c.b16 %v3770, %v3768
    %3803 = vmatprep.subr.bf16.mxu0 %v3772
    %3804 = vmatpush1.bf16.msra.mxu0 %v3771
    %3805 = vmatprep.subr.bf16.mxu0 %v3774
    %3806 = vmatpush1.bf16.msra.mxu0 %v3773
    %3807 = vmatprep.subr.bf16.mxu0 %v3776
    %3808 = vmatpush1.bf16.msra.mxu0 %v3775
    %3809 = vmatprep.subr.bf16.mxu0 %v3778
    %3810 = vmatpush1.bf16.msra.mxu0 %v3777
    %3811 = vmatprep.subr.bf16.mxu0 %v3780
    %3812 = vmatpush1.bf16.msra.mxu0 %v3779
    %3813 = vmatprep.subr.bf16.mxu0 %v3782
    %3814 = vmatpush1.bf16.msra.mxu0 %v3781
    %3815 = vmatprep.subr.bf16.mxu0 %v3784
    %3816 = vmatpush1.bf16.msra.mxu0 %v3783
    %3817 = vmatprep.subr.bf16.mxu0 %v3786
    %3818 = vmatpush1.bf16.msra.mxu0 %v3785
    %3819 = vmatprep.subr.bf16.mxu0 0
    %3820 = vmatpush1.bf16.msra.mxu0 0
    %3821 = vmatprep.subr.bf16.mxu0 0
    %3822 = vmatpush1.bf16.msra.mxu0 0
    %3823 = vmatprep.subr.bf16.mxu0 0
    %3824 = vmatpush1.bf16.msra.mxu0 0
    %3825 = vmatprep.subr.bf16.mxu0 0
    %3826 = vmatpush1.bf16.msra.mxu0 0
    %3827 = vmatprep.subr.bf16.mxu0 0
    %3828 = vmatpush1.bf16.msra.mxu0 0
    %3829 = vmatprep.subr.bf16.mxu0 0
    %3830 = vmatpush1.bf16.msra.mxu0 0
    %3831 = vmatprep.subr.bf16.mxu0 0
    %3832 = vmatpush1.bf16.msra.mxu0 0
    %3833 = vmatprep.subr.bf16.mxu0 0
    %3834 = vmatpush1.bf16.msra.mxu0 0
    %3835 = vmatprep.mubr.bf16.mxu0 0
    %3836 = vmatmul.mubr.bf16.gmra.mrb[0].mxu0 %v3699
    %v3837 = vpop.f32.mrb[0].mxu0
    %v3838 = vadd.f32 0.0, %v3837
    %v3839 = vpop.f32.mrb[0].mxu0
    %v3840 = vadd.f32 0.0, %v3839
    %v3841 = vpop.f32.mrb[0].mxu0
    %v3842 = vadd.f32 0.0, %v3841
    %v3843 = vpop.f32.mrb[0].mxu0
    %v3844 = vadd.f32 0.0, %v3843
    %3845 = vmatprep.mubr.bf16.mxu0 0
    %3846 = vmatmul.mubr.bf16.gmra.mrb[0].mxu0 %v3700
    %v3847 = vpop.f32.mrb[0].mxu0
    %v3848 = vadd.f32 0.0, %v3847
    %v3849 = vpop.f32.mrb[0].mxu0
    %v3850 = vadd.f32 0.0, %v3849
    %v3851 = vpop.f32.mrb[0].mxu0
    %v3852 = vadd.f32 0.0, %v3851
    %v3853 = vpop.f32.mrb[0].mxu0
    %v3854 = vadd.f32 0.0, %v3853
    %3855 = vmatprep.mubr.bf16.mxu0 0
    %3856 = vmatmul.mubr.bf16.gmra.mrb[0].mxu0 %v3701
    %v3857 = vpop.f32.mrb[0].mxu0
    %v3858 = vadd.f32 0.0, %v3857
    %v3859 = vpop.f32.mrb[0].mxu0
    %v3860 = vadd.f32 0.0, %v3859
    %v3861 = vpop.f32.mrb[0].mxu0
    %v3862 = vadd.f32 0.0, %v3861
    %v3863 = vpop.f32.mrb[0].mxu0
    %v3864 = vadd.f32 0.0, %v3863
    %3865 = vmatprep.mubr.bf16.mxu0 0
    %3866 = vmatmul.mubr.bf16.gmra.mrb[0].mxu0 %v3702
    %v3867 = vpop.f32.mrb[0].mxu0
    %v3868 = vadd.f32 0.0, %v3867
    %v3869 = vpop.f32.mrb[0].mxu0
    %v3870 = vadd.f32 0.0, %v3869
    %v3871 = vpop.f32.mrb[0].mxu0
    %v3872 = vadd.f32 0.0, %v3871
    %v3873 = vpop.f32.mrb[0].mxu0
    %v3874 = vadd.f32 0.0, %v3873
    %3875 = vmatprep.mubr.bf16.mxu0 0
    %3876 = vmatmul.mubr.bf16.gmra.mrb[0].mxu0 %v3703
    %v3877 = vpop.f32.mrb[0].mxu0
    %v3878 = vadd.f32 0.0, %v3877
    %v3879 = vpop.f32.mrb[0].mxu0
    %v3880 = vadd.f32 0.0, %v3879
    %v3881 = vpop.f32.mrb[0].mxu0
    %v3882 = vadd.f32 0.0, %v3881
    %v3883 = vpop.f32.mrb[0].mxu0
    %v3884 = vadd.f32 0.0, %v3883
    %3885 = vmatprep.mubr.bf16.mxu0 0
    %3886 = vmatmul.mubr.bf16.gmra.mrb[0].mxu0 %v3704
    %v3887 = vpop.f32.mrb[0].mxu0
    %v3888 = vadd.f32 0.0, %v3887
    %v3889 = vpop.f32.mrb[0].mxu0
    %v3890 = vadd.f32 0.0, %v3889
    %v3891 = vpop.f32.mrb[0].mxu0
    %v3892 = vadd.f32 0.0, %v3891
    %v3893 = vpop.f32.mrb[0].mxu0
    %v3894 = vadd.f32 0.0, %v3893
    %3895 = vmatprep.mubr.bf16.mxu0 0
    %3896 = vmatmul.mubr.bf16.gmra.mrb[0].mxu0 %v3705
    %v3897 = vpop.f32.mrb[0].mxu0
    %v3898 = vadd.f32 0.0, %v3897
    %v3899 = vpop.f32.mrb[0].mxu0
    %v3900 = vadd.f32 0.0, %v3899
    %v3901 = vpop.f32.mrb[0].mxu0
    %v3902 = vadd.f32 0.0, %v3901
    %v3903 = vpop.f32.mrb[0].mxu0
    %v3904 = vadd.f32 0.0, %v3903
    %3905 = vmatprep.mubr.bf16.mxu0 0
    %3906 = vmatmul.mubr.bf16.gmra.mrb[0].mxu0 %v3706
    %v3907 = vpop.f32.mrb[0].mxu0
    %v3908 = vadd.f32 0.0, %v3907
    %v3909 = vpop.f32.mrb[0].mxu0
    %v3910 = vadd.f32 0.0, %v3909
    %v3911 = vpop.f32.mrb[0].mxu0
    %v3912 = vadd.f32 0.0, %v3911
    %v3913 = vpop.f32.mrb[0].mxu0
    %v3914 = vadd.f32 0.0, %v3913
    %3915 = vdwg.mxu0
    %v3916 = vld [vmem:[#allocation10] sm:$0xff]
    %v3917 = vld [vmem:[#allocation10 + $0x8] sm:$0xff]
    %v3918 = vld [vmem:[#allocation10 + $0x10] sm:$0xff]
    %v3919 = vld [vmem:[#allocation10 + $0x18] sm:$0xff]
    %v3920 = vld [vmem:[#allocation10 + $0x20] sm:$0xff]
    %v3921 = vld [vmem:[#allocation10 + $0x28] sm:$0xff]
    %v3922 = vld [vmem:[#allocation10 + $0x30] sm:$0xff]
    %v3923 = vld [vmem:[#allocation10 + $0x38] sm:$0xff]
    %v3924 = vld [vmem:[#allocation10 + $0x40] sm:$0xff]
    %v3925 = vld [vmem:[#allocation10 + $0x48] sm:$0xff]
    %v3926 = vld [vmem:[#allocation10 + $0x50] sm:$0xff]
    %v3927 = vld [vmem:[#allocation10 + $0x58] sm:$0xff]
    %v3928 = vld [vmem:[#allocation10 + $0x60] sm:$0xff]
    %v3929 = vld [vmem:[#allocation10 + $0x68] sm:$0xff]
    %v3930 = vld [vmem:[#allocation10 + $0x70] sm:$0xff]
    %v3931 = vld [vmem:[#allocation10 + $0x78] sm:$0xff]
    %v3948 = vunpack.c.l.b16 %v3916
    %v3949 = vunpack.c.h.b16 %v3916
    %v3950 = vunpack.c.l.b16 %v3917
    %v3951 = vunpack.c.h.b16 %v3917
    %v3952 = vunpack.c.l.b16 %v3918
    %v3953 = vunpack.c.h.b16 %v3918
    %v3954 = vunpack.c.l.b16 %v3919
    %v3955 = vunpack.c.h.b16 %v3919
    %v3956 = vunpack.c.l.b16 %v3920
    %v3957 = vunpack.c.h.b16 %v3920
    %v3958 = vunpack.c.l.b16 %v3921
    %v3959 = vunpack.c.h.b16 %v3921
    %v3960 = vunpack.c.l.b16 %v3922
    %v3961 = vunpack.c.h.b16 %v3922
    %v3962 = vunpack.c.l.b16 %v3923
    %v3963 = vunpack.c.h.b16 %v3923
    %v3964 = vunpack.c.l.b16 %v3924
    %v3965 = vunpack.c.h.b16 %v3924
    %v3966 = vunpack.c.l.b16 %v3925
    %v3967 = vunpack.c.h.b16 %v3925
    %v3968 = vunpack.c.l.b16 %v3926
    %v3969 = vunpack.c.h.b16 %v3926
    %v3970 = vunpack.c.l.b16 %v3927
    %v3971 = vunpack.c.h.b16 %v3927
    %v3972 = vunpack.c.l.b16 %v3928
    %v3973 = vunpack.c.h.b16 %v3928
    %v3974 = vunpack.c.l.b16 %v3929
    %v3975 = vunpack.c.h.b16 %v3929
    %v3976 = vunpack.c.l.b16 %v3930
    %v3977 = vunpack.c.h.b16 %v3930
    %v3978 = vunpack.c.l.b16 %v3931
    %v3979 = vunpack.c.h.b16 %v3931
    %v3980 = vpack.c.b16 %v3950, %v3948
    %v3981 = vpack.c.b16 %v3951, %v3949
    %v3982 = vpack.c.b16 %v3954, %v3952
    %v3983 = vpack.c.b16 %v3955, %v3953
    %v3984 = vpack.c.b16 %v3958, %v3956
    %v3985 = vpack.c.b16 %v3959, %v3957
    %v3986 = vpack.c.b16 %v3962, %v3960
    %v3987 = vpack.c.b16 %v3963, %v3961
    %v3988 = vpack.c.b16 %v3966, %v3964
    %v3989 = vpack.c.b16 %v3967, %v3965
    %v3990 = vpack.c.b16 %v3970, %v3968
    %v3991 = vpack.c.b16 %v3971, %v3969
    %v3992 = vpack.c.b16 %v3974, %v3972
    %v3993 = vpack.c.b16 %v3975, %v3973
    %v3994 = vpack.c.b16 %v3978, %v3976
    %v3995 = vpack.c.b16 %v3979, %v3977
    %4012 = vmatprep.subr.bf16.mxu0 %v3981
    %4013 = vmatpush1.bf16.msra.mxu0 %v3980
    %4014 = vmatprep.subr.bf16.mxu0 %v3983
    %4015 = vmatpush1.bf16.msra.mxu0 %v3982
    %4016 = vmatprep.subr.bf16.mxu0 %v3985
    %4017 = vmatpush1.bf16.msra.mxu0 %v3984
    %4018 = vmatprep.subr.bf16.mxu0 %v3987
    %4019 = vmatpush1.bf16.msra.mxu0 %v3986
    %4020 = vmatprep.subr.bf16.mxu0 %v3989
    %4021 = vmatpush1.bf16.msra.mxu0 %v3988
    %4022 = vmatprep.subr.bf16.mxu0 %v3991
    %4023 = vmatpush1.bf16.msra.mxu0 %v3990
    %4024 = vmatprep.subr.bf16.mxu0 %v3993
    %4025 = vmatpush1.bf16.msra.mxu0 %v3992
    %4026 = vmatprep.subr.bf16.mxu0 %v3995
    %4027 = vmatpush1.bf16.msra.mxu0 %v3994
    %4028 = vmatprep.subr.bf16.mxu0 0
    %4029 = vmatpush1.bf16.msra.mxu0 0
    %4030 = vmatprep.subr.bf16.mxu0 0
    %4031 = vmatpush1.bf16.msra.mxu0 0
    %4032 = vmatprep.subr.bf16.mxu0 0
    %4033 = vmatpush1.bf16.msra.mxu0 0
    %4034 = vmatprep.subr.bf16.mxu0 0
    %4035 = vmatpush1.bf16.msra.mxu0 0
    %4036 = vmatprep.subr.bf16.mxu0 0
    %4037 = vmatpush1.bf16.msra.mxu0 0
    %4038 = vmatprep.subr.bf16.mxu0 0
    %4039 = vmatpush1.bf16.msra.mxu0 0
    %4040 = vmatprep.subr.bf16.mxu0 0
    %4041 = vmatpush1.bf16.msra.mxu0 0
    %4042 = vmatprep.subr.bf16.mxu0 0
    %4043 = vmatpush1.bf16.msra.mxu0 0
    %4044 = vmatprep.mubr.bf16.mxu0 0
    %4045 = vmatmul.mubr.bf16.gmra.mrb[0].mxu0 %v3699
    %v4046 = vpop.f32.mrb[0].mxu0
    %v4047 = vadd.f32 0.0, %v4046
    %v4048 = vpop.f32.mrb[0].mxu0
    %v4049 = vadd.f32 0.0, %v4048
    %v4050 = vpop.f32.mrb[0].mxu0
    %v4051 = vadd.f32 0.0, %v4050
    %v4052 = vpop.f32.mrb[0].mxu0
    %v4053 = vadd.f32 0.0, %v4052
    %4054 = vmatprep.mubr.bf16.mxu0 0
    %4055 = vmatmul.mubr.bf16.gmra.mrb[0].mxu0 %v3700
    %v4056 = vpop.f32.mrb[0].mxu0
    %v4057 = vadd.f32 0.0, %v4056
    %v4058 = vpop.f32.mrb[0].mxu0
    %v4059 = vadd.f32 0.0, %v4058
    %v4060 = vpop.f32.mrb[0].mxu0
    %v4061 = vadd.f32 0.0, %v4060
    %v4062 = vpop.f32.mrb[0].mxu0
    %v4063 = vadd.f32 0.0, %v4062
    %4064 = vmatprep.mubr.bf16.mxu0 0
    %4065 = vmatmul.mubr.bf16.gmra.mrb[0].mxu0 %v3701
    %v4066 = vpop.f32.mrb[0].mxu0
    %v4067 = vadd.f32 0.0, %v4066
    %v4068 = vpop.f32.mrb[0].mxu0
    %v4069 = vadd.f32 0.0, %v4068
    %v4070 = vpop.f32.mrb[0].mxu0
    %v4071 = vadd.f32 0.0, %v4070
    %v4072 = vpop.f32.mrb[0].mxu0
    %v4073 = vadd.f32 0.0, %v4072
    %4074 = vmatprep.mubr.bf16.mxu0 0
    %4075 = vmatmul.mubr.bf16.gmra.mrb[0].mxu0 %v3702
    %v4076 = vpop.f32.mrb[0].mxu0
    %v4077 = vadd.f32 0.0, %v4076
    %v4078 = vpop.f32.mrb[0].mxu0
    %v4079 = vadd.f32 0.0, %v4078
    %v4080 = vpop.f32.mrb[0].mxu0
    %v4081 = vadd.f32 0.0, %v4080
    %v4082 = vpop.f32.mrb[0].mxu0
    %v4083 = vadd.f32 0.0, %v4082
    %4084 = vmatprep.mubr.bf16.mxu0 0
    %4085 = vmatmul.mubr.bf16.gmra.mrb[0].mxu0 %v3703
    %v4086 = vpop.f32.mrb[0].mxu0
    %v4087 = vadd.f32 0.0, %v4086
    %v4088 = vpop.f32.mrb[0].mxu0
    %v4089 = vadd.f32 0.0, %v4088
    %v4090 = vpop.f32.mrb[0].mxu0
    %v4091 = vadd.f32 0.0, %v4090
    %v4092 = vpop.f32.mrb[0].mxu0
    %v4093 = vadd.f32 0.0, %v4092
    %4094 = vmatprep.mubr.bf16.mxu0 0
    %4095 = vmatmul.mubr.bf16.gmra.mrb[0].mxu0 %v3704
    %v4096 = vpop.f32.mrb[0].mxu0
    %v4097 = vadd.f32 0.0, %v4096
    %v4098 = vpop.f32.mrb[0].mxu0
    %v4099 = vadd.f32 0.0, %v4098
    %v4100 = vpop.f32.mrb[0].mxu0
    %v4101 = vadd.f32 0.0, %v4100
    %v4102 = vpop.f32.mrb[0].mxu0
    %v4103 = vadd.f32 0.0, %v4102
    %4104 = vmatprep.mubr.bf16.mxu0 0
    %4105 = vmatmul.mubr.bf16.gmra.mrb[0].mxu0 %v3705
    %v4106 = vpop.f32.mrb[0].mxu0
    %v4107 = vadd.f32 0.0, %v4106
    %v4108 = vpop.f32.mrb[0].mxu0
    %v4109 = vadd.f32 0.0, %v4108
    %v4110 = vpop.f32.mrb[0].mxu0
    %v4111 = vadd.f32 0.0, %v4110
    %v4112 = vpop.f32.mrb[0].mxu0
    %v4113 = vadd.f32 0.0, %v4112
    %4114 = vmatprep.mubr.bf16.mxu0 0
    %4115 = vmatmul.mubr.bf16.gmra.mrb[0].mxu0 %v3706
    %v4116 = vpop.f32.mrb[0].mxu0
    %v4117 = vadd.f32 0.0, %v4116
    %v4118 = vpop.f32.mrb[0].mxu0
    %v4119 = vadd.f32 0.0, %v4118
    %v4120 = vpop.f32.mrb[0].mxu0
    %v4121 = vadd.f32 0.0, %v4120
    %v4122 = vpop.f32.mrb[0].mxu0
    %v4123 = vadd.f32 0.0, %v4122
    %4124 = vdwg.mxu0
    %v4125 = vmul.f32 %v3838, 0.5
    %v4126 = vmul.f32 %v3840, 0.5
    %v4127 = vmul.f32 %v3842, 0.5
    %v4128 = vmul.f32 %v3844, 0.5
    %v4129 = vmul.f32 %v3848, 0.5
    %v4130 = vmul.f32 %v3850, 0.5
    %v4131 = vmul.f32 %v3852, 0.5
    %v4132 = vmul.f32 %v3854, 0.5
    %v4133 = vmul.f32 %v3858, 0.5
    %v4134 = vmul.f32 %v3860, 0.5
    %v4135 = vmul.f32 %v3862, 0.5
    %v4136 = vmul.f32 %v3864, 0.5
    %v4137 = vmul.f32 %v3868, 0.5
    %v4138 = vmul.f32 %v3870, 0.5
    %v4139 = vmul.f32 %v3872, 0.5
    %v4140 = vmul.f32 %v3874, 0.5
    %v4141 = vmul.f32 %v3878, 0.5
    %v4142 = vmul.f32 %v3880, 0.5
    %v4143 = vmul.f32 %v3882, 0.5
    %v4144 = vmul.f32 %v3884, 0.5
    %v4145 = vmul.f32 %v3888, 0.5
    %v4146 = vmul.f32 %v3890, 0.5
    %v4147 = vmul.f32 %v3892, 0.5
    %v4148 = vmul.f32 %v3894, 0.5
    %v4149 = vmul.f32 %v3898, 0.5
    %v4150 = vmul.f32 %v3900, 0.5
    %v4151 = vmul.f32 %v3902, 0.5
    %v4152 = vmul.f32 %v3904, 0.5
    %v4153 = vmul.f32 %v3908, 0.5
    %v4154 = vmul.f32 %v3910, 0.5
    %v4155 = vmul.f32 %v3912, 0.5
    %v4156 = vmul.f32 %v3914, 0.5
    %v4157 = vmul.f32 %v3838, 0.70710677
    %v4158 = vmul.f32 %v3840, 0.70710677
    %v4159 = vmul.f32 %v3842, 0.70710677
    %v4160 = vmul.f32 %v3844, 0.70710677
    %v4161 = vmul.f32 %v3848, 0.70710677
    %v4162 = vmul.f32 %v3850, 0.70710677
    %v4163 = vmul.f32 %v3852, 0.70710677
    %v4164 = vmul.f32 %v3854, 0.70710677
    %v4165 = vmul.f32 %v3858, 0.70710677
    %v4166 = vmul.f32 %v3860, 0.70710677
    %v4167 = vmul.f32 %v3862, 0.70710677
    %v4168 = vmul.f32 %v3864, 0.70710677
    %v4169 = vmul.f32 %v3868, 0.70710677
    %v4170 = vmul.f32 %v3870, 0.70710677
    %v4171 = vmul.f32 %v3872, 0.70710677
    %v4172 = vmul.f32 %v3874, 0.70710677
    %v4173 = vmul.f32 %v3878, 0.70710677
    %v4174 = vmul.f32 %v3880, 0.70710677
    %v4175 = vmul.f32 %v3882, 0.70710677
    %v4176 = vmul.f32 %v3884, 0.70710677
    %v4177 = vmul.f32 %v3888, 0.70710677
    %v4178 = vmul.f32 %v3890, 0.70710677
    %v4179 = vmul.f32 %v3892, 0.70710677
    %v4180 = vmul.f32 %v3894, 0.70710677
    %v4181 = vmul.f32 %v3898, 0.70710677
    %v4182 = vmul.f32 %v3900, 0.70710677
    %v4183 = vmul.f32 %v3902, 0.70710677
    %v4184 = vmul.f32 %v3904, 0.70710677
    %v4185 = vmul.f32 %v3908, 0.70710677
    %v4186 = vmul.f32 %v3910, 0.70710677
    %v4187 = vmul.f32 %v3912, 0.70710677
    %v4188 = vmul.f32 %v3914, 0.70710677
    %v4189 = verf.f32.pop %v4157
    %v4190 = verf.f32.pop %v4158
    %v4191 = verf.f32.pop %v4159
    %v4192 = verf.f32.pop %v4160
    %v4193 = verf.f32.pop %v4161
    %v4194 = verf.f32.pop %v4162
    %v4195 = verf.f32.pop %v4163
    %v4196 = verf.f32.pop %v4164
    %v4197 = verf.f32.pop %v4165
    %v4198 = verf.f32.pop %v4166
    %v4199 = verf.f32.pop %v4167
    %v4200 = verf.f32.pop %v4168
    %v4201 = verf.f32.pop %v4169
    %v4202 = verf.f32.pop %v4170
    %v4203 = verf.f32.pop %v4171
    %v4204 = verf.f32.pop %v4172
    %v4205 = verf.f32.pop %v4173
    %v4206 = verf.f32.pop %v4174
    %v4207 = verf.f32.pop %v4175
    %v4208 = verf.f32.pop %v4176
    %v4209 = verf.f32.pop %v4177
    %v4210 = verf.f32.pop %v4178
    %v4211 = verf.f32.pop %v4179
    %v4212 = verf.f32.pop %v4180
    %v4213 = verf.f32.pop %v4181
    %v4214 = verf.f32.pop %v4182
    %v4215 = verf.f32.pop %v4183
    %v4216 = verf.f32.pop %v4184
    %v4217 = verf.f32.pop %v4185
    %v4218 = verf.f32.pop %v4186
    %v4219 = verf.f32.pop %v4187
    %v4220 = verf.f32.pop %v4188
    %v4221 = vadd.f32 %v4189, 1.0
    %v4222 = vadd.f32 %v4190, 1.0
    %v4223 = vadd.f32 %v4191, 1.0
    %v4224 = vadd.f32 %v4192, 1.0
    %v4225 = vadd.f32 %v4193, 1.0
    %v4226 = vadd.f32 %v4194, 1.0
    %v4227 = vadd.f32 %v4195, 1.0
    %v4228 = vadd.f32 %v4196, 1.0
    %v4229 = vadd.f32 %v4197, 1.0
    %v4230 = vadd.f32 %v4198, 1.0
    %v4231 = vadd.f32 %v4199, 1.0
    %v4232 = vadd.f32 %v4200, 1.0
    %v4233 = vadd.f32 %v4201, 1.0
    %v4234 = vadd.f32 %v4202, 1.0
    %v4235 = vadd.f32 %v4203, 1.0
    %v4236 = vadd.f32 %v4204, 1.0
    %v4237 = vadd.f32 %v4205, 1.0
    %v4238 = vadd.f32 %v4206, 1.0
    %v4239 = vadd.f32 %v4207, 1.0
    %v4240 = vadd.f32 %v4208, 1.0
    %v4241 = vadd.f32 %v4209, 1.0
    %v4242 = vadd.f32 %v4210, 1.0
    %v4243 = vadd.f32 %v4211, 1.0
    %v4244 = vadd.f32 %v4212, 1.0
    %v4245 = vadd.f32 %v4213, 1.0
    %v4246 = vadd.f32 %v4214, 1.0
    %v4247 = vadd.f32 %v4215, 1.0
    %v4248 = vadd.f32 %v4216, 1.0
    %v4249 = vadd.f32 %v4217, 1.0
    %v4250 = vadd.f32 %v4218, 1.0
    %v4251 = vadd.f32 %v4219, 1.0
    %v4252 = vadd.f32 %v4220, 1.0
    %v4253 = vmul.f32 %v4125, %v4221
    %v4254 = vmul.f32 %v4126, %v4222
    %v4255 = vmul.f32 %v4127, %v4223
    %v4256 = vmul.f32 %v4128, %v4224
    %v4257 = vmul.f32 %v4129, %v4225
    %v4258 = vmul.f32 %v4130, %v4226
    %v4259 = vmul.f32 %v4131, %v4227
    %v4260 = vmul.f32 %v4132, %v4228
    %v4261 = vmul.f32 %v4133, %v4229
    %v4262 = vmul.f32 %v4134, %v4230
    %v4263 = vmul.f32 %v4135, %v4231
    %v4264 = vmul.f32 %v4136, %v4232
    %v4265 = vmul.f32 %v4137, %v4233
    %v4266 = vmul.f32 %v4138, %v4234
    %v4267 = vmul.f32 %v4139, %v4235
    %v4268 = vmul.f32 %v4140, %v4236
    %v4269 = vmul.f32 %v4141, %v4237
    %v4270 = vmul.f32 %v4142, %v4238
    %v4271 = vmul.f32 %v4143, %v4239
    %v4272 = vmul.f32 %v4144, %v4240
    %v4273 = vmul.f32 %v4145, %v4241
    %v4274 = vmul.f32 %v4146, %v4242
    %v4275 = vmul.f32 %v4147, %v4243
    %v4276 = vmul.f32 %v4148, %v4244
    %v4277 = vmul.f32 %v4149, %v4245
    %v4278 = vmul.f32 %v4150, %v4246
    %v4279 = vmul.f32 %v4151, %v4247
    %v4280 = vmul.f32 %v4152, %v4248
    %v4281 = vmul.f32 %v4153, %v4249
    %v4282 = vmul.f32 %v4154, %v4250
    %v4283 = vmul.f32 %v4155, %v4251
    %v4284 = vmul.f32 %v4156, %v4252
    %v4285 = vmul.f32 %v4253, %v4047
    %v4286 = vmul.f32 %v4254, %v4049
    %v4287 = vmul.f32 %v4255, %v4051
    %v4288 = vmul.f32 %v4256, %v4053
    %v4289 = vmul.f32 %v4257, %v4057
    %v4290 = vmul.f32 %v4258, %v4059
    %v4291 = vmul.f32 %v4259, %v4061
    %v4292 = vmul.f32 %v4260, %v4063
    %v4293 = vmul.f32 %v4261, %v4067
    %v4294 = vmul.f32 %v4262, %v4069
    %v4295 = vmul.f32 %v4263, %v4071
    %v4296 = vmul.f32 %v4264, %v4073
    %v4297 = vmul.f32 %v4265, %v4077
    %v4298 = vmul.f32 %v4266, %v4079
    %v4299 = vmul.f32 %v4267, %v4081
    %v4300 = vmul.f32 %v4268, %v4083
    %v4301 = vmul.f32 %v4269, %v4087
    %v4302 = vmul.f32 %v4270, %v4089
    %v4303 = vmul.f32 %v4271, %v4091
    %v4304 = vmul.f32 %v4272, %v4093
    %v4305 = vmul.f32 %v4273, %v4097
    %v4306 = vmul.f32 %v4274, %v4099
    %v4307 = vmul.f32 %v4275, %v4101
    %v4308 = vmul.f32 %v4276, %v4103
    %v4309 = vmul.f32 %v4277, %v4107
    %v4310 = vmul.f32 %v4278, %v4109
    %v4311 = vmul.f32 %v4279, %v4111
    %v4312 = vmul.f32 %v4280, %v4113
    %v4313 = vmul.f32 %v4281, %v4117
    %v4314 = vmul.f32 %v4282, %v4119
    %v4315 = vmul.f32 %v4283, %v4121
    %v4316 = vmul.f32 %v4284, %v4123
    %v4317 = vpack.c.bf16 %v4287, %v4285
    %v4318 = vpack.c.bf16 %v4288, %v4286
    %v4319 = vpack.c.bf16 %v4291, %v4289
    %v4320 = vpack.c.bf16 %v4292, %v4290
    %v4321 = vpack.c.bf16 %v4295, %v4293
    %v4322 = vpack.c.bf16 %v4296, %v4294
    %v4323 = vpack.c.bf16 %v4299, %v4297
    %v4324 = vpack.c.bf16 %v4300, %v4298
    %v4325 = vpack.c.bf16 %v4303, %v4301
    %v4326 = vpack.c.bf16 %v4304, %v4302
    %v4327 = vpack.c.bf16 %v4307, %v4305
    %v4328 = vpack.c.bf16 %v4308, %v4306
    %v4329 = vpack.c.bf16 %v4311, %v4309
    %v4330 = vpack.c.bf16 %v4312, %v4310
    %v4331 = vpack.c.bf16 %v4315, %v4313
    %v4332 = vpack.c.bf16 %v4316, %v4314
    %v4333 = vld [vmem:[#allocation11] sm:$0xf]
    %v4334 = vld [vmem:[#allocation11 + $0x4] sm:$0xf]
    %v4335 = vld [vmem:[#allocation11 + $0x8] sm:$0xf]
    %v4336 = vld [vmem:[#allocation11 + $0xc] sm:$0xf]
    %v4337 = vld [vmem:[#allocation11 + $0x10] sm:$0xf]
    %v4338 = vld [vmem:[#allocation11 + $0x14] sm:$0xf]
    %v4339 = vld [vmem:[#allocation11 + $0x18] sm:$0xf]
    %v4340 = vld [vmem:[#allocation11 + $0x1c] sm:$0xf]
    %v4341 = vld [vmem:[#allocation11 + $0x20] sm:$0xf]
    %v4342 = vld [vmem:[#allocation11 + $0x24] sm:$0xf]
    %v4343 = vld [vmem:[#allocation11 + $0x28] sm:$0xf]
    %v4344 = vld [vmem:[#allocation11 + $0x2c] sm:$0xf]
    %v4345 = vld [vmem:[#allocation11 + $0x30] sm:$0xf]
    %v4346 = vld [vmem:[#allocation11 + $0x34] sm:$0xf]
    %v4347 = vld [vmem:[#allocation11 + $0x38] sm:$0xf]
    %v4348 = vld [vmem:[#allocation11 + $0x3c] sm:$0xf]
    %v4349 = vld [vmem:[#allocation11 + $0x40] sm:$0xf]
    %v4350 = vld [vmem:[#allocation11 + $0x44] sm:$0xf]
    %v4351 = vld [vmem:[#allocation11 + $0x48] sm:$0xf]
    %v4352 = vld [vmem:[#allocation11 + $0x4c] sm:$0xf]
    %v4353 = vld [vmem:[#allocation11 + $0x50] sm:$0xf]
    %v4354 = vld [vmem:[#allocation11 + $0x54] sm:$0xf]
    %v4355 = vld [vmem:[#allocation11 + $0x58] sm:$0xf]
    %v4356 = vld [vmem:[#allocation11 + $0x5c] sm:$0xf]
    %v4357 = vld [vmem:[#allocation11 + $0x60] sm:$0xf]
    %v4358 = vld [vmem:[#allocation11 + $0x64] sm:$0xf]
    %v4359 = vld [vmem:[#allocation11 + $0x68] sm:$0xf]
    %v4360 = vld [vmem:[#allocation11 + $0x6c] sm:$0xf]
    %v4361 = vld [vmem:[#allocation11 + $0x70] sm:$0xf]
    %v4362 = vld [vmem:[#allocation11 + $0x74] sm:$0xf]
    %v4363 = vld [vmem:[#allocation11 + $0x78] sm:$0xf]
    %v4364 = vld [vmem:[#allocation11 + $0x7c] sm:$0xf]
    %v4397 = vunpack.c.l.b16 %v4333
    %v4398 = vunpack.c.l.b16 %v4334
    %v4399 = vunpack.c.l.b16 %v4335
    %v4400 = vunpack.c.l.b16 %v4336
    %v4401 = vunpack.c.l.b16 %v4337
    %v4402 = vunpack.c.l.b16 %v4338
    %v4403 = vunpack.c.l.b16 %v4339
    %v4404 = vunpack.c.l.b16 %v4340
    %v4405 = vunpack.c.l.b16 %v4341
    %v4406 = vunpack.c.l.b16 %v4342
    %v4407 = vunpack.c.l.b16 %v4343
    %v4408 = vunpack.c.l.b16 %v4344
    %v4409 = vunpack.c.l.b16 %v4345
    %v4410 = vunpack.c.l.b16 %v4346
    %v4411 = vunpack.c.l.b16 %v4347
    %v4412 = vunpack.c.l.b16 %v4348
    %v4413 = vunpack.c.l.b16 %v4349
    %v4414 = vunpack.c.l.b16 %v4350
    %v4415 = vunpack.c.l.b16 %v4351
    %v4416 = vunpack.c.l.b16 %v4352
    %v4417 = vunpack.c.l.b16 %v4353
    %v4418 = vunpack.c.l.b16 %v4354
    %v4419 = vunpack.c.l.b16 %v4355
    %v4420 = vunpack.c.l.b16 %v4356
    %v4421 = vunpack.c.l.b16 %v4357
    %v4422 = vunpack.c.l.b16 %v4358
    %v4423 = vunpack.c.l.b16 %v4359
    %v4424 = vunpack.c.l.b16 %v4360
    %v4425 = vunpack.c.l.b16 %v4361
    %v4426 = vunpack.c.l.b16 %v4362
    %v4427 = vunpack.c.l.b16 %v4363
    %v4428 = vunpack.c.l.b16 %v4364
    %v4429 = vpack.c.b16 %v4398, %v4397
    %v4430 = vpack.c.b16 %v4400, %v4399
    %v4431 = vpack.c.b16 %v4402, %v4401
    %v4432 = vpack.c.b16 %v4404, %v4403
    %v4433 = vpack.c.b16 %v4406, %v4405
    %v4434 = vpack.c.b16 %v4408, %v4407
    %v4435 = vpack.c.b16 %v4410, %v4409
    %v4436 = vpack.c.b16 %v4412, %v4411
    %v4437 = vpack.c.b16 %v4414, %v4413
    %v4438 = vpack.c.b16 %v4416, %v4415
    %v4439 = vpack.c.b16 %v4418, %v4417
    %v4440 = vpack.c.b16 %v4420, %v4419
    %v4441 = vpack.c.b16 %v4422, %v4421
    %v4442 = vpack.c.b16 %v4424, %v4423
    %v4443 = vpack.c.b16 %v4426, %v4425
    %v4444 = vpack.c.b16 %v4428, %v4427
    %4461 = vmatprep.subr.bf16.mxu0 0
    %4462 = vmatpush1.bf16.msra.mxu0 %v4429
    %4463 = vmatprep.subr.bf16.mxu0 0
    %4464 = vmatpush1.bf16.msra.mxu0 %v4430
    %4465 = vmatprep.subr.bf16.mxu0 0
    %4466 = vmatpush1.bf16.msra.mxu0 %v4431
    %4467 = vmatprep.subr.bf16.mxu0 0
    %4468 = vmatpush1.bf16.msra.mxu0 %v4432
    %4469 = vmatprep.subr.bf16.mxu0 0
    %4470 = vmatpush1.bf16.msra.mxu0 %v4433
    %4471 = vmatprep.subr.bf16.mxu0 0
    %4472 = vmatpush1.bf16.msra.mxu0 %v4434
    %4473 = vmatprep.subr.bf16.mxu0 0
    %4474 = vmatpush1.bf16.msra.mxu0 %v4435
    %4475 = vmatprep.subr.bf16.mxu0 0
    %4476 = vmatpush1.bf16.msra.mxu0 %v4436
    %4477 = vmatprep.subr.bf16.mxu0 0
    %4478 = vmatpush1.bf16.msra.mxu0 %v4437
    %4479 = vmatprep.subr.bf16.mxu0 0
    %4480 = vmatpush1.bf16.msra.mxu0 %v4438
    %4481 = vmatprep.subr.bf16.mxu0 0
    %4482 = vmatpush1.bf16.msra.mxu0 %v4439
    %4483 = vmatprep.subr.bf16.mxu0 0
    %4484 = vmatpush1.bf16.msra.mxu0 %v4440
    %4485 = vmatprep.subr.bf16.mxu0 0
    %4486 = vmatpush1.bf16.msra.mxu0 %v4441
    %4487 = vmatprep.subr.bf16.mxu0 0
    %4488 = vmatpush1.bf16.msra.mxu0 %v4442
    %4489 = vmatprep.subr.bf16.mxu0 0
    %4490 = vmatpush1.bf16.msra.mxu0 %v4443
    %4491 = vmatprep.subr.bf16.mxu0 0
    %4492 = vmatpush1.bf16.msra.mxu0 %v4444
    %4493 = vmatprep.mubr.bf16.mxu0 %v4318
    %4494 = vmatmul.mubr.bf16.gmra.mrb[0].mxu0 %v4317
    %v4495 = vpop.f32.mrb[0].mxu0
    %v4496 = vadd.f32 0.0, %v4495
    %v4497 = vpop.f32.mrb[0].mxu0
    %v4498 = vpop.f32.mrb[0].mxu0
    %v4499 = vadd.f32 0.0, %v4498
    %v4500 = vpop.f32.mrb[0].mxu0
    %4501 = vmatprep.mubr.bf16.mxu0 %v4320
    %4502 = vmatmul.mubr.bf16.gmra.mrb[0].mxu0 %v4319
    %v4503 = vpop.f32.mrb[0].mxu0
    %v4504 = vadd.f32 0.0, %v4503
    %v4505 = vpop.f32.mrb[0].mxu0
    %v4506 = vpop.f32.mrb[0].mxu0
    %v4507 = vadd.f32 0.0, %v4506
    %v4508 = vpop.f32.mrb[0].mxu0
    %4509 = vmatprep.mubr.bf16.mxu0 %v4322
    %4510 = vmatmul.mubr.bf16.gmra.mrb[0].mxu0 %v4321
    %v4511 = vpop.f32.mrb[0].mxu0
    %v4512 = vadd.f32 0.0, %v4511
    %v4513 = vpop.f32.mrb[0].mxu0
    %v4514 = vpop.f32.mrb[0].mxu0
    %v4515 = vadd.f32 0.0, %v4514
    %v4516 = vpop.f32.mrb[0].mxu0
    %4517 = vmatprep.mubr.bf16.mxu0 %v4324
    %4518 = vmatmul.mubr.bf16.gmra.mrb[0].mxu0 %v4323
    %v4519 = vpop.f32.mrb[0].mxu0
    %v4520 = vadd.f32 0.0, %v4519
    %v4521 = vpop.f32.mrb[0].mxu0
    %v4522 = vpop.f32.mrb[0].mxu0
    %v4523 = vadd.f32 0.0, %v4522
    %v4524 = vpop.f32.mrb[0].mxu0
    %4525 = vmatprep.mubr.bf16.mxu0 %v4326
    %4526 = vmatmul.mubr.bf16.gmra.mrb[0].mxu0 %v4325
    %v4527 = vpop.f32.mrb[0].mxu0
    %v4528 = vadd.f32 0.0, %v4527
    %v4529 = vpop.f32.mrb[0].mxu0
    %v4530 = vpop.f32.mrb[0].mxu0
    %v4531 = vadd.f32 0.0, %v4530
    %v4532 = vpop.f32.mrb[0].mxu0
    %4533 = vmatprep.mubr.bf16.mxu0 %v4328
    %4534 = vmatmul.mubr.bf16.gmra.mrb[0].mxu0 %v4327
    %v4535 = vpop.f32.mrb[0].mxu0
    %v4536 = vadd.f32 0.0, %v4535
    %v4537 = vpop.f32.mrb[0].mxu0
    %v4538 = vpop.f32.mrb[0].mxu0
    %v4539 = vadd.f32 0.0, %v4538
    %v4540 = vpop.f32.mrb[0].mxu0
    %4541 = vmatprep.mubr.bf16.mxu0 %v4330
    %4542 = vmatmul.mubr.bf16.gmra.mrb[0].mxu0 %v4329
    %v4543 = vpop.f32.mrb[0].mxu0
    %v4544 = vadd.f32 0.0, %v4543
    %v4545 = vpop.f32.mrb[0].mxu0
    %v4546 = vpop.f32.mrb[0].mxu0
    %v4547 = vadd.f32 0.0, %v4546
    %v4548 = vpop.f32.mrb[0].mxu0
    %4549 = vmatprep.mubr.bf16.mxu0 %v4332
    %4550 = vmatmul.mubr.bf16.gmra.mrb[0].mxu0 %v4331
    %v4551 = vpop.f32.mrb[0].mxu0
    %v4552 = vadd.f32 0.0, %v4551
    %v4553 = vpop.f32.mrb[0].mxu0
    %v4554 = vpop.f32.mrb[0].mxu0
    %v4555 = vadd.f32 0.0, %v4554
    %v4556 = vpop.f32.mrb[0].mxu0
    %4557 = vdwg.mxu0
    %v4558 = vadd.f32 %v3587, %v4496
    %v4559 = vadd.f32 %v3588, %v4499
    %v4560 = vadd.f32 %v3589, %v4504
    %v4561 = vadd.f32 %v3590, %v4507
    %v4562 = vadd.f32 %v3591, %v4512
    %v4563 = vadd.f32 %v3592, %v4515
    %v4564 = vadd.f32 %v3593, %v4520
    %v4565 = vadd.f32 %v3594, %v4523
    %v4566 = vadd.f32 %v3595, %v4528
    %v4567 = vadd.f32 %v3596, %v4531
    %v4568 = vadd.f32 %v3597, %v4536
    %v4569 = vadd.f32 %v3598, %v4539
    %v4570 = vadd.f32 %v3599, %v4544
    %v4571 = vadd.f32 %v3600, %v4547
    %v4572 = vadd.f32 %v3601, %v4552
    %v4573 = vadd.f32 %v3602, %v4555
    %4574 = vst [vmem:[#allocation13] sm:$0xff] %v4558
    %4575 = vst [vmem:[#allocation13 + $0x8] sm:$0xff] %v4559
    %4576 = vst [vmem:[#allocation13 + $0x10] sm:$0xff] %v4560
    %4577 = vst [vmem:[#allocation13 + $0x18] sm:$0xff] %v4561
    %4578 = vst [vmem:[#allocation13 + $0x20] sm:$0xff] %v4562
    %4579 = vst [vmem:[#allocation13 + $0x28] sm:$0xff] %v4563
    %4580 = vst [vmem:[#allocation13 + $0x30] sm:$0xff] %v4564
    %4581 = vst [vmem:[#allocation13 + $0x38] sm:$0xff] %v4565
    %4582 = vst [vmem:[#allocation13 + $0x40] sm:$0xff] %v4566
    %4583 = vst [vmem:[#allocation13 + $0x48] sm:$0xff] %v4567
    %4584 = vst [vmem:[#allocation13 + $0x50] sm:$0xff] %v4568
    %4585 = vst [vmem:[#allocation13 + $0x58] sm:$0xff] %v4569
    %4586 = vst [vmem:[#allocation13 + $0x60] sm:$0xff] %v4570
    %4587 = vst [vmem:[#allocation13 + $0x68] sm:$0xff] %v4571
    %4588 = vst [vmem:[#allocation13 + $0x70] sm:$0xff] %v4572
    %4589 = vst [vmem:[#allocation13 + $0x78] sm:$0xff] %v4573
    // Predicated region
    $region58: #{tpu_custom_call.1} parent=1 // pred_check
      _
    $region59: #{tpu_custom_call.1} parent=1 // pred_check_branch
      %4591 = sbr.rel (0) target = $region61
    $region60: #{tpu_custom_call.1} parent=1 // pred_region
      %s4593 = ssub.s32 2048, 2048
      %4594 = vsyncadd [#allocation4], %s4593
      %s4595 = sshll.u32 [#allocation13], 4
      %s4596 = int_to_ptr.vmem [resolvable:$true] %s4595
      %4601 = dma.vmem_to_hbm [thread:$0]  %s4596, 2048, %s8, [#allocation4], 128, 128, 8
    $region61: #{tpu_custom_call.1} parent=1 // pred_fallthru
      _
    // Predicated region
    $region62: #{tpu_custom_call.1} parent=1 // pred_check
      _
    $region63: #{tpu_custom_call.1} parent=1 // pred_check_branch
      %4603 = sbr.rel (0) target = $region65
    $region64: #{tpu_custom_call.1} parent=1 // pred_region
      %4604 = dma.done [#allocation4], 2048
    $region65: #{tpu_custom_call.1} parent=1 // pred_fallthru
      _
    %4605 = vsyncpa [#allocation3], 1
    %4606 = vsyncpa [#allocation6], 1
    %4607 = vsyncpa [#allocation9], 1
    %4608 = vsyncpa [#allocation12], 1
    %4609 = vsyncpa [#allocation4], 1

</llo_original>
